<compile_context>
chip_gen: v7x
topology: tpu7x:2x2x1
jax: 0.10.0
libtpu: 0.0.40
codegen_flags: <defaults>
</compile_context>

<pallas_src>
import functools

import numpy as np
import jax
import jax.numpy as jnp
from jax.experimental import pallas as pl
from jax.experimental.pallas import tpu as pltpu

BN_EPS = 1e-5


def _round_up(x, m):
    return (x + m - 1) // m * m


# ---------------------------------------------------------------------------
# Pallas kernel: fused (bf16 matmul -> f32 accumulate) + shift + activation
# ---------------------------------------------------------------------------
def _conv_mm_kernel(p_ref, w_ref, b_ref, o_ref, *, act):
    # p_ref: (Pp, Kp) bf16   w_ref: (Kp, Cp) bf16 (BN scale folded in)
    # b_ref: (1, Cp) f32     o_ref: (Pp, Cp) bf16 or f32
    y = jnp.dot(p_ref[...], w_ref[...], preferred_element_type=jnp.float32)
    y = y + b_ref[...]                                   # f32 affine on VPU
    if act == "lrelu":
        y = jnp.maximum(y, 0.2 * y)                      # LeakyReLU(0.2)
    else:  # sigmoid: exp + reciprocal both go to the EUP slot
        y = pl.reciprocal(1.0 + jnp.exp(-y), approx=True)
    o_ref[...] = y.astype(o_ref.dtype)


def _pallas_conv_matmul(patches, w, shift, act, out_dtype):
    """patches: (Pp, Kp) bf16, w: (Kp, Cp) bf16, shift: (1, Cp) f32."""
    Pp, Kp = patches.shape
    Kp2, Cp = w.shape
    assert Kp == Kp2
    return pl.pallas_call(
        functools.partial(_conv_mm_kernel, act=act),
        out_shape=jax.ShapeDtypeStruct((Pp, Cp), out_dtype),
        in_specs=[pl.BlockSpec(memory_space=pltpu.VMEM)] * 3,
        out_specs=pl.BlockSpec(memory_space=pltpu.VMEM),
    )(patches, w, shift)


# ---------------------------------------------------------------------------
# JAX glue: NHWC im2col (channels lane-contiguous, patch dim ordered kh,kw,C)
# ---------------------------------------------------------------------------
def _im2col_nhwc(x, kh, kw, stride, pad):
    """x: (N, H, W, C) -> patches (N*Ho*Wo, kh*kw*C)."""
    N, H, W, C = x.shape
    if pad:
        x = jnp.pad(x, ((0, 0), (pad, pad), (pad, pad), (0, 0)))
    Ho = (H + 2 * pad - kh) // stride + 1
    Wo = (W + 2 * pad - kw) // stride + 1
    cols = []
    for ki in range(kh):
        for kj in range(kw):
            cols.append(x[:, ki:ki + (Ho - 1) * stride + 1:stride,
                          kj:kj + (Wo - 1) * stride + 1:stride, :])
    p = jnp.stack(cols, axis=3)                          # (N, Ho, Wo, kh*kw, C)
    p = p.reshape(N * Ho * Wo, kh * kw * C)
    return p, Ho, Wo


# ---------------------------------------------------------------------------
# Parameter init (deterministic, PyTorch Conv2d default U(-1/sqrt(fan_in), .))
# ---------------------------------------------------------------------------
_LAYER_SPECS = [
    # (Cin, Cout, k, stride, pad, has_bn, activation)
    (1,    64, 4, 2, 1, False, "lrelu"),
    (64,  128, 4, 2, 1, True,  "lrelu"),
    (128, 256, 3, 2, 1, True,  "lrelu"),
    (256, 512, 3, 2, 1, True,  "lrelu"),
    (512,   1, 2, 1, 0, False, "sigmoid"),
]


def init_params(key):
    """Returns layer dicts holding kernel-ready tensors (scale-folded, padded,
    bf16 weights; f32 shift row) plus the raw f32 tensors for the reference."""
    params = []
    for i, (cin, cout, k, s, p, has_bn, act) in enumerate(_LAYER_SPECS):
        kw_key, kb_key = jax.random.split(jax.random.fold_in(key, i))
        fan_in = cin * k * k
        bound = 1.0 / np.sqrt(fan_in)
        w = jax.random.uniform(kw_key, (cout, cin, k, k), jnp.float32, -bound, bound)
        b = jax.random.uniform(kb_key, (cout,), jnp.float32, -bound, bound)
        if has_bn:
            # BatchNorm2d at init (eval): gamma=1, beta=0, mean=0, var=1.
            gamma = jnp.ones((cout,), jnp.float32)
            beta = jnp.zeros((cout,), jnp.float32)
            mean = jnp.zeros((cout,), jnp.float32)
            var = jnp.ones((cout,), jnp.float32)
            scale = gamma / jnp.sqrt(var + BN_EPS)
            shift = beta - mean * scale + b * scale      # fold conv bias into BN
        else:
            scale = jnp.ones((cout,), jnp.float32)
            shift = b
        # Kernel-ready weight: (kh,kw,Cin,Cout) ordering to match NHWC patches,
        # BN scale folded into columns, padded to MXU-friendly multiples, bf16.
        K = k * k * cin
        Kp, Cp = _round_up(K, 128), _round_up(cout, 128)
        w2d = w.transpose(2, 3, 1, 0).reshape(K, cout) * scale[None, :]
        w2d = jnp.pad(w2d, ((0, Kp - K), (0, Cp - cout))).astype(jnp.bfloat16)
        shift_row = jnp.pad(shift[None, :], ((0, 0), (0, Cp - cout)))  # f32
        params.append(dict(
            w2d=w2d, shift_row=shift_row, cout=cout, k=k, stride=s, pad=p,
            act=act, w_oihw=w, scale=scale, shift=shift))
    return params


# ---------------------------------------------------------------------------
# Forward pass (NHWC internally; NCHW at the module boundary)
# ---------------------------------------------------------------------------
def discriminator_forward(params, x):
    """x: (N, 1, H, W) f32 NCHW. Returns (N, 1) like x.view(-1, 1)."""
    N = x.shape[0]
    x = jnp.transpose(x, (0, 2, 3, 1))                   # NCHW -> NHWC, once
    n_layers = len(params)
    for idx, layer in enumerate(params):
        k, s, p = layer["k"], layer["stride"], layer["pad"]
        patches, Ho, Wo = _im2col_nhwc(x, k, k, s, p)
        P, K = patches.shape
        Pp = _round_up(P, 16)
        Kp = layer["w2d"].shape[0]
        patches = patches.astype(jnp.bfloat16)
        if Pp != P or Kp != K:
            patches = jnp.pad(patches, ((0, Pp - P), (0, Kp - K)))
        last = idx == n_layers - 1
        out_dtype = jnp.float32 if last else jnp.bfloat16
        out = _pallas_conv_matmul(patches, layer["w2d"], layer["shift_row"],
                                  layer["act"], out_dtype)
        cout = layer["cout"]
        x = out[:P, :cout].reshape(N, Ho, Wo, cout)      # already NHWC
        # Dropout2d(0.3): identity (inference semantics).
    return x.reshape(-1, 1)


# Pure-JAX f32 reference for correctness checking.
def _reference_forward(params, x):
    for layer in params:
        y = jax.lax.conv_general_dilated(
            x, layer["w_oihw"], window_strides=(layer["stride"],) * 2,
            padding=[(layer["pad"],) * 2] * 2,
            dimension_numbers=("NCHW", "OIHW", "NCHW"))
        y = (y * layer["scale"][None, :, None, None]
             + layer["shift"][None, :, None, None])
        if layer["act"] == "lrelu":
            y = jnp.where(y > 0, y, 0.2 * y)
        else:
            y = jax.nn.sigmoid(y)
        x = y
    return x.reshape(-1, 1)


if __name__ == "__main__":
    key = jax.random.PRNGKey(0)
    params = init_params(key)

    # 1-channel 32x32 image, batch 2 (consistent with the module's conv stack).
    x = jax.random.normal(jax.random.fold_in(key, 999), (2, 1, 32, 32),
                          dtype=jnp.float32)

    fwd = jax.jit(lambda inp: discriminator_forward(params, inp))
    out = jax.block_until_ready(fwd(x))
    assert out.shape == (2, 1), out.shape

    ref = jax.block_until_ready(_reference_forward(params, x))
    # bf16 matmul inputs (f32 accumulation) -> loosened tolerance vs f32 ref.
    np.testing.assert_allclose(np.asarray(out), np.asarray(ref),
                               rtol=2e-2, atol=2e-2)
    print("KERNEL_OK")
</pallas_src>

<mosaic_0001>
module attributes {stable_mosaic.version = 11 : i64} {
  func.func @_conv_mm_kernel(%arg0: memref<512x128xbf16, #tpu.memory_space<vmem>>, %arg1: memref<128x128xbf16, #tpu.memory_space<vmem>>, %arg2: memref<1x128xf32, #tpu.memory_space<vmem>>, %arg3: memref<512x128xbf16, #tpu.memory_space<vmem>>) attributes {dimension_semantics = [], scalar_prefetch = 0 : i64, scratch_operands = 0 : i64, tpu.core_type = #tpu.core_type<tc>} {
    %c0 = arith.constant 0 : index
    %c0_0 = arith.constant 0 : index
    %0 = vector.load %arg0[%c0, %c0_0] : memref<512x128xbf16, #tpu.memory_space<vmem>>, vector<512x128xbf16>
    %c0_1 = arith.constant 0 : index
    %c0_2 = arith.constant 0 : index
    %1 = vector.load %arg1[%c0_1, %c0_2] : memref<128x128xbf16, #tpu.memory_space<vmem>>, vector<128x128xbf16>
    %cst = arith.constant dense<0.000000e+00> : vector<512x128xf32>
    %2 = tpu.matmul %0, %1, %cst {dimension_numbers = #tpu.dot_dimension_numbers<[1], [0], [0], [1], [0, 0, 1, 1], [], []>} : vector<512x128xbf16>, vector<128x128xbf16>, vector<512x128xf32> -> vector<512x128xf32>
    %c0_3 = arith.constant 0 : index
    %c0_4 = arith.constant 0 : index
    %3 = vector.load %arg2[%c0_3, %c0_4] : memref<1x128xf32, #tpu.memory_space<vmem>>, vector<1x128xf32>
    %4 = vector.broadcast %3 : vector<1x128xf32> to vector<512x128xf32>
    %5 = arith.addf %2, %4 : vector<512x128xf32>
    %cst_5 = arith.constant 2.000000e-01 : f32
    %6 = vector.broadcast %cst_5 : f32 to vector<512x128xf32>
    %7 = arith.mulf %6, %5 : vector<512x128xf32>
    %8 = arith.maximumf %5, %7 : vector<512x128xf32>
    %9 = arith.truncf %8 : vector<512x128xf32> to vector<512x128xbf16>
    %c0_6 = arith.constant 0 : index
    %c0_7 = arith.constant 0 : index
    %10 = vector.load %arg3[%c0_6, %c0_7] : memref<512x128xbf16, #tpu.memory_space<vmem>>, vector<512x128xbf16>
    tpu.vector_store %arg3[%c0_6, %c0_7], %9 {strides = array<i32>} : memref<512x128xbf16, #tpu.memory_space<vmem>>, vector<512x128xbf16>,
    return
  }
}

module attributes {stable_mosaic.version = 11 : i64} {
  func.func @_conv_mm_kernel(%arg0: memref<128x1024xbf16, #tpu.memory_space<vmem>>, %arg1: memref<1024x128xbf16, #tpu.memory_space<vmem>>, %arg2: memref<1x128xf32, #tpu.memory_space<vmem>>, %arg3: memref<128x128xbf16, #tpu.memory_space<vmem>>) attributes {dimension_semantics = [], scalar_prefetch = 0 : i64, scratch_operands = 0 : i64, tpu.core_type = #tpu.core_type<tc>} {
    %c0 = arith.constant 0 : index
    %c0_0 = arith.constant 0 : index
    %0 = vector.load %arg0[%c0, %c0_0] : memref<128x1024xbf16, #tpu.memory_space<vmem>>, vector<128x1024xbf16>
    %c0_1 = arith.constant 0 : index
    %c0_2 = arith.constant 0 : index
    %1 = vector.load %arg1[%c0_1, %c0_2] : memref<1024x128xbf16, #tpu.memory_space<vmem>>, vector<1024x128xbf16>
    %cst = arith.constant dense<0.000000e+00> : vector<128x128xf32>
    %2 = tpu.matmul %0, %1, %cst {dimension_numbers = #tpu.dot_dimension_numbers<[1], [0], [0], [1], [0, 0, 1, 1], [], []>} : vector<128x1024xbf16>, vector<1024x128xbf16>, vector<128x128xf32> -> vector<128x128xf32>
    %c0_3 = arith.constant 0 : index
    %c0_4 = arith.constant 0 : index
    %3 = vector.load %arg2[%c0_3, %c0_4] : memref<1x128xf32, #tpu.memory_space<vmem>>, vector<1x128xf32>
    %4 = vector.broadcast %3 : vector<1x128xf32> to vector<128x128xf32>
    %5 = arith.addf %2, %4 : vector<128x128xf32>
    %cst_5 = arith.constant 2.000000e-01 : f32
    %6 = vector.broadcast %cst_5 : f32 to vector<128x128xf32>
    %7 = arith.mulf %6, %5 : vector<128x128xf32>
    %8 = arith.maximumf %5, %7 : vector<128x128xf32>
    %9 = arith.truncf %8 : vector<128x128xf32> to vector<128x128xbf16>
    %c0_6 = arith.constant 0 : index
    %c0_7 = arith.constant 0 : index
    %10 = vector.load %arg3[%c0_6, %c0_7] : memref<128x128xbf16, #tpu.memory_space<vmem>>, vector<128x128xbf16>
    tpu.vector_store %arg3[%c0_6, %c0_7], %9 {strides = array<i32>} : memref<128x128xbf16, #tpu.memory_space<vmem>>, vector<128x128xbf16>,
    return
  }
}

module attributes {stable_mosaic.version = 11 : i64} {
  func.func @_conv_mm_kernel(%arg0: memref<32x1152xbf16, #tpu.memory_space<vmem>>, %arg1: memref<1152x256xbf16, #tpu.memory_space<vmem>>, %arg2: memref<1x256xf32, #tpu.memory_space<vmem>>, %arg3: memref<32x256xbf16, #tpu.memory_space<vmem>>) attributes {dimension_semantics = [], scalar_prefetch = 0 : i64, scratch_operands = 0 : i64, tpu.core_type = #tpu.core_type<tc>} {
    %c0 = arith.constant 0 : index
    %c0_0 = arith.constant 0 : index
    %0 = vector.load %arg0[%c0, %c0_0] : memref<32x1152xbf16, #tpu.memory_space<vmem>>, vector<32x1152xbf16>
    %c0_1 = arith.constant 0 : index
    %c0_2 = arith.constant 0 : index
    %1 = vector.load %arg1[%c0_1, %c0_2] : memref<1152x256xbf16, #tpu.memory_space<vmem>>, vector<1152x256xbf16>
    %cst = arith.constant dense<0.000000e+00> : vector<32x256xf32>
    %2 = tpu.matmul %0, %1, %cst {dimension_numbers = #tpu.dot_dimension_numbers<[1], [0], [0], [1], [0, 0, 1, 1], [], []>} : vector<32x1152xbf16>, vector<1152x256xbf16>, vector<32x256xf32> -> vector<32x256xf32>
    %c0_3 = arith.constant 0 : index
    %c0_4 = arith.constant 0 : index
    %3 = vector.load %arg2[%c0_3, %c0_4] : memref<1x256xf32, #tpu.memory_space<vmem>>, vector<1x256xf32>
    %4 = vector.broadcast %3 : vector<1x256xf32> to vector<32x256xf32>
    %5 = arith.addf %2, %4 : vector<32x256xf32>
    %cst_5 = arith.constant 2.000000e-01 : f32
    %6 = vector.broadcast %cst_5 : f32 to vector<32x256xf32>
    %7 = arith.mulf %6, %5 : vector<32x256xf32>
    %8 = arith.maximumf %5, %7 : vector<32x256xf32>
    %9 = arith.truncf %8 : vector<32x256xf32> to vector<32x256xbf16>
    %c0_6 = arith.constant 0 : index
    %c0_7 = arith.constant 0 : index
    %10 = vector.load %arg3[%c0_6, %c0_7] : memref<32x256xbf16, #tpu.memory_space<vmem>>, vector<32x256xbf16>
    tpu.vector_store %arg3[%c0_6, %c0_7], %9 {strides = array<i32>} : memref<32x256xbf16, #tpu.memory_space<vmem>>, vector<32x256xbf16>,
    return
  }
}

module attributes {stable_mosaic.version = 11 : i64} {
  func.func @_conv_mm_kernel(%arg0: memref<16x2304xbf16, #tpu.memory_space<vmem>>, %arg1: memref<2304x512xbf16, #tpu.memory_space<vmem>>, %arg2: memref<1x512xf32, #tpu.memory_space<vmem>>, %arg3: memref<16x512xbf16, #tpu.memory_space<vmem>>) attributes {dimension_semantics = [], scalar_prefetch = 0 : i64, scratch_operands = 0 : i64, tpu.core_type = #tpu.core_type<tc>} {
    %c0 = arith.constant 0 : index
    %c0_0 = arith.constant 0 : index
    %0 = vector.load %arg0[%c0, %c0_0] : memref<16x2304xbf16, #tpu.memory_space<vmem>>, vector<16x2304xbf16>
    %c0_1 = arith.constant 0 : index
    %c0_2 = arith.constant 0 : index
    %1 = vector.load %arg1[%c0_1, %c0_2] : memref<2304x512xbf16, #tpu.memory_space<vmem>>, vector<2304x512xbf16>
    %cst = arith.constant dense<0.000000e+00> : vector<16x512xf32>
    %2 = tpu.matmul %0, %1, %cst {dimension_numbers = #tpu.dot_dimension_numbers<[1], [0], [0], [1], [0, 0, 1, 1], [], []>} : vector<16x2304xbf16>, vector<2304x512xbf16>, vector<16x512xf32> -> vector<16x512xf32>
    %c0_3 = arith.constant 0 : index
    %c0_4 = arith.constant 0 : index
    %3 = vector.load %arg2[%c0_3, %c0_4] : memref<1x512xf32, #tpu.memory_space<vmem>>, vector<1x512xf32>
    %4 = vector.broadcast %3 : vector<1x512xf32> to vector<16x512xf32>
    %5 = arith.addf %2, %4 : vector<16x512xf32>
    %cst_5 = arith.constant 2.000000e-01 : f32
    %6 = vector.broadcast %cst_5 : f32 to vector<16x512xf32>
    %7 = arith.mulf %6, %5 : vector<16x512xf32>
    %8 = arith.maximumf %5, %7 : vector<16x512xf32>
    %9 = arith.truncf %8 : vector<16x512xf32> to vector<16x512xbf16>
    %c0_6 = arith.constant 0 : index
    %c0_7 = arith.constant 0 : index
    %10 = vector.load %arg3[%c0_6, %c0_7] : memref<16x512xbf16, #tpu.memory_space<vmem>>, vector<16x512xbf16>
    tpu.vector_store %arg3[%c0_6, %c0_7], %9 {strides = array<i32>} : memref<16x512xbf16, #tpu.memory_space<vmem>>, vector<16x512xbf16>,
    return
  }
}

module attributes {stable_mosaic.version = 11 : i64} {
  func.func @_conv_mm_kernel(%arg0: memref<16x2048xbf16, #tpu.memory_space<vmem>>, %arg1: memref<2048x128xbf16, #tpu.memory_space<vmem>>, %arg2: memref<1x128xf32, #tpu.memory_space<vmem>>, %arg3: memref<16x128xf32, #tpu.memory_space<vmem>>) attributes {dimension_semantics = [], scalar_prefetch = 0 : i64, scratch_operands = 0 : i64, tpu.core_type = #tpu.core_type<tc>} {
    %c0 = arith.constant 0 : index
    %c0_0 = arith.constant 0 : index
    %0 = vector.load %arg0[%c0, %c0_0] : memref<16x2048xbf16, #tpu.memory_space<vmem>>, vector<16x2048xbf16>
    %c0_1 = arith.constant 0 : index
    %c0_2 = arith.constant 0 : index
    %1 = vector.load %arg1[%c0_1, %c0_2] : memref<2048x128xbf16, #tpu.memory_space<vmem>>, vector<2048x128xbf16>
    %cst = arith.constant dense<0.000000e+00> : vector<16x128xf32>
    %2 = tpu.matmul %0, %1, %cst {dimension_numbers = #tpu.dot_dimension_numbers<[1], [0], [0], [1], [0, 0, 1, 1], [], []>} : vector<16x2048xbf16>, vector<2048x128xbf16>, vector<16x128xf32> -> vector<16x128xf32>
    %c0_3 = arith.constant 0 : index
    %c0_4 = arith.constant 0 : index
    %3 = vector.load %arg2[%c0_3, %c0_4] : memref<1x128xf32, #tpu.memory_space<vmem>>, vector<1x128xf32>
    %4 = vector.broadcast %3 : vector<1x128xf32> to vector<16x128xf32>
    %5 = arith.addf %2, %4 : vector<16x128xf32>
    %cst_5 = arith.constant 0.000000e+00 : f32
    %6 = vector.broadcast %cst_5 : f32 to vector<16x128xf32>
    %7 = arith.subf %6, %5 : vector<16x128xf32>
    %8 = math.exp %7 : vector<16x128xf32>
    %cst_6 = arith.constant 1.000000e+00 : f32
    %9 = vector.broadcast %cst_6 : f32 to vector<16x128xf32>
    %10 = arith.addf %9, %8 : vector<16x128xf32>
    %11 = tpu.reciprocal %10 {approx = true} : vector<16x128xf32> -> vector<16x128xf32>
    %c0_7 = arith.constant 0 : index
    %c0_8 = arith.constant 0 : index
    %12 = vector.load %arg3[%c0_7, %c0_8] : memref<16x128xf32, #tpu.memory_space<vmem>>, vector<16x128xf32>
    tpu.vector_store %arg3[%c0_7, %c0_8], %11 {strides = array<i32>} : memref<16x128xf32, #tpu.memory_space<vmem>>, vector<16x128xf32>,
    return
  }
}

</mosaic_0001>

<llo_original>
// kernel: _lambda_.5
$region0: #{_lambda_.5}
  #allocation0 [shape = 'u32[]', space=smem, size = 0x4, offset = 0x4, fixed_abs, tag = 'smem constant byte address 0x4 - core index']
  #allocation1 [shape = 'u32[144,128]{1,0:T(1,128)}', space=vmem, size = 0x12000, scoped, tag = 'internal scratch']
  %s0 = inlined_call_operand.vmem [shape: bf16[512,128], index: 0, kind: input, shape index: {}]
  %s1 = inlined_call_operand.hbm [shape: bf16[128,128], index: 1, kind: input, shape index: {}]
  %s2 = inlined_call_operand.hbm [shape: f32[1,128], index: 2, kind: input, shape index: {}]
  %s3 = inlined_call_operand.vmem [shape: bf16[512,128], index: 3, kind: output, shape index: {}]
  %s4 = sld [smem:[#allocation0]]
  $region30: #{_lambda_.5} parent=0
    _
  %s6 = ssub.s32 1, %s4
  %s7 = scalar_select 0, %s6, %s4
  $region1: #{_lambda_.5} parent=0
    #allocation2 [shape = 'u8[32768]{0}', space=vmem, size = 0x8000, scoped, tag = 'input window, operand 1, single buffered']
    #allocation3 [shape = 's32[1]{0}', space=sflag, size = 0x4, scoped, tag = 'scoped memory for _lambda_.5']
    #allocation4 [shape = 'u8[512]{0}', space=vmem, size = 0x400, scoped, tag = 'input window, operand 2, single buffered']
    #allocation5 [shape = 's32[1]{0}', space=sflag, size = 0x4, scoped, tag = 'scoped memory for _lambda_.5']
    %8 = vsyncpa [#allocation3], 0
    %9 = vsyncpa [#allocation5], 0
    // Predicated region
    $region2: #{_lambda_.5} parent=1 // pred_check
      _
    $region3: #{_lambda_.5} parent=1 // pred_check_branch
      %11 = sbr.rel (0) target = $region5
    $region4: #{_lambda_.5} parent=1 // pred_region
      _
    $region5: #{_lambda_.5} parent=1 // pred_fallthru
      _
    // Predicated region
    $region6: #{_lambda_.5} parent=1 // pred_check
      _
    $region7: #{_lambda_.5} parent=1 // pred_check_branch
      %13 = sbr.rel (0) target = $region9
    $region8: #{_lambda_.5} parent=1 // pred_region
      %s15 = ssub.s32 1024, 1024
      %16 = vsyncadd [#allocation3], %s15
      %s17 = sshll.u32 [#allocation2], 4
      %s18 = int_to_ptr.vmem [resolvable:$true] %s17
      %23 = dma.hbm_to_vmem [thread:$0]  %s1, 1024, %s18, [#allocation3], 64, 64, 4
    $region9: #{_lambda_.5} parent=1 // pred_fallthru
      _
    // Predicated region
    $region10: #{_lambda_.5} parent=1 // pred_check
      _
    $region11: #{_lambda_.5} parent=1 // pred_check_branch
      %25 = sbr.rel (0) target = $region13
    $region12: #{_lambda_.5} parent=1 // pred_region
      %s27 = ssub.s32 16, 16
      %28 = vsyncadd [#allocation5], %s27
      %s30 = sshll.u32 [#allocation4], 4
      %s31 = int_to_ptr.vmem [resolvable:$true] %s30
      %33 = dma.hbm_to_vmem [thread:$0]  %s2, 16, %s31, [#allocation5]
    $region13: #{_lambda_.5} parent=1 // pred_fallthru
      _
    // Predicated region
    $region14: #{_lambda_.5} parent=1 // pred_check
      _
    $region15: #{_lambda_.5} parent=1 // pred_check_branch
      %35 = sbr.rel (0) target = $region17
    $region16: #{_lambda_.5} parent=1 // pred_region
      %36 = dma.done [#allocation3], 1024
    $region17: #{_lambda_.5} parent=1 // pred_fallthru
      _
    // Predicated region
    $region18: #{_lambda_.5} parent=1 // pred_check
      _
    $region19: #{_lambda_.5} parent=1 // pred_check_branch
      %38 = sbr.rel (0) target = $region21
    $region20: #{_lambda_.5} parent=1 // pred_region
      %39 = dma.done [#allocation5], 16
    $region21: #{_lambda_.5} parent=1 // pred_fallthru
      _
    %v41 = vld [vmem:[%s0] sm:$0xf]
    %v42 = vld [vmem:[%s0 + $0x4] sm:$0xf]
    %v43 = vld [vmem:[%s0 + $0x8] sm:$0xf]
    %v44 = vld [vmem:[%s0 + $0xc] sm:$0xf]
    %v45 = vld [vmem:[%s0 + $0x10] sm:$0xf]
    %v46 = vld [vmem:[%s0 + $0x14] sm:$0xf]
    %v47 = vld [vmem:[%s0 + $0x18] sm:$0xf]
    %v48 = vld [vmem:[%s0 + $0x1c] sm:$0xf]
    %v49 = vld [vmem:[%s0 + $0x20] sm:$0xf]
    %v50 = vld [vmem:[%s0 + $0x24] sm:$0xf]
    %v51 = vld [vmem:[%s0 + $0x28] sm:$0xf]
    %v52 = vld [vmem:[%s0 + $0x2c] sm:$0xf]
    %v53 = vld [vmem:[%s0 + $0x30] sm:$0xf]
    %v54 = vld [vmem:[%s0 + $0x34] sm:$0xf]
    %v55 = vld [vmem:[%s0 + $0x38] sm:$0xf]
    %v56 = vld [vmem:[%s0 + $0x3c] sm:$0xf]
    %v57 = vld [vmem:[%s0 + $0x40] sm:$0xf]
    %v58 = vld [vmem:[%s0 + $0x44] sm:$0xf]
    %v59 = vld [vmem:[%s0 + $0x48] sm:$0xf]
    %v60 = vld [vmem:[%s0 + $0x4c] sm:$0xf]
    %v61 = vld [vmem:[%s0 + $0x50] sm:$0xf]
    %v62 = vld [vmem:[%s0 + $0x54] sm:$0xf]
    %v63 = vld [vmem:[%s0 + $0x58] sm:$0xf]
    %v64 = vld [vmem:[%s0 + $0x5c] sm:$0xf]
    %v65 = vld [vmem:[%s0 + $0x60] sm:$0xf]
    %v66 = vld [vmem:[%s0 + $0x64] sm:$0xf]
    %v67 = vld [vmem:[%s0 + $0x68] sm:$0xf]
    %v68 = vld [vmem:[%s0 + $0x6c] sm:$0xf]
    %v69 = vld [vmem:[%s0 + $0x70] sm:$0xf]
    %v70 = vld [vmem:[%s0 + $0x74] sm:$0xf]
    %v71 = vld [vmem:[%s0 + $0x78] sm:$0xf]
    %v72 = vld [vmem:[%s0 + $0x7c] sm:$0xf]
    %v73 = vld [vmem:[%s0 + $0x80] sm:$0xf]
    %v74 = vld [vmem:[%s0 + $0x84] sm:$0xf]
    %v75 = vld [vmem:[%s0 + $0x88] sm:$0xf]
    %v76 = vld [vmem:[%s0 + $0x8c] sm:$0xf]
    %v77 = vld [vmem:[%s0 + $0x90] sm:$0xf]
    %v78 = vld [vmem:[%s0 + $0x94] sm:$0xf]
    %v79 = vld [vmem:[%s0 + $0x98] sm:$0xf]
    %v80 = vld [vmem:[%s0 + $0x9c] sm:$0xf]
    %v81 = vld [vmem:[%s0 + $0xa0] sm:$0xf]
    %v82 = vld [vmem:[%s0 + $0xa4] sm:$0xf]
    %v83 = vld [vmem:[%s0 + $0xa8] sm:$0xf]
    %v84 = vld [vmem:[%s0 + $0xac] sm:$0xf]
    %v85 = vld [vmem:[%s0 + $0xb0] sm:$0xf]
    %v86 = vld [vmem:[%s0 + $0xb4] sm:$0xf]
    %v87 = vld [vmem:[%s0 + $0xb8] sm:$0xf]
    %v88 = vld [vmem:[%s0 + $0xbc] sm:$0xf]
    %v89 = vld [vmem:[%s0 + $0xc0] sm:$0xf]
    %v90 = vld [vmem:[%s0 + $0xc4] sm:$0xf]
    %v91 = vld [vmem:[%s0 + $0xc8] sm:$0xf]
    %v92 = vld [vmem:[%s0 + $0xcc] sm:$0xf]
    %v93 = vld [vmem:[%s0 + $0xd0] sm:$0xf]
    %v94 = vld [vmem:[%s0 + $0xd4] sm:$0xf]
    %v95 = vld [vmem:[%s0 + $0xd8] sm:$0xf]
    %v96 = vld [vmem:[%s0 + $0xdc] sm:$0xf]
    %v97 = vld [vmem:[%s0 + $0xe0] sm:$0xf]
    %v98 = vld [vmem:[%s0 + $0xe4] sm:$0xf]
    %v99 = vld [vmem:[%s0 + $0xe8] sm:$0xf]
    %v100 = vld [vmem:[%s0 + $0xec] sm:$0xf]
    %v101 = vld [vmem:[%s0 + $0xf0] sm:$0xf]
    %v102 = vld [vmem:[%s0 + $0xf4] sm:$0xf]
    %v103 = vld [vmem:[%s0 + $0xf8] sm:$0xf]
    %v104 = vld [vmem:[%s0 + $0xfc] sm:$0xf]
    %v105 = vld [vmem:[#allocation2] sm:$0xf]
    %v106 = vld [vmem:[#allocation2 + $0x4] sm:$0xf]
    %v107 = vld [vmem:[#allocation2 + $0x8] sm:$0xf]
    %v108 = vld [vmem:[#allocation2 + $0xc] sm:$0xf]
    %v109 = vld [vmem:[#allocation2 + $0x10] sm:$0xf]
    %v110 = vld [vmem:[#allocation2 + $0x14] sm:$0xf]
    %v111 = vld [vmem:[#allocation2 + $0x18] sm:$0xf]
    %v112 = vld [vmem:[#allocation2 + $0x1c] sm:$0xf]
    %v113 = vld [vmem:[#allocation2 + $0x20] sm:$0xf]
    %v114 = vld [vmem:[#allocation2 + $0x24] sm:$0xf]
    %v115 = vld [vmem:[#allocation2 + $0x28] sm:$0xf]
    %v116 = vld [vmem:[#allocation2 + $0x2c] sm:$0xf]
    %v117 = vld [vmem:[#allocation2 + $0x30] sm:$0xf]
    %v118 = vld [vmem:[#allocation2 + $0x34] sm:$0xf]
    %v119 = vld [vmem:[#allocation2 + $0x38] sm:$0xf]
    %v120 = vld [vmem:[#allocation2 + $0x3c] sm:$0xf]
    %v121 = vld [vmem:[#allocation4] sm:$0x1]
    %v123 = vlaneseq
    %v124 = vshrl.u32 %v123, 7
    %v125 = vsub.s32 0, %v124
    %v126 = vrot.slane %v121, %v125
    %v192 = vunpack.c.l.b16 %v41
    %v193 = vunpack.c.l.b16 %v42
    %v194 = vunpack.c.l.b16 %v43
    %v195 = vunpack.c.l.b16 %v44
    %v196 = vunpack.c.l.b16 %v45
    %v197 = vunpack.c.l.b16 %v46
    %v198 = vunpack.c.l.b16 %v47
    %v199 = vunpack.c.l.b16 %v48
    %v200 = vunpack.c.l.b16 %v49
    %v201 = vunpack.c.l.b16 %v50
    %v202 = vunpack.c.l.b16 %v51
    %v203 = vunpack.c.l.b16 %v52
    %v204 = vunpack.c.l.b16 %v53
    %v205 = vunpack.c.l.b16 %v54
    %v206 = vunpack.c.l.b16 %v55
    %v207 = vunpack.c.l.b16 %v56
    %v208 = vunpack.c.l.b16 %v57
    %v209 = vunpack.c.l.b16 %v58
    %v210 = vunpack.c.l.b16 %v59
    %v211 = vunpack.c.l.b16 %v60
    %v212 = vunpack.c.l.b16 %v61
    %v213 = vunpack.c.l.b16 %v62
    %v214 = vunpack.c.l.b16 %v63
    %v215 = vunpack.c.l.b16 %v64
    %v216 = vunpack.c.l.b16 %v65
    %v217 = vunpack.c.l.b16 %v66
    %v218 = vunpack.c.l.b16 %v67
    %v219 = vunpack.c.l.b16 %v68
    %v220 = vunpack.c.l.b16 %v69
    %v221 = vunpack.c.l.b16 %v70
    %v222 = vunpack.c.l.b16 %v71
    %v223 = vunpack.c.l.b16 %v72
    %v224 = vunpack.c.l.b16 %v73
    %v225 = vunpack.c.l.b16 %v74
    %v226 = vunpack.c.l.b16 %v75
    %v227 = vunpack.c.l.b16 %v76
    %v228 = vunpack.c.l.b16 %v77
    %v229 = vunpack.c.l.b16 %v78
    %v230 = vunpack.c.l.b16 %v79
    %v231 = vunpack.c.l.b16 %v80
    %v232 = vunpack.c.l.b16 %v81
    %v233 = vunpack.c.l.b16 %v82
    %v234 = vunpack.c.l.b16 %v83
    %v235 = vunpack.c.l.b16 %v84
    %v236 = vunpack.c.l.b16 %v85
    %v237 = vunpack.c.l.b16 %v86
    %v238 = vunpack.c.l.b16 %v87
    %v239 = vunpack.c.l.b16 %v88
    %v240 = vunpack.c.l.b16 %v89
    %v241 = vunpack.c.l.b16 %v90
    %v242 = vunpack.c.l.b16 %v91
    %v243 = vunpack.c.l.b16 %v92
    %v244 = vunpack.c.l.b16 %v93
    %v245 = vunpack.c.l.b16 %v94
    %v246 = vunpack.c.l.b16 %v95
    %v247 = vunpack.c.l.b16 %v96
    %v248 = vunpack.c.l.b16 %v97
    %v249 = vunpack.c.l.b16 %v98
    %v250 = vunpack.c.l.b16 %v99
    %v251 = vunpack.c.l.b16 %v100
    %v252 = vunpack.c.l.b16 %v101
    %v253 = vunpack.c.l.b16 %v102
    %v254 = vunpack.c.l.b16 %v103
    %v255 = vunpack.c.l.b16 %v104
    %v256 = vpack.c.b16 %v193, %v192
    %v257 = vpack.c.b16 %v195, %v194
    %v258 = vpack.c.b16 %v197, %v196
    %v259 = vpack.c.b16 %v199, %v198
    %v260 = vpack.c.b16 %v201, %v200
    %v261 = vpack.c.b16 %v203, %v202
    %v262 = vpack.c.b16 %v205, %v204
    %v263 = vpack.c.b16 %v207, %v206
    %v264 = vpack.c.b16 %v209, %v208
    %v265 = vpack.c.b16 %v211, %v210
    %v266 = vpack.c.b16 %v213, %v212
    %v267 = vpack.c.b16 %v215, %v214
    %v268 = vpack.c.b16 %v217, %v216
    %v269 = vpack.c.b16 %v219, %v218
    %v270 = vpack.c.b16 %v221, %v220
    %v271 = vpack.c.b16 %v223, %v222
    %v272 = vpack.c.b16 %v225, %v224
    %v273 = vpack.c.b16 %v227, %v226
    %v274 = vpack.c.b16 %v229, %v228
    %v275 = vpack.c.b16 %v231, %v230
    %v276 = vpack.c.b16 %v233, %v232
    %v277 = vpack.c.b16 %v235, %v234
    %v278 = vpack.c.b16 %v237, %v236
    %v279 = vpack.c.b16 %v239, %v238
    %v280 = vpack.c.b16 %v241, %v240
    %v281 = vpack.c.b16 %v243, %v242
    %v282 = vpack.c.b16 %v245, %v244
    %v283 = vpack.c.b16 %v247, %v246
    %v284 = vpack.c.b16 %v249, %v248
    %v285 = vpack.c.b16 %v251, %v250
    %v286 = vpack.c.b16 %v253, %v252
    %v287 = vpack.c.b16 %v255, %v254
    %v336 = vunpack.c.l.b16 %v105
    %v337 = vunpack.c.l.b16 %v106
    %v338 = vunpack.c.l.b16 %v107
    %v339 = vunpack.c.l.b16 %v108
    %v340 = vunpack.c.l.b16 %v109
    %v341 = vunpack.c.l.b16 %v110
    %v342 = vunpack.c.l.b16 %v111
    %v343 = vunpack.c.l.b16 %v112
    %v344 = vunpack.c.l.b16 %v113
    %v345 = vunpack.c.l.b16 %v114
    %v346 = vunpack.c.l.b16 %v115
    %v347 = vunpack.c.l.b16 %v116
    %v348 = vunpack.c.l.b16 %v117
    %v349 = vunpack.c.l.b16 %v118
    %v350 = vunpack.c.l.b16 %v119
    %v351 = vunpack.c.l.b16 %v120
    %v352 = vpack.c.b16 %v337, %v336
    %v353 = vpack.c.b16 %v339, %v338
    %v354 = vpack.c.b16 %v341, %v340
    %v355 = vpack.c.b16 %v343, %v342
    %v356 = vpack.c.b16 %v345, %v344
    %v357 = vpack.c.b16 %v347, %v346
    %v358 = vpack.c.b16 %v349, %v348
    %v359 = vpack.c.b16 %v351, %v350
    %368 = vmatprep.subr.bf16.mxu0 0
    %369 = vmatpush1.bf16.msra.mxu0 %v352
    %370 = vmatprep.subr.bf16.mxu0 0
    %371 = vmatpush1.bf16.msra.mxu0 %v353
    %372 = vmatprep.subr.bf16.mxu0 0
    %373 = vmatpush1.bf16.msra.mxu0 %v354
    %374 = vmatprep.subr.bf16.mxu0 0
    %375 = vmatpush1.bf16.msra.mxu0 %v355
    %376 = vmatprep.subr.bf16.mxu0 0
    %377 = vmatpush1.bf16.msra.mxu0 %v356
    %378 = vmatprep.subr.bf16.mxu0 0
    %379 = vmatpush1.bf16.msra.mxu0 %v357
    %380 = vmatprep.subr.bf16.mxu0 0
    %381 = vmatpush1.bf16.msra.mxu0 %v358
    %382 = vmatprep.subr.bf16.mxu0 0
    %383 = vmatpush1.bf16.msra.mxu0 %v359
    %384 = vmatprep.subr.bf16.mxu0 0
    %385 = vmatpush1.bf16.msra.mxu0 0
    %386 = vmatprep.subr.bf16.mxu0 0
    %387 = vmatpush1.bf16.msra.mxu0 0
    %388 = vmatprep.subr.bf16.mxu0 0
    %389 = vmatpush1.bf16.msra.mxu0 0
    %390 = vmatprep.subr.bf16.mxu0 0
    %391 = vmatpush1.bf16.msra.mxu0 0
    %392 = vmatprep.subr.bf16.mxu0 0
    %393 = vmatpush1.bf16.msra.mxu0 0
    %394 = vmatprep.subr.bf16.mxu0 0
    %395 = vmatpush1.bf16.msra.mxu0 0
    %396 = vmatprep.subr.bf16.mxu0 0
    %397 = vmatpush1.bf16.msra.mxu0 0
    %398 = vmatprep.subr.bf16.mxu0 0
    %399 = vmatpush1.bf16.msra.mxu0 0
    %400 = vmatprep.mubr.bf16.mxu0 0
    %401 = vmatmul.mubr.bf16.gmra.mrb[0].mxu0 %v256
    %v402 = vpop.f32.mrb[0].mxu0
    %v403 = vadd.f32 %v126, %v402
    %v404 = vpop.f32.mrb[0].mxu0
    %v405 = vpop.f32.mrb[0].mxu0
    %v406 = vadd.f32 %v126, %v405
    %v407 = vpop.f32.mrb[0].mxu0
    %408 = vmatprep.mubr.bf16.mxu0 0
    %409 = vmatmul.mubr.bf16.gmra.mrb[0].mxu0 %v257
    %v410 = vpop.f32.mrb[0].mxu0
    %v411 = vadd.f32 %v126, %v410
    %v412 = vpop.f32.mrb[0].mxu0
    %v413 = vpop.f32.mrb[0].mxu0
    %v414 = vadd.f32 %v126, %v413
    %v415 = vpop.f32.mrb[0].mxu0
    %416 = vmatprep.mubr.bf16.mxu0 0
    %417 = vmatmul.mubr.bf16.gmra.mrb[0].mxu0 %v258
    %v418 = vpop.f32.mrb[0].mxu0
    %v419 = vadd.f32 %v126, %v418
    %v420 = vpop.f32.mrb[0].mxu0
    %v421 = vpop.f32.mrb[0].mxu0
    %v422 = vadd.f32 %v126, %v421
    %v423 = vpop.f32.mrb[0].mxu0
    %424 = vmatprep.mubr.bf16.mxu0 0
    %425 = vmatmul.mubr.bf16.gmra.mrb[0].mxu0 %v259
    %v426 = vpop.f32.mrb[0].mxu0
    %v427 = vadd.f32 %v126, %v426
    %v428 = vpop.f32.mrb[0].mxu0
    %v429 = vpop.f32.mrb[0].mxu0
    %v430 = vadd.f32 %v126, %v429
    %v431 = vpop.f32.mrb[0].mxu0
    %432 = vmatprep.mubr.bf16.mxu0 0
    %433 = vmatmul.mubr.bf16.gmra.mrb[0].mxu0 %v260
    %v434 = vpop.f32.mrb[0].mxu0
    %v435 = vadd.f32 %v126, %v434
    %v436 = vpop.f32.mrb[0].mxu0
    %v437 = vpop.f32.mrb[0].mxu0
    %v438 = vadd.f32 %v126, %v437
    %v439 = vpop.f32.mrb[0].mxu0
    %440 = vmatprep.mubr.bf16.mxu0 0
    %441 = vmatmul.mubr.bf16.gmra.mrb[0].mxu0 %v261
    %v442 = vpop.f32.mrb[0].mxu0
    %v443 = vadd.f32 %v126, %v442
    %v444 = vpop.f32.mrb[0].mxu0
    %v445 = vpop.f32.mrb[0].mxu0
    %v446 = vadd.f32 %v126, %v445
    %v447 = vpop.f32.mrb[0].mxu0
    %448 = vmatprep.mubr.bf16.mxu0 0
    %449 = vmatmul.mubr.bf16.gmra.mrb[0].mxu0 %v262
    %v450 = vpop.f32.mrb[0].mxu0
    %v451 = vadd.f32 %v126, %v450
    %v452 = vpop.f32.mrb[0].mxu0
    %v453 = vpop.f32.mrb[0].mxu0
    %v454 = vadd.f32 %v126, %v453
    %v455 = vpop.f32.mrb[0].mxu0
    %456 = vmatprep.mubr.bf16.mxu0 0
    %457 = vmatmul.mubr.bf16.gmra.mrb[0].mxu0 %v263
    %v458 = vpop.f32.mrb[0].mxu0
    %v459 = vadd.f32 %v126, %v458
    %v460 = vpop.f32.mrb[0].mxu0
    %v461 = vpop.f32.mrb[0].mxu0
    %v462 = vadd.f32 %v126, %v461
    %v463 = vpop.f32.mrb[0].mxu0
    %464 = vmatprep.mubr.bf16.mxu0 0
    %465 = vmatmul.mubr.bf16.gmra.mrb[0].mxu0 %v264
    %v466 = vpop.f32.mrb[0].mxu0
    %v467 = vadd.f32 %v126, %v466
    %v468 = vpop.f32.mrb[0].mxu0
    %v469 = vpop.f32.mrb[0].mxu0
    %v470 = vadd.f32 %v126, %v469
    %v471 = vpop.f32.mrb[0].mxu0
    %472 = vmatprep.mubr.bf16.mxu0 0
    %473 = vmatmul.mubr.bf16.gmra.mrb[0].mxu0 %v265
    %v474 = vpop.f32.mrb[0].mxu0
    %v475 = vadd.f32 %v126, %v474
    %v476 = vpop.f32.mrb[0].mxu0
    %v477 = vpop.f32.mrb[0].mxu0
    %v478 = vadd.f32 %v126, %v477
    %v479 = vpop.f32.mrb[0].mxu0
    %480 = vmatprep.mubr.bf16.mxu0 0
    %481 = vmatmul.mubr.bf16.gmra.mrb[0].mxu0 %v266
    %v482 = vpop.f32.mrb[0].mxu0
    %v483 = vadd.f32 %v126, %v482
    %v484 = vpop.f32.mrb[0].mxu0
    %v485 = vpop.f32.mrb[0].mxu0
    %v486 = vadd.f32 %v126, %v485
    %v487 = vpop.f32.mrb[0].mxu0
    %488 = vmatprep.mubr.bf16.mxu0 0
    %489 = vmatmul.mubr.bf16.gmra.mrb[0].mxu0 %v267
    %v490 = vpop.f32.mrb[0].mxu0
    %v491 = vadd.f32 %v126, %v490
    %v492 = vpop.f32.mrb[0].mxu0
    %v493 = vpop.f32.mrb[0].mxu0
    %v494 = vadd.f32 %v126, %v493
    %v495 = vpop.f32.mrb[0].mxu0
    %496 = vmatprep.mubr.bf16.mxu0 0
    %497 = vmatmul.mubr.bf16.gmra.mrb[0].mxu0 %v268
    %v498 = vpop.f32.mrb[0].mxu0
    %v499 = vadd.f32 %v126, %v498
    %v500 = vpop.f32.mrb[0].mxu0
    %v501 = vpop.f32.mrb[0].mxu0
    %v502 = vadd.f32 %v126, %v501
    %v503 = vpop.f32.mrb[0].mxu0
    %504 = vmatprep.mubr.bf16.mxu0 0
    %505 = vmatmul.mubr.bf16.gmra.mrb[0].mxu0 %v269
    %v506 = vpop.f32.mrb[0].mxu0
    %v507 = vadd.f32 %v126, %v506
    %v508 = vpop.f32.mrb[0].mxu0
    %v509 = vpop.f32.mrb[0].mxu0
    %v510 = vadd.f32 %v126, %v509
    %v511 = vpop.f32.mrb[0].mxu0
    %512 = vmatprep.mubr.bf16.mxu0 0
    %513 = vmatmul.mubr.bf16.gmra.mrb[0].mxu0 %v270
    %v514 = vpop.f32.mrb[0].mxu0
    %v515 = vadd.f32 %v126, %v514
    %v516 = vpop.f32.mrb[0].mxu0
    %v517 = vpop.f32.mrb[0].mxu0
    %v518 = vadd.f32 %v126, %v517
    %v519 = vpop.f32.mrb[0].mxu0
    %520 = vmatprep.mubr.bf16.mxu0 0
    %521 = vmatmul.mubr.bf16.gmra.mrb[0].mxu0 %v271
    %v522 = vpop.f32.mrb[0].mxu0
    %v523 = vadd.f32 %v126, %v522
    %v524 = vpop.f32.mrb[0].mxu0
    %v525 = vpop.f32.mrb[0].mxu0
    %v526 = vadd.f32 %v126, %v525
    %v527 = vpop.f32.mrb[0].mxu0
    %528 = vmatprep.mubr.bf16.mxu0 0
    %529 = vmatmul.mubr.bf16.gmra.mrb[0].mxu0 %v272
    %v530 = vpop.f32.mrb[0].mxu0
    %v531 = vadd.f32 %v126, %v530
    %v532 = vpop.f32.mrb[0].mxu0
    %v533 = vpop.f32.mrb[0].mxu0
    %v534 = vadd.f32 %v126, %v533
    %v535 = vpop.f32.mrb[0].mxu0
    %536 = vmatprep.mubr.bf16.mxu0 0
    %537 = vmatmul.mubr.bf16.gmra.mrb[0].mxu0 %v273
    %v538 = vpop.f32.mrb[0].mxu0
    %v539 = vadd.f32 %v126, %v538
    %v540 = vpop.f32.mrb[0].mxu0
    %v541 = vpop.f32.mrb[0].mxu0
    %v542 = vadd.f32 %v126, %v541
    %v543 = vpop.f32.mrb[0].mxu0
    %544 = vmatprep.mubr.bf16.mxu0 0
    %545 = vmatmul.mubr.bf16.gmra.mrb[0].mxu0 %v274
    %v546 = vpop.f32.mrb[0].mxu0
    %v547 = vadd.f32 %v126, %v546
    %v548 = vpop.f32.mrb[0].mxu0
    %v549 = vpop.f32.mrb[0].mxu0
    %v550 = vadd.f32 %v126, %v549
    %v551 = vpop.f32.mrb[0].mxu0
    %552 = vmatprep.mubr.bf16.mxu0 0
    %553 = vmatmul.mubr.bf16.gmra.mrb[0].mxu0 %v275
    %v554 = vpop.f32.mrb[0].mxu0
    %v555 = vadd.f32 %v126, %v554
    %v556 = vpop.f32.mrb[0].mxu0
    %v557 = vpop.f32.mrb[0].mxu0
    %v558 = vadd.f32 %v126, %v557
    %v559 = vpop.f32.mrb[0].mxu0
    %560 = vmatprep.mubr.bf16.mxu0 0
    %561 = vmatmul.mubr.bf16.gmra.mrb[0].mxu0 %v276
    %v562 = vpop.f32.mrb[0].mxu0
    %v563 = vadd.f32 %v126, %v562
    %v564 = vpop.f32.mrb[0].mxu0
    %v565 = vpop.f32.mrb[0].mxu0
    %v566 = vadd.f32 %v126, %v565
    %v567 = vpop.f32.mrb[0].mxu0
    %568 = vmatprep.mubr.bf16.mxu0 0
    %569 = vmatmul.mubr.bf16.gmra.mrb[0].mxu0 %v277
    %v570 = vpop.f32.mrb[0].mxu0
    %v571 = vadd.f32 %v126, %v570
    %v572 = vpop.f32.mrb[0].mxu0
    %v573 = vpop.f32.mrb[0].mxu0
    %v574 = vadd.f32 %v126, %v573
    %v575 = vpop.f32.mrb[0].mxu0
    %576 = vmatprep.mubr.bf16.mxu0 0
    %577 = vmatmul.mubr.bf16.gmra.mrb[0].mxu0 %v278
    %v578 = vpop.f32.mrb[0].mxu0
    %v579 = vadd.f32 %v126, %v578
    %v580 = vpop.f32.mrb[0].mxu0
    %v581 = vpop.f32.mrb[0].mxu0
    %v582 = vadd.f32 %v126, %v581
    %v583 = vpop.f32.mrb[0].mxu0
    %584 = vmatprep.mubr.bf16.mxu0 0
    %585 = vmatmul.mubr.bf16.gmra.mrb[0].mxu0 %v279
    %v586 = vpop.f32.mrb[0].mxu0
    %v587 = vadd.f32 %v126, %v586
    %v588 = vpop.f32.mrb[0].mxu0
    %v589 = vpop.f32.mrb[0].mxu0
    %v590 = vadd.f32 %v126, %v589
    %v591 = vpop.f32.mrb[0].mxu0
    %592 = vmatprep.mubr.bf16.mxu0 0
    %593 = vmatmul.mubr.bf16.gmra.mrb[0].mxu0 %v280
    %v594 = vpop.f32.mrb[0].mxu0
    %v595 = vadd.f32 %v126, %v594
    %v596 = vpop.f32.mrb[0].mxu0
    %v597 = vpop.f32.mrb[0].mxu0
    %v598 = vadd.f32 %v126, %v597
    %v599 = vpop.f32.mrb[0].mxu0
    %600 = vmatprep.mubr.bf16.mxu0 0
    %601 = vmatmul.mubr.bf16.gmra.mrb[0].mxu0 %v281
    %v602 = vpop.f32.mrb[0].mxu0
    %v603 = vadd.f32 %v126, %v602
    %v604 = vpop.f32.mrb[0].mxu0
    %v605 = vpop.f32.mrb[0].mxu0
    %v606 = vadd.f32 %v126, %v605
    %v607 = vpop.f32.mrb[0].mxu0
    %608 = vmatprep.mubr.bf16.mxu0 0
    %609 = vmatmul.mubr.bf16.gmra.mrb[0].mxu0 %v282
    %v610 = vpop.f32.mrb[0].mxu0
    %v611 = vadd.f32 %v126, %v610
    %v612 = vpop.f32.mrb[0].mxu0
    %v613 = vpop.f32.mrb[0].mxu0
    %v614 = vadd.f32 %v126, %v613
    %v615 = vpop.f32.mrb[0].mxu0
    %616 = vmatprep.mubr.bf16.mxu0 0
    %617 = vmatmul.mubr.bf16.gmra.mrb[0].mxu0 %v283
    %v618 = vpop.f32.mrb[0].mxu0
    %v619 = vadd.f32 %v126, %v618
    %v620 = vpop.f32.mrb[0].mxu0
    %v621 = vpop.f32.mrb[0].mxu0
    %v622 = vadd.f32 %v126, %v621
    %v623 = vpop.f32.mrb[0].mxu0
    %624 = vmatprep.mubr.bf16.mxu0 0
    %625 = vmatmul.mubr.bf16.gmra.mrb[0].mxu0 %v284
    %v626 = vpop.f32.mrb[0].mxu0
    %v627 = vadd.f32 %v126, %v626
    %v628 = vpop.f32.mrb[0].mxu0
    %v629 = vpop.f32.mrb[0].mxu0
    %v630 = vadd.f32 %v126, %v629
    %v631 = vpop.f32.mrb[0].mxu0
    %632 = vmatprep.mubr.bf16.mxu0 0
    %633 = vmatmul.mubr.bf16.gmra.mrb[0].mxu0 %v285
    %v634 = vpop.f32.mrb[0].mxu0
    %v635 = vadd.f32 %v126, %v634
    %v636 = vpop.f32.mrb[0].mxu0
    %v637 = vpop.f32.mrb[0].mxu0
    %v638 = vadd.f32 %v126, %v637
    %v639 = vpop.f32.mrb[0].mxu0
    %640 = vmatprep.mubr.bf16.mxu0 0
    %641 = vmatmul.mubr.bf16.gmra.mrb[0].mxu0 %v286
    %v642 = vpop.f32.mrb[0].mxu0
    %v643 = vadd.f32 %v126, %v642
    %v644 = vpop.f32.mrb[0].mxu0
    %v645 = vpop.f32.mrb[0].mxu0
    %v646 = vadd.f32 %v126, %v645
    %v647 = vpop.f32.mrb[0].mxu0
    %648 = vmatprep.mubr.bf16.mxu0 0
    %649 = vmatmul.mubr.bf16.gmra.mrb[0].mxu0 %v287
    %v650 = vpop.f32.mrb[0].mxu0
    %v651 = vadd.f32 %v126, %v650
    %v652 = vpop.f32.mrb[0].mxu0
    %v653 = vpop.f32.mrb[0].mxu0
    %v654 = vadd.f32 %v126, %v653
    %v655 = vpop.f32.mrb[0].mxu0
    %656 = vdwg.mxu0
    %v657 = vmul.f32 %v403, 0.2
    %v658 = vmul.f32 %v406, 0.2
    %v659 = vmul.f32 %v411, 0.2
    %v660 = vmul.f32 %v414, 0.2
    %v661 = vmul.f32 %v419, 0.2
    %v662 = vmul.f32 %v422, 0.2
    %v663 = vmul.f32 %v427, 0.2
    %v664 = vmul.f32 %v430, 0.2
    %v665 = vmul.f32 %v435, 0.2
    %v666 = vmul.f32 %v438, 0.2
    %v667 = vmul.f32 %v443, 0.2
    %v668 = vmul.f32 %v446, 0.2
    %v669 = vmul.f32 %v451, 0.2
    %v670 = vmul.f32 %v454, 0.2
    %v671 = vmul.f32 %v459, 0.2
    %v672 = vmul.f32 %v462, 0.2
    %v673 = vmul.f32 %v467, 0.2
    %v674 = vmul.f32 %v470, 0.2
    %v675 = vmul.f32 %v475, 0.2
    %v676 = vmul.f32 %v478, 0.2
    %v677 = vmul.f32 %v483, 0.2
    %v678 = vmul.f32 %v486, 0.2
    %v679 = vmul.f32 %v491, 0.2
    %v680 = vmul.f32 %v494, 0.2
    %v681 = vmul.f32 %v499, 0.2
    %v682 = vmul.f32 %v502, 0.2
    %v683 = vmul.f32 %v507, 0.2
    %v684 = vmul.f32 %v510, 0.2
    %v685 = vmul.f32 %v515, 0.2
    %v686 = vmul.f32 %v518, 0.2
    %v687 = vmul.f32 %v523, 0.2
    %v688 = vmul.f32 %v526, 0.2
    %v689 = vmul.f32 %v531, 0.2
    %v690 = vmul.f32 %v534, 0.2
    %v691 = vmul.f32 %v539, 0.2
    %v692 = vmul.f32 %v542, 0.2
    %v693 = vmul.f32 %v547, 0.2
    %v694 = vmul.f32 %v550, 0.2
    %v695 = vmul.f32 %v555, 0.2
    %v696 = vmul.f32 %v558, 0.2
    %v697 = vmul.f32 %v563, 0.2
    %v698 = vmul.f32 %v566, 0.2
    %v699 = vmul.f32 %v571, 0.2
    %v700 = vmul.f32 %v574, 0.2
    %v701 = vmul.f32 %v579, 0.2
    %v702 = vmul.f32 %v582, 0.2
    %v703 = vmul.f32 %v587, 0.2
    %v704 = vmul.f32 %v590, 0.2
    %v705 = vmul.f32 %v595, 0.2
    %v706 = vmul.f32 %v598, 0.2
    %v707 = vmul.f32 %v603, 0.2
    %v708 = vmul.f32 %v606, 0.2
    %v709 = vmul.f32 %v611, 0.2
    %v710 = vmul.f32 %v614, 0.2
    %v711 = vmul.f32 %v619, 0.2
    %v712 = vmul.f32 %v622, 0.2
    %v713 = vmul.f32 %v627, 0.2
    %v714 = vmul.f32 %v630, 0.2
    %v715 = vmul.f32 %v635, 0.2
    %v716 = vmul.f32 %v638, 0.2
    %v717 = vmul.f32 %v643, 0.2
    %v718 = vmul.f32 %v646, 0.2
    %v719 = vmul.f32 %v651, 0.2
    %v720 = vmul.f32 %v654, 0.2
    %v721 = vmax.f32 %v403, %v657
    %v722 = vmax.f32 %v406, %v658
    %v723 = vmax.f32 %v411, %v659
    %v724 = vmax.f32 %v414, %v660
    %v725 = vmax.f32 %v419, %v661
    %v726 = vmax.f32 %v422, %v662
    %v727 = vmax.f32 %v427, %v663
    %v728 = vmax.f32 %v430, %v664
    %v729 = vmax.f32 %v435, %v665
    %v730 = vmax.f32 %v438, %v666
    %v731 = vmax.f32 %v443, %v667
    %v732 = vmax.f32 %v446, %v668
    %v733 = vmax.f32 %v451, %v669
    %v734 = vmax.f32 %v454, %v670
    %v735 = vmax.f32 %v459, %v671
    %v736 = vmax.f32 %v462, %v672
    %v737 = vmax.f32 %v467, %v673
    %v738 = vmax.f32 %v470, %v674
    %v739 = vmax.f32 %v475, %v675
    %v740 = vmax.f32 %v478, %v676
    %v741 = vmax.f32 %v483, %v677
    %v742 = vmax.f32 %v486, %v678
    %v743 = vmax.f32 %v491, %v679
    %v744 = vmax.f32 %v494, %v680
    %v745 = vmax.f32 %v499, %v681
    %v746 = vmax.f32 %v502, %v682
    %v747 = vmax.f32 %v507, %v683
    %v748 = vmax.f32 %v510, %v684
    %v749 = vmax.f32 %v515, %v685
    %v750 = vmax.f32 %v518, %v686
    %v751 = vmax.f32 %v523, %v687
    %v752 = vmax.f32 %v526, %v688
    %v753 = vmax.f32 %v531, %v689
    %v754 = vmax.f32 %v534, %v690
    %v755 = vmax.f32 %v539, %v691
    %v756 = vmax.f32 %v542, %v692
    %v757 = vmax.f32 %v547, %v693
    %v758 = vmax.f32 %v550, %v694
    %v759 = vmax.f32 %v555, %v695
    %v760 = vmax.f32 %v558, %v696
    %v761 = vmax.f32 %v563, %v697
    %v762 = vmax.f32 %v566, %v698
    %v763 = vmax.f32 %v571, %v699
    %v764 = vmax.f32 %v574, %v700
    %v765 = vmax.f32 %v579, %v701
    %v766 = vmax.f32 %v582, %v702
    %v767 = vmax.f32 %v587, %v703
    %v768 = vmax.f32 %v590, %v704
    %v769 = vmax.f32 %v595, %v705
    %v770 = vmax.f32 %v598, %v706
    %v771 = vmax.f32 %v603, %v707
    %v772 = vmax.f32 %v606, %v708
    %v773 = vmax.f32 %v611, %v709
    %v774 = vmax.f32 %v614, %v710
    %v775 = vmax.f32 %v619, %v711
    %v776 = vmax.f32 %v622, %v712
    %v777 = vmax.f32 %v627, %v713
    %v778 = vmax.f32 %v630, %v714
    %v779 = vmax.f32 %v635, %v715
    %v780 = vmax.f32 %v638, %v716
    %v781 = vmax.f32 %v643, %v717
    %v782 = vmax.f32 %v646, %v718
    %v783 = vmax.f32 %v651, %v719
    %v784 = vmax.f32 %v654, %v720
    %v785 = vpack.c.bf16 %v722, %v721
    %v786 = vpack.c.bf16 %v724, %v723
    %v787 = vpack.c.bf16 %v726, %v725
    %v788 = vpack.c.bf16 %v728, %v727
    %v789 = vpack.c.bf16 %v730, %v729
    %v790 = vpack.c.bf16 %v732, %v731
    %v791 = vpack.c.bf16 %v734, %v733
    %v792 = vpack.c.bf16 %v736, %v735
    %v793 = vpack.c.bf16 %v738, %v737
    %v794 = vpack.c.bf16 %v740, %v739
    %v795 = vpack.c.bf16 %v742, %v741
    %v796 = vpack.c.bf16 %v744, %v743
    %v797 = vpack.c.bf16 %v746, %v745
    %v798 = vpack.c.bf16 %v748, %v747
    %v799 = vpack.c.bf16 %v750, %v749
    %v800 = vpack.c.bf16 %v752, %v751
    %v801 = vpack.c.bf16 %v754, %v753
    %v802 = vpack.c.bf16 %v756, %v755
    %v803 = vpack.c.bf16 %v758, %v757
    %v804 = vpack.c.bf16 %v760, %v759
    %v805 = vpack.c.bf16 %v762, %v761
    %v806 = vpack.c.bf16 %v764, %v763
    %v807 = vpack.c.bf16 %v766, %v765
    %v808 = vpack.c.bf16 %v768, %v767
    %v809 = vpack.c.bf16 %v770, %v769
    %v810 = vpack.c.bf16 %v772, %v771
    %v811 = vpack.c.bf16 %v774, %v773
    %v812 = vpack.c.bf16 %v776, %v775
    %v813 = vpack.c.bf16 %v778, %v777
    %v814 = vpack.c.bf16 %v780, %v779
    %v815 = vpack.c.bf16 %v782, %v781
    %v816 = vpack.c.bf16 %v784, %v783
    %v849 = vunpack.c.l.b16 %v785
    %v850 = vunpack.c.h.b16 %v785
    %v851 = vunpack.c.l.b16 %v786
    %v852 = vunpack.c.h.b16 %v786
    %v853 = vunpack.c.l.b16 %v787
    %v854 = vunpack.c.h.b16 %v787
    %v855 = vunpack.c.l.b16 %v788
    %v856 = vunpack.c.h.b16 %v788
    %v857 = vunpack.c.l.b16 %v789
    %v858 = vunpack.c.h.b16 %v789
    %v859 = vunpack.c.l.b16 %v790
    %v860 = vunpack.c.h.b16 %v790
    %v861 = vunpack.c.l.b16 %v791
    %v862 = vunpack.c.h.b16 %v791
    %v863 = vunpack.c.l.b16 %v792
    %v864 = vunpack.c.h.b16 %v792
    %v865 = vunpack.c.l.b16 %v793
    %v866 = vunpack.c.h.b16 %v793
    %v867 = vunpack.c.l.b16 %v794
    %v868 = vunpack.c.h.b16 %v794
    %v869 = vunpack.c.l.b16 %v795
    %v870 = vunpack.c.h.b16 %v795
    %v871 = vunpack.c.l.b16 %v796
    %v872 = vunpack.c.h.b16 %v796
    %v873 = vunpack.c.l.b16 %v797
    %v874 = vunpack.c.h.b16 %v797
    %v875 = vunpack.c.l.b16 %v798
    %v876 = vunpack.c.h.b16 %v798
    %v877 = vunpack.c.l.b16 %v799
    %v878 = vunpack.c.h.b16 %v799
    %v879 = vunpack.c.l.b16 %v800
    %v880 = vunpack.c.h.b16 %v800
    %v881 = vunpack.c.l.b16 %v801
    %v882 = vunpack.c.h.b16 %v801
    %v883 = vunpack.c.l.b16 %v802
    %v884 = vunpack.c.h.b16 %v802
    %v885 = vunpack.c.l.b16 %v803
    %v886 = vunpack.c.h.b16 %v803
    %v887 = vunpack.c.l.b16 %v804
    %v888 = vunpack.c.h.b16 %v804
    %v889 = vunpack.c.l.b16 %v805
    %v890 = vunpack.c.h.b16 %v805
    %v891 = vunpack.c.l.b16 %v806
    %v892 = vunpack.c.h.b16 %v806
    %v893 = vunpack.c.l.b16 %v807
    %v894 = vunpack.c.h.b16 %v807
    %v895 = vunpack.c.l.b16 %v808
    %v896 = vunpack.c.h.b16 %v808
    %v897 = vunpack.c.l.b16 %v809
    %v898 = vunpack.c.h.b16 %v809
    %v899 = vunpack.c.l.b16 %v810
    %v900 = vunpack.c.h.b16 %v810
    %v901 = vunpack.c.l.b16 %v811
    %v902 = vunpack.c.h.b16 %v811
    %v903 = vunpack.c.l.b16 %v812
    %v904 = vunpack.c.h.b16 %v812
    %v905 = vunpack.c.l.b16 %v813
    %v906 = vunpack.c.h.b16 %v813
    %v907 = vunpack.c.l.b16 %v814
    %v908 = vunpack.c.h.b16 %v814
    %v909 = vunpack.c.l.b16 %v815
    %v910 = vunpack.c.h.b16 %v815
    %v911 = vunpack.c.l.b16 %v816
    %v912 = vunpack.c.h.b16 %v816
    %v913 = vpack.c.b16 %v849, %v849
    %v914 = vpack.c.b16 %v850, %v850
    %v915 = vpack.c.b16 %v851, %v851
    %v916 = vpack.c.b16 %v852, %v852
    %v917 = vpack.c.b16 %v853, %v853
    %v918 = vpack.c.b16 %v854, %v854
    %v919 = vpack.c.b16 %v855, %v855
    %v920 = vpack.c.b16 %v856, %v856
    %v921 = vpack.c.b16 %v857, %v857
    %v922 = vpack.c.b16 %v858, %v858
    %v923 = vpack.c.b16 %v859, %v859
    %v924 = vpack.c.b16 %v860, %v860
    %v925 = vpack.c.b16 %v861, %v861
    %v926 = vpack.c.b16 %v862, %v862
    %v927 = vpack.c.b16 %v863, %v863
    %v928 = vpack.c.b16 %v864, %v864
    %v929 = vpack.c.b16 %v865, %v865
    %v930 = vpack.c.b16 %v866, %v866
    %v931 = vpack.c.b16 %v867, %v867
    %v932 = vpack.c.b16 %v868, %v868
    %v933 = vpack.c.b16 %v869, %v869
    %v934 = vpack.c.b16 %v870, %v870
    %v935 = vpack.c.b16 %v871, %v871
    %v936 = vpack.c.b16 %v872, %v872
    %v937 = vpack.c.b16 %v873, %v873
    %v938 = vpack.c.b16 %v874, %v874
    %v939 = vpack.c.b16 %v875, %v875
    %v940 = vpack.c.b16 %v876, %v876
    %v941 = vpack.c.b16 %v877, %v877
    %v942 = vpack.c.b16 %v878, %v878
    %v943 = vpack.c.b16 %v879, %v879
    %v944 = vpack.c.b16 %v880, %v880
    %v945 = vpack.c.b16 %v881, %v881
    %v946 = vpack.c.b16 %v882, %v882
    %v947 = vpack.c.b16 %v883, %v883
    %v948 = vpack.c.b16 %v884, %v884
    %v949 = vpack.c.b16 %v885, %v885
    %v950 = vpack.c.b16 %v886, %v886
    %v951 = vpack.c.b16 %v887, %v887
    %v952 = vpack.c.b16 %v888, %v888
    %v953 = vpack.c.b16 %v889, %v889
    %v954 = vpack.c.b16 %v890, %v890
    %v955 = vpack.c.b16 %v891, %v891
    %v956 = vpack.c.b16 %v892, %v892
    %v957 = vpack.c.b16 %v893, %v893
    %v958 = vpack.c.b16 %v894, %v894
    %v959 = vpack.c.b16 %v895, %v895
    %v960 = vpack.c.b16 %v896, %v896
    %v961 = vpack.c.b16 %v897, %v897
    %v962 = vpack.c.b16 %v898, %v898
    %v963 = vpack.c.b16 %v899, %v899
    %v964 = vpack.c.b16 %v900, %v900
    %v965 = vpack.c.b16 %v901, %v901
    %v966 = vpack.c.b16 %v902, %v902
    %v967 = vpack.c.b16 %v903, %v903
    %v968 = vpack.c.b16 %v904, %v904
    %v969 = vpack.c.b16 %v905, %v905
    %v970 = vpack.c.b16 %v906, %v906
    %v971 = vpack.c.b16 %v907, %v907
    %v972 = vpack.c.b16 %v908, %v908
    %v973 = vpack.c.b16 %v909, %v909
    %v974 = vpack.c.b16 %v910, %v910
    %v975 = vpack.c.b16 %v911, %v911
    %v976 = vpack.c.b16 %v912, %v912
    %1041 = vst [vmem:[%s3] sm:$0xf] %v913
    %1042 = vst [vmem:[%s3 + $0x4] sm:$0xf] %v914
    %1043 = vst [vmem:[%s3 + $0x8] sm:$0xf] %v915
    %1044 = vst [vmem:[%s3 + $0xc] sm:$0xf] %v916
    %1045 = vst [vmem:[%s3 + $0x10] sm:$0xf] %v917
    %1046 = vst [vmem:[%s3 + $0x14] sm:$0xf] %v918
    %1047 = vst [vmem:[%s3 + $0x18] sm:$0xf] %v919
    %1048 = vst [vmem:[%s3 + $0x1c] sm:$0xf] %v920
    %1049 = vst [vmem:[%s3 + $0x20] sm:$0xf] %v921
    %1050 = vst [vmem:[%s3 + $0x24] sm:$0xf] %v922
    %1051 = vst [vmem:[%s3 + $0x28] sm:$0xf] %v923
    %1052 = vst [vmem:[%s3 + $0x2c] sm:$0xf] %v924
    %1053 = vst [vmem:[%s3 + $0x30] sm:$0xf] %v925
    %1054 = vst [vmem:[%s3 + $0x34] sm:$0xf] %v926
    %1055 = vst [vmem:[%s3 + $0x38] sm:$0xf] %v927
    %1056 = vst [vmem:[%s3 + $0x3c] sm:$0xf] %v928
    %1057 = vst [vmem:[%s3 + $0x40] sm:$0xf] %v929
    %1058 = vst [vmem:[%s3 + $0x44] sm:$0xf] %v930
    %1059 = vst [vmem:[%s3 + $0x48] sm:$0xf] %v931
    %1060 = vst [vmem:[%s3 + $0x4c] sm:$0xf] %v932
    %1061 = vst [vmem:[%s3 + $0x50] sm:$0xf] %v933
    %1062 = vst [vmem:[%s3 + $0x54] sm:$0xf] %v934
    %1063 = vst [vmem:[%s3 + $0x58] sm:$0xf] %v935
    %1064 = vst [vmem:[%s3 + $0x5c] sm:$0xf] %v936
    %1065 = vst [vmem:[%s3 + $0x60] sm:$0xf] %v937
    %1066 = vst [vmem:[%s3 + $0x64] sm:$0xf] %v938
    %1067 = vst [vmem:[%s3 + $0x68] sm:$0xf] %v939
    %1068 = vst [vmem:[%s3 + $0x6c] sm:$0xf] %v940
    %1069 = vst [vmem:[%s3 + $0x70] sm:$0xf] %v941
    %1070 = vst [vmem:[%s3 + $0x74] sm:$0xf] %v942
    %1071 = vst [vmem:[%s3 + $0x78] sm:$0xf] %v943
    %1072 = vst [vmem:[%s3 + $0x7c] sm:$0xf] %v944
    %1073 = vst [vmem:[%s3 + $0x80] sm:$0xf] %v945
    %1074 = vst [vmem:[%s3 + $0x84] sm:$0xf] %v946
    %1075 = vst [vmem:[%s3 + $0x88] sm:$0xf] %v947
    %1076 = vst [vmem:[%s3 + $0x8c] sm:$0xf] %v948
    %1077 = vst [vmem:[%s3 + $0x90] sm:$0xf] %v949
    %1078 = vst [vmem:[%s3 + $0x94] sm:$0xf] %v950
    %1079 = vst [vmem:[%s3 + $0x98] sm:$0xf] %v951
    %1080 = vst [vmem:[%s3 + $0x9c] sm:$0xf] %v952
    %1081 = vst [vmem:[%s3 + $0xa0] sm:$0xf] %v953
    %1082 = vst [vmem:[%s3 + $0xa4] sm:$0xf] %v954
    %1083 = vst [vmem:[%s3 + $0xa8] sm:$0xf] %v955
    %1084 = vst [vmem:[%s3 + $0xac] sm:$0xf] %v956
    %1085 = vst [vmem:[%s3 + $0xb0] sm:$0xf] %v957
    %1086 = vst [vmem:[%s3 + $0xb4] sm:$0xf] %v958
    %1087 = vst [vmem:[%s3 + $0xb8] sm:$0xf] %v959
    %1088 = vst [vmem:[%s3 + $0xbc] sm:$0xf] %v960
    %1089 = vst [vmem:[%s3 + $0xc0] sm:$0xf] %v961
    %1090 = vst [vmem:[%s3 + $0xc4] sm:$0xf] %v962
    %1091 = vst [vmem:[%s3 + $0xc8] sm:$0xf] %v963
    %1092 = vst [vmem:[%s3 + $0xcc] sm:$0xf] %v964
    %1093 = vst [vmem:[%s3 + $0xd0] sm:$0xf] %v965
    %1094 = vst [vmem:[%s3 + $0xd4] sm:$0xf] %v966
    %1095 = vst [vmem:[%s3 + $0xd8] sm:$0xf] %v967
    %1096 = vst [vmem:[%s3 + $0xdc] sm:$0xf] %v968
    %1097 = vst [vmem:[%s3 + $0xe0] sm:$0xf] %v969
    %1098 = vst [vmem:[%s3 + $0xe4] sm:$0xf] %v970
    %1099 = vst [vmem:[%s3 + $0xe8] sm:$0xf] %v971
    %1100 = vst [vmem:[%s3 + $0xec] sm:$0xf] %v972
    %1101 = vst [vmem:[%s3 + $0xf0] sm:$0xf] %v973
    %1102 = vst [vmem:[%s3 + $0xf4] sm:$0xf] %v974
    %1103 = vst [vmem:[%s3 + $0xf8] sm:$0xf] %v975
    %1104 = vst [vmem:[%s3 + $0xfc] sm:$0xf] %v976
    // Predicated region
    $region22: #{_lambda_.5} parent=1 // pred_check
      _
    $region23: #{_lambda_.5} parent=1 // pred_check_branch
      %1106 = sbr.rel (0) target = $region25
    $region24: #{_lambda_.5} parent=1 // pred_region
      _
    $region25: #{_lambda_.5} parent=1 // pred_fallthru
      _
    // Predicated region
    $region26: #{_lambda_.5} parent=1 // pred_check
      _
    $region27: #{_lambda_.5} parent=1 // pred_check_branch
      %1108 = sbr.rel (0) target = $region29
    $region28: #{_lambda_.5} parent=1 // pred_region
      _
    $region29: #{_lambda_.5} parent=1 // pred_fallthru
      _
    %1109 = vsyncpa [#allocation3], 1
    %1110 = vsyncpa [#allocation5], 1

// kernel: _lambda_.6
$region0: #{_lambda_.6}
  #allocation0 [shape = 'u32[]', space=smem, size = 0x4, offset = 0x4, fixed_abs, tag = 'smem constant byte address 0x4 - core index']
  #allocation1 [shape = 'u32[144,128]{1,0:T(1,128)}', space=vmem, size = 0x12000, scoped, tag = 'internal scratch']
  %s0 = inlined_call_operand.vmem [shape: bf16[128,1024], index: 0, kind: input, shape index: {}]
  %s1 = inlined_call_operand.vmem [shape: bf16[1024,128], index: 1, kind: input, shape index: {}]
  %s2 = inlined_call_operand.vmem [shape: f32[1,128], index: 2, kind: input, shape index: {}]
  %s3 = inlined_call_operand.vmem [shape: bf16[128,128], index: 3, kind: output, shape index: {}]
  %s4 = sld [smem:[#allocation0]]
  $region22: #{_lambda_.6} parent=0
    _
  %s6 = ssub.s32 1, %s4
  %s7 = scalar_select 0, %s6, %s4
  // Predicated region
  $region2: #{_lambda_.6} parent=0 // pred_check
    _
  $region3: #{_lambda_.6} parent=0 // pred_check_branch
    %9 = sbr.rel (0) target = $region5
  $region4: #{_lambda_.6} parent=0 // pred_region
    _
  $region5: #{_lambda_.6} parent=0 // pred_fallthru
    _
  // Predicated region
  $region6: #{_lambda_.6} parent=0 // pred_check
    _
  $region7: #{_lambda_.6} parent=0 // pred_check_branch
    %11 = sbr.rel (0) target = $region9
  $region8: #{_lambda_.6} parent=0 // pred_region
    _
  $region9: #{_lambda_.6} parent=0 // pred_fallthru
    _
  // Predicated region
  $region10: #{_lambda_.6} parent=0 // pred_check
    _
  $region11: #{_lambda_.6} parent=0 // pred_check_branch
    %13 = sbr.rel (0) target = $region13
  $region12: #{_lambda_.6} parent=0 // pred_region
    _
  $region13: #{_lambda_.6} parent=0 // pred_fallthru
    _
  %v15 = vld [vmem:[%s0] sm:$0xff]
  %v16 = vld [vmem:[%s0 + $0x8] sm:$0xff]
  %v17 = vld [vmem:[%s0 + $0x10] sm:$0xff]
  %v18 = vld [vmem:[%s0 + $0x18] sm:$0xff]
  %v19 = vld [vmem:[%s0 + $0x20] sm:$0xff]
  %v20 = vld [vmem:[%s0 + $0x28] sm:$0xff]
  %v21 = vld [vmem:[%s0 + $0x30] sm:$0xff]
  %v22 = vld [vmem:[%s0 + $0x38] sm:$0xff]
  %v23 = vld [vmem:[%s0 + $0x40] sm:$0xff]
  %v24 = vld [vmem:[%s0 + $0x48] sm:$0xff]
  %v25 = vld [vmem:[%s0 + $0x50] sm:$0xff]
  %v26 = vld [vmem:[%s0 + $0x58] sm:$0xff]
  %v27 = vld [vmem:[%s0 + $0x60] sm:$0xff]
  %v28 = vld [vmem:[%s0 + $0x68] sm:$0xff]
  %v29 = vld [vmem:[%s0 + $0x70] sm:$0xff]
  %v30 = vld [vmem:[%s0 + $0x78] sm:$0xff]
  %v31 = vld [vmem:[%s0 + $0x80] sm:$0xff]
  %v32 = vld [vmem:[%s0 + $0x88] sm:$0xff]
  %v33 = vld [vmem:[%s0 + $0x90] sm:$0xff]
  %v34 = vld [vmem:[%s0 + $0x98] sm:$0xff]
  %v35 = vld [vmem:[%s0 + $0xa0] sm:$0xff]
  %v36 = vld [vmem:[%s0 + $0xa8] sm:$0xff]
  %v37 = vld [vmem:[%s0 + $0xb0] sm:$0xff]
  %v38 = vld [vmem:[%s0 + $0xb8] sm:$0xff]
  %v39 = vld [vmem:[%s0 + $0xc0] sm:$0xff]
  %v40 = vld [vmem:[%s0 + $0xc8] sm:$0xff]
  %v41 = vld [vmem:[%s0 + $0xd0] sm:$0xff]
  %v42 = vld [vmem:[%s0 + $0xd8] sm:$0xff]
  %v43 = vld [vmem:[%s0 + $0xe0] sm:$0xff]
  %v44 = vld [vmem:[%s0 + $0xe8] sm:$0xff]
  %v45 = vld [vmem:[%s0 + $0xf0] sm:$0xff]
  %v46 = vld [vmem:[%s0 + $0xf8] sm:$0xff]
  %v47 = vld [vmem:[%s0 + $0x100] sm:$0xff]
  %v48 = vld [vmem:[%s0 + $0x108] sm:$0xff]
  %v49 = vld [vmem:[%s0 + $0x110] sm:$0xff]
  %v50 = vld [vmem:[%s0 + $0x118] sm:$0xff]
  %v51 = vld [vmem:[%s0 + $0x120] sm:$0xff]
  %v52 = vld [vmem:[%s0 + $0x128] sm:$0xff]
  %v53 = vld [vmem:[%s0 + $0x130] sm:$0xff]
  %v54 = vld [vmem:[%s0 + $0x138] sm:$0xff]
  %v55 = vld [vmem:[%s0 + $0x140] sm:$0xff]
  %v56 = vld [vmem:[%s0 + $0x148] sm:$0xff]
  %v57 = vld [vmem:[%s0 + $0x150] sm:$0xff]
  %v58 = vld [vmem:[%s0 + $0x158] sm:$0xff]
  %v59 = vld [vmem:[%s0 + $0x160] sm:$0xff]
  %v60 = vld [vmem:[%s0 + $0x168] sm:$0xff]
  %v61 = vld [vmem:[%s0 + $0x170] sm:$0xff]
  %v62 = vld [vmem:[%s0 + $0x178] sm:$0xff]
  %v63 = vld [vmem:[%s0 + $0x180] sm:$0xff]
  %v64 = vld [vmem:[%s0 + $0x188] sm:$0xff]
  %v65 = vld [vmem:[%s0 + $0x190] sm:$0xff]
  %v66 = vld [vmem:[%s0 + $0x198] sm:$0xff]
  %v67 = vld [vmem:[%s0 + $0x1a0] sm:$0xff]
  %v68 = vld [vmem:[%s0 + $0x1a8] sm:$0xff]
  %v69 = vld [vmem:[%s0 + $0x1b0] sm:$0xff]
  %v70 = vld [vmem:[%s0 + $0x1b8] sm:$0xff]
  %v71 = vld [vmem:[%s0 + $0x1c0] sm:$0xff]
  %v72 = vld [vmem:[%s0 + $0x1c8] sm:$0xff]
  %v73 = vld [vmem:[%s0 + $0x1d0] sm:$0xff]
  %v74 = vld [vmem:[%s0 + $0x1d8] sm:$0xff]
  %v75 = vld [vmem:[%s0 + $0x1e0] sm:$0xff]
  %v76 = vld [vmem:[%s0 + $0x1e8] sm:$0xff]
  %v77 = vld [vmem:[%s0 + $0x1f0] sm:$0xff]
  %v78 = vld [vmem:[%s0 + $0x1f8] sm:$0xff]
  %v79 = vld [vmem:[%s1] sm:$0xf]
  %v80 = vld [vmem:[%s1 + $0x4] sm:$0xf]
  %v81 = vld [vmem:[%s1 + $0x8] sm:$0xf]
  %v82 = vld [vmem:[%s1 + $0xc] sm:$0xf]
  %v83 = vld [vmem:[%s1 + $0x10] sm:$0xf]
  %v84 = vld [vmem:[%s1 + $0x14] sm:$0xf]
  %v85 = vld [vmem:[%s1 + $0x18] sm:$0xf]
  %v86 = vld [vmem:[%s1 + $0x1c] sm:$0xf]
  %v87 = vld [vmem:[%s1 + $0x20] sm:$0xf]
  %v88 = vld [vmem:[%s1 + $0x24] sm:$0xf]
  %v89 = vld [vmem:[%s1 + $0x28] sm:$0xf]
  %v90 = vld [vmem:[%s1 + $0x2c] sm:$0xf]
  %v91 = vld [vmem:[%s1 + $0x30] sm:$0xf]
  %v92 = vld [vmem:[%s1 + $0x34] sm:$0xf]
  %v93 = vld [vmem:[%s1 + $0x38] sm:$0xf]
  %v94 = vld [vmem:[%s1 + $0x3c] sm:$0xf]
  %v95 = vld [vmem:[%s1 + $0x40] sm:$0xf]
  %v96 = vld [vmem:[%s1 + $0x44] sm:$0xf]
  %v97 = vld [vmem:[%s1 + $0x48] sm:$0xf]
  %v98 = vld [vmem:[%s1 + $0x4c] sm:$0xf]
  %v99 = vld [vmem:[%s1 + $0x50] sm:$0xf]
  %v100 = vld [vmem:[%s1 + $0x54] sm:$0xf]
  %v101 = vld [vmem:[%s1 + $0x58] sm:$0xf]
  %v102 = vld [vmem:[%s1 + $0x5c] sm:$0xf]
  %v103 = vld [vmem:[%s1 + $0x60] sm:$0xf]
  %v104 = vld [vmem:[%s1 + $0x64] sm:$0xf]
  %v105 = vld [vmem:[%s1 + $0x68] sm:$0xf]
  %v106 = vld [vmem:[%s1 + $0x6c] sm:$0xf]
  %v107 = vld [vmem:[%s1 + $0x70] sm:$0xf]
  %v108 = vld [vmem:[%s1 + $0x74] sm:$0xf]
  %v109 = vld [vmem:[%s1 + $0x78] sm:$0xf]
  %v110 = vld [vmem:[%s1 + $0x7c] sm:$0xf]
  %v111 = vld [vmem:[%s1 + $0x80] sm:$0xf]
  %v112 = vld [vmem:[%s1 + $0x84] sm:$0xf]
  %v113 = vld [vmem:[%s1 + $0x88] sm:$0xf]
  %v114 = vld [vmem:[%s1 + $0x8c] sm:$0xf]
  %v115 = vld [vmem:[%s1 + $0x90] sm:$0xf]
  %v116 = vld [vmem:[%s1 + $0x94] sm:$0xf]
  %v117 = vld [vmem:[%s1 + $0x98] sm:$0xf]
  %v118 = vld [vmem:[%s1 + $0x9c] sm:$0xf]
  %v119 = vld [vmem:[%s1 + $0xa0] sm:$0xf]
  %v120 = vld [vmem:[%s1 + $0xa4] sm:$0xf]
  %v121 = vld [vmem:[%s1 + $0xa8] sm:$0xf]
  %v122 = vld [vmem:[%s1 + $0xac] sm:$0xf]
  %v123 = vld [vmem:[%s1 + $0xb0] sm:$0xf]
  %v124 = vld [vmem:[%s1 + $0xb4] sm:$0xf]
  %v125 = vld [vmem:[%s1 + $0xb8] sm:$0xf]
  %v126 = vld [vmem:[%s1 + $0xbc] sm:$0xf]
  %v127 = vld [vmem:[%s1 + $0xc0] sm:$0xf]
  %v128 = vld [vmem:[%s1 + $0xc4] sm:$0xf]
  %v129 = vld [vmem:[%s1 + $0xc8] sm:$0xf]
  %v130 = vld [vmem:[%s1 + $0xcc] sm:$0xf]
  %v131 = vld [vmem:[%s1 + $0xd0] sm:$0xf]
  %v132 = vld [vmem:[%s1 + $0xd4] sm:$0xf]
  %v133 = vld [vmem:[%s1 + $0xd8] sm:$0xf]
  %v134 = vld [vmem:[%s1 + $0xdc] sm:$0xf]
  %v135 = vld [vmem:[%s1 + $0xe0] sm:$0xf]
  %v136 = vld [vmem:[%s1 + $0xe4] sm:$0xf]
  %v137 = vld [vmem:[%s1 + $0xe8] sm:$0xf]
  %v138 = vld [vmem:[%s1 + $0xec] sm:$0xf]
  %v139 = vld [vmem:[%s1 + $0xf0] sm:$0xf]
  %v140 = vld [vmem:[%s1 + $0xf4] sm:$0xf]
  %v141 = vld [vmem:[%s1 + $0xf8] sm:$0xf]
  %v142 = vld [vmem:[%s1 + $0xfc] sm:$0xf]
  %v143 = vld [vmem:[%s1 + $0x100] sm:$0xf]
  %v144 = vld [vmem:[%s1 + $0x104] sm:$0xf]
  %v145 = vld [vmem:[%s1 + $0x108] sm:$0xf]
  %v146 = vld [vmem:[%s1 + $0x10c] sm:$0xf]
  %v147 = vld [vmem:[%s1 + $0x110] sm:$0xf]
  %v148 = vld [vmem:[%s1 + $0x114] sm:$0xf]
  %v149 = vld [vmem:[%s1 + $0x118] sm:$0xf]
  %v150 = vld [vmem:[%s1 + $0x11c] sm:$0xf]
  %v151 = vld [vmem:[%s1 + $0x120] sm:$0xf]
  %v152 = vld [vmem:[%s1 + $0x124] sm:$0xf]
  %v153 = vld [vmem:[%s1 + $0x128] sm:$0xf]
  %v154 = vld [vmem:[%s1 + $0x12c] sm:$0xf]
  %v155 = vld [vmem:[%s1 + $0x130] sm:$0xf]
  %v156 = vld [vmem:[%s1 + $0x134] sm:$0xf]
  %v157 = vld [vmem:[%s1 + $0x138] sm:$0xf]
  %v158 = vld [vmem:[%s1 + $0x13c] sm:$0xf]
  %v159 = vld [vmem:[%s1 + $0x140] sm:$0xf]
  %v160 = vld [vmem:[%s1 + $0x144] sm:$0xf]
  %v161 = vld [vmem:[%s1 + $0x148] sm:$0xf]
  %v162 = vld [vmem:[%s1 + $0x14c] sm:$0xf]
  %v163 = vld [vmem:[%s1 + $0x150] sm:$0xf]
  %v164 = vld [vmem:[%s1 + $0x154] sm:$0xf]
  %v165 = vld [vmem:[%s1 + $0x158] sm:$0xf]
  %v166 = vld [vmem:[%s1 + $0x15c] sm:$0xf]
  %v167 = vld [vmem:[%s1 + $0x160] sm:$0xf]
  %v168 = vld [vmem:[%s1 + $0x164] sm:$0xf]
  %v169 = vld [vmem:[%s1 + $0x168] sm:$0xf]
  %v170 = vld [vmem:[%s1 + $0x16c] sm:$0xf]
  %v171 = vld [vmem:[%s1 + $0x170] sm:$0xf]
  %v172 = vld [vmem:[%s1 + $0x174] sm:$0xf]
  %v173 = vld [vmem:[%s1 + $0x178] sm:$0xf]
  %v174 = vld [vmem:[%s1 + $0x17c] sm:$0xf]
  %v175 = vld [vmem:[%s1 + $0x180] sm:$0xf]
  %v176 = vld [vmem:[%s1 + $0x184] sm:$0xf]
  %v177 = vld [vmem:[%s1 + $0x188] sm:$0xf]
  %v178 = vld [vmem:[%s1 + $0x18c] sm:$0xf]
  %v179 = vld [vmem:[%s1 + $0x190] sm:$0xf]
  %v180 = vld [vmem:[%s1 + $0x194] sm:$0xf]
  %v181 = vld [vmem:[%s1 + $0x198] sm:$0xf]
  %v182 = vld [vmem:[%s1 + $0x19c] sm:$0xf]
  %v183 = vld [vmem:[%s1 + $0x1a0] sm:$0xf]
  %v184 = vld [vmem:[%s1 + $0x1a4] sm:$0xf]
  %v185 = vld [vmem:[%s1 + $0x1a8] sm:$0xf]
  %v186 = vld [vmem:[%s1 + $0x1ac] sm:$0xf]
  %v187 = vld [vmem:[%s1 + $0x1b0] sm:$0xf]
  %v188 = vld [vmem:[%s1 + $0x1b4] sm:$0xf]
  %v189 = vld [vmem:[%s1 + $0x1b8] sm:$0xf]
  %v190 = vld [vmem:[%s1 + $0x1bc] sm:$0xf]
  %v191 = vld [vmem:[%s1 + $0x1c0] sm:$0xf]
  %v192 = vld [vmem:[%s1 + $0x1c4] sm:$0xf]
  %v193 = vld [vmem:[%s1 + $0x1c8] sm:$0xf]
  %v194 = vld [vmem:[%s1 + $0x1cc] sm:$0xf]
  %v195 = vld [vmem:[%s1 + $0x1d0] sm:$0xf]
  %v196 = vld [vmem:[%s1 + $0x1d4] sm:$0xf]
  %v197 = vld [vmem:[%s1 + $0x1d8] sm:$0xf]
  %v198 = vld [vmem:[%s1 + $0x1dc] sm:$0xf]
  %v199 = vld [vmem:[%s1 + $0x1e0] sm:$0xf]
  %v200 = vld [vmem:[%s1 + $0x1e4] sm:$0xf]
  %v201 = vld [vmem:[%s1 + $0x1e8] sm:$0xf]
  %v202 = vld [vmem:[%s1 + $0x1ec] sm:$0xf]
  %v203 = vld [vmem:[%s1 + $0x1f0] sm:$0xf]
  %v204 = vld [vmem:[%s1 + $0x1f4] sm:$0xf]
  %v205 = vld [vmem:[%s1 + $0x1f8] sm:$0xf]
  %v206 = vld [vmem:[%s1 + $0x1fc] sm:$0xf]
  %v207 = vld [vmem:[%s2] sm:$0x1]
  %v209 = vlaneseq
  %v210 = vshrl.u32 %v209, 7
  %v211 = vsub.s32 0, %v210
  %v212 = vrot.slane %v207, %v211
  %v278 = vunpack.c.l.b16 %v15
  %v279 = vunpack.c.h.b16 %v15
  %v280 = vunpack.c.l.b16 %v16
  %v281 = vunpack.c.h.b16 %v16
  %v282 = vunpack.c.l.b16 %v17
  %v283 = vunpack.c.h.b16 %v17
  %v284 = vunpack.c.l.b16 %v18
  %v285 = vunpack.c.h.b16 %v18
  %v286 = vunpack.c.l.b16 %v19
  %v287 = vunpack.c.h.b16 %v19
  %v288 = vunpack.c.l.b16 %v20
  %v289 = vunpack.c.h.b16 %v20
  %v290 = vunpack.c.l.b16 %v21
  %v291 = vunpack.c.h.b16 %v21
  %v292 = vunpack.c.l.b16 %v22
  %v293 = vunpack.c.h.b16 %v22
  %v294 = vunpack.c.l.b16 %v23
  %v295 = vunpack.c.h.b16 %v23
  %v296 = vunpack.c.l.b16 %v24
  %v297 = vunpack.c.h.b16 %v24
  %v298 = vunpack.c.l.b16 %v25
  %v299 = vunpack.c.h.b16 %v25
  %v300 = vunpack.c.l.b16 %v26
  %v301 = vunpack.c.h.b16 %v26
  %v302 = vunpack.c.l.b16 %v27
  %v303 = vunpack.c.h.b16 %v27
  %v304 = vunpack.c.l.b16 %v28
  %v305 = vunpack.c.h.b16 %v28
  %v306 = vunpack.c.l.b16 %v29
  %v307 = vunpack.c.h.b16 %v29
  %v308 = vunpack.c.l.b16 %v30
  %v309 = vunpack.c.h.b16 %v30
  %v310 = vunpack.c.l.b16 %v31
  %v311 = vunpack.c.h.b16 %v31
  %v312 = vunpack.c.l.b16 %v32
  %v313 = vunpack.c.h.b16 %v32
  %v314 = vunpack.c.l.b16 %v33
  %v315 = vunpack.c.h.b16 %v33
  %v316 = vunpack.c.l.b16 %v34
  %v317 = vunpack.c.h.b16 %v34
  %v318 = vunpack.c.l.b16 %v35
  %v319 = vunpack.c.h.b16 %v35
  %v320 = vunpack.c.l.b16 %v36
  %v321 = vunpack.c.h.b16 %v36
  %v322 = vunpack.c.l.b16 %v37
  %v323 = vunpack.c.h.b16 %v37
  %v324 = vunpack.c.l.b16 %v38
  %v325 = vunpack.c.h.b16 %v38
  %v326 = vunpack.c.l.b16 %v39
  %v327 = vunpack.c.h.b16 %v39
  %v328 = vunpack.c.l.b16 %v40
  %v329 = vunpack.c.h.b16 %v40
  %v330 = vunpack.c.l.b16 %v41
  %v331 = vunpack.c.h.b16 %v41
  %v332 = vunpack.c.l.b16 %v42
  %v333 = vunpack.c.h.b16 %v42
  %v334 = vunpack.c.l.b16 %v43
  %v335 = vunpack.c.h.b16 %v43
  %v336 = vunpack.c.l.b16 %v44
  %v337 = vunpack.c.h.b16 %v44
  %v338 = vunpack.c.l.b16 %v45
  %v339 = vunpack.c.h.b16 %v45
  %v340 = vunpack.c.l.b16 %v46
  %v341 = vunpack.c.h.b16 %v46
  %v342 = vunpack.c.l.b16 %v47
  %v343 = vunpack.c.h.b16 %v47
  %v344 = vunpack.c.l.b16 %v48
  %v345 = vunpack.c.h.b16 %v48
  %v346 = vunpack.c.l.b16 %v49
  %v347 = vunpack.c.h.b16 %v49
  %v348 = vunpack.c.l.b16 %v50
  %v349 = vunpack.c.h.b16 %v50
  %v350 = vunpack.c.l.b16 %v51
  %v351 = vunpack.c.h.b16 %v51
  %v352 = vunpack.c.l.b16 %v52
  %v353 = vunpack.c.h.b16 %v52
  %v354 = vunpack.c.l.b16 %v53
  %v355 = vunpack.c.h.b16 %v53
  %v356 = vunpack.c.l.b16 %v54
  %v357 = vunpack.c.h.b16 %v54
  %v358 = vunpack.c.l.b16 %v55
  %v359 = vunpack.c.h.b16 %v55
  %v360 = vunpack.c.l.b16 %v56
  %v361 = vunpack.c.h.b16 %v56
  %v362 = vunpack.c.l.b16 %v57
  %v363 = vunpack.c.h.b16 %v57
  %v364 = vunpack.c.l.b16 %v58
  %v365 = vunpack.c.h.b16 %v58
  %v366 = vunpack.c.l.b16 %v59
  %v367 = vunpack.c.h.b16 %v59
  %v368 = vunpack.c.l.b16 %v60
  %v369 = vunpack.c.h.b16 %v60
  %v370 = vunpack.c.l.b16 %v61
  %v371 = vunpack.c.h.b16 %v61
  %v372 = vunpack.c.l.b16 %v62
  %v373 = vunpack.c.h.b16 %v62
  %v374 = vunpack.c.l.b16 %v63
  %v375 = vunpack.c.h.b16 %v63
  %v376 = vunpack.c.l.b16 %v64
  %v377 = vunpack.c.h.b16 %v64
  %v378 = vunpack.c.l.b16 %v65
  %v379 = vunpack.c.h.b16 %v65
  %v380 = vunpack.c.l.b16 %v66
  %v381 = vunpack.c.h.b16 %v66
  %v382 = vunpack.c.l.b16 %v67
  %v383 = vunpack.c.h.b16 %v67
  %v384 = vunpack.c.l.b16 %v68
  %v385 = vunpack.c.h.b16 %v68
  %v386 = vunpack.c.l.b16 %v69
  %v387 = vunpack.c.h.b16 %v69
  %v388 = vunpack.c.l.b16 %v70
  %v389 = vunpack.c.h.b16 %v70
  %v390 = vunpack.c.l.b16 %v71
  %v391 = vunpack.c.h.b16 %v71
  %v392 = vunpack.c.l.b16 %v72
  %v393 = vunpack.c.h.b16 %v72
  %v394 = vunpack.c.l.b16 %v73
  %v395 = vunpack.c.h.b16 %v73
  %v396 = vunpack.c.l.b16 %v74
  %v397 = vunpack.c.h.b16 %v74
  %v398 = vunpack.c.l.b16 %v75
  %v399 = vunpack.c.h.b16 %v75
  %v400 = vunpack.c.l.b16 %v76
  %v401 = vunpack.c.h.b16 %v76
  %v402 = vunpack.c.l.b16 %v77
  %v403 = vunpack.c.h.b16 %v77
  %v404 = vunpack.c.l.b16 %v78
  %v405 = vunpack.c.h.b16 %v78
  %v406 = vpack.c.b16 %v286, %v278
  %v407 = vpack.c.b16 %v287, %v279
  %v408 = vpack.c.b16 %v288, %v280
  %v409 = vpack.c.b16 %v289, %v281
  %v410 = vpack.c.b16 %v290, %v282
  %v411 = vpack.c.b16 %v291, %v283
  %v412 = vpack.c.b16 %v292, %v284
  %v413 = vpack.c.b16 %v293, %v285
  %v414 = vpack.c.b16 %v302, %v294
  %v415 = vpack.c.b16 %v303, %v295
  %v416 = vpack.c.b16 %v304, %v296
  %v417 = vpack.c.b16 %v305, %v297
  %v418 = vpack.c.b16 %v306, %v298
  %v419 = vpack.c.b16 %v307, %v299
  %v420 = vpack.c.b16 %v308, %v300
  %v421 = vpack.c.b16 %v309, %v301
  %v422 = vpack.c.b16 %v318, %v310
  %v423 = vpack.c.b16 %v319, %v311
  %v424 = vpack.c.b16 %v320, %v312
  %v425 = vpack.c.b16 %v321, %v313
  %v426 = vpack.c.b16 %v322, %v314
  %v427 = vpack.c.b16 %v323, %v315
  %v428 = vpack.c.b16 %v324, %v316
  %v429 = vpack.c.b16 %v325, %v317
  %v430 = vpack.c.b16 %v334, %v326
  %v431 = vpack.c.b16 %v335, %v327
  %v432 = vpack.c.b16 %v336, %v328
  %v433 = vpack.c.b16 %v337, %v329
  %v434 = vpack.c.b16 %v338, %v330
  %v435 = vpack.c.b16 %v339, %v331
  %v436 = vpack.c.b16 %v340, %v332
  %v437 = vpack.c.b16 %v341, %v333
  %v438 = vpack.c.b16 %v350, %v342
  %v439 = vpack.c.b16 %v351, %v343
  %v440 = vpack.c.b16 %v352, %v344
  %v441 = vpack.c.b16 %v353, %v345
  %v442 = vpack.c.b16 %v354, %v346
  %v443 = vpack.c.b16 %v355, %v347
  %v444 = vpack.c.b16 %v356, %v348
  %v445 = vpack.c.b16 %v357, %v349
  %v446 = vpack.c.b16 %v366, %v358
  %v447 = vpack.c.b16 %v367, %v359
  %v448 = vpack.c.b16 %v368, %v360
  %v449 = vpack.c.b16 %v369, %v361
  %v450 = vpack.c.b16 %v370, %v362
  %v451 = vpack.c.b16 %v371, %v363
  %v452 = vpack.c.b16 %v372, %v364
  %v453 = vpack.c.b16 %v373, %v365
  %v454 = vpack.c.b16 %v382, %v374
  %v455 = vpack.c.b16 %v383, %v375
  %v456 = vpack.c.b16 %v384, %v376
  %v457 = vpack.c.b16 %v385, %v377
  %v458 = vpack.c.b16 %v386, %v378
  %v459 = vpack.c.b16 %v387, %v379
  %v460 = vpack.c.b16 %v388, %v380
  %v461 = vpack.c.b16 %v389, %v381
  %v462 = vpack.c.b16 %v398, %v390
  %v463 = vpack.c.b16 %v399, %v391
  %v464 = vpack.c.b16 %v400, %v392
  %v465 = vpack.c.b16 %v401, %v393
  %v466 = vpack.c.b16 %v402, %v394
  %v467 = vpack.c.b16 %v403, %v395
  %v468 = vpack.c.b16 %v404, %v396
  %v469 = vpack.c.b16 %v405, %v397
  %v662 = vunpack.c.l.b16 %v79
  %v663 = vunpack.c.l.b16 %v80
  %v664 = vunpack.c.l.b16 %v81
  %v665 = vunpack.c.l.b16 %v82
  %v666 = vunpack.c.l.b16 %v83
  %v667 = vunpack.c.l.b16 %v84
  %v668 = vunpack.c.l.b16 %v85
  %v669 = vunpack.c.l.b16 %v86
  %v670 = vunpack.c.l.b16 %v87
  %v671 = vunpack.c.l.b16 %v88
  %v672 = vunpack.c.l.b16 %v89
  %v673 = vunpack.c.l.b16 %v90
  %v674 = vunpack.c.l.b16 %v91
  %v675 = vunpack.c.l.b16 %v92
  %v676 = vunpack.c.l.b16 %v93
  %v677 = vunpack.c.l.b16 %v94
  %v678 = vunpack.c.l.b16 %v95
  %v679 = vunpack.c.l.b16 %v96
  %v680 = vunpack.c.l.b16 %v97
  %v681 = vunpack.c.l.b16 %v98
  %v682 = vunpack.c.l.b16 %v99
  %v683 = vunpack.c.l.b16 %v100
  %v684 = vunpack.c.l.b16 %v101
  %v685 = vunpack.c.l.b16 %v102
  %v686 = vunpack.c.l.b16 %v103
  %v687 = vunpack.c.l.b16 %v104
  %v688 = vunpack.c.l.b16 %v105
  %v689 = vunpack.c.l.b16 %v106
  %v690 = vunpack.c.l.b16 %v107
  %v691 = vunpack.c.l.b16 %v108
  %v692 = vunpack.c.l.b16 %v109
  %v693 = vunpack.c.l.b16 %v110
  %v694 = vunpack.c.l.b16 %v111
  %v695 = vunpack.c.l.b16 %v112
  %v696 = vunpack.c.l.b16 %v113
  %v697 = vunpack.c.l.b16 %v114
  %v698 = vunpack.c.l.b16 %v115
  %v699 = vunpack.c.l.b16 %v116
  %v700 = vunpack.c.l.b16 %v117
  %v701 = vunpack.c.l.b16 %v118
  %v702 = vunpack.c.l.b16 %v119
  %v703 = vunpack.c.l.b16 %v120
  %v704 = vunpack.c.l.b16 %v121
  %v705 = vunpack.c.l.b16 %v122
  %v706 = vunpack.c.l.b16 %v123
  %v707 = vunpack.c.l.b16 %v124
  %v708 = vunpack.c.l.b16 %v125
  %v709 = vunpack.c.l.b16 %v126
  %v710 = vunpack.c.l.b16 %v127
  %v711 = vunpack.c.l.b16 %v128
  %v712 = vunpack.c.l.b16 %v129
  %v713 = vunpack.c.l.b16 %v130
  %v714 = vunpack.c.l.b16 %v131
  %v715 = vunpack.c.l.b16 %v132
  %v716 = vunpack.c.l.b16 %v133
  %v717 = vunpack.c.l.b16 %v134
  %v718 = vunpack.c.l.b16 %v135
  %v719 = vunpack.c.l.b16 %v136
  %v720 = vunpack.c.l.b16 %v137
  %v721 = vunpack.c.l.b16 %v138
  %v722 = vunpack.c.l.b16 %v139
  %v723 = vunpack.c.l.b16 %v140
  %v724 = vunpack.c.l.b16 %v141
  %v725 = vunpack.c.l.b16 %v142
  %v726 = vunpack.c.l.b16 %v143
  %v727 = vunpack.c.l.b16 %v144
  %v728 = vunpack.c.l.b16 %v145
  %v729 = vunpack.c.l.b16 %v146
  %v730 = vunpack.c.l.b16 %v147
  %v731 = vunpack.c.l.b16 %v148
  %v732 = vunpack.c.l.b16 %v149
  %v733 = vunpack.c.l.b16 %v150
  %v734 = vunpack.c.l.b16 %v151
  %v735 = vunpack.c.l.b16 %v152
  %v736 = vunpack.c.l.b16 %v153
  %v737 = vunpack.c.l.b16 %v154
  %v738 = vunpack.c.l.b16 %v155
  %v739 = vunpack.c.l.b16 %v156
  %v740 = vunpack.c.l.b16 %v157
  %v741 = vunpack.c.l.b16 %v158
  %v742 = vunpack.c.l.b16 %v159
  %v743 = vunpack.c.l.b16 %v160
  %v744 = vunpack.c.l.b16 %v161
  %v745 = vunpack.c.l.b16 %v162
  %v746 = vunpack.c.l.b16 %v163
  %v747 = vunpack.c.l.b16 %v164
  %v748 = vunpack.c.l.b16 %v165
  %v749 = vunpack.c.l.b16 %v166
  %v750 = vunpack.c.l.b16 %v167
  %v751 = vunpack.c.l.b16 %v168
  %v752 = vunpack.c.l.b16 %v169
  %v753 = vunpack.c.l.b16 %v170
  %v754 = vunpack.c.l.b16 %v171
  %v755 = vunpack.c.l.b16 %v172
  %v756 = vunpack.c.l.b16 %v173
  %v757 = vunpack.c.l.b16 %v174
  %v758 = vunpack.c.l.b16 %v175
  %v759 = vunpack.c.l.b16 %v176
  %v760 = vunpack.c.l.b16 %v177
  %v761 = vunpack.c.l.b16 %v178
  %v762 = vunpack.c.l.b16 %v179
  %v763 = vunpack.c.l.b16 %v180
  %v764 = vunpack.c.l.b16 %v181
  %v765 = vunpack.c.l.b16 %v182
  %v766 = vunpack.c.l.b16 %v183
  %v767 = vunpack.c.l.b16 %v184
  %v768 = vunpack.c.l.b16 %v185
  %v769 = vunpack.c.l.b16 %v186
  %v770 = vunpack.c.l.b16 %v187
  %v771 = vunpack.c.l.b16 %v188
  %v772 = vunpack.c.l.b16 %v189
  %v773 = vunpack.c.l.b16 %v190
  %v774 = vunpack.c.l.b16 %v191
  %v775 = vunpack.c.l.b16 %v192
  %v776 = vunpack.c.l.b16 %v193
  %v777 = vunpack.c.l.b16 %v194
  %v778 = vunpack.c.l.b16 %v195
  %v779 = vunpack.c.l.b16 %v196
  %v780 = vunpack.c.l.b16 %v197
  %v781 = vunpack.c.l.b16 %v198
  %v782 = vunpack.c.l.b16 %v199
  %v783 = vunpack.c.l.b16 %v200
  %v784 = vunpack.c.l.b16 %v201
  %v785 = vunpack.c.l.b16 %v202
  %v786 = vunpack.c.l.b16 %v203
  %v787 = vunpack.c.l.b16 %v204
  %v788 = vunpack.c.l.b16 %v205
  %v789 = vunpack.c.l.b16 %v206
  %v790 = vpack.c.b16 %v663, %v662
  %v791 = vpack.c.b16 %v665, %v664
  %v792 = vpack.c.b16 %v667, %v666
  %v793 = vpack.c.b16 %v669, %v668
  %v794 = vpack.c.b16 %v671, %v670
  %v795 = vpack.c.b16 %v673, %v672
  %v796 = vpack.c.b16 %v675, %v674
  %v797 = vpack.c.b16 %v677, %v676
  %v798 = vpack.c.b16 %v679, %v678
  %v799 = vpack.c.b16 %v681, %v680
  %v800 = vpack.c.b16 %v683, %v682
  %v801 = vpack.c.b16 %v685, %v684
  %v802 = vpack.c.b16 %v687, %v686
  %v803 = vpack.c.b16 %v689, %v688
  %v804 = vpack.c.b16 %v691, %v690
  %v805 = vpack.c.b16 %v693, %v692
  %v806 = vpack.c.b16 %v695, %v694
  %v807 = vpack.c.b16 %v697, %v696
  %v808 = vpack.c.b16 %v699, %v698
  %v809 = vpack.c.b16 %v701, %v700
  %v810 = vpack.c.b16 %v703, %v702
  %v811 = vpack.c.b16 %v705, %v704
  %v812 = vpack.c.b16 %v707, %v706
  %v813 = vpack.c.b16 %v709, %v708
  %v814 = vpack.c.b16 %v711, %v710
  %v815 = vpack.c.b16 %v713, %v712
  %v816 = vpack.c.b16 %v715, %v714
  %v817 = vpack.c.b16 %v717, %v716
  %v818 = vpack.c.b16 %v719, %v718
  %v819 = vpack.c.b16 %v721, %v720
  %v820 = vpack.c.b16 %v723, %v722
  %v821 = vpack.c.b16 %v725, %v724
  %v822 = vpack.c.b16 %v727, %v726
  %v823 = vpack.c.b16 %v729, %v728
  %v824 = vpack.c.b16 %v731, %v730
  %v825 = vpack.c.b16 %v733, %v732
  %v826 = vpack.c.b16 %v735, %v734
  %v827 = vpack.c.b16 %v737, %v736
  %v828 = vpack.c.b16 %v739, %v738
  %v829 = vpack.c.b16 %v741, %v740
  %v830 = vpack.c.b16 %v743, %v742
  %v831 = vpack.c.b16 %v745, %v744
  %v832 = vpack.c.b16 %v747, %v746
  %v833 = vpack.c.b16 %v749, %v748
  %v834 = vpack.c.b16 %v751, %v750
  %v835 = vpack.c.b16 %v753, %v752
  %v836 = vpack.c.b16 %v755, %v754
  %v837 = vpack.c.b16 %v757, %v756
  %v838 = vpack.c.b16 %v759, %v758
  %v839 = vpack.c.b16 %v761, %v760
  %v840 = vpack.c.b16 %v763, %v762
  %v841 = vpack.c.b16 %v765, %v764
  %v842 = vpack.c.b16 %v767, %v766
  %v843 = vpack.c.b16 %v769, %v768
  %v844 = vpack.c.b16 %v771, %v770
  %v845 = vpack.c.b16 %v773, %v772
  %v846 = vpack.c.b16 %v775, %v774
  %v847 = vpack.c.b16 %v777, %v776
  %v848 = vpack.c.b16 %v779, %v778
  %v849 = vpack.c.b16 %v781, %v780
  %v850 = vpack.c.b16 %v783, %v782
  %v851 = vpack.c.b16 %v785, %v784
  %v852 = vpack.c.b16 %v787, %v786
  %v853 = vpack.c.b16 %v789, %v788
  %918 = vmatprep.subr.bf16.mxu0 0
  %919 = vmatpush1.bf16.msra.mxu0 %v790
  %920 = vmatprep.subr.bf16.mxu0 0
  %921 = vmatpush1.bf16.msra.mxu0 %v791
  %922 = vmatprep.subr.bf16.mxu0 0
  %923 = vmatpush1.bf16.msra.mxu0 %v792
  %924 = vmatprep.subr.bf16.mxu0 0
  %925 = vmatpush1.bf16.msra.mxu0 %v793
  %926 = vmatprep.subr.bf16.mxu0 0
  %927 = vmatpush1.bf16.msra.mxu0 %v794
  %928 = vmatprep.subr.bf16.mxu0 0
  %929 = vmatpush1.bf16.msra.mxu0 %v795
  %930 = vmatprep.subr.bf16.mxu0 0
  %931 = vmatpush1.bf16.msra.mxu0 %v796
  %932 = vmatprep.subr.bf16.mxu0 0
  %933 = vmatpush1.bf16.msra.mxu0 %v797
  %934 = vmatprep.subr.bf16.mxu0 0
  %935 = vmatpush1.bf16.msra.mxu0 %v798
  %936 = vmatprep.subr.bf16.mxu0 0
  %937 = vmatpush1.bf16.msra.mxu0 %v799
  %938 = vmatprep.subr.bf16.mxu0 0
  %939 = vmatpush1.bf16.msra.mxu0 %v800
  %940 = vmatprep.subr.bf16.mxu0 0
  %941 = vmatpush1.bf16.msra.mxu0 %v801
  %942 = vmatprep.subr.bf16.mxu0 0
  %943 = vmatpush1.bf16.msra.mxu0 %v802
  %944 = vmatprep.subr.bf16.mxu0 0
  %945 = vmatpush1.bf16.msra.mxu0 %v803
  %946 = vmatprep.subr.bf16.mxu0 0
  %947 = vmatpush1.bf16.msra.mxu0 %v804
  %948 = vmatprep.subr.bf16.mxu0 0
  %949 = vmatpush1.bf16.msra.mxu0 %v805
  %950 = vmatprep.mubr.bf16.mxu0 %v407
  %951 = vmatmul.mubr.bf16.gmra.mrb[0].mxu0 %v406
  %v952 = vpop.f32.mrb[0].mxu0
  %v953 = vadd.f32 %v212, %v952
  %v954 = vpop.f32.mrb[0].mxu0
  %v955 = vpop.f32.mrb[0].mxu0
  %v956 = vadd.f32 %v212, %v955
  %v957 = vpop.f32.mrb[0].mxu0
  %958 = vmatprep.mubr.bf16.mxu0 %v415
  %959 = vmatmul.mubr.bf16.gmra.mrb[0].mxu0 %v414
  %v960 = vpop.f32.mrb[0].mxu0
  %v961 = vadd.f32 %v212, %v960
  %v962 = vpop.f32.mrb[0].mxu0
  %v963 = vpop.f32.mrb[0].mxu0
  %v964 = vadd.f32 %v212, %v963
  %v965 = vpop.f32.mrb[0].mxu0
  %966 = vmatprep.mubr.bf16.mxu0 %v423
  %967 = vmatmul.mubr.bf16.gmra.mrb[0].mxu0 %v422
  %v968 = vpop.f32.mrb[0].mxu0
  %v969 = vadd.f32 %v212, %v968
  %v970 = vpop.f32.mrb[0].mxu0
  %v971 = vpop.f32.mrb[0].mxu0
  %v972 = vadd.f32 %v212, %v971
  %v973 = vpop.f32.mrb[0].mxu0
  %974 = vmatprep.mubr.bf16.mxu0 %v431
  %975 = vmatmul.mubr.bf16.gmra.mrb[0].mxu0 %v430
  %v976 = vpop.f32.mrb[0].mxu0
  %v977 = vadd.f32 %v212, %v976
  %v978 = vpop.f32.mrb[0].mxu0
  %v979 = vpop.f32.mrb[0].mxu0
  %v980 = vadd.f32 %v212, %v979
  %v981 = vpop.f32.mrb[0].mxu0
  %982 = vmatprep.mubr.bf16.mxu0 %v439
  %983 = vmatmul.mubr.bf16.gmra.mrb[0].mxu0 %v438
  %v984 = vpop.f32.mrb[0].mxu0
  %v985 = vadd.f32 %v212, %v984
  %v986 = vpop.f32.mrb[0].mxu0
  %v987 = vpop.f32.mrb[0].mxu0
  %v988 = vadd.f32 %v212, %v987
  %v989 = vpop.f32.mrb[0].mxu0
  %990 = vmatprep.mubr.bf16.mxu0 %v447
  %991 = vmatmul.mubr.bf16.gmra.mrb[0].mxu0 %v446
  %v992 = vpop.f32.mrb[0].mxu0
  %v993 = vadd.f32 %v212, %v992
  %v994 = vpop.f32.mrb[0].mxu0
  %v995 = vpop.f32.mrb[0].mxu0
  %v996 = vadd.f32 %v212, %v995
  %v997 = vpop.f32.mrb[0].mxu0
  %998 = vmatprep.mubr.bf16.mxu0 %v455
  %999 = vmatmul.mubr.bf16.gmra.mrb[0].mxu0 %v454
  %v1000 = vpop.f32.mrb[0].mxu0
  %v1001 = vadd.f32 %v212, %v1000
  %v1002 = vpop.f32.mrb[0].mxu0
  %v1003 = vpop.f32.mrb[0].mxu0
  %v1004 = vadd.f32 %v212, %v1003
  %v1005 = vpop.f32.mrb[0].mxu0
  %1006 = vmatprep.mubr.bf16.mxu0 %v463
  %1007 = vmatmul.mubr.bf16.gmra.mrb[0].mxu0 %v462
  %v1008 = vpop.f32.mrb[0].mxu0
  %v1009 = vadd.f32 %v212, %v1008
  %v1010 = vpop.f32.mrb[0].mxu0
  %v1011 = vpop.f32.mrb[0].mxu0
  %v1012 = vadd.f32 %v212, %v1011
  %v1013 = vpop.f32.mrb[0].mxu0
  %1014 = vdwg.mxu0
  %1015 = vmatprep.subr.bf16.mxu0 0
  %1016 = vmatpush1.bf16.msra.mxu0 %v806
  %1017 = vmatprep.subr.bf16.mxu0 0
  %1018 = vmatpush1.bf16.msra.mxu0 %v807
  %1019 = vmatprep.subr.bf16.mxu0 0
  %1020 = vmatpush1.bf16.msra.mxu0 %v808
  %1021 = vmatprep.subr.bf16.mxu0 0
  %1022 = vmatpush1.bf16.msra.mxu0 %v809
  %1023 = vmatprep.subr.bf16.mxu0 0
  %1024 = vmatpush1.bf16.msra.mxu0 %v810
  %1025 = vmatprep.subr.bf16.mxu0 0
  %1026 = vmatpush1.bf16.msra.mxu0 %v811
  %1027 = vmatprep.subr.bf16.mxu0 0
  %1028 = vmatpush1.bf16.msra.mxu0 %v812
  %1029 = vmatprep.subr.bf16.mxu0 0
  %1030 = vmatpush1.bf16.msra.mxu0 %v813
  %1031 = vmatprep.subr.bf16.mxu0 0
  %1032 = vmatpush1.bf16.msra.mxu0 %v814
  %1033 = vmatprep.subr.bf16.mxu0 0
  %1034 = vmatpush1.bf16.msra.mxu0 %v815
  %1035 = vmatprep.subr.bf16.mxu0 0
  %1036 = vmatpush1.bf16.msra.mxu0 %v816
  %1037 = vmatprep.subr.bf16.mxu0 0
  %1038 = vmatpush1.bf16.msra.mxu0 %v817
  %1039 = vmatprep.subr.bf16.mxu0 0
  %1040 = vmatpush1.bf16.msra.mxu0 %v818
  %1041 = vmatprep.subr.bf16.mxu0 0
  %1042 = vmatpush1.bf16.msra.mxu0 %v819
  %1043 = vmatprep.subr.bf16.mxu0 0
  %1044 = vmatpush1.bf16.msra.mxu0 %v820
  %1045 = vmatprep.subr.bf16.mxu0 0
  %1046 = vmatpush1.bf16.msra.mxu0 %v821
  %1047 = vmatprep.mubr.bf16.mxu0 %v409
  %1048 = vmatmul.mubr.bf16.gmra.mrb[0].mxu0 %v408
  %v1049 = vpop.f32.mrb[0].mxu0
  %v1050 = vadd.f32 %v953, %v1049
  %v1051 = vpop.f32.mrb[0].mxu0
  %v1052 = vpop.f32.mrb[0].mxu0
  %v1053 = vadd.f32 %v956, %v1052
  %v1054 = vpop.f32.mrb[0].mxu0
  %1055 = vmatprep.mubr.bf16.mxu0 %v417
  %1056 = vmatmul.mubr.bf16.gmra.mrb[0].mxu0 %v416
  %v1057 = vpop.f32.mrb[0].mxu0
  %v1058 = vadd.f32 %v961, %v1057
  %v1059 = vpop.f32.mrb[0].mxu0
  %v1060 = vpop.f32.mrb[0].mxu0
  %v1061 = vadd.f32 %v964, %v1060
  %v1062 = vpop.f32.mrb[0].mxu0
  %1063 = vmatprep.mubr.bf16.mxu0 %v425
  %1064 = vmatmul.mubr.bf16.gmra.mrb[0].mxu0 %v424
  %v1065 = vpop.f32.mrb[0].mxu0
  %v1066 = vadd.f32 %v969, %v1065
  %v1067 = vpop.f32.mrb[0].mxu0
  %v1068 = vpop.f32.mrb[0].mxu0
  %v1069 = vadd.f32 %v972, %v1068
  %v1070 = vpop.f32.mrb[0].mxu0
  %1071 = vmatprep.mubr.bf16.mxu0 %v433
  %1072 = vmatmul.mubr.bf16.gmra.mrb[0].mxu0 %v432
  %v1073 = vpop.f32.mrb[0].mxu0
  %v1074 = vadd.f32 %v977, %v1073
  %v1075 = vpop.f32.mrb[0].mxu0
  %v1076 = vpop.f32.mrb[0].mxu0
  %v1077 = vadd.f32 %v980, %v1076
  %v1078 = vpop.f32.mrb[0].mxu0
  %1079 = vmatprep.mubr.bf16.mxu0 %v441
  %1080 = vmatmul.mubr.bf16.gmra.mrb[0].mxu0 %v440
  %v1081 = vpop.f32.mrb[0].mxu0
  %v1082 = vadd.f32 %v985, %v1081
  %v1083 = vpop.f32.mrb[0].mxu0
  %v1084 = vpop.f32.mrb[0].mxu0
  %v1085 = vadd.f32 %v988, %v1084
  %v1086 = vpop.f32.mrb[0].mxu0
  %1087 = vmatprep.mubr.bf16.mxu0 %v449
  %1088 = vmatmul.mubr.bf16.gmra.mrb[0].mxu0 %v448
  %v1089 = vpop.f32.mrb[0].mxu0
  %v1090 = vadd.f32 %v993, %v1089
  %v1091 = vpop.f32.mrb[0].mxu0
  %v1092 = vpop.f32.mrb[0].mxu0
  %v1093 = vadd.f32 %v996, %v1092
  %v1094 = vpop.f32.mrb[0].mxu0
  %1095 = vmatprep.mubr.bf16.mxu0 %v457
  %1096 = vmatmul.mubr.bf16.gmra.mrb[0].mxu0 %v456
  %v1097 = vpop.f32.mrb[0].mxu0
  %v1098 = vadd.f32 %v1001, %v1097
  %v1099 = vpop.f32.mrb[0].mxu0
  %v1100 = vpop.f32.mrb[0].mxu0
  %v1101 = vadd.f32 %v1004, %v1100
  %v1102 = vpop.f32.mrb[0].mxu0
  %1103 = vmatprep.mubr.bf16.mxu0 %v465
  %1104 = vmatmul.mubr.bf16.gmra.mrb[0].mxu0 %v464
  %v1105 = vpop.f32.mrb[0].mxu0
  %v1106 = vadd.f32 %v1009, %v1105
  %v1107 = vpop.f32.mrb[0].mxu0
  %v1108 = vpop.f32.mrb[0].mxu0
  %v1109 = vadd.f32 %v1012, %v1108
  %v1110 = vpop.f32.mrb[0].mxu0
  %1111 = vdwg.mxu0
  %1112 = vmatprep.subr.bf16.mxu0 0
  %1113 = vmatpush1.bf16.msra.mxu0 %v822
  %1114 = vmatprep.subr.bf16.mxu0 0
  %1115 = vmatpush1.bf16.msra.mxu0 %v823
  %1116 = vmatprep.subr.bf16.mxu0 0
  %1117 = vmatpush1.bf16.msra.mxu0 %v824
  %1118 = vmatprep.subr.bf16.mxu0 0
  %1119 = vmatpush1.bf16.msra.mxu0 %v825
  %1120 = vmatprep.subr.bf16.mxu0 0
  %1121 = vmatpush1.bf16.msra.mxu0 %v826
  %1122 = vmatprep.subr.bf16.mxu0 0
  %1123 = vmatpush1.bf16.msra.mxu0 %v827
  %1124 = vmatprep.subr.bf16.mxu0 0
  %1125 = vmatpush1.bf16.msra.mxu0 %v828
  %1126 = vmatprep.subr.bf16.mxu0 0
  %1127 = vmatpush1.bf16.msra.mxu0 %v829
  %1128 = vmatprep.subr.bf16.mxu0 0
  %1129 = vmatpush1.bf16.msra.mxu0 %v830
  %1130 = vmatprep.subr.bf16.mxu0 0
  %1131 = vmatpush1.bf16.msra.mxu0 %v831
  %1132 = vmatprep.subr.bf16.mxu0 0
  %1133 = vmatpush1.bf16.msra.mxu0 %v832
  %1134 = vmatprep.subr.bf16.mxu0 0
  %1135 = vmatpush1.bf16.msra.mxu0 %v833
  %1136 = vmatprep.subr.bf16.mxu0 0
  %1137 = vmatpush1.bf16.msra.mxu0 %v834
  %1138 = vmatprep.subr.bf16.mxu0 0
  %1139 = vmatpush1.bf16.msra.mxu0 %v835
  %1140 = vmatprep.subr.bf16.mxu0 0
  %1141 = vmatpush1.bf16.msra.mxu0 %v836
  %1142 = vmatprep.subr.bf16.mxu0 0
  %1143 = vmatpush1.bf16.msra.mxu0 %v837
  %1144 = vmatprep.mubr.bf16.mxu0 %v411
  %1145 = vmatmul.mubr.bf16.gmra.mrb[0].mxu0 %v410
  %v1146 = vpop.f32.mrb[0].mxu0
  %v1147 = vadd.f32 %v1050, %v1146
  %v1148 = vpop.f32.mrb[0].mxu0
  %v1149 = vpop.f32.mrb[0].mxu0
  %v1150 = vadd.f32 %v1053, %v1149
  %v1151 = vpop.f32.mrb[0].mxu0
  %1152 = vmatprep.mubr.bf16.mxu0 %v419
  %1153 = vmatmul.mubr.bf16.gmra.mrb[0].mxu0 %v418
  %v1154 = vpop.f32.mrb[0].mxu0
  %v1155 = vadd.f32 %v1058, %v1154
  %v1156 = vpop.f32.mrb[0].mxu0
  %v1157 = vpop.f32.mrb[0].mxu0
  %v1158 = vadd.f32 %v1061, %v1157
  %v1159 = vpop.f32.mrb[0].mxu0
  %1160 = vmatprep.mubr.bf16.mxu0 %v427
  %1161 = vmatmul.mubr.bf16.gmra.mrb[0].mxu0 %v426
  %v1162 = vpop.f32.mrb[0].mxu0
  %v1163 = vadd.f32 %v1066, %v1162
  %v1164 = vpop.f32.mrb[0].mxu0
  %v1165 = vpop.f32.mrb[0].mxu0
  %v1166 = vadd.f32 %v1069, %v1165
  %v1167 = vpop.f32.mrb[0].mxu0
  %1168 = vmatprep.mubr.bf16.mxu0 %v435
  %1169 = vmatmul.mubr.bf16.gmra.mrb[0].mxu0 %v434
  %v1170 = vpop.f32.mrb[0].mxu0
  %v1171 = vadd.f32 %v1074, %v1170
  %v1172 = vpop.f32.mrb[0].mxu0
  %v1173 = vpop.f32.mrb[0].mxu0
  %v1174 = vadd.f32 %v1077, %v1173
  %v1175 = vpop.f32.mrb[0].mxu0
  %1176 = vmatprep.mubr.bf16.mxu0 %v443
  %1177 = vmatmul.mubr.bf16.gmra.mrb[0].mxu0 %v442
  %v1178 = vpop.f32.mrb[0].mxu0
  %v1179 = vadd.f32 %v1082, %v1178
  %v1180 = vpop.f32.mrb[0].mxu0
  %v1181 = vpop.f32.mrb[0].mxu0
  %v1182 = vadd.f32 %v1085, %v1181
  %v1183 = vpop.f32.mrb[0].mxu0
  %1184 = vmatprep.mubr.bf16.mxu0 %v451
  %1185 = vmatmul.mubr.bf16.gmra.mrb[0].mxu0 %v450
  %v1186 = vpop.f32.mrb[0].mxu0
  %v1187 = vadd.f32 %v1090, %v1186
  %v1188 = vpop.f32.mrb[0].mxu0
  %v1189 = vpop.f32.mrb[0].mxu0
  %v1190 = vadd.f32 %v1093, %v1189
  %v1191 = vpop.f32.mrb[0].mxu0
  %1192 = vmatprep.mubr.bf16.mxu0 %v459
  %1193 = vmatmul.mubr.bf16.gmra.mrb[0].mxu0 %v458
  %v1194 = vpop.f32.mrb[0].mxu0
  %v1195 = vadd.f32 %v1098, %v1194
  %v1196 = vpop.f32.mrb[0].mxu0
  %v1197 = vpop.f32.mrb[0].mxu0
  %v1198 = vadd.f32 %v1101, %v1197
  %v1199 = vpop.f32.mrb[0].mxu0
  %1200 = vmatprep.mubr.bf16.mxu0 %v467
  %1201 = vmatmul.mubr.bf16.gmra.mrb[0].mxu0 %v466
  %v1202 = vpop.f32.mrb[0].mxu0
  %v1203 = vadd.f32 %v1106, %v1202
  %v1204 = vpop.f32.mrb[0].mxu0
  %v1205 = vpop.f32.mrb[0].mxu0
  %v1206 = vadd.f32 %v1109, %v1205
  %v1207 = vpop.f32.mrb[0].mxu0
  %1208 = vdwg.mxu0
  %1209 = vmatprep.subr.bf16.mxu0 0
  %1210 = vmatpush1.bf16.msra.mxu0 %v838
  %1211 = vmatprep.subr.bf16.mxu0 0
  %1212 = vmatpush1.bf16.msra.mxu0 %v839
  %1213 = vmatprep.subr.bf16.mxu0 0
  %1214 = vmatpush1.bf16.msra.mxu0 %v840
  %1215 = vmatprep.subr.bf16.mxu0 0
  %1216 = vmatpush1.bf16.msra.mxu0 %v841
  %1217 = vmatprep.subr.bf16.mxu0 0
  %1218 = vmatpush1.bf16.msra.mxu0 %v842
  %1219 = vmatprep.subr.bf16.mxu0 0
  %1220 = vmatpush1.bf16.msra.mxu0 %v843
  %1221 = vmatprep.subr.bf16.mxu0 0
  %1222 = vmatpush1.bf16.msra.mxu0 %v844
  %1223 = vmatprep.subr.bf16.mxu0 0
  %1224 = vmatpush1.bf16.msra.mxu0 %v845
  %1225 = vmatprep.subr.bf16.mxu0 0
  %1226 = vmatpush1.bf16.msra.mxu0 %v846
  %1227 = vmatprep.subr.bf16.mxu0 0
  %1228 = vmatpush1.bf16.msra.mxu0 %v847
  %1229 = vmatprep.subr.bf16.mxu0 0
  %1230 = vmatpush1.bf16.msra.mxu0 %v848
  %1231 = vmatprep.subr.bf16.mxu0 0
  %1232 = vmatpush1.bf16.msra.mxu0 %v849
  %1233 = vmatprep.subr.bf16.mxu0 0
  %1234 = vmatpush1.bf16.msra.mxu0 %v850
  %1235 = vmatprep.subr.bf16.mxu0 0
  %1236 = vmatpush1.bf16.msra.mxu0 %v851
  %1237 = vmatprep.subr.bf16.mxu0 0
  %1238 = vmatpush1.bf16.msra.mxu0 %v852
  %1239 = vmatprep.subr.bf16.mxu0 0
  %1240 = vmatpush1.bf16.msra.mxu0 %v853
  %1241 = vmatprep.mubr.bf16.mxu0 %v413
  %1242 = vmatmul.mubr.bf16.gmra.mrb[0].mxu0 %v412
  %v1243 = vpop.f32.mrb[0].mxu0
  %v1244 = vadd.f32 %v1147, %v1243
  %v1245 = vpop.f32.mrb[0].mxu0
  %v1246 = vpop.f32.mrb[0].mxu0
  %v1247 = vadd.f32 %v1150, %v1246
  %v1248 = vpop.f32.mrb[0].mxu0
  %1249 = vmatprep.mubr.bf16.mxu0 %v421
  %1250 = vmatmul.mubr.bf16.gmra.mrb[0].mxu0 %v420
  %v1251 = vpop.f32.mrb[0].mxu0
  %v1252 = vadd.f32 %v1155, %v1251
  %v1253 = vpop.f32.mrb[0].mxu0
  %v1254 = vpop.f32.mrb[0].mxu0
  %v1255 = vadd.f32 %v1158, %v1254
  %v1256 = vpop.f32.mrb[0].mxu0
  %1257 = vmatprep.mubr.bf16.mxu0 %v429
  %1258 = vmatmul.mubr.bf16.gmra.mrb[0].mxu0 %v428
  %v1259 = vpop.f32.mrb[0].mxu0
  %v1260 = vadd.f32 %v1163, %v1259
  %v1261 = vpop.f32.mrb[0].mxu0
  %v1262 = vpop.f32.mrb[0].mxu0
  %v1263 = vadd.f32 %v1166, %v1262
  %v1264 = vpop.f32.mrb[0].mxu0
  %1265 = vmatprep.mubr.bf16.mxu0 %v437
  %1266 = vmatmul.mubr.bf16.gmra.mrb[0].mxu0 %v436
  %v1267 = vpop.f32.mrb[0].mxu0
  %v1268 = vadd.f32 %v1171, %v1267
  %v1269 = vpop.f32.mrb[0].mxu0
  %v1270 = vpop.f32.mrb[0].mxu0
  %v1271 = vadd.f32 %v1174, %v1270
  %v1272 = vpop.f32.mrb[0].mxu0
  %1273 = vmatprep.mubr.bf16.mxu0 %v445
  %1274 = vmatmul.mubr.bf16.gmra.mrb[0].mxu0 %v444
  %v1275 = vpop.f32.mrb[0].mxu0
  %v1276 = vadd.f32 %v1179, %v1275
  %v1277 = vpop.f32.mrb[0].mxu0
  %v1278 = vpop.f32.mrb[0].mxu0
  %v1279 = vadd.f32 %v1182, %v1278
  %v1280 = vpop.f32.mrb[0].mxu0
  %1281 = vmatprep.mubr.bf16.mxu0 %v453
  %1282 = vmatmul.mubr.bf16.gmra.mrb[0].mxu0 %v452
  %v1283 = vpop.f32.mrb[0].mxu0
  %v1284 = vadd.f32 %v1187, %v1283
  %v1285 = vpop.f32.mrb[0].mxu0
  %v1286 = vpop.f32.mrb[0].mxu0
  %v1287 = vadd.f32 %v1190, %v1286
  %v1288 = vpop.f32.mrb[0].mxu0
  %1289 = vmatprep.mubr.bf16.mxu0 %v461
  %1290 = vmatmul.mubr.bf16.gmra.mrb[0].mxu0 %v460
  %v1291 = vpop.f32.mrb[0].mxu0
  %v1292 = vadd.f32 %v1195, %v1291
  %v1293 = vpop.f32.mrb[0].mxu0
  %v1294 = vpop.f32.mrb[0].mxu0
  %v1295 = vadd.f32 %v1198, %v1294
  %v1296 = vpop.f32.mrb[0].mxu0
  %1297 = vmatprep.mubr.bf16.mxu0 %v469
  %1298 = vmatmul.mubr.bf16.gmra.mrb[0].mxu0 %v468
  %v1299 = vpop.f32.mrb[0].mxu0
  %v1300 = vadd.f32 %v1203, %v1299
  %v1301 = vpop.f32.mrb[0].mxu0
  %v1302 = vpop.f32.mrb[0].mxu0
  %v1303 = vadd.f32 %v1206, %v1302
  %v1304 = vpop.f32.mrb[0].mxu0
  %1305 = vdwg.mxu0
  %v1306 = vmul.f32 %v1244, 0.2
  %v1307 = vmul.f32 %v1247, 0.2
  %v1308 = vmul.f32 %v1252, 0.2
  %v1309 = vmul.f32 %v1255, 0.2
  %v1310 = vmul.f32 %v1260, 0.2
  %v1311 = vmul.f32 %v1263, 0.2
  %v1312 = vmul.f32 %v1268, 0.2
  %v1313 = vmul.f32 %v1271, 0.2
  %v1314 = vmul.f32 %v1276, 0.2
  %v1315 = vmul.f32 %v1279, 0.2
  %v1316 = vmul.f32 %v1284, 0.2
  %v1317 = vmul.f32 %v1287, 0.2
  %v1318 = vmul.f32 %v1292, 0.2
  %v1319 = vmul.f32 %v1295, 0.2
  %v1320 = vmul.f32 %v1300, 0.2
  %v1321 = vmul.f32 %v1303, 0.2
  %v1322 = vmax.f32 %v1244, %v1306
  %v1323 = vmax.f32 %v1247, %v1307
  %v1324 = vmax.f32 %v1252, %v1308
  %v1325 = vmax.f32 %v1255, %v1309
  %v1326 = vmax.f32 %v1260, %v1310
  %v1327 = vmax.f32 %v1263, %v1311
  %v1328 = vmax.f32 %v1268, %v1312
  %v1329 = vmax.f32 %v1271, %v1313
  %v1330 = vmax.f32 %v1276, %v1314
  %v1331 = vmax.f32 %v1279, %v1315
  %v1332 = vmax.f32 %v1284, %v1316
  %v1333 = vmax.f32 %v1287, %v1317
  %v1334 = vmax.f32 %v1292, %v1318
  %v1335 = vmax.f32 %v1295, %v1319
  %v1336 = vmax.f32 %v1300, %v1320
  %v1337 = vmax.f32 %v1303, %v1321
  %v1338 = vpack.c.bf16 %v1323, %v1322
  %v1339 = vpack.c.bf16 %v1325, %v1324
  %v1340 = vpack.c.bf16 %v1327, %v1326
  %v1341 = vpack.c.bf16 %v1329, %v1328
  %v1342 = vpack.c.bf16 %v1331, %v1330
  %v1343 = vpack.c.bf16 %v1333, %v1332
  %v1344 = vpack.c.bf16 %v1335, %v1334
  %v1345 = vpack.c.bf16 %v1337, %v1336
  %v1354 = vunpack.c.l.b16 %v1338
  %v1355 = vunpack.c.h.b16 %v1338
  %v1356 = vunpack.c.l.b16 %v1339
  %v1357 = vunpack.c.h.b16 %v1339
  %v1358 = vunpack.c.l.b16 %v1340
  %v1359 = vunpack.c.h.b16 %v1340
  %v1360 = vunpack.c.l.b16 %v1341
  %v1361 = vunpack.c.h.b16 %v1341
  %v1362 = vunpack.c.l.b16 %v1342
  %v1363 = vunpack.c.h.b16 %v1342
  %v1364 = vunpack.c.l.b16 %v1343
  %v1365 = vunpack.c.h.b16 %v1343
  %v1366 = vunpack.c.l.b16 %v1344
  %v1367 = vunpack.c.h.b16 %v1344
  %v1368 = vunpack.c.l.b16 %v1345
  %v1369 = vunpack.c.h.b16 %v1345
  %v1370 = vpack.c.b16 %v1354, %v1354
  %v1371 = vpack.c.b16 %v1355, %v1355
  %v1372 = vpack.c.b16 %v1356, %v1356
  %v1373 = vpack.c.b16 %v1357, %v1357
  %v1374 = vpack.c.b16 %v1358, %v1358
  %v1375 = vpack.c.b16 %v1359, %v1359
  %v1376 = vpack.c.b16 %v1360, %v1360
  %v1377 = vpack.c.b16 %v1361, %v1361
  %v1378 = vpack.c.b16 %v1362, %v1362
  %v1379 = vpack.c.b16 %v1363, %v1363
  %v1380 = vpack.c.b16 %v1364, %v1364
  %v1381 = vpack.c.b16 %v1365, %v1365
  %v1382 = vpack.c.b16 %v1366, %v1366
  %v1383 = vpack.c.b16 %v1367, %v1367
  %v1384 = vpack.c.b16 %v1368, %v1368
  %v1385 = vpack.c.b16 %v1369, %v1369
  %1402 = vst [vmem:[%s3] sm:$0xf] %v1370
  %1403 = vst [vmem:[%s3 + $0x4] sm:$0xf] %v1371
  %1404 = vst [vmem:[%s3 + $0x8] sm:$0xf] %v1372
  %1405 = vst [vmem:[%s3 + $0xc] sm:$0xf] %v1373
  %1406 = vst [vmem:[%s3 + $0x10] sm:$0xf] %v1374
  %1407 = vst [vmem:[%s3 + $0x14] sm:$0xf] %v1375
  %1408 = vst [vmem:[%s3 + $0x18] sm:$0xf] %v1376
  %1409 = vst [vmem:[%s3 + $0x1c] sm:$0xf] %v1377
  %1410 = vst [vmem:[%s3 + $0x20] sm:$0xf] %v1378
  %1411 = vst [vmem:[%s3 + $0x24] sm:$0xf] %v1379
  %1412 = vst [vmem:[%s3 + $0x28] sm:$0xf] %v1380
  %1413 = vst [vmem:[%s3 + $0x2c] sm:$0xf] %v1381
  %1414 = vst [vmem:[%s3 + $0x30] sm:$0xf] %v1382
  %1415 = vst [vmem:[%s3 + $0x34] sm:$0xf] %v1383
  %1416 = vst [vmem:[%s3 + $0x38] sm:$0xf] %v1384
  %1417 = vst [vmem:[%s3 + $0x3c] sm:$0xf] %v1385
  // Predicated region
  $region14: #{_lambda_.6} parent=0 // pred_check
    _
  $region15: #{_lambda_.6} parent=0 // pred_check_branch
    %1419 = sbr.rel (0) target = $region17
  $region16: #{_lambda_.6} parent=0 // pred_region
    _
  $region17: #{_lambda_.6} parent=0 // pred_fallthru
    _
  // Predicated region
  $region18: #{_lambda_.6} parent=0 // pred_check
    _
  $region19: #{_lambda_.6} parent=0 // pred_check_branch
    %1421 = sbr.rel (0) target = $region21
  $region20: #{_lambda_.6} parent=0 // pred_region
    _
  $region21: #{_lambda_.6} parent=0 // pred_fallthru
    _

// kernel: _lambda_.7
$region0: #{_lambda_.7}
  #allocation0 [shape = 'u32[]', space=smem, size = 0x4, offset = 0x4, fixed_abs, tag = 'smem constant byte address 0x4 - core index']
  #allocation1 [shape = 'u32[144,128]{1,0:T(1,128)}', space=vmem, size = 0x12000, scoped, tag = 'internal scratch']
  %s0 = inlined_call_operand.vmem [shape: bf16[32,1152], index: 0, kind: input, shape index: {}]
  %s1 = inlined_call_operand.vmem [shape: bf16[1152,256], index: 1, kind: input, shape index: {}]
  %s2 = inlined_call_operand.vmem [shape: f32[1,256], index: 2, kind: input, shape index: {}]
  %s3 = inlined_call_operand.vmem [shape: bf16[32,256], index: 3, kind: output, shape index: {}]
  %s4 = sld [smem:[#allocation0]]
  $region22: #{_lambda_.7} parent=0
    _
  %s6 = ssub.s32 1, %s4
  %s7 = scalar_select 0, %s6, %s4
  // Predicated region
  $region2: #{_lambda_.7} parent=0 // pred_check
    _
  $region3: #{_lambda_.7} parent=0 // pred_check_branch
    %9 = sbr.rel (0) target = $region5
  $region4: #{_lambda_.7} parent=0 // pred_region
    _
  $region5: #{_lambda_.7} parent=0 // pred_fallthru
    _
  // Predicated region
  $region6: #{_lambda_.7} parent=0 // pred_check
    _
  $region7: #{_lambda_.7} parent=0 // pred_check_branch
    %11 = sbr.rel (0) target = $region9
  $region8: #{_lambda_.7} parent=0 // pred_region
    _
  $region9: #{_lambda_.7} parent=0 // pred_fallthru
    _
  // Predicated region
  $region10: #{_lambda_.7} parent=0 // pred_check
    _
  $region11: #{_lambda_.7} parent=0 // pred_check_branch
    %13 = sbr.rel (0) target = $region13
  $region12: #{_lambda_.7} parent=0 // pred_region
    _
  $region13: #{_lambda_.7} parent=0 // pred_fallthru
    _
  %v15 = vld [vmem:[%s0] sm:$0xff]
  %v16 = vld [vmem:[%s0 + $0x8] sm:$0xff]
  %v17 = vld [vmem:[%s0 + $0x10] sm:$0xff]
  %v18 = vld [vmem:[%s0 + $0x18] sm:$0xff]
  %v19 = vld [vmem:[%s0 + $0x20] sm:$0xf]
  %v20 = vld [vmem:[%s0 + $0x24] sm:$0xff]
  %v21 = vld [vmem:[%s0 + $0x2c] sm:$0xff]
  %v22 = vld [vmem:[%s0 + $0x34] sm:$0xff]
  %v23 = vld [vmem:[%s0 + $0x3c] sm:$0xff]
  %v24 = vld [vmem:[%s0 + $0x44] sm:$0xf]
  %v25 = vld [vmem:[%s0 + $0x48] sm:$0xff]
  %v26 = vld [vmem:[%s0 + $0x50] sm:$0xff]
  %v27 = vld [vmem:[%s0 + $0x58] sm:$0xff]
  %v28 = vld [vmem:[%s0 + $0x60] sm:$0xff]
  %v29 = vld [vmem:[%s0 + $0x68] sm:$0xf]
  %v30 = vld [vmem:[%s0 + $0x6c] sm:$0xff]
  %v31 = vld [vmem:[%s0 + $0x74] sm:$0xff]
  %v32 = vld [vmem:[%s0 + $0x7c] sm:$0xff]
  %v33 = vld [vmem:[%s0 + $0x84] sm:$0xff]
  %v34 = vld [vmem:[%s0 + $0x8c] sm:$0xf]
  %v35 = vld [vmem:[%s1] sm:$0xff]
  %v36 = vld [vmem:[%s1 + $0x8] sm:$0xff]
  %v37 = vld [vmem:[%s1 + $0x10] sm:$0xff]
  %v38 = vld [vmem:[%s1 + $0x18] sm:$0xff]
  %v39 = vld [vmem:[%s1 + $0x20] sm:$0xff]
  %v40 = vld [vmem:[%s1 + $0x28] sm:$0xff]
  %v41 = vld [vmem:[%s1 + $0x30] sm:$0xff]
  %v42 = vld [vmem:[%s1 + $0x38] sm:$0xff]
  %v43 = vld [vmem:[%s1 + $0x40] sm:$0xff]
  %v44 = vld [vmem:[%s1 + $0x48] sm:$0xff]
  %v45 = vld [vmem:[%s1 + $0x50] sm:$0xff]
  %v46 = vld [vmem:[%s1 + $0x58] sm:$0xff]
  %v47 = vld [vmem:[%s1 + $0x60] sm:$0xff]
  %v48 = vld [vmem:[%s1 + $0x68] sm:$0xff]
  %v49 = vld [vmem:[%s1 + $0x70] sm:$0xff]
  %v50 = vld [vmem:[%s1 + $0x78] sm:$0xff]
  %v51 = vld [vmem:[%s1 + $0x80] sm:$0xff]
  %v52 = vld [vmem:[%s1 + $0x88] sm:$0xff]
  %v53 = vld [vmem:[%s1 + $0x90] sm:$0xff]
  %v54 = vld [vmem:[%s1 + $0x98] sm:$0xff]
  %v55 = vld [vmem:[%s1 + $0xa0] sm:$0xff]
  %v56 = vld [vmem:[%s1 + $0xa8] sm:$0xff]
  %v57 = vld [vmem:[%s1 + $0xb0] sm:$0xff]
  %v58 = vld [vmem:[%s1 + $0xb8] sm:$0xff]
  %v59 = vld [vmem:[%s1 + $0xc0] sm:$0xff]
  %v60 = vld [vmem:[%s1 + $0xc8] sm:$0xff]
  %v61 = vld [vmem:[%s1 + $0xd0] sm:$0xff]
  %v62 = vld [vmem:[%s1 + $0xd8] sm:$0xff]
  %v63 = vld [vmem:[%s1 + $0xe0] sm:$0xff]
  %v64 = vld [vmem:[%s1 + $0xe8] sm:$0xff]
  %v65 = vld [vmem:[%s1 + $0xf0] sm:$0xff]
  %v66 = vld [vmem:[%s1 + $0xf8] sm:$0xff]
  %v67 = vld [vmem:[%s1 + $0x100] sm:$0xff]
  %v68 = vld [vmem:[%s1 + $0x108] sm:$0xff]
  %v69 = vld [vmem:[%s1 + $0x110] sm:$0xff]
  %v70 = vld [vmem:[%s1 + $0x118] sm:$0xff]
  %v71 = vld [vmem:[%s1 + $0x120] sm:$0xff]
  %v72 = vld [vmem:[%s1 + $0x128] sm:$0xff]
  %v73 = vld [vmem:[%s1 + $0x130] sm:$0xff]
  %v74 = vld [vmem:[%s1 + $0x138] sm:$0xff]
  %v75 = vld [vmem:[%s1 + $0x140] sm:$0xff]
  %v76 = vld [vmem:[%s1 + $0x148] sm:$0xff]
  %v77 = vld [vmem:[%s1 + $0x150] sm:$0xff]
  %v78 = vld [vmem:[%s1 + $0x158] sm:$0xff]
  %v79 = vld [vmem:[%s1 + $0x160] sm:$0xff]
  %v80 = vld [vmem:[%s1 + $0x168] sm:$0xff]
  %v81 = vld [vmem:[%s1 + $0x170] sm:$0xff]
  %v82 = vld [vmem:[%s1 + $0x178] sm:$0xff]
  %v83 = vld [vmem:[%s1 + $0x180] sm:$0xff]
  %v84 = vld [vmem:[%s1 + $0x188] sm:$0xff]
  %v85 = vld [vmem:[%s1 + $0x190] sm:$0xff]
  %v86 = vld [vmem:[%s1 + $0x198] sm:$0xff]
  %v87 = vld [vmem:[%s1 + $0x1a0] sm:$0xff]
  %v88 = vld [vmem:[%s1 + $0x1a8] sm:$0xff]
  %v89 = vld [vmem:[%s1 + $0x1b0] sm:$0xff]
  %v90 = vld [vmem:[%s1 + $0x1b8] sm:$0xff]
  %v91 = vld [vmem:[%s1 + $0x1c0] sm:$0xff]
  %v92 = vld [vmem:[%s1 + $0x1c8] sm:$0xff]
  %v93 = vld [vmem:[%s1 + $0x1d0] sm:$0xff]
  %v94 = vld [vmem:[%s1 + $0x1d8] sm:$0xff]
  %v95 = vld [vmem:[%s1 + $0x1e0] sm:$0xff]
  %v96 = vld [vmem:[%s1 + $0x1e8] sm:$0xff]
  %v97 = vld [vmem:[%s1 + $0x1f0] sm:$0xff]
  %v98 = vld [vmem:[%s1 + $0x1f8] sm:$0xff]
  %v99 = vld [vmem:[%s1 + $0x200] sm:$0xff]
  %v100 = vld [vmem:[%s1 + $0x208] sm:$0xff]
  %v101 = vld [vmem:[%s1 + $0x210] sm:$0xff]
  %v102 = vld [vmem:[%s1 + $0x218] sm:$0xff]
  %v103 = vld [vmem:[%s1 + $0x220] sm:$0xff]
  %v104 = vld [vmem:[%s1 + $0x228] sm:$0xff]
  %v105 = vld [vmem:[%s1 + $0x230] sm:$0xff]
  %v106 = vld [vmem:[%s1 + $0x238] sm:$0xff]
  %v107 = vld [vmem:[%s1 + $0x240] sm:$0xff]
  %v108 = vld [vmem:[%s1 + $0x248] sm:$0xff]
  %v109 = vld [vmem:[%s1 + $0x250] sm:$0xff]
  %v110 = vld [vmem:[%s1 + $0x258] sm:$0xff]
  %v111 = vld [vmem:[%s1 + $0x260] sm:$0xff]
  %v112 = vld [vmem:[%s1 + $0x268] sm:$0xff]
  %v113 = vld [vmem:[%s1 + $0x270] sm:$0xff]
  %v114 = vld [vmem:[%s1 + $0x278] sm:$0xff]
  %v115 = vld [vmem:[%s1 + $0x280] sm:$0xff]
  %v116 = vld [vmem:[%s1 + $0x288] sm:$0xff]
  %v117 = vld [vmem:[%s1 + $0x290] sm:$0xff]
  %v118 = vld [vmem:[%s1 + $0x298] sm:$0xff]
  %v119 = vld [vmem:[%s1 + $0x2a0] sm:$0xff]
  %v120 = vld [vmem:[%s1 + $0x2a8] sm:$0xff]
  %v121 = vld [vmem:[%s1 + $0x2b0] sm:$0xff]
  %v122 = vld [vmem:[%s1 + $0x2b8] sm:$0xff]
  %v123 = vld [vmem:[%s1 + $0x2c0] sm:$0xff]
  %v124 = vld [vmem:[%s1 + $0x2c8] sm:$0xff]
  %v125 = vld [vmem:[%s1 + $0x2d0] sm:$0xff]
  %v126 = vld [vmem:[%s1 + $0x2d8] sm:$0xff]
  %v127 = vld [vmem:[%s1 + $0x2e0] sm:$0xff]
  %v128 = vld [vmem:[%s1 + $0x2e8] sm:$0xff]
  %v129 = vld [vmem:[%s1 + $0x2f0] sm:$0xff]
  %v130 = vld [vmem:[%s1 + $0x2f8] sm:$0xff]
  %v131 = vld [vmem:[%s1 + $0x300] sm:$0xff]
  %v132 = vld [vmem:[%s1 + $0x308] sm:$0xff]
  %v133 = vld [vmem:[%s1 + $0x310] sm:$0xff]
  %v134 = vld [vmem:[%s1 + $0x318] sm:$0xff]
  %v135 = vld [vmem:[%s1 + $0x320] sm:$0xff]
  %v136 = vld [vmem:[%s1 + $0x328] sm:$0xff]
  %v137 = vld [vmem:[%s1 + $0x330] sm:$0xff]
  %v138 = vld [vmem:[%s1 + $0x338] sm:$0xff]
  %v139 = vld [vmem:[%s1 + $0x340] sm:$0xff]
  %v140 = vld [vmem:[%s1 + $0x348] sm:$0xff]
  %v141 = vld [vmem:[%s1 + $0x350] sm:$0xff]
  %v142 = vld [vmem:[%s1 + $0x358] sm:$0xff]
  %v143 = vld [vmem:[%s1 + $0x360] sm:$0xff]
  %v144 = vld [vmem:[%s1 + $0x368] sm:$0xff]
  %v145 = vld [vmem:[%s1 + $0x370] sm:$0xff]
  %v146 = vld [vmem:[%s1 + $0x378] sm:$0xff]
  %v147 = vld [vmem:[%s1 + $0x380] sm:$0xff]
  %v148 = vld [vmem:[%s1 + $0x388] sm:$0xff]
  %v149 = vld [vmem:[%s1 + $0x390] sm:$0xff]
  %v150 = vld [vmem:[%s1 + $0x398] sm:$0xff]
  %v151 = vld [vmem:[%s1 + $0x3a0] sm:$0xff]
  %v152 = vld [vmem:[%s1 + $0x3a8] sm:$0xff]
  %v153 = vld [vmem:[%s1 + $0x3b0] sm:$0xff]
  %v154 = vld [vmem:[%s1 + $0x3b8] sm:$0xff]
  %v155 = vld [vmem:[%s1 + $0x3c0] sm:$0xff]
  %v156 = vld [vmem:[%s1 + $0x3c8] sm:$0xff]
  %v157 = vld [vmem:[%s1 + $0x3d0] sm:$0xff]
  %v158 = vld [vmem:[%s1 + $0x3d8] sm:$0xff]
  %v159 = vld [vmem:[%s1 + $0x3e0] sm:$0xff]
  %v160 = vld [vmem:[%s1 + $0x3e8] sm:$0xff]
  %v161 = vld [vmem:[%s1 + $0x3f0] sm:$0xff]
  %v162 = vld [vmem:[%s1 + $0x3f8] sm:$0xff]
  %v163 = vld [vmem:[%s1 + $0x400] sm:$0xff]
  %v164 = vld [vmem:[%s1 + $0x408] sm:$0xff]
  %v165 = vld [vmem:[%s1 + $0x410] sm:$0xff]
  %v166 = vld [vmem:[%s1 + $0x418] sm:$0xff]
  %v167 = vld [vmem:[%s1 + $0x420] sm:$0xff]
  %v168 = vld [vmem:[%s1 + $0x428] sm:$0xff]
  %v169 = vld [vmem:[%s1 + $0x430] sm:$0xff]
  %v170 = vld [vmem:[%s1 + $0x438] sm:$0xff]
  %v171 = vld [vmem:[%s1 + $0x440] sm:$0xff]
  %v172 = vld [vmem:[%s1 + $0x448] sm:$0xff]
  %v173 = vld [vmem:[%s1 + $0x450] sm:$0xff]
  %v174 = vld [vmem:[%s1 + $0x458] sm:$0xff]
  %v175 = vld [vmem:[%s1 + $0x460] sm:$0xff]
  %v176 = vld [vmem:[%s1 + $0x468] sm:$0xff]
  %v177 = vld [vmem:[%s1 + $0x470] sm:$0xff]
  %v178 = vld [vmem:[%s1 + $0x478] sm:$0xff]
  %v179 = vld [vmem:[%s2] sm:$0x3]
  %v181 = vlaneseq
  %v182 = vshrl.u32 %v181, 7
  %v183 = vsub.s32 0, %v182
  %v184 = vrot.slane %v179, %v183
  %v185 = vlaneseq
  %v186 = vshrl.u32 %v185, 7
  %v187 = vsub.s32 1, %v186
  %v188 = vrot.slane %v179, %v187
  %v211 = vunpack.c.l.b16 %v15
  %v212 = vunpack.c.h.b16 %v15
  %v213 = vunpack.c.l.b16 %v16
  %v214 = vunpack.c.h.b16 %v16
  %v215 = vunpack.c.l.b16 %v17
  %v216 = vunpack.c.h.b16 %v17
  %v217 = vunpack.c.l.b16 %v18
  %v218 = vunpack.c.h.b16 %v18
  %v219 = vunpack.c.l.b16 %v19
  %v220 = vunpack.c.l.b16 %v20
  %v221 = vunpack.c.h.b16 %v20
  %v222 = vunpack.c.l.b16 %v21
  %v223 = vunpack.c.h.b16 %v21
  %v224 = vunpack.c.l.b16 %v22
  %v225 = vunpack.c.h.b16 %v22
  %v226 = vunpack.c.l.b16 %v23
  %v227 = vunpack.c.h.b16 %v23
  %v228 = vunpack.c.l.b16 %v24
  %v229 = vunpack.c.l.b16 %v25
  %v230 = vunpack.c.h.b16 %v25
  %v231 = vunpack.c.l.b16 %v26
  %v232 = vunpack.c.h.b16 %v26
  %v233 = vunpack.c.l.b16 %v27
  %v234 = vunpack.c.h.b16 %v27
  %v235 = vunpack.c.l.b16 %v28
  %v236 = vunpack.c.h.b16 %v28
  %v237 = vunpack.c.l.b16 %v29
  %v238 = vunpack.c.l.b16 %v30
  %v239 = vunpack.c.h.b16 %v30
  %v240 = vunpack.c.l.b16 %v31
  %v241 = vunpack.c.h.b16 %v31
  %v242 = vunpack.c.l.b16 %v32
  %v243 = vunpack.c.h.b16 %v32
  %v244 = vunpack.c.l.b16 %v33
  %v245 = vunpack.c.h.b16 %v33
  %v246 = vunpack.c.l.b16 %v34
  %v247 = vpack.c.b16 %v220, %v211
  %v248 = vpack.c.b16 %v221, %v212
  %v249 = vpack.c.b16 %v222, %v213
  %v250 = vpack.c.b16 %v223, %v214
  %v251 = vpack.c.b16 %v224, %v215
  %v252 = vpack.c.b16 %v225, %v216
  %v253 = vpack.c.b16 %v226, %v217
  %v254 = vpack.c.b16 %v227, %v218
  %v255 = vpack.c.b16 %v228, %v219
  %v256 = vpack.c.b16 %v238, %v229
  %v257 = vpack.c.b16 %v239, %v230
  %v258 = vpack.c.b16 %v240, %v231
  %v259 = vpack.c.b16 %v241, %v232
  %v260 = vpack.c.b16 %v242, %v233
  %v261 = vpack.c.b16 %v243, %v234
  %v262 = vpack.c.b16 %v244, %v235
  %v263 = vpack.c.b16 %v245, %v236
  %v264 = vpack.c.b16 %v246, %v237
  %v427 = vunpack.c.l.b16 %v35
  %v428 = vunpack.c.h.b16 %v35
  %v429 = vunpack.c.l.b16 %v36
  %v430 = vunpack.c.h.b16 %v36
  %v431 = vunpack.c.l.b16 %v37
  %v432 = vunpack.c.h.b16 %v37
  %v433 = vunpack.c.l.b16 %v38
  %v434 = vunpack.c.h.b16 %v38
  %v435 = vunpack.c.l.b16 %v39
  %v436 = vunpack.c.h.b16 %v39
  %v437 = vunpack.c.l.b16 %v40
  %v438 = vunpack.c.h.b16 %v40
  %v439 = vunpack.c.l.b16 %v41
  %v440 = vunpack.c.h.b16 %v41
  %v441 = vunpack.c.l.b16 %v42
  %v442 = vunpack.c.h.b16 %v42
  %v443 = vunpack.c.l.b16 %v43
  %v444 = vunpack.c.h.b16 %v43
  %v445 = vunpack.c.l.b16 %v44
  %v446 = vunpack.c.h.b16 %v44
  %v447 = vunpack.c.l.b16 %v45
  %v448 = vunpack.c.h.b16 %v45
  %v449 = vunpack.c.l.b16 %v46
  %v450 = vunpack.c.h.b16 %v46
  %v451 = vunpack.c.l.b16 %v47
  %v452 = vunpack.c.h.b16 %v47
  %v453 = vunpack.c.l.b16 %v48
  %v454 = vunpack.c.h.b16 %v48
  %v455 = vunpack.c.l.b16 %v49
  %v456 = vunpack.c.h.b16 %v49
  %v457 = vunpack.c.l.b16 %v50
  %v458 = vunpack.c.h.b16 %v50
  %v459 = vunpack.c.l.b16 %v51
  %v460 = vunpack.c.h.b16 %v51
  %v461 = vunpack.c.l.b16 %v52
  %v462 = vunpack.c.h.b16 %v52
  %v463 = vunpack.c.l.b16 %v53
  %v464 = vunpack.c.h.b16 %v53
  %v465 = vunpack.c.l.b16 %v54
  %v466 = vunpack.c.h.b16 %v54
  %v467 = vunpack.c.l.b16 %v55
  %v468 = vunpack.c.h.b16 %v55
  %v469 = vunpack.c.l.b16 %v56
  %v470 = vunpack.c.h.b16 %v56
  %v471 = vunpack.c.l.b16 %v57
  %v472 = vunpack.c.h.b16 %v57
  %v473 = vunpack.c.l.b16 %v58
  %v474 = vunpack.c.h.b16 %v58
  %v475 = vunpack.c.l.b16 %v59
  %v476 = vunpack.c.h.b16 %v59
  %v477 = vunpack.c.l.b16 %v60
  %v478 = vunpack.c.h.b16 %v60
  %v479 = vunpack.c.l.b16 %v61
  %v480 = vunpack.c.h.b16 %v61
  %v481 = vunpack.c.l.b16 %v62
  %v482 = vunpack.c.h.b16 %v62
  %v483 = vunpack.c.l.b16 %v63
  %v484 = vunpack.c.h.b16 %v63
  %v485 = vunpack.c.l.b16 %v64
  %v486 = vunpack.c.h.b16 %v64
  %v487 = vunpack.c.l.b16 %v65
  %v488 = vunpack.c.h.b16 %v65
  %v489 = vunpack.c.l.b16 %v66
  %v490 = vunpack.c.h.b16 %v66
  %v491 = vunpack.c.l.b16 %v67
  %v492 = vunpack.c.h.b16 %v67
  %v493 = vunpack.c.l.b16 %v68
  %v494 = vunpack.c.h.b16 %v68
  %v495 = vunpack.c.l.b16 %v69
  %v496 = vunpack.c.h.b16 %v69
  %v497 = vunpack.c.l.b16 %v70
  %v498 = vunpack.c.h.b16 %v70
  %v499 = vunpack.c.l.b16 %v71
  %v500 = vunpack.c.h.b16 %v71
  %v501 = vunpack.c.l.b16 %v72
  %v502 = vunpack.c.h.b16 %v72
  %v503 = vunpack.c.l.b16 %v73
  %v504 = vunpack.c.h.b16 %v73
  %v505 = vunpack.c.l.b16 %v74
  %v506 = vunpack.c.h.b16 %v74
  %v507 = vunpack.c.l.b16 %v75
  %v508 = vunpack.c.h.b16 %v75
  %v509 = vunpack.c.l.b16 %v76
  %v510 = vunpack.c.h.b16 %v76
  %v511 = vunpack.c.l.b16 %v77
  %v512 = vunpack.c.h.b16 %v77
  %v513 = vunpack.c.l.b16 %v78
  %v514 = vunpack.c.h.b16 %v78
  %v515 = vunpack.c.l.b16 %v79
  %v516 = vunpack.c.h.b16 %v79
  %v517 = vunpack.c.l.b16 %v80
  %v518 = vunpack.c.h.b16 %v80
  %v519 = vunpack.c.l.b16 %v81
  %v520 = vunpack.c.h.b16 %v81
  %v521 = vunpack.c.l.b16 %v82
  %v522 = vunpack.c.h.b16 %v82
  %v523 = vunpack.c.l.b16 %v83
  %v524 = vunpack.c.h.b16 %v83
  %v525 = vunpack.c.l.b16 %v84
  %v526 = vunpack.c.h.b16 %v84
  %v527 = vunpack.c.l.b16 %v85
  %v528 = vunpack.c.h.b16 %v85
  %v529 = vunpack.c.l.b16 %v86
  %v530 = vunpack.c.h.b16 %v86
  %v531 = vunpack.c.l.b16 %v87
  %v532 = vunpack.c.h.b16 %v87
  %v533 = vunpack.c.l.b16 %v88
  %v534 = vunpack.c.h.b16 %v88
  %v535 = vunpack.c.l.b16 %v89
  %v536 = vunpack.c.h.b16 %v89
  %v537 = vunpack.c.l.b16 %v90
  %v538 = vunpack.c.h.b16 %v90
  %v539 = vunpack.c.l.b16 %v91
  %v540 = vunpack.c.h.b16 %v91
  %v541 = vunpack.c.l.b16 %v92
  %v542 = vunpack.c.h.b16 %v92
  %v543 = vunpack.c.l.b16 %v93
  %v544 = vunpack.c.h.b16 %v93
  %v545 = vunpack.c.l.b16 %v94
  %v546 = vunpack.c.h.b16 %v94
  %v547 = vunpack.c.l.b16 %v95
  %v548 = vunpack.c.h.b16 %v95
  %v549 = vunpack.c.l.b16 %v96
  %v550 = vunpack.c.h.b16 %v96
  %v551 = vunpack.c.l.b16 %v97
  %v552 = vunpack.c.h.b16 %v97
  %v553 = vunpack.c.l.b16 %v98
  %v554 = vunpack.c.h.b16 %v98
  %v555 = vunpack.c.l.b16 %v99
  %v556 = vunpack.c.h.b16 %v99
  %v557 = vunpack.c.l.b16 %v100
  %v558 = vunpack.c.h.b16 %v100
  %v559 = vunpack.c.l.b16 %v101
  %v560 = vunpack.c.h.b16 %v101
  %v561 = vunpack.c.l.b16 %v102
  %v562 = vunpack.c.h.b16 %v102
  %v563 = vunpack.c.l.b16 %v103
  %v564 = vunpack.c.h.b16 %v103
  %v565 = vunpack.c.l.b16 %v104
  %v566 = vunpack.c.h.b16 %v104
  %v567 = vunpack.c.l.b16 %v105
  %v568 = vunpack.c.h.b16 %v105
  %v569 = vunpack.c.l.b16 %v106
  %v570 = vunpack.c.h.b16 %v106
  %v571 = vunpack.c.l.b16 %v107
  %v572 = vunpack.c.h.b16 %v107
  %v573 = vunpack.c.l.b16 %v108
  %v574 = vunpack.c.h.b16 %v108
  %v575 = vunpack.c.l.b16 %v109
  %v576 = vunpack.c.h.b16 %v109
  %v577 = vunpack.c.l.b16 %v110
  %v578 = vunpack.c.h.b16 %v110
  %v579 = vunpack.c.l.b16 %v111
  %v580 = vunpack.c.h.b16 %v111
  %v581 = vunpack.c.l.b16 %v112
  %v582 = vunpack.c.h.b16 %v112
  %v583 = vunpack.c.l.b16 %v113
  %v584 = vunpack.c.h.b16 %v113
  %v585 = vunpack.c.l.b16 %v114
  %v586 = vunpack.c.h.b16 %v114
  %v587 = vunpack.c.l.b16 %v115
  %v588 = vunpack.c.h.b16 %v115
  %v589 = vunpack.c.l.b16 %v116
  %v590 = vunpack.c.h.b16 %v116
  %v591 = vunpack.c.l.b16 %v117
  %v592 = vunpack.c.h.b16 %v117
  %v593 = vunpack.c.l.b16 %v118
  %v594 = vunpack.c.h.b16 %v118
  %v595 = vunpack.c.l.b16 %v119
  %v596 = vunpack.c.h.b16 %v119
  %v597 = vunpack.c.l.b16 %v120
  %v598 = vunpack.c.h.b16 %v120
  %v599 = vunpack.c.l.b16 %v121
  %v600 = vunpack.c.h.b16 %v121
  %v601 = vunpack.c.l.b16 %v122
  %v602 = vunpack.c.h.b16 %v122
  %v603 = vunpack.c.l.b16 %v123
  %v604 = vunpack.c.h.b16 %v123
  %v605 = vunpack.c.l.b16 %v124
  %v606 = vunpack.c.h.b16 %v124
  %v607 = vunpack.c.l.b16 %v125
  %v608 = vunpack.c.h.b16 %v125
  %v609 = vunpack.c.l.b16 %v126
  %v610 = vunpack.c.h.b16 %v126
  %v611 = vunpack.c.l.b16 %v127
  %v612 = vunpack.c.h.b16 %v127
  %v613 = vunpack.c.l.b16 %v128
  %v614 = vunpack.c.h.b16 %v128
  %v615 = vunpack.c.l.b16 %v129
  %v616 = vunpack.c.h.b16 %v129
  %v617 = vunpack.c.l.b16 %v130
  %v618 = vunpack.c.h.b16 %v130
  %v619 = vunpack.c.l.b16 %v131
  %v620 = vunpack.c.h.b16 %v131
  %v621 = vunpack.c.l.b16 %v132
  %v622 = vunpack.c.h.b16 %v132
  %v623 = vunpack.c.l.b16 %v133
  %v624 = vunpack.c.h.b16 %v133
  %v625 = vunpack.c.l.b16 %v134
  %v626 = vunpack.c.h.b16 %v134
  %v627 = vunpack.c.l.b16 %v135
  %v628 = vunpack.c.h.b16 %v135
  %v629 = vunpack.c.l.b16 %v136
  %v630 = vunpack.c.h.b16 %v136
  %v631 = vunpack.c.l.b16 %v137
  %v632 = vunpack.c.h.b16 %v137
  %v633 = vunpack.c.l.b16 %v138
  %v634 = vunpack.c.h.b16 %v138
  %v635 = vunpack.c.l.b16 %v139
  %v636 = vunpack.c.h.b16 %v139
  %v637 = vunpack.c.l.b16 %v140
  %v638 = vunpack.c.h.b16 %v140
  %v639 = vunpack.c.l.b16 %v141
  %v640 = vunpack.c.h.b16 %v141
  %v641 = vunpack.c.l.b16 %v142
  %v642 = vunpack.c.h.b16 %v142
  %v643 = vunpack.c.l.b16 %v143
  %v644 = vunpack.c.h.b16 %v143
  %v645 = vunpack.c.l.b16 %v144
  %v646 = vunpack.c.h.b16 %v144
  %v647 = vunpack.c.l.b16 %v145
  %v648 = vunpack.c.h.b16 %v145
  %v649 = vunpack.c.l.b16 %v146
  %v650 = vunpack.c.h.b16 %v146
  %v651 = vunpack.c.l.b16 %v147
  %v652 = vunpack.c.h.b16 %v147
  %v653 = vunpack.c.l.b16 %v148
  %v654 = vunpack.c.h.b16 %v148
  %v655 = vunpack.c.l.b16 %v149
  %v656 = vunpack.c.h.b16 %v149
  %v657 = vunpack.c.l.b16 %v150
  %v658 = vunpack.c.h.b16 %v150
  %v659 = vunpack.c.l.b16 %v151
  %v660 = vunpack.c.h.b16 %v151
  %v661 = vunpack.c.l.b16 %v152
  %v662 = vunpack.c.h.b16 %v152
  %v663 = vunpack.c.l.b16 %v153
  %v664 = vunpack.c.h.b16 %v153
  %v665 = vunpack.c.l.b16 %v154
  %v666 = vunpack.c.h.b16 %v154
  %v667 = vunpack.c.l.b16 %v155
  %v668 = vunpack.c.h.b16 %v155
  %v669 = vunpack.c.l.b16 %v156
  %v670 = vunpack.c.h.b16 %v156
  %v671 = vunpack.c.l.b16 %v157
  %v672 = vunpack.c.h.b16 %v157
  %v673 = vunpack.c.l.b16 %v158
  %v674 = vunpack.c.h.b16 %v158
  %v675 = vunpack.c.l.b16 %v159
  %v676 = vunpack.c.h.b16 %v159
  %v677 = vunpack.c.l.b16 %v160
  %v678 = vunpack.c.h.b16 %v160
  %v679 = vunpack.c.l.b16 %v161
  %v680 = vunpack.c.h.b16 %v161
  %v681 = vunpack.c.l.b16 %v162
  %v682 = vunpack.c.h.b16 %v162
  %v683 = vunpack.c.l.b16 %v163
  %v684 = vunpack.c.h.b16 %v163
  %v685 = vunpack.c.l.b16 %v164
  %v686 = vunpack.c.h.b16 %v164
  %v687 = vunpack.c.l.b16 %v165
  %v688 = vunpack.c.h.b16 %v165
  %v689 = vunpack.c.l.b16 %v166
  %v690 = vunpack.c.h.b16 %v166
  %v691 = vunpack.c.l.b16 %v167
  %v692 = vunpack.c.h.b16 %v167
  %v693 = vunpack.c.l.b16 %v168
  %v694 = vunpack.c.h.b16 %v168
  %v695 = vunpack.c.l.b16 %v169
  %v696 = vunpack.c.h.b16 %v169
  %v697 = vunpack.c.l.b16 %v170
  %v698 = vunpack.c.h.b16 %v170
  %v699 = vunpack.c.l.b16 %v171
  %v700 = vunpack.c.h.b16 %v171
  %v701 = vunpack.c.l.b16 %v172
  %v702 = vunpack.c.h.b16 %v172
  %v703 = vunpack.c.l.b16 %v173
  %v704 = vunpack.c.h.b16 %v173
  %v705 = vunpack.c.l.b16 %v174
  %v706 = vunpack.c.h.b16 %v174
  %v707 = vunpack.c.l.b16 %v175
  %v708 = vunpack.c.h.b16 %v175
  %v709 = vunpack.c.l.b16 %v176
  %v710 = vunpack.c.h.b16 %v176
  %v711 = vunpack.c.l.b16 %v177
  %v712 = vunpack.c.h.b16 %v177
  %v713 = vunpack.c.l.b16 %v178
  %v714 = vunpack.c.h.b16 %v178
  %v715 = vpack.c.b16 %v429, %v427
  %v716 = vpack.c.b16 %v430, %v428
  %v717 = vpack.c.b16 %v433, %v431
  %v718 = vpack.c.b16 %v434, %v432
  %v719 = vpack.c.b16 %v437, %v435
  %v720 = vpack.c.b16 %v438, %v436
  %v721 = vpack.c.b16 %v441, %v439
  %v722 = vpack.c.b16 %v442, %v440
  %v723 = vpack.c.b16 %v445, %v443
  %v724 = vpack.c.b16 %v446, %v444
  %v725 = vpack.c.b16 %v449, %v447
  %v726 = vpack.c.b16 %v450, %v448
  %v727 = vpack.c.b16 %v453, %v451
  %v728 = vpack.c.b16 %v454, %v452
  %v729 = vpack.c.b16 %v457, %v455
  %v730 = vpack.c.b16 %v458, %v456
  %v731 = vpack.c.b16 %v461, %v459
  %v732 = vpack.c.b16 %v462, %v460
  %v733 = vpack.c.b16 %v465, %v463
  %v734 = vpack.c.b16 %v466, %v464
  %v735 = vpack.c.b16 %v469, %v467
  %v736 = vpack.c.b16 %v470, %v468
  %v737 = vpack.c.b16 %v473, %v471
  %v738 = vpack.c.b16 %v474, %v472
  %v739 = vpack.c.b16 %v477, %v475
  %v740 = vpack.c.b16 %v478, %v476
  %v741 = vpack.c.b16 %v481, %v479
  %v742 = vpack.c.b16 %v482, %v480
  %v743 = vpack.c.b16 %v485, %v483
  %v744 = vpack.c.b16 %v486, %v484
  %v745 = vpack.c.b16 %v489, %v487
  %v746 = vpack.c.b16 %v490, %v488
  %v747 = vpack.c.b16 %v493, %v491
  %v748 = vpack.c.b16 %v494, %v492
  %v749 = vpack.c.b16 %v497, %v495
  %v750 = vpack.c.b16 %v498, %v496
  %v751 = vpack.c.b16 %v501, %v499
  %v752 = vpack.c.b16 %v502, %v500
  %v753 = vpack.c.b16 %v505, %v503
  %v754 = vpack.c.b16 %v506, %v504
  %v755 = vpack.c.b16 %v509, %v507
  %v756 = vpack.c.b16 %v510, %v508
  %v757 = vpack.c.b16 %v513, %v511
  %v758 = vpack.c.b16 %v514, %v512
  %v759 = vpack.c.b16 %v517, %v515
  %v760 = vpack.c.b16 %v518, %v516
  %v761 = vpack.c.b16 %v521, %v519
  %v762 = vpack.c.b16 %v522, %v520
  %v763 = vpack.c.b16 %v525, %v523
  %v764 = vpack.c.b16 %v526, %v524
  %v765 = vpack.c.b16 %v529, %v527
  %v766 = vpack.c.b16 %v530, %v528
  %v767 = vpack.c.b16 %v533, %v531
  %v768 = vpack.c.b16 %v534, %v532
  %v769 = vpack.c.b16 %v537, %v535
  %v770 = vpack.c.b16 %v538, %v536
  %v771 = vpack.c.b16 %v541, %v539
  %v772 = vpack.c.b16 %v542, %v540
  %v773 = vpack.c.b16 %v545, %v543
  %v774 = vpack.c.b16 %v546, %v544
  %v775 = vpack.c.b16 %v549, %v547
  %v776 = vpack.c.b16 %v550, %v548
  %v777 = vpack.c.b16 %v553, %v551
  %v778 = vpack.c.b16 %v554, %v552
  %v779 = vpack.c.b16 %v557, %v555
  %v780 = vpack.c.b16 %v558, %v556
  %v781 = vpack.c.b16 %v561, %v559
  %v782 = vpack.c.b16 %v562, %v560
  %v783 = vpack.c.b16 %v565, %v563
  %v784 = vpack.c.b16 %v566, %v564
  %v785 = vpack.c.b16 %v569, %v567
  %v786 = vpack.c.b16 %v570, %v568
  %v787 = vpack.c.b16 %v573, %v571
  %v788 = vpack.c.b16 %v574, %v572
  %v789 = vpack.c.b16 %v577, %v575
  %v790 = vpack.c.b16 %v578, %v576
  %v791 = vpack.c.b16 %v581, %v579
  %v792 = vpack.c.b16 %v582, %v580
  %v793 = vpack.c.b16 %v585, %v583
  %v794 = vpack.c.b16 %v586, %v584
  %v795 = vpack.c.b16 %v589, %v587
  %v796 = vpack.c.b16 %v590, %v588
  %v797 = vpack.c.b16 %v593, %v591
  %v798 = vpack.c.b16 %v594, %v592
  %v799 = vpack.c.b16 %v597, %v595
  %v800 = vpack.c.b16 %v598, %v596
  %v801 = vpack.c.b16 %v601, %v599
  %v802 = vpack.c.b16 %v602, %v600
  %v803 = vpack.c.b16 %v605, %v603
  %v804 = vpack.c.b16 %v606, %v604
  %v805 = vpack.c.b16 %v609, %v607
  %v806 = vpack.c.b16 %v610, %v608
  %v807 = vpack.c.b16 %v613, %v611
  %v808 = vpack.c.b16 %v614, %v612
  %v809 = vpack.c.b16 %v617, %v615
  %v810 = vpack.c.b16 %v618, %v616
  %v811 = vpack.c.b16 %v621, %v619
  %v812 = vpack.c.b16 %v622, %v620
  %v813 = vpack.c.b16 %v625, %v623
  %v814 = vpack.c.b16 %v626, %v624
  %v815 = vpack.c.b16 %v629, %v627
  %v816 = vpack.c.b16 %v630, %v628
  %v817 = vpack.c.b16 %v633, %v631
  %v818 = vpack.c.b16 %v634, %v632
  %v819 = vpack.c.b16 %v637, %v635
  %v820 = vpack.c.b16 %v638, %v636
  %v821 = vpack.c.b16 %v641, %v639
  %v822 = vpack.c.b16 %v642, %v640
  %v823 = vpack.c.b16 %v645, %v643
  %v824 = vpack.c.b16 %v646, %v644
  %v825 = vpack.c.b16 %v649, %v647
  %v826 = vpack.c.b16 %v650, %v648
  %v827 = vpack.c.b16 %v653, %v651
  %v828 = vpack.c.b16 %v654, %v652
  %v829 = vpack.c.b16 %v657, %v655
  %v830 = vpack.c.b16 %v658, %v656
  %v831 = vpack.c.b16 %v661, %v659
  %v832 = vpack.c.b16 %v662, %v660
  %v833 = vpack.c.b16 %v665, %v663
  %v834 = vpack.c.b16 %v666, %v664
  %v835 = vpack.c.b16 %v669, %v667
  %v836 = vpack.c.b16 %v670, %v668
  %v837 = vpack.c.b16 %v673, %v671
  %v838 = vpack.c.b16 %v674, %v672
  %v839 = vpack.c.b16 %v677, %v675
  %v840 = vpack.c.b16 %v678, %v676
  %v841 = vpack.c.b16 %v681, %v679
  %v842 = vpack.c.b16 %v682, %v680
  %v843 = vpack.c.b16 %v685, %v683
  %v844 = vpack.c.b16 %v686, %v684
  %v845 = vpack.c.b16 %v689, %v687
  %v846 = vpack.c.b16 %v690, %v688
  %v847 = vpack.c.b16 %v693, %v691
  %v848 = vpack.c.b16 %v694, %v692
  %v849 = vpack.c.b16 %v697, %v695
  %v850 = vpack.c.b16 %v698, %v696
  %v851 = vpack.c.b16 %v701, %v699
  %v852 = vpack.c.b16 %v702, %v700
  %v853 = vpack.c.b16 %v705, %v703
  %v854 = vpack.c.b16 %v706, %v704
  %v855 = vpack.c.b16 %v709, %v707
  %v856 = vpack.c.b16 %v710, %v708
  %v857 = vpack.c.b16 %v713, %v711
  %v858 = vpack.c.b16 %v714, %v712
  %1003 = vmatprep.subr.bf16.mxu0 %v716
  %1004 = vmatpush1.bf16.msra.mxu0 %v715
  %1005 = vmatprep.subr.bf16.mxu0 %v718
  %1006 = vmatpush1.bf16.msra.mxu0 %v717
  %1007 = vmatprep.subr.bf16.mxu0 %v720
  %1008 = vmatpush1.bf16.msra.mxu0 %v719
  %1009 = vmatprep.subr.bf16.mxu0 %v722
  %1010 = vmatpush1.bf16.msra.mxu0 %v721
  %1011 = vmatprep.subr.bf16.mxu0 %v724
  %1012 = vmatpush1.bf16.msra.mxu0 %v723
  %1013 = vmatprep.subr.bf16.mxu0 %v726
  %1014 = vmatpush1.bf16.msra.mxu0 %v725
  %1015 = vmatprep.subr.bf16.mxu0 %v728
  %1016 = vmatpush1.bf16.msra.mxu0 %v727
  %1017 = vmatprep.subr.bf16.mxu0 %v730
  %1018 = vmatpush1.bf16.msra.mxu0 %v729
  %1019 = vmatprep.subr.bf16.mxu0 %v732
  %1020 = vmatpush1.bf16.msra.mxu0 %v731
  %1021 = vmatprep.subr.bf16.mxu0 %v734
  %1022 = vmatpush1.bf16.msra.mxu0 %v733
  %1023 = vmatprep.subr.bf16.mxu0 %v736
  %1024 = vmatpush1.bf16.msra.mxu0 %v735
  %1025 = vmatprep.subr.bf16.mxu0 %v738
  %1026 = vmatpush1.bf16.msra.mxu0 %v737
  %1027 = vmatprep.subr.bf16.mxu0 %v740
  %1028 = vmatpush1.bf16.msra.mxu0 %v739
  %1029 = vmatprep.subr.bf16.mxu0 %v742
  %1030 = vmatpush1.bf16.msra.mxu0 %v741
  %1031 = vmatprep.subr.bf16.mxu0 %v744
  %1032 = vmatpush1.bf16.msra.mxu0 %v743
  %1033 = vmatprep.subr.bf16.mxu0 %v746
  %1034 = vmatpush1.bf16.msra.mxu0 %v745
  %1035 = vmatprep.mubr.bf16.mxu0 %v248
  %1036 = vmatmul.mubr.bf16.gmra.mrb[0].mxu0 %v247
  %v1037 = vpop.f32.mrb[0].mxu0
  %v1038 = vadd.f32 %v184, %v1037
  %v1039 = vpop.f32.mrb[0].mxu0
  %v1040 = vadd.f32 %v188, %v1039
  %v1041 = vpop.f32.mrb[0].mxu0
  %v1042 = vadd.f32 %v184, %v1041
  %v1043 = vpop.f32.mrb[0].mxu0
  %v1044 = vadd.f32 %v188, %v1043
  %1045 = vmatprep.mubr.bf16.mxu0 %v257
  %1046 = vmatmul.mubr.bf16.gmra.mrb[0].mxu0 %v256
  %v1047 = vpop.f32.mrb[0].mxu0
  %v1048 = vadd.f32 %v184, %v1047
  %v1049 = vpop.f32.mrb[0].mxu0
  %v1050 = vadd.f32 %v188, %v1049
  %v1051 = vpop.f32.mrb[0].mxu0
  %v1052 = vadd.f32 %v184, %v1051
  %v1053 = vpop.f32.mrb[0].mxu0
  %v1054 = vadd.f32 %v188, %v1053
  %1055 = vdwg.mxu0
  %1056 = vmatprep.subr.bf16.mxu0 %v748
  %1057 = vmatpush1.bf16.msra.mxu0 %v747
  %1058 = vmatprep.subr.bf16.mxu0 %v750
  %1059 = vmatpush1.bf16.msra.mxu0 %v749
  %1060 = vmatprep.subr.bf16.mxu0 %v752
  %1061 = vmatpush1.bf16.msra.mxu0 %v751
  %1062 = vmatprep.subr.bf16.mxu0 %v754
  %1063 = vmatpush1.bf16.msra.mxu0 %v753
  %1064 = vmatprep.subr.bf16.mxu0 %v756
  %1065 = vmatpush1.bf16.msra.mxu0 %v755
  %1066 = vmatprep.subr.bf16.mxu0 %v758
  %1067 = vmatpush1.bf16.msra.mxu0 %v757
  %1068 = vmatprep.subr.bf16.mxu0 %v760
  %1069 = vmatpush1.bf16.msra.mxu0 %v759
  %1070 = vmatprep.subr.bf16.mxu0 %v762
  %1071 = vmatpush1.bf16.msra.mxu0 %v761
  %1072 = vmatprep.subr.bf16.mxu0 %v764
  %1073 = vmatpush1.bf16.msra.mxu0 %v763
  %1074 = vmatprep.subr.bf16.mxu0 %v766
  %1075 = vmatpush1.bf16.msra.mxu0 %v765
  %1076 = vmatprep.subr.bf16.mxu0 %v768
  %1077 = vmatpush1.bf16.msra.mxu0 %v767
  %1078 = vmatprep.subr.bf16.mxu0 %v770
  %1079 = vmatpush1.bf16.msra.mxu0 %v769
  %1080 = vmatprep.subr.bf16.mxu0 %v772
  %1081 = vmatpush1.bf16.msra.mxu0 %v771
  %1082 = vmatprep.subr.bf16.mxu0 %v774
  %1083 = vmatpush1.bf16.msra.mxu0 %v773
  %1084 = vmatprep.subr.bf16.mxu0 %v776
  %1085 = vmatpush1.bf16.msra.mxu0 %v775
  %1086 = vmatprep.subr.bf16.mxu0 %v778
  %1087 = vmatpush1.bf16.msra.mxu0 %v777
  %1088 = vmatprep.mubr.bf16.mxu0 %v250
  %1089 = vmatmul.mubr.bf16.gmra.mrb[0].mxu0 %v249
  %v1090 = vpop.f32.mrb[0].mxu0
  %v1091 = vadd.f32 %v1038, %v1090
  %v1092 = vpop.f32.mrb[0].mxu0
  %v1093 = vadd.f32 %v1040, %v1092
  %v1094 = vpop.f32.mrb[0].mxu0
  %v1095 = vadd.f32 %v1042, %v1094
  %v1096 = vpop.f32.mrb[0].mxu0
  %v1097 = vadd.f32 %v1044, %v1096
  %1098 = vmatprep.mubr.bf16.mxu0 %v259
  %1099 = vmatmul.mubr.bf16.gmra.mrb[0].mxu0 %v258
  %v1100 = vpop.f32.mrb[0].mxu0
  %v1101 = vadd.f32 %v1048, %v1100
  %v1102 = vpop.f32.mrb[0].mxu0
  %v1103 = vadd.f32 %v1050, %v1102
  %v1104 = vpop.f32.mrb[0].mxu0
  %v1105 = vadd.f32 %v1052, %v1104
  %v1106 = vpop.f32.mrb[0].mxu0
  %v1107 = vadd.f32 %v1054, %v1106
  %1108 = vdwg.mxu0
  %1109 = vmatprep.subr.bf16.mxu0 %v780
  %1110 = vmatpush1.bf16.msra.mxu0 %v779
  %1111 = vmatprep.subr.bf16.mxu0 %v782
  %1112 = vmatpush1.bf16.msra.mxu0 %v781
  %1113 = vmatprep.subr.bf16.mxu0 %v784
  %1114 = vmatpush1.bf16.msra.mxu0 %v783
  %1115 = vmatprep.subr.bf16.mxu0 %v786
  %1116 = vmatpush1.bf16.msra.mxu0 %v785
  %1117 = vmatprep.subr.bf16.mxu0 %v788
  %1118 = vmatpush1.bf16.msra.mxu0 %v787
  %1119 = vmatprep.subr.bf16.mxu0 %v790
  %1120 = vmatpush1.bf16.msra.mxu0 %v789
  %1121 = vmatprep.subr.bf16.mxu0 %v792
  %1122 = vmatpush1.bf16.msra.mxu0 %v791
  %1123 = vmatprep.subr.bf16.mxu0 %v794
  %1124 = vmatpush1.bf16.msra.mxu0 %v793
  %1125 = vmatprep.subr.bf16.mxu0 %v796
  %1126 = vmatpush1.bf16.msra.mxu0 %v795
  %1127 = vmatprep.subr.bf16.mxu0 %v798
  %1128 = vmatpush1.bf16.msra.mxu0 %v797
  %1129 = vmatprep.subr.bf16.mxu0 %v800
  %1130 = vmatpush1.bf16.msra.mxu0 %v799
  %1131 = vmatprep.subr.bf16.mxu0 %v802
  %1132 = vmatpush1.bf16.msra.mxu0 %v801
  %1133 = vmatprep.subr.bf16.mxu0 %v804
  %1134 = vmatpush1.bf16.msra.mxu0 %v803
  %1135 = vmatprep.subr.bf16.mxu0 %v806
  %1136 = vmatpush1.bf16.msra.mxu0 %v805
  %1137 = vmatprep.subr.bf16.mxu0 %v808
  %1138 = vmatpush1.bf16.msra.mxu0 %v807
  %1139 = vmatprep.subr.bf16.mxu0 %v810
  %1140 = vmatpush1.bf16.msra.mxu0 %v809
  %1141 = vmatprep.mubr.bf16.mxu0 %v252
  %1142 = vmatmul.mubr.bf16.gmra.mrb[0].mxu0 %v251
  %v1143 = vpop.f32.mrb[0].mxu0
  %v1144 = vadd.f32 %v1091, %v1143
  %v1145 = vpop.f32.mrb[0].mxu0
  %v1146 = vadd.f32 %v1093, %v1145
  %v1147 = vpop.f32.mrb[0].mxu0
  %v1148 = vadd.f32 %v1095, %v1147
  %v1149 = vpop.f32.mrb[0].mxu0
  %v1150 = vadd.f32 %v1097, %v1149
  %1151 = vmatprep.mubr.bf16.mxu0 %v261
  %1152 = vmatmul.mubr.bf16.gmra.mrb[0].mxu0 %v260
  %v1153 = vpop.f32.mrb[0].mxu0
  %v1154 = vadd.f32 %v1101, %v1153
  %v1155 = vpop.f32.mrb[0].mxu0
  %v1156 = vadd.f32 %v1103, %v1155
  %v1157 = vpop.f32.mrb[0].mxu0
  %v1158 = vadd.f32 %v1105, %v1157
  %v1159 = vpop.f32.mrb[0].mxu0
  %v1160 = vadd.f32 %v1107, %v1159
  %1161 = vdwg.mxu0
  %1162 = vmatprep.subr.bf16.mxu0 %v812
  %1163 = vmatpush1.bf16.msra.mxu0 %v811
  %1164 = vmatprep.subr.bf16.mxu0 %v814
  %1165 = vmatpush1.bf16.msra.mxu0 %v813
  %1166 = vmatprep.subr.bf16.mxu0 %v816
  %1167 = vmatpush1.bf16.msra.mxu0 %v815
  %1168 = vmatprep.subr.bf16.mxu0 %v818
  %1169 = vmatpush1.bf16.msra.mxu0 %v817
  %1170 = vmatprep.subr.bf16.mxu0 %v820
  %1171 = vmatpush1.bf16.msra.mxu0 %v819
  %1172 = vmatprep.subr.bf16.mxu0 %v822
  %1173 = vmatpush1.bf16.msra.mxu0 %v821
  %1174 = vmatprep.subr.bf16.mxu0 %v824
  %1175 = vmatpush1.bf16.msra.mxu0 %v823
  %1176 = vmatprep.subr.bf16.mxu0 %v826
  %1177 = vmatpush1.bf16.msra.mxu0 %v825
  %1178 = vmatprep.subr.bf16.mxu0 %v828
  %1179 = vmatpush1.bf16.msra.mxu0 %v827
  %1180 = vmatprep.subr.bf16.mxu0 %v830
  %1181 = vmatpush1.bf16.msra.mxu0 %v829
  %1182 = vmatprep.subr.bf16.mxu0 %v832
  %1183 = vmatpush1.bf16.msra.mxu0 %v831
  %1184 = vmatprep.subr.bf16.mxu0 %v834
  %1185 = vmatpush1.bf16.msra.mxu0 %v833
  %1186 = vmatprep.subr.bf16.mxu0 %v836
  %1187 = vmatpush1.bf16.msra.mxu0 %v835
  %1188 = vmatprep.subr.bf16.mxu0 %v838
  %1189 = vmatpush1.bf16.msra.mxu0 %v837
  %1190 = vmatprep.subr.bf16.mxu0 %v840
  %1191 = vmatpush1.bf16.msra.mxu0 %v839
  %1192 = vmatprep.subr.bf16.mxu0 %v842
  %1193 = vmatpush1.bf16.msra.mxu0 %v841
  %1194 = vmatprep.mubr.bf16.mxu0 %v254
  %1195 = vmatmul.mubr.bf16.gmra.mrb[0].mxu0 %v253
  %v1196 = vpop.f32.mrb[0].mxu0
  %v1197 = vadd.f32 %v1144, %v1196
  %v1198 = vpop.f32.mrb[0].mxu0
  %v1199 = vadd.f32 %v1146, %v1198
  %v1200 = vpop.f32.mrb[0].mxu0
  %v1201 = vadd.f32 %v1148, %v1200
  %v1202 = vpop.f32.mrb[0].mxu0
  %v1203 = vadd.f32 %v1150, %v1202
  %1204 = vmatprep.mubr.bf16.mxu0 %v263
  %1205 = vmatmul.mubr.bf16.gmra.mrb[0].mxu0 %v262
  %v1206 = vpop.f32.mrb[0].mxu0
  %v1207 = vadd.f32 %v1154, %v1206
  %v1208 = vpop.f32.mrb[0].mxu0
  %v1209 = vadd.f32 %v1156, %v1208
  %v1210 = vpop.f32.mrb[0].mxu0
  %v1211 = vadd.f32 %v1158, %v1210
  %v1212 = vpop.f32.mrb[0].mxu0
  %v1213 = vadd.f32 %v1160, %v1212
  %1214 = vdwg.mxu0
  %1215 = vmatprep.subr.bf16.mxu0 %v844
  %1216 = vmatpush1.bf16.msra.mxu0 %v843
  %1217 = vmatprep.subr.bf16.mxu0 %v846
  %1218 = vmatpush1.bf16.msra.mxu0 %v845
  %1219 = vmatprep.subr.bf16.mxu0 %v848
  %1220 = vmatpush1.bf16.msra.mxu0 %v847
  %1221 = vmatprep.subr.bf16.mxu0 %v850
  %1222 = vmatpush1.bf16.msra.mxu0 %v849
  %1223 = vmatprep.subr.bf16.mxu0 %v852
  %1224 = vmatpush1.bf16.msra.mxu0 %v851
  %1225 = vmatprep.subr.bf16.mxu0 %v854
  %1226 = vmatpush1.bf16.msra.mxu0 %v853
  %1227 = vmatprep.subr.bf16.mxu0 %v856
  %1228 = vmatpush1.bf16.msra.mxu0 %v855
  %1229 = vmatprep.subr.bf16.mxu0 %v858
  %1230 = vmatpush1.bf16.msra.mxu0 %v857
  %1231 = vmatprep.subr.bf16.mxu0 0
  %1232 = vmatpush1.bf16.msra.mxu0 0
  %1233 = vmatprep.subr.bf16.mxu0 0
  %1234 = vmatpush1.bf16.msra.mxu0 0
  %1235 = vmatprep.subr.bf16.mxu0 0
  %1236 = vmatpush1.bf16.msra.mxu0 0
  %1237 = vmatprep.subr.bf16.mxu0 0
  %1238 = vmatpush1.bf16.msra.mxu0 0
  %1239 = vmatprep.subr.bf16.mxu0 0
  %1240 = vmatpush1.bf16.msra.mxu0 0
  %1241 = vmatprep.subr.bf16.mxu0 0
  %1242 = vmatpush1.bf16.msra.mxu0 0
  %1243 = vmatprep.subr.bf16.mxu0 0
  %1244 = vmatpush1.bf16.msra.mxu0 0
  %1245 = vmatprep.subr.bf16.mxu0 0
  %1246 = vmatpush1.bf16.msra.mxu0 0
  %1247 = vmatprep.mubr.bf16.mxu0 0
  %1248 = vmatmul.mubr.bf16.gmra.mrb[0].mxu0 %v255
  %v1249 = vpop.f32.mrb[0].mxu0
  %v1250 = vadd.f32 %v1197, %v1249
  %v1251 = vpop.f32.mrb[0].mxu0
  %v1252 = vadd.f32 %v1199, %v1251
  %v1253 = vpop.f32.mrb[0].mxu0
  %v1254 = vadd.f32 %v1201, %v1253
  %v1255 = vpop.f32.mrb[0].mxu0
  %v1256 = vadd.f32 %v1203, %v1255
  %1257 = vmatprep.mubr.bf16.mxu0 0
  %1258 = vmatmul.mubr.bf16.gmra.mrb[0].mxu0 %v264
  %v1259 = vpop.f32.mrb[0].mxu0
  %v1260 = vadd.f32 %v1207, %v1259
  %v1261 = vpop.f32.mrb[0].mxu0
  %v1262 = vadd.f32 %v1209, %v1261
  %v1263 = vpop.f32.mrb[0].mxu0
  %v1264 = vadd.f32 %v1211, %v1263
  %v1265 = vpop.f32.mrb[0].mxu0
  %v1266 = vadd.f32 %v1213, %v1265
  %1267 = vdwg.mxu0
  %v1268 = vmul.f32 %v1250, 0.2
  %v1269 = vmul.f32 %v1252, 0.2
  %v1270 = vmul.f32 %v1254, 0.2
  %v1271 = vmul.f32 %v1256, 0.2
  %v1272 = vmul.f32 %v1260, 0.2
  %v1273 = vmul.f32 %v1262, 0.2
  %v1274 = vmul.f32 %v1264, 0.2
  %v1275 = vmul.f32 %v1266, 0.2
  %v1276 = vmax.f32 %v1250, %v1268
  %v1277 = vmax.f32 %v1252, %v1269
  %v1278 = vmax.f32 %v1254, %v1270
  %v1279 = vmax.f32 %v1256, %v1271
  %v1280 = vmax.f32 %v1260, %v1272
  %v1281 = vmax.f32 %v1262, %v1273
  %v1282 = vmax.f32 %v1264, %v1274
  %v1283 = vmax.f32 %v1266, %v1275
  %v1284 = vpack.c.bf16 %v1278, %v1276
  %v1285 = vpack.c.bf16 %v1279, %v1277
  %v1286 = vpack.c.bf16 %v1282, %v1280
  %v1287 = vpack.c.bf16 %v1283, %v1281
  %v1292 = vunpack.c.l.b16 %v1284
  %v1293 = vunpack.c.l.b16 %v1285
  %v1294 = vunpack.c.h.b16 %v1284
  %v1295 = vunpack.c.h.b16 %v1285
  %v1296 = vunpack.c.l.b16 %v1286
  %v1297 = vunpack.c.l.b16 %v1287
  %v1298 = vunpack.c.h.b16 %v1286
  %v1299 = vunpack.c.h.b16 %v1287
  %v1300 = vpack.c.b16 %v1293, %v1292
  %v1301 = vpack.c.b16 %v1295, %v1294
  %v1302 = vpack.c.b16 %v1297, %v1296
  %v1303 = vpack.c.b16 %v1299, %v1298
  %1308 = vst [vmem:[%s3] sm:$0xff] %v1300
  %1309 = vst [vmem:[%s3 + $0x8] sm:$0xff] %v1301
  %1310 = vst [vmem:[%s3 + $0x10] sm:$0xff] %v1302
  %1311 = vst [vmem:[%s3 + $0x18] sm:$0xff] %v1303
  // Predicated region
  $region14: #{_lambda_.7} parent=0 // pred_check
    _
  $region15: #{_lambda_.7} parent=0 // pred_check_branch
    %1313 = sbr.rel (0) target = $region17
  $region16: #{_lambda_.7} parent=0 // pred_region
    _
  $region17: #{_lambda_.7} parent=0 // pred_fallthru
    _
  // Predicated region
  $region18: #{_lambda_.7} parent=0 // pred_check
    _
  $region19: #{_lambda_.7} parent=0 // pred_check_branch
    %1315 = sbr.rel (0) target = $region21
  $region20: #{_lambda_.7} parent=0 // pred_region
    _
  $region21: #{_lambda_.7} parent=0 // pred_fallthru
    _

// kernel: _lambda_.9
$region0: #{_lambda_.9}
  #allocation0 [shape = 'u32[]', space=smem, size = 0x4, offset = 0x4, fixed_abs, tag = 'smem constant byte address 0x4 - core index']
  #allocation1 [shape = 'u32[144,128]{1,0:T(1,128)}', space=vmem, size = 0x12000, scoped, tag = 'internal scratch']
  %s0 = inlined_call_operand.vmem [shape: bf16[16,2048], index: 0, kind: input, shape index: {}]
  %s1 = inlined_call_operand.vmem [shape: bf16[2048,128], index: 1, kind: input, shape index: {}]
  %s2 = inlined_call_operand.vmem [shape: f32[1,128], index: 2, kind: input, shape index: {}]
  %s3 = inlined_call_operand.vmem [shape: f32[16,128], index: 3, kind: output, shape index: {}]
  %s4 = sld [smem:[#allocation0]]
  $region22: #{_lambda_.9} parent=0
    _
  %s6 = ssub.s32 1, %s4
  %s7 = scalar_select 0, %s6, %s4
  // Predicated region
  $region2: #{_lambda_.9} parent=0 // pred_check
    _
  $region3: #{_lambda_.9} parent=0 // pred_check_branch
    %9 = sbr.rel (0) target = $region5
  $region4: #{_lambda_.9} parent=0 // pred_region
    _
  $region5: #{_lambda_.9} parent=0 // pred_fallthru
    _
  // Predicated region
  $region6: #{_lambda_.9} parent=0 // pred_check
    _
  $region7: #{_lambda_.9} parent=0 // pred_check_branch
    %11 = sbr.rel (0) target = $region9
  $region8: #{_lambda_.9} parent=0 // pred_region
    _
  $region9: #{_lambda_.9} parent=0 // pred_fallthru
    _
  // Predicated region
  $region10: #{_lambda_.9} parent=0 // pred_check
    _
  $region11: #{_lambda_.9} parent=0 // pred_check_branch
    %13 = sbr.rel (0) target = $region13
  $region12: #{_lambda_.9} parent=0 // pred_region
    _
  $region13: #{_lambda_.9} parent=0 // pred_fallthru
    _
  %v15 = vld [vmem:[%s0] sm:$0xff]
  %v16 = vld [vmem:[%s0 + $0x8] sm:$0xff]
  %v17 = vld [vmem:[%s0 + $0x10] sm:$0xff]
  %v18 = vld [vmem:[%s0 + $0x18] sm:$0xff]
  %v19 = vld [vmem:[%s0 + $0x20] sm:$0xff]
  %v20 = vld [vmem:[%s0 + $0x28] sm:$0xff]
  %v21 = vld [vmem:[%s0 + $0x30] sm:$0xff]
  %v22 = vld [vmem:[%s0 + $0x38] sm:$0xff]
  %v23 = vld [vmem:[%s0 + $0x40] sm:$0xff]
  %v24 = vld [vmem:[%s0 + $0x48] sm:$0xff]
  %v25 = vld [vmem:[%s0 + $0x50] sm:$0xff]
  %v26 = vld [vmem:[%s0 + $0x58] sm:$0xff]
  %v27 = vld [vmem:[%s0 + $0x60] sm:$0xff]
  %v28 = vld [vmem:[%s0 + $0x68] sm:$0xff]
  %v29 = vld [vmem:[%s0 + $0x70] sm:$0xff]
  %v30 = vld [vmem:[%s0 + $0x78] sm:$0xff]
  %v31 = vld [vmem:[%s1] sm:$0xf]
  %v32 = vld [vmem:[%s1 + $0x4] sm:$0xf]
  %v33 = vld [vmem:[%s1 + $0x8] sm:$0xf]
  %v34 = vld [vmem:[%s1 + $0xc] sm:$0xf]
  %v35 = vld [vmem:[%s1 + $0x10] sm:$0xf]
  %v36 = vld [vmem:[%s1 + $0x14] sm:$0xf]
  %v37 = vld [vmem:[%s1 + $0x18] sm:$0xf]
  %v38 = vld [vmem:[%s1 + $0x1c] sm:$0xf]
  %v39 = vld [vmem:[%s1 + $0x20] sm:$0xf]
  %v40 = vld [vmem:[%s1 + $0x24] sm:$0xf]
  %v41 = vld [vmem:[%s1 + $0x28] sm:$0xf]
  %v42 = vld [vmem:[%s1 + $0x2c] sm:$0xf]
  %v43 = vld [vmem:[%s1 + $0x30] sm:$0xf]
  %v44 = vld [vmem:[%s1 + $0x34] sm:$0xf]
  %v45 = vld [vmem:[%s1 + $0x38] sm:$0xf]
  %v46 = vld [vmem:[%s1 + $0x3c] sm:$0xf]
  %v47 = vld [vmem:[%s1 + $0x40] sm:$0xf]
  %v48 = vld [vmem:[%s1 + $0x44] sm:$0xf]
  %v49 = vld [vmem:[%s1 + $0x48] sm:$0xf]
  %v50 = vld [vmem:[%s1 + $0x4c] sm:$0xf]
  %v51 = vld [vmem:[%s1 + $0x50] sm:$0xf]
  %v52 = vld [vmem:[%s1 + $0x54] sm:$0xf]
  %v53 = vld [vmem:[%s1 + $0x58] sm:$0xf]
  %v54 = vld [vmem:[%s1 + $0x5c] sm:$0xf]
  %v55 = vld [vmem:[%s1 + $0x60] sm:$0xf]
  %v56 = vld [vmem:[%s1 + $0x64] sm:$0xf]
  %v57 = vld [vmem:[%s1 + $0x68] sm:$0xf]
  %v58 = vld [vmem:[%s1 + $0x6c] sm:$0xf]
  %v59 = vld [vmem:[%s1 + $0x70] sm:$0xf]
  %v60 = vld [vmem:[%s1 + $0x74] sm:$0xf]
  %v61 = vld [vmem:[%s1 + $0x78] sm:$0xf]
  %v62 = vld [vmem:[%s1 + $0x7c] sm:$0xf]
  %v63 = vld [vmem:[%s1 + $0x80] sm:$0xf]
  %v64 = vld [vmem:[%s1 + $0x84] sm:$0xf]
  %v65 = vld [vmem:[%s1 + $0x88] sm:$0xf]
  %v66 = vld [vmem:[%s1 + $0x8c] sm:$0xf]
  %v67 = vld [vmem:[%s1 + $0x90] sm:$0xf]
  %v68 = vld [vmem:[%s1 + $0x94] sm:$0xf]
  %v69 = vld [vmem:[%s1 + $0x98] sm:$0xf]
  %v70 = vld [vmem:[%s1 + $0x9c] sm:$0xf]
  %v71 = vld [vmem:[%s1 + $0xa0] sm:$0xf]
  %v72 = vld [vmem:[%s1 + $0xa4] sm:$0xf]
  %v73 = vld [vmem:[%s1 + $0xa8] sm:$0xf]
  %v74 = vld [vmem:[%s1 + $0xac] sm:$0xf]
  %v75 = vld [vmem:[%s1 + $0xb0] sm:$0xf]
  %v76 = vld [vmem:[%s1 + $0xb4] sm:$0xf]
  %v77 = vld [vmem:[%s1 + $0xb8] sm:$0xf]
  %v78 = vld [vmem:[%s1 + $0xbc] sm:$0xf]
  %v79 = vld [vmem:[%s1 + $0xc0] sm:$0xf]
  %v80 = vld [vmem:[%s1 + $0xc4] sm:$0xf]
  %v81 = vld [vmem:[%s1 + $0xc8] sm:$0xf]
  %v82 = vld [vmem:[%s1 + $0xcc] sm:$0xf]
  %v83 = vld [vmem:[%s1 + $0xd0] sm:$0xf]
  %v84 = vld [vmem:[%s1 + $0xd4] sm:$0xf]
  %v85 = vld [vmem:[%s1 + $0xd8] sm:$0xf]
  %v86 = vld [vmem:[%s1 + $0xdc] sm:$0xf]
  %v87 = vld [vmem:[%s1 + $0xe0] sm:$0xf]
  %v88 = vld [vmem:[%s1 + $0xe4] sm:$0xf]
  %v89 = vld [vmem:[%s1 + $0xe8] sm:$0xf]
  %v90 = vld [vmem:[%s1 + $0xec] sm:$0xf]
  %v91 = vld [vmem:[%s1 + $0xf0] sm:$0xf]
  %v92 = vld [vmem:[%s1 + $0xf4] sm:$0xf]
  %v93 = vld [vmem:[%s1 + $0xf8] sm:$0xf]
  %v94 = vld [vmem:[%s1 + $0xfc] sm:$0xf]
  %v95 = vld [vmem:[%s1 + $0x100] sm:$0xf]
  %v96 = vld [vmem:[%s1 + $0x104] sm:$0xf]
  %v97 = vld [vmem:[%s1 + $0x108] sm:$0xf]
  %v98 = vld [vmem:[%s1 + $0x10c] sm:$0xf]
  %v99 = vld [vmem:[%s1 + $0x110] sm:$0xf]
  %v100 = vld [vmem:[%s1 + $0x114] sm:$0xf]
  %v101 = vld [vmem:[%s1 + $0x118] sm:$0xf]
  %v102 = vld [vmem:[%s1 + $0x11c] sm:$0xf]
  %v103 = vld [vmem:[%s1 + $0x120] sm:$0xf]
  %v104 = vld [vmem:[%s1 + $0x124] sm:$0xf]
  %v105 = vld [vmem:[%s1 + $0x128] sm:$0xf]
  %v106 = vld [vmem:[%s1 + $0x12c] sm:$0xf]
  %v107 = vld [vmem:[%s1 + $0x130] sm:$0xf]
  %v108 = vld [vmem:[%s1 + $0x134] sm:$0xf]
  %v109 = vld [vmem:[%s1 + $0x138] sm:$0xf]
  %v110 = vld [vmem:[%s1 + $0x13c] sm:$0xf]
  %v111 = vld [vmem:[%s1 + $0x140] sm:$0xf]
  %v112 = vld [vmem:[%s1 + $0x144] sm:$0xf]
  %v113 = vld [vmem:[%s1 + $0x148] sm:$0xf]
  %v114 = vld [vmem:[%s1 + $0x14c] sm:$0xf]
  %v115 = vld [vmem:[%s1 + $0x150] sm:$0xf]
  %v116 = vld [vmem:[%s1 + $0x154] sm:$0xf]
  %v117 = vld [vmem:[%s1 + $0x158] sm:$0xf]
  %v118 = vld [vmem:[%s1 + $0x15c] sm:$0xf]
  %v119 = vld [vmem:[%s1 + $0x160] sm:$0xf]
  %v120 = vld [vmem:[%s1 + $0x164] sm:$0xf]
  %v121 = vld [vmem:[%s1 + $0x168] sm:$0xf]
  %v122 = vld [vmem:[%s1 + $0x16c] sm:$0xf]
  %v123 = vld [vmem:[%s1 + $0x170] sm:$0xf]
  %v124 = vld [vmem:[%s1 + $0x174] sm:$0xf]
  %v125 = vld [vmem:[%s1 + $0x178] sm:$0xf]
  %v126 = vld [vmem:[%s1 + $0x17c] sm:$0xf]
  %v127 = vld [vmem:[%s1 + $0x180] sm:$0xf]
  %v128 = vld [vmem:[%s1 + $0x184] sm:$0xf]
  %v129 = vld [vmem:[%s1 + $0x188] sm:$0xf]
  %v130 = vld [vmem:[%s1 + $0x18c] sm:$0xf]
  %v131 = vld [vmem:[%s1 + $0x190] sm:$0xf]
  %v132 = vld [vmem:[%s1 + $0x194] sm:$0xf]
  %v133 = vld [vmem:[%s1 + $0x198] sm:$0xf]
  %v134 = vld [vmem:[%s1 + $0x19c] sm:$0xf]
  %v135 = vld [vmem:[%s1 + $0x1a0] sm:$0xf]
  %v136 = vld [vmem:[%s1 + $0x1a4] sm:$0xf]
  %v137 = vld [vmem:[%s1 + $0x1a8] sm:$0xf]
  %v138 = vld [vmem:[%s1 + $0x1ac] sm:$0xf]
  %v139 = vld [vmem:[%s1 + $0x1b0] sm:$0xf]
  %v140 = vld [vmem:[%s1 + $0x1b4] sm:$0xf]
  %v141 = vld [vmem:[%s1 + $0x1b8] sm:$0xf]
  %v142 = vld [vmem:[%s1 + $0x1bc] sm:$0xf]
  %v143 = vld [vmem:[%s1 + $0x1c0] sm:$0xf]
  %v144 = vld [vmem:[%s1 + $0x1c4] sm:$0xf]
  %v145 = vld [vmem:[%s1 + $0x1c8] sm:$0xf]
  %v146 = vld [vmem:[%s1 + $0x1cc] sm:$0xf]
  %v147 = vld [vmem:[%s1 + $0x1d0] sm:$0xf]
  %v148 = vld [vmem:[%s1 + $0x1d4] sm:$0xf]
  %v149 = vld [vmem:[%s1 + $0x1d8] sm:$0xf]
  %v150 = vld [vmem:[%s1 + $0x1dc] sm:$0xf]
  %v151 = vld [vmem:[%s1 + $0x1e0] sm:$0xf]
  %v152 = vld [vmem:[%s1 + $0x1e4] sm:$0xf]
  %v153 = vld [vmem:[%s1 + $0x1e8] sm:$0xf]
  %v154 = vld [vmem:[%s1 + $0x1ec] sm:$0xf]
  %v155 = vld [vmem:[%s1 + $0x1f0] sm:$0xf]
  %v156 = vld [vmem:[%s1 + $0x1f4] sm:$0xf]
  %v157 = vld [vmem:[%s1 + $0x1f8] sm:$0xf]
  %v158 = vld [vmem:[%s1 + $0x1fc] sm:$0xf]
  %v159 = vld [vmem:[%s1 + $0x200] sm:$0xf]
  %v160 = vld [vmem:[%s1 + $0x204] sm:$0xf]
  %v161 = vld [vmem:[%s1 + $0x208] sm:$0xf]
  %v162 = vld [vmem:[%s1 + $0x20c] sm:$0xf]
  %v163 = vld [vmem:[%s1 + $0x210] sm:$0xf]
  %v164 = vld [vmem:[%s1 + $0x214] sm:$0xf]
  %v165 = vld [vmem:[%s1 + $0x218] sm:$0xf]
  %v166 = vld [vmem:[%s1 + $0x21c] sm:$0xf]
  %v167 = vld [vmem:[%s1 + $0x220] sm:$0xf]
  %v168 = vld [vmem:[%s1 + $0x224] sm:$0xf]
  %v169 = vld [vmem:[%s1 + $0x228] sm:$0xf]
  %v170 = vld [vmem:[%s1 + $0x22c] sm:$0xf]
  %v171 = vld [vmem:[%s1 + $0x230] sm:$0xf]
  %v172 = vld [vmem:[%s1 + $0x234] sm:$0xf]
  %v173 = vld [vmem:[%s1 + $0x238] sm:$0xf]
  %v174 = vld [vmem:[%s1 + $0x23c] sm:$0xf]
  %v175 = vld [vmem:[%s1 + $0x240] sm:$0xf]
  %v176 = vld [vmem:[%s1 + $0x244] sm:$0xf]
  %v177 = vld [vmem:[%s1 + $0x248] sm:$0xf]
  %v178 = vld [vmem:[%s1 + $0x24c] sm:$0xf]
  %v179 = vld [vmem:[%s1 + $0x250] sm:$0xf]
  %v180 = vld [vmem:[%s1 + $0x254] sm:$0xf]
  %v181 = vld [vmem:[%s1 + $0x258] sm:$0xf]
  %v182 = vld [vmem:[%s1 + $0x25c] sm:$0xf]
  %v183 = vld [vmem:[%s1 + $0x260] sm:$0xf]
  %v184 = vld [vmem:[%s1 + $0x264] sm:$0xf]
  %v185 = vld [vmem:[%s1 + $0x268] sm:$0xf]
  %v186 = vld [vmem:[%s1 + $0x26c] sm:$0xf]
  %v187 = vld [vmem:[%s1 + $0x270] sm:$0xf]
  %v188 = vld [vmem:[%s1 + $0x274] sm:$0xf]
  %v189 = vld [vmem:[%s1 + $0x278] sm:$0xf]
  %v190 = vld [vmem:[%s1 + $0x27c] sm:$0xf]
  %v191 = vld [vmem:[%s1 + $0x280] sm:$0xf]
  %v192 = vld [vmem:[%s1 + $0x284] sm:$0xf]
  %v193 = vld [vmem:[%s1 + $0x288] sm:$0xf]
  %v194 = vld [vmem:[%s1 + $0x28c] sm:$0xf]
  %v195 = vld [vmem:[%s1 + $0x290] sm:$0xf]
  %v196 = vld [vmem:[%s1 + $0x294] sm:$0xf]
  %v197 = vld [vmem:[%s1 + $0x298] sm:$0xf]
  %v198 = vld [vmem:[%s1 + $0x29c] sm:$0xf]
  %v199 = vld [vmem:[%s1 + $0x2a0] sm:$0xf]
  %v200 = vld [vmem:[%s1 + $0x2a4] sm:$0xf]
  %v201 = vld [vmem:[%s1 + $0x2a8] sm:$0xf]
  %v202 = vld [vmem:[%s1 + $0x2ac] sm:$0xf]
  %v203 = vld [vmem:[%s1 + $0x2b0] sm:$0xf]
  %v204 = vld [vmem:[%s1 + $0x2b4] sm:$0xf]
  %v205 = vld [vmem:[%s1 + $0x2b8] sm:$0xf]
  %v206 = vld [vmem:[%s1 + $0x2bc] sm:$0xf]
  %v207 = vld [vmem:[%s1 + $0x2c0] sm:$0xf]
  %v208 = vld [vmem:[%s1 + $0x2c4] sm:$0xf]
  %v209 = vld [vmem:[%s1 + $0x2c8] sm:$0xf]
  %v210 = vld [vmem:[%s1 + $0x2cc] sm:$0xf]
  %v211 = vld [vmem:[%s1 + $0x2d0] sm:$0xf]
  %v212 = vld [vmem:[%s1 + $0x2d4] sm:$0xf]
  %v213 = vld [vmem:[%s1 + $0x2d8] sm:$0xf]
  %v214 = vld [vmem:[%s1 + $0x2dc] sm:$0xf]
  %v215 = vld [vmem:[%s1 + $0x2e0] sm:$0xf]
  %v216 = vld [vmem:[%s1 + $0x2e4] sm:$0xf]
  %v217 = vld [vmem:[%s1 + $0x2e8] sm:$0xf]
  %v218 = vld [vmem:[%s1 + $0x2ec] sm:$0xf]
  %v219 = vld [vmem:[%s1 + $0x2f0] sm:$0xf]
  %v220 = vld [vmem:[%s1 + $0x2f4] sm:$0xf]
  %v221 = vld [vmem:[%s1 + $0x2f8] sm:$0xf]
  %v222 = vld [vmem:[%s1 + $0x2fc] sm:$0xf]
  %v223 = vld [vmem:[%s1 + $0x300] sm:$0xf]
  %v224 = vld [vmem:[%s1 + $0x304] sm:$0xf]
  %v225 = vld [vmem:[%s1 + $0x308] sm:$0xf]
  %v226 = vld [vmem:[%s1 + $0x30c] sm:$0xf]
  %v227 = vld [vmem:[%s1 + $0x310] sm:$0xf]
  %v228 = vld [vmem:[%s1 + $0x314] sm:$0xf]
  %v229 = vld [vmem:[%s1 + $0x318] sm:$0xf]
  %v230 = vld [vmem:[%s1 + $0x31c] sm:$0xf]
  %v231 = vld [vmem:[%s1 + $0x320] sm:$0xf]
  %v232 = vld [vmem:[%s1 + $0x324] sm:$0xf]
  %v233 = vld [vmem:[%s1 + $0x328] sm:$0xf]
  %v234 = vld [vmem:[%s1 + $0x32c] sm:$0xf]
  %v235 = vld [vmem:[%s1 + $0x330] sm:$0xf]
  %v236 = vld [vmem:[%s1 + $0x334] sm:$0xf]
  %v237 = vld [vmem:[%s1 + $0x338] sm:$0xf]
  %v238 = vld [vmem:[%s1 + $0x33c] sm:$0xf]
  %v239 = vld [vmem:[%s1 + $0x340] sm:$0xf]
  %v240 = vld [vmem:[%s1 + $0x344] sm:$0xf]
  %v241 = vld [vmem:[%s1 + $0x348] sm:$0xf]
  %v242 = vld [vmem:[%s1 + $0x34c] sm:$0xf]
  %v243 = vld [vmem:[%s1 + $0x350] sm:$0xf]
  %v244 = vld [vmem:[%s1 + $0x354] sm:$0xf]
  %v245 = vld [vmem:[%s1 + $0x358] sm:$0xf]
  %v246 = vld [vmem:[%s1 + $0x35c] sm:$0xf]
  %v247 = vld [vmem:[%s1 + $0x360] sm:$0xf]
  %v248 = vld [vmem:[%s1 + $0x364] sm:$0xf]
  %v249 = vld [vmem:[%s1 + $0x368] sm:$0xf]
  %v250 = vld [vmem:[%s1 + $0x36c] sm:$0xf]
  %v251 = vld [vmem:[%s1 + $0x370] sm:$0xf]
  %v252 = vld [vmem:[%s1 + $0x374] sm:$0xf]
  %v253 = vld [vmem:[%s1 + $0x378] sm:$0xf]
  %v254 = vld [vmem:[%s1 + $0x37c] sm:$0xf]
  %v255 = vld [vmem:[%s1 + $0x380] sm:$0xf]
  %v256 = vld [vmem:[%s1 + $0x384] sm:$0xf]
  %v257 = vld [vmem:[%s1 + $0x388] sm:$0xf]
  %v258 = vld [vmem:[%s1 + $0x38c] sm:$0xf]
  %v259 = vld [vmem:[%s1 + $0x390] sm:$0xf]
  %v260 = vld [vmem:[%s1 + $0x394] sm:$0xf]
  %v261 = vld [vmem:[%s1 + $0x398] sm:$0xf]
  %v262 = vld [vmem:[%s1 + $0x39c] sm:$0xf]
  %v263 = vld [vmem:[%s1 + $0x3a0] sm:$0xf]
  %v264 = vld [vmem:[%s1 + $0x3a4] sm:$0xf]
  %v265 = vld [vmem:[%s1 + $0x3a8] sm:$0xf]
  %v266 = vld [vmem:[%s1 + $0x3ac] sm:$0xf]
  %v267 = vld [vmem:[%s1 + $0x3b0] sm:$0xf]
  %v268 = vld [vmem:[%s1 + $0x3b4] sm:$0xf]
  %v269 = vld [vmem:[%s1 + $0x3b8] sm:$0xf]
  %v270 = vld [vmem:[%s1 + $0x3bc] sm:$0xf]
  %v271 = vld [vmem:[%s1 + $0x3c0] sm:$0xf]
  %v272 = vld [vmem:[%s1 + $0x3c4] sm:$0xf]
  %v273 = vld [vmem:[%s1 + $0x3c8] sm:$0xf]
  %v274 = vld [vmem:[%s1 + $0x3cc] sm:$0xf]
  %v275 = vld [vmem:[%s1 + $0x3d0] sm:$0xf]
  %v276 = vld [vmem:[%s1 + $0x3d4] sm:$0xf]
  %v277 = vld [vmem:[%s1 + $0x3d8] sm:$0xf]
  %v278 = vld [vmem:[%s1 + $0x3dc] sm:$0xf]
  %v279 = vld [vmem:[%s1 + $0x3e0] sm:$0xf]
  %v280 = vld [vmem:[%s1 + $0x3e4] sm:$0xf]
  %v281 = vld [vmem:[%s1 + $0x3e8] sm:$0xf]
  %v282 = vld [vmem:[%s1 + $0x3ec] sm:$0xf]
  %v283 = vld [vmem:[%s1 + $0x3f0] sm:$0xf]
  %v284 = vld [vmem:[%s1 + $0x3f4] sm:$0xf]
  %v285 = vld [vmem:[%s1 + $0x3f8] sm:$0xf]
  %v286 = vld [vmem:[%s1 + $0x3fc] sm:$0xf]
  %v287 = vld [vmem:[%s2] sm:$0x1]
  %v289 = vlaneseq
  %v290 = vshrl.u32 %v289, 7
  %v291 = vsub.s32 0, %v290
  %v292 = vrot.slane %v287, %v291
  %v310 = vunpack.c.l.b16 %v15
  %v311 = vunpack.c.h.b16 %v15
  %v312 = vunpack.c.l.b16 %v16
  %v313 = vunpack.c.h.b16 %v16
  %v314 = vunpack.c.l.b16 %v17
  %v315 = vunpack.c.h.b16 %v17
  %v316 = vunpack.c.l.b16 %v18
  %v317 = vunpack.c.h.b16 %v18
  %v318 = vunpack.c.l.b16 %v19
  %v319 = vunpack.c.h.b16 %v19
  %v320 = vunpack.c.l.b16 %v20
  %v321 = vunpack.c.h.b16 %v20
  %v322 = vunpack.c.l.b16 %v21
  %v323 = vunpack.c.h.b16 %v21
  %v324 = vunpack.c.l.b16 %v22
  %v325 = vunpack.c.h.b16 %v22
  %v326 = vunpack.c.l.b16 %v23
  %v327 = vunpack.c.h.b16 %v23
  %v328 = vunpack.c.l.b16 %v24
  %v329 = vunpack.c.h.b16 %v24
  %v330 = vunpack.c.l.b16 %v25
  %v331 = vunpack.c.h.b16 %v25
  %v332 = vunpack.c.l.b16 %v26
  %v333 = vunpack.c.h.b16 %v26
  %v334 = vunpack.c.l.b16 %v27
  %v335 = vunpack.c.h.b16 %v27
  %v336 = vunpack.c.l.b16 %v28
  %v337 = vunpack.c.h.b16 %v28
  %v338 = vunpack.c.l.b16 %v29
  %v339 = vunpack.c.h.b16 %v29
  %v340 = vunpack.c.l.b16 %v30
  %v341 = vunpack.c.h.b16 %v30
  %v342 = vpack.c.b16 %v326, %v310
  %v343 = vpack.c.b16 %v327, %v311
  %v344 = vpack.c.b16 %v328, %v312
  %v345 = vpack.c.b16 %v329, %v313
  %v346 = vpack.c.b16 %v330, %v314
  %v347 = vpack.c.b16 %v331, %v315
  %v348 = vpack.c.b16 %v332, %v316
  %v349 = vpack.c.b16 %v333, %v317
  %v350 = vpack.c.b16 %v334, %v318
  %v351 = vpack.c.b16 %v335, %v319
  %v352 = vpack.c.b16 %v336, %v320
  %v353 = vpack.c.b16 %v337, %v321
  %v354 = vpack.c.b16 %v338, %v322
  %v355 = vpack.c.b16 %v339, %v323
  %v356 = vpack.c.b16 %v340, %v324
  %v357 = vpack.c.b16 %v341, %v325
  %v630 = vunpack.c.l.b16 %v31
  %v631 = vunpack.c.l.b16 %v32
  %v632 = vunpack.c.l.b16 %v33
  %v633 = vunpack.c.l.b16 %v34
  %v634 = vunpack.c.l.b16 %v35
  %v635 = vunpack.c.l.b16 %v36
  %v636 = vunpack.c.l.b16 %v37
  %v637 = vunpack.c.l.b16 %v38
  %v638 = vunpack.c.l.b16 %v39
  %v639 = vunpack.c.l.b16 %v40
  %v640 = vunpack.c.l.b16 %v41
  %v641 = vunpack.c.l.b16 %v42
  %v642 = vunpack.c.l.b16 %v43
  %v643 = vunpack.c.l.b16 %v44
  %v644 = vunpack.c.l.b16 %v45
  %v645 = vunpack.c.l.b16 %v46
  %v646 = vunpack.c.l.b16 %v47
  %v647 = vunpack.c.l.b16 %v48
  %v648 = vunpack.c.l.b16 %v49
  %v649 = vunpack.c.l.b16 %v50
  %v650 = vunpack.c.l.b16 %v51
  %v651 = vunpack.c.l.b16 %v52
  %v652 = vunpack.c.l.b16 %v53
  %v653 = vunpack.c.l.b16 %v54
  %v654 = vunpack.c.l.b16 %v55
  %v655 = vunpack.c.l.b16 %v56
  %v656 = vunpack.c.l.b16 %v57
  %v657 = vunpack.c.l.b16 %v58
  %v658 = vunpack.c.l.b16 %v59
  %v659 = vunpack.c.l.b16 %v60
  %v660 = vunpack.c.l.b16 %v61
  %v661 = vunpack.c.l.b16 %v62
  %v662 = vunpack.c.l.b16 %v63
  %v663 = vunpack.c.l.b16 %v64
  %v664 = vunpack.c.l.b16 %v65
  %v665 = vunpack.c.l.b16 %v66
  %v666 = vunpack.c.l.b16 %v67
  %v667 = vunpack.c.l.b16 %v68
  %v668 = vunpack.c.l.b16 %v69
  %v669 = vunpack.c.l.b16 %v70
  %v670 = vunpack.c.l.b16 %v71
  %v671 = vunpack.c.l.b16 %v72
  %v672 = vunpack.c.l.b16 %v73
  %v673 = vunpack.c.l.b16 %v74
  %v674 = vunpack.c.l.b16 %v75
  %v675 = vunpack.c.l.b16 %v76
  %v676 = vunpack.c.l.b16 %v77
  %v677 = vunpack.c.l.b16 %v78
  %v678 = vunpack.c.l.b16 %v79
  %v679 = vunpack.c.l.b16 %v80
  %v680 = vunpack.c.l.b16 %v81
  %v681 = vunpack.c.l.b16 %v82
  %v682 = vunpack.c.l.b16 %v83
  %v683 = vunpack.c.l.b16 %v84
  %v684 = vunpack.c.l.b16 %v85
  %v685 = vunpack.c.l.b16 %v86
  %v686 = vunpack.c.l.b16 %v87
  %v687 = vunpack.c.l.b16 %v88
  %v688 = vunpack.c.l.b16 %v89
  %v689 = vunpack.c.l.b16 %v90
  %v690 = vunpack.c.l.b16 %v91
  %v691 = vunpack.c.l.b16 %v92
  %v692 = vunpack.c.l.b16 %v93
  %v693 = vunpack.c.l.b16 %v94
  %v694 = vunpack.c.l.b16 %v95
  %v695 = vunpack.c.l.b16 %v96
  %v696 = vunpack.c.l.b16 %v97
  %v697 = vunpack.c.l.b16 %v98
  %v698 = vunpack.c.l.b16 %v99
  %v699 = vunpack.c.l.b16 %v100
  %v700 = vunpack.c.l.b16 %v101
  %v701 = vunpack.c.l.b16 %v102
  %v702 = vunpack.c.l.b16 %v103
  %v703 = vunpack.c.l.b16 %v104
  %v704 = vunpack.c.l.b16 %v105
  %v705 = vunpack.c.l.b16 %v106
  %v706 = vunpack.c.l.b16 %v107
  %v707 = vunpack.c.l.b16 %v108
  %v708 = vunpack.c.l.b16 %v109
  %v709 = vunpack.c.l.b16 %v110
  %v710 = vunpack.c.l.b16 %v111
  %v711 = vunpack.c.l.b16 %v112
  %v712 = vunpack.c.l.b16 %v113
  %v713 = vunpack.c.l.b16 %v114
  %v714 = vunpack.c.l.b16 %v115
  %v715 = vunpack.c.l.b16 %v116
  %v716 = vunpack.c.l.b16 %v117
  %v717 = vunpack.c.l.b16 %v118
  %v718 = vunpack.c.l.b16 %v119
  %v719 = vunpack.c.l.b16 %v120
  %v720 = vunpack.c.l.b16 %v121
  %v721 = vunpack.c.l.b16 %v122
  %v722 = vunpack.c.l.b16 %v123
  %v723 = vunpack.c.l.b16 %v124
  %v724 = vunpack.c.l.b16 %v125
  %v725 = vunpack.c.l.b16 %v126
  %v726 = vunpack.c.l.b16 %v127
  %v727 = vunpack.c.l.b16 %v128
  %v728 = vunpack.c.l.b16 %v129
  %v729 = vunpack.c.l.b16 %v130
  %v730 = vunpack.c.l.b16 %v131
  %v731 = vunpack.c.l.b16 %v132
  %v732 = vunpack.c.l.b16 %v133
  %v733 = vunpack.c.l.b16 %v134
  %v734 = vunpack.c.l.b16 %v135
  %v735 = vunpack.c.l.b16 %v136
  %v736 = vunpack.c.l.b16 %v137
  %v737 = vunpack.c.l.b16 %v138
  %v738 = vunpack.c.l.b16 %v139
  %v739 = vunpack.c.l.b16 %v140
  %v740 = vunpack.c.l.b16 %v141
  %v741 = vunpack.c.l.b16 %v142
  %v742 = vunpack.c.l.b16 %v143
  %v743 = vunpack.c.l.b16 %v144
  %v744 = vunpack.c.l.b16 %v145
  %v745 = vunpack.c.l.b16 %v146
  %v746 = vunpack.c.l.b16 %v147
  %v747 = vunpack.c.l.b16 %v148
  %v748 = vunpack.c.l.b16 %v149
  %v749 = vunpack.c.l.b16 %v150
  %v750 = vunpack.c.l.b16 %v151
  %v751 = vunpack.c.l.b16 %v152
  %v752 = vunpack.c.l.b16 %v153
  %v753 = vunpack.c.l.b16 %v154
  %v754 = vunpack.c.l.b16 %v155
  %v755 = vunpack.c.l.b16 %v156
  %v756 = vunpack.c.l.b16 %v157
  %v757 = vunpack.c.l.b16 %v158
  %v758 = vunpack.c.l.b16 %v159
  %v759 = vunpack.c.l.b16 %v160
  %v760 = vunpack.c.l.b16 %v161
  %v761 = vunpack.c.l.b16 %v162
  %v762 = vunpack.c.l.b16 %v163
  %v763 = vunpack.c.l.b16 %v164
  %v764 = vunpack.c.l.b16 %v165
  %v765 = vunpack.c.l.b16 %v166
  %v766 = vunpack.c.l.b16 %v167
  %v767 = vunpack.c.l.b16 %v168
  %v768 = vunpack.c.l.b16 %v169
  %v769 = vunpack.c.l.b16 %v170
  %v770 = vunpack.c.l.b16 %v171
  %v771 = vunpack.c.l.b16 %v172
  %v772 = vunpack.c.l.b16 %v173
  %v773 = vunpack.c.l.b16 %v174
  %v774 = vunpack.c.l.b16 %v175
  %v775 = vunpack.c.l.b16 %v176
  %v776 = vunpack.c.l.b16 %v177
  %v777 = vunpack.c.l.b16 %v178
  %v778 = vunpack.c.l.b16 %v179
  %v779 = vunpack.c.l.b16 %v180
  %v780 = vunpack.c.l.b16 %v181
  %v781 = vunpack.c.l.b16 %v182
  %v782 = vunpack.c.l.b16 %v183
  %v783 = vunpack.c.l.b16 %v184
  %v784 = vunpack.c.l.b16 %v185
  %v785 = vunpack.c.l.b16 %v186
  %v786 = vunpack.c.l.b16 %v187
  %v787 = vunpack.c.l.b16 %v188
  %v788 = vunpack.c.l.b16 %v189
  %v789 = vunpack.c.l.b16 %v190
  %v790 = vunpack.c.l.b16 %v191
  %v791 = vunpack.c.l.b16 %v192
  %v792 = vunpack.c.l.b16 %v193
  %v793 = vunpack.c.l.b16 %v194
  %v794 = vunpack.c.l.b16 %v195
  %v795 = vunpack.c.l.b16 %v196
  %v796 = vunpack.c.l.b16 %v197
  %v797 = vunpack.c.l.b16 %v198
  %v798 = vunpack.c.l.b16 %v199
  %v799 = vunpack.c.l.b16 %v200
  %v800 = vunpack.c.l.b16 %v201
  %v801 = vunpack.c.l.b16 %v202
  %v802 = vunpack.c.l.b16 %v203
  %v803 = vunpack.c.l.b16 %v204
  %v804 = vunpack.c.l.b16 %v205
  %v805 = vunpack.c.l.b16 %v206
  %v806 = vunpack.c.l.b16 %v207
  %v807 = vunpack.c.l.b16 %v208
  %v808 = vunpack.c.l.b16 %v209
  %v809 = vunpack.c.l.b16 %v210
  %v810 = vunpack.c.l.b16 %v211
  %v811 = vunpack.c.l.b16 %v212
  %v812 = vunpack.c.l.b16 %v213
  %v813 = vunpack.c.l.b16 %v214
  %v814 = vunpack.c.l.b16 %v215
  %v815 = vunpack.c.l.b16 %v216
  %v816 = vunpack.c.l.b16 %v217
  %v817 = vunpack.c.l.b16 %v218
  %v818 = vunpack.c.l.b16 %v219
  %v819 = vunpack.c.l.b16 %v220
  %v820 = vunpack.c.l.b16 %v221
  %v821 = vunpack.c.l.b16 %v222
  %v822 = vunpack.c.l.b16 %v223
  %v823 = vunpack.c.l.b16 %v224
  %v824 = vunpack.c.l.b16 %v225
  %v825 = vunpack.c.l.b16 %v226
  %v826 = vunpack.c.l.b16 %v227
  %v827 = vunpack.c.l.b16 %v228
  %v828 = vunpack.c.l.b16 %v229
  %v829 = vunpack.c.l.b16 %v230
  %v830 = vunpack.c.l.b16 %v231
  %v831 = vunpack.c.l.b16 %v232
  %v832 = vunpack.c.l.b16 %v233
  %v833 = vunpack.c.l.b16 %v234
  %v834 = vunpack.c.l.b16 %v235
  %v835 = vunpack.c.l.b16 %v236
  %v836 = vunpack.c.l.b16 %v237
  %v837 = vunpack.c.l.b16 %v238
  %v838 = vunpack.c.l.b16 %v239
  %v839 = vunpack.c.l.b16 %v240
  %v840 = vunpack.c.l.b16 %v241
  %v841 = vunpack.c.l.b16 %v242
  %v842 = vunpack.c.l.b16 %v243
  %v843 = vunpack.c.l.b16 %v244
  %v844 = vunpack.c.l.b16 %v245
  %v845 = vunpack.c.l.b16 %v246
  %v846 = vunpack.c.l.b16 %v247
  %v847 = vunpack.c.l.b16 %v248
  %v848 = vunpack.c.l.b16 %v249
  %v849 = vunpack.c.l.b16 %v250
  %v850 = vunpack.c.l.b16 %v251
  %v851 = vunpack.c.l.b16 %v252
  %v852 = vunpack.c.l.b16 %v253
  %v853 = vunpack.c.l.b16 %v254
  %v854 = vunpack.c.l.b16 %v255
  %v855 = vunpack.c.l.b16 %v256
  %v856 = vunpack.c.l.b16 %v257
  %v857 = vunpack.c.l.b16 %v258
  %v858 = vunpack.c.l.b16 %v259
  %v859 = vunpack.c.l.b16 %v260
  %v860 = vunpack.c.l.b16 %v261
  %v861 = vunpack.c.l.b16 %v262
  %v862 = vunpack.c.l.b16 %v263
  %v863 = vunpack.c.l.b16 %v264
  %v864 = vunpack.c.l.b16 %v265
  %v865 = vunpack.c.l.b16 %v266
  %v866 = vunpack.c.l.b16 %v267
  %v867 = vunpack.c.l.b16 %v268
  %v868 = vunpack.c.l.b16 %v269
  %v869 = vunpack.c.l.b16 %v270
  %v870 = vunpack.c.l.b16 %v271
  %v871 = vunpack.c.l.b16 %v272
  %v872 = vunpack.c.l.b16 %v273
  %v873 = vunpack.c.l.b16 %v274
  %v874 = vunpack.c.l.b16 %v275
  %v875 = vunpack.c.l.b16 %v276
  %v876 = vunpack.c.l.b16 %v277
  %v877 = vunpack.c.l.b16 %v278
  %v878 = vunpack.c.l.b16 %v279
  %v879 = vunpack.c.l.b16 %v280
  %v880 = vunpack.c.l.b16 %v281
  %v881 = vunpack.c.l.b16 %v282
  %v882 = vunpack.c.l.b16 %v283
  %v883 = vunpack.c.l.b16 %v284
  %v884 = vunpack.c.l.b16 %v285
  %v885 = vunpack.c.l.b16 %v286
  %v886 = vpack.c.b16 %v631, %v630
  %v887 = vpack.c.b16 %v633, %v632
  %v888 = vpack.c.b16 %v635, %v634
  %v889 = vpack.c.b16 %v637, %v636
  %v890 = vpack.c.b16 %v639, %v638
  %v891 = vpack.c.b16 %v641, %v640
  %v892 = vpack.c.b16 %v643, %v642
  %v893 = vpack.c.b16 %v645, %v644
  %v894 = vpack.c.b16 %v647, %v646
  %v895 = vpack.c.b16 %v649, %v648
  %v896 = vpack.c.b16 %v651, %v650
  %v897 = vpack.c.b16 %v653, %v652
  %v898 = vpack.c.b16 %v655, %v654
  %v899 = vpack.c.b16 %v657, %v656
  %v900 = vpack.c.b16 %v659, %v658
  %v901 = vpack.c.b16 %v661, %v660
  %v902 = vpack.c.b16 %v663, %v662
  %v903 = vpack.c.b16 %v665, %v664
  %v904 = vpack.c.b16 %v667, %v666
  %v905 = vpack.c.b16 %v669, %v668
  %v906 = vpack.c.b16 %v671, %v670
  %v907 = vpack.c.b16 %v673, %v672
  %v908 = vpack.c.b16 %v675, %v674
  %v909 = vpack.c.b16 %v677, %v676
  %v910 = vpack.c.b16 %v679, %v678
  %v911 = vpack.c.b16 %v681, %v680
  %v912 = vpack.c.b16 %v683, %v682
  %v913 = vpack.c.b16 %v685, %v684
  %v914 = vpack.c.b16 %v687, %v686
  %v915 = vpack.c.b16 %v689, %v688
  %v916 = vpack.c.b16 %v691, %v690
  %v917 = vpack.c.b16 %v693, %v692
  %v918 = vpack.c.b16 %v695, %v694
  %v919 = vpack.c.b16 %v697, %v696
  %v920 = vpack.c.b16 %v699, %v698
  %v921 = vpack.c.b16 %v701, %v700
  %v922 = vpack.c.b16 %v703, %v702
  %v923 = vpack.c.b16 %v705, %v704
  %v924 = vpack.c.b16 %v707, %v706
  %v925 = vpack.c.b16 %v709, %v708
  %v926 = vpack.c.b16 %v711, %v710
  %v927 = vpack.c.b16 %v713, %v712
  %v928 = vpack.c.b16 %v715, %v714
  %v929 = vpack.c.b16 %v717, %v716
  %v930 = vpack.c.b16 %v719, %v718
  %v931 = vpack.c.b16 %v721, %v720
  %v932 = vpack.c.b16 %v723, %v722
  %v933 = vpack.c.b16 %v725, %v724
  %v934 = vpack.c.b16 %v727, %v726
  %v935 = vpack.c.b16 %v729, %v728
  %v936 = vpack.c.b16 %v731, %v730
  %v937 = vpack.c.b16 %v733, %v732
  %v938 = vpack.c.b16 %v735, %v734
  %v939 = vpack.c.b16 %v737, %v736
  %v940 = vpack.c.b16 %v739, %v738
  %v941 = vpack.c.b16 %v741, %v740
  %v942 = vpack.c.b16 %v743, %v742
  %v943 = vpack.c.b16 %v745, %v744
  %v944 = vpack.c.b16 %v747, %v746
  %v945 = vpack.c.b16 %v749, %v748
  %v946 = vpack.c.b16 %v751, %v750
  %v947 = vpack.c.b16 %v753, %v752
  %v948 = vpack.c.b16 %v755, %v754
  %v949 = vpack.c.b16 %v757, %v756
  %v950 = vpack.c.b16 %v759, %v758
  %v951 = vpack.c.b16 %v761, %v760
  %v952 = vpack.c.b16 %v763, %v762
  %v953 = vpack.c.b16 %v765, %v764
  %v954 = vpack.c.b16 %v767, %v766
  %v955 = vpack.c.b16 %v769, %v768
  %v956 = vpack.c.b16 %v771, %v770
  %v957 = vpack.c.b16 %v773, %v772
  %v958 = vpack.c.b16 %v775, %v774
  %v959 = vpack.c.b16 %v777, %v776
  %v960 = vpack.c.b16 %v779, %v778
  %v961 = vpack.c.b16 %v781, %v780
  %v962 = vpack.c.b16 %v783, %v782
  %v963 = vpack.c.b16 %v785, %v784
  %v964 = vpack.c.b16 %v787, %v786
  %v965 = vpack.c.b16 %v789, %v788
  %v966 = vpack.c.b16 %v791, %v790
  %v967 = vpack.c.b16 %v793, %v792
  %v968 = vpack.c.b16 %v795, %v794
  %v969 = vpack.c.b16 %v797, %v796
  %v970 = vpack.c.b16 %v799, %v798
  %v971 = vpack.c.b16 %v801, %v800
  %v972 = vpack.c.b16 %v803, %v802
  %v973 = vpack.c.b16 %v805, %v804
  %v974 = vpack.c.b16 %v807, %v806
  %v975 = vpack.c.b16 %v809, %v808
  %v976 = vpack.c.b16 %v811, %v810
  %v977 = vpack.c.b16 %v813, %v812
  %v978 = vpack.c.b16 %v815, %v814
  %v979 = vpack.c.b16 %v817, %v816
  %v980 = vpack.c.b16 %v819, %v818
  %v981 = vpack.c.b16 %v821, %v820
  %v982 = vpack.c.b16 %v823, %v822
  %v983 = vpack.c.b16 %v825, %v824
  %v984 = vpack.c.b16 %v827, %v826
  %v985 = vpack.c.b16 %v829, %v828
  %v986 = vpack.c.b16 %v831, %v830
  %v987 = vpack.c.b16 %v833, %v832
  %v988 = vpack.c.b16 %v835, %v834
  %v989 = vpack.c.b16 %v837, %v836
  %v990 = vpack.c.b16 %v839, %v838
  %v991 = vpack.c.b16 %v841, %v840
  %v992 = vpack.c.b16 %v843, %v842
  %v993 = vpack.c.b16 %v845, %v844
  %v994 = vpack.c.b16 %v847, %v846
  %v995 = vpack.c.b16 %v849, %v848
  %v996 = vpack.c.b16 %v851, %v850
  %v997 = vpack.c.b16 %v853, %v852
  %v998 = vpack.c.b16 %v855, %v854
  %v999 = vpack.c.b16 %v857, %v856
  %v1000 = vpack.c.b16 %v859, %v858
  %v1001 = vpack.c.b16 %v861, %v860
  %v1002 = vpack.c.b16 %v863, %v862
  %v1003 = vpack.c.b16 %v865, %v864
  %v1004 = vpack.c.b16 %v867, %v866
  %v1005 = vpack.c.b16 %v869, %v868
  %v1006 = vpack.c.b16 %v871, %v870
  %v1007 = vpack.c.b16 %v873, %v872
  %v1008 = vpack.c.b16 %v875, %v874
  %v1009 = vpack.c.b16 %v877, %v876
  %v1010 = vpack.c.b16 %v879, %v878
  %v1011 = vpack.c.b16 %v881, %v880
  %v1012 = vpack.c.b16 %v883, %v882
  %v1013 = vpack.c.b16 %v885, %v884
  %1142 = vmatprep.subr.bf16.mxu0 0
  %1143 = vmatpush1.bf16.msra.mxu0 %v886
  %1144 = vmatprep.subr.bf16.mxu0 0
  %1145 = vmatpush1.bf16.msra.mxu0 %v887
  %1146 = vmatprep.subr.bf16.mxu0 0
  %1147 = vmatpush1.bf16.msra.mxu0 %v888
  %1148 = vmatprep.subr.bf16.mxu0 0
  %1149 = vmatpush1.bf16.msra.mxu0 %v889
  %1150 = vmatprep.subr.bf16.mxu0 0
  %1151 = vmatpush1.bf16.msra.mxu0 %v890
  %1152 = vmatprep.subr.bf16.mxu0 0
  %1153 = vmatpush1.bf16.msra.mxu0 %v891
  %1154 = vmatprep.subr.bf16.mxu0 0
  %1155 = vmatpush1.bf16.msra.mxu0 %v892
  %1156 = vmatprep.subr.bf16.mxu0 0
  %1157 = vmatpush1.bf16.msra.mxu0 %v893
  %1158 = vmatprep.subr.bf16.mxu0 0
  %1159 = vmatpush1.bf16.msra.mxu0 %v894
  %1160 = vmatprep.subr.bf16.mxu0 0
  %1161 = vmatpush1.bf16.msra.mxu0 %v895
  %1162 = vmatprep.subr.bf16.mxu0 0
  %1163 = vmatpush1.bf16.msra.mxu0 %v896
  %1164 = vmatprep.subr.bf16.mxu0 0
  %1165 = vmatpush1.bf16.msra.mxu0 %v897
  %1166 = vmatprep.subr.bf16.mxu0 0
  %1167 = vmatpush1.bf16.msra.mxu0 %v898
  %1168 = vmatprep.subr.bf16.mxu0 0
  %1169 = vmatpush1.bf16.msra.mxu0 %v899
  %1170 = vmatprep.subr.bf16.mxu0 0
  %1171 = vmatpush1.bf16.msra.mxu0 %v900
  %1172 = vmatprep.subr.bf16.mxu0 0
  %1173 = vmatpush1.bf16.msra.mxu0 %v901
  %1174 = vmatprep.mubr.bf16.mxu0 %v343
  %1175 = vmatmul.mubr.bf16.gmra.mrb[0].mxu0 %v342
  %v1176 = vpop.f32.mrb[0].mxu0
  %v1177 = vadd.f32 %v292, %v1176
  %v1178 = vpop.f32.mrb[0].mxu0
  %v1179 = vpop.f32.mrb[0].mxu0
  %v1180 = vadd.f32 %v292, %v1179
  %v1181 = vpop.f32.mrb[0].mxu0
  %1182 = vdwg.mxu0
  %1183 = vmatprep.subr.bf16.mxu0 0
  %1184 = vmatpush1.bf16.msra.mxu0 %v902
  %1185 = vmatprep.subr.bf16.mxu0 0
  %1186 = vmatpush1.bf16.msra.mxu0 %v903
  %1187 = vmatprep.subr.bf16.mxu0 0
  %1188 = vmatpush1.bf16.msra.mxu0 %v904
  %1189 = vmatprep.subr.bf16.mxu0 0
  %1190 = vmatpush1.bf16.msra.mxu0 %v905
  %1191 = vmatprep.subr.bf16.mxu0 0
  %1192 = vmatpush1.bf16.msra.mxu0 %v906
  %1193 = vmatprep.subr.bf16.mxu0 0
  %1194 = vmatpush1.bf16.msra.mxu0 %v907
  %1195 = vmatprep.subr.bf16.mxu0 0
  %1196 = vmatpush1.bf16.msra.mxu0 %v908
  %1197 = vmatprep.subr.bf16.mxu0 0
  %1198 = vmatpush1.bf16.msra.mxu0 %v909
  %1199 = vmatprep.subr.bf16.mxu0 0
  %1200 = vmatpush1.bf16.msra.mxu0 %v910
  %1201 = vmatprep.subr.bf16.mxu0 0
  %1202 = vmatpush1.bf16.msra.mxu0 %v911
  %1203 = vmatprep.subr.bf16.mxu0 0
  %1204 = vmatpush1.bf16.msra.mxu0 %v912
  %1205 = vmatprep.subr.bf16.mxu0 0
  %1206 = vmatpush1.bf16.msra.mxu0 %v913
  %1207 = vmatprep.subr.bf16.mxu0 0
  %1208 = vmatpush1.bf16.msra.mxu0 %v914
  %1209 = vmatprep.subr.bf16.mxu0 0
  %1210 = vmatpush1.bf16.msra.mxu0 %v915
  %1211 = vmatprep.subr.bf16.mxu0 0
  %1212 = vmatpush1.bf16.msra.mxu0 %v916
  %1213 = vmatprep.subr.bf16.mxu0 0
  %1214 = vmatpush1.bf16.msra.mxu0 %v917
  %1215 = vmatprep.mubr.bf16.mxu0 %v345
  %1216 = vmatmul.mubr.bf16.gmra.mrb[0].mxu0 %v344
  %v1217 = vpop.f32.mrb[0].mxu0
  %v1218 = vadd.f32 %v1177, %v1217
  %v1219 = vpop.f32.mrb[0].mxu0
  %v1220 = vpop.f32.mrb[0].mxu0
  %v1221 = vadd.f32 %v1180, %v1220
  %v1222 = vpop.f32.mrb[0].mxu0
  %1223 = vdwg.mxu0
  %1224 = vmatprep.subr.bf16.mxu0 0
  %1225 = vmatpush1.bf16.msra.mxu0 %v918
  %1226 = vmatprep.subr.bf16.mxu0 0
  %1227 = vmatpush1.bf16.msra.mxu0 %v919
  %1228 = vmatprep.subr.bf16.mxu0 0
  %1229 = vmatpush1.bf16.msra.mxu0 %v920
  %1230 = vmatprep.subr.bf16.mxu0 0
  %1231 = vmatpush1.bf16.msra.mxu0 %v921
  %1232 = vmatprep.subr.bf16.mxu0 0
  %1233 = vmatpush1.bf16.msra.mxu0 %v922
  %1234 = vmatprep.subr.bf16.mxu0 0
  %1235 = vmatpush1.bf16.msra.mxu0 %v923
  %1236 = vmatprep.subr.bf16.mxu0 0
  %1237 = vmatpush1.bf16.msra.mxu0 %v924
  %1238 = vmatprep.subr.bf16.mxu0 0
  %1239 = vmatpush1.bf16.msra.mxu0 %v925
  %1240 = vmatprep.subr.bf16.mxu0 0
  %1241 = vmatpush1.bf16.msra.mxu0 %v926
  %1242 = vmatprep.subr.bf16.mxu0 0
  %1243 = vmatpush1.bf16.msra.mxu0 %v927
  %1244 = vmatprep.subr.bf16.mxu0 0
  %1245 = vmatpush1.bf16.msra.mxu0 %v928
  %1246 = vmatprep.subr.bf16.mxu0 0
  %1247 = vmatpush1.bf16.msra.mxu0 %v929
  %1248 = vmatprep.subr.bf16.mxu0 0
  %1249 = vmatpush1.bf16.msra.mxu0 %v930
  %1250 = vmatprep.subr.bf16.mxu0 0
  %1251 = vmatpush1.bf16.msra.mxu0 %v931
  %1252 = vmatprep.subr.bf16.mxu0 0
  %1253 = vmatpush1.bf16.msra.mxu0 %v932
  %1254 = vmatprep.subr.bf16.mxu0 0
  %1255 = vmatpush1.bf16.msra.mxu0 %v933
  %1256 = vmatprep.mubr.bf16.mxu0 %v347
  %1257 = vmatmul.mubr.bf16.gmra.mrb[0].mxu0 %v346
  %v1258 = vpop.f32.mrb[0].mxu0
  %v1259 = vadd.f32 %v1218, %v1258
  %v1260 = vpop.f32.mrb[0].mxu0
  %v1261 = vpop.f32.mrb[0].mxu0
  %v1262 = vadd.f32 %v1221, %v1261
  %v1263 = vpop.f32.mrb[0].mxu0
  %1264 = vdwg.mxu0
  %1265 = vmatprep.subr.bf16.mxu0 0
  %1266 = vmatpush1.bf16.msra.mxu0 %v934
  %1267 = vmatprep.subr.bf16.mxu0 0
  %1268 = vmatpush1.bf16.msra.mxu0 %v935
  %1269 = vmatprep.subr.bf16.mxu0 0
  %1270 = vmatpush1.bf16.msra.mxu0 %v936
  %1271 = vmatprep.subr.bf16.mxu0 0
  %1272 = vmatpush1.bf16.msra.mxu0 %v937
  %1273 = vmatprep.subr.bf16.mxu0 0
  %1274 = vmatpush1.bf16.msra.mxu0 %v938
  %1275 = vmatprep.subr.bf16.mxu0 0
  %1276 = vmatpush1.bf16.msra.mxu0 %v939
  %1277 = vmatprep.subr.bf16.mxu0 0
  %1278 = vmatpush1.bf16.msra.mxu0 %v940
  %1279 = vmatprep.subr.bf16.mxu0 0
  %1280 = vmatpush1.bf16.msra.mxu0 %v941
  %1281 = vmatprep.subr.bf16.mxu0 0
  %1282 = vmatpush1.bf16.msra.mxu0 %v942
  %1283 = vmatprep.subr.bf16.mxu0 0
  %1284 = vmatpush1.bf16.msra.mxu0 %v943
  %1285 = vmatprep.subr.bf16.mxu0 0
  %1286 = vmatpush1.bf16.msra.mxu0 %v944
  %1287 = vmatprep.subr.bf16.mxu0 0
  %1288 = vmatpush1.bf16.msra.mxu0 %v945
  %1289 = vmatprep.subr.bf16.mxu0 0
  %1290 = vmatpush1.bf16.msra.mxu0 %v946
  %1291 = vmatprep.subr.bf16.mxu0 0
  %1292 = vmatpush1.bf16.msra.mxu0 %v947
  %1293 = vmatprep.subr.bf16.mxu0 0
  %1294 = vmatpush1.bf16.msra.mxu0 %v948
  %1295 = vmatprep.subr.bf16.mxu0 0
  %1296 = vmatpush1.bf16.msra.mxu0 %v949
  %1297 = vmatprep.mubr.bf16.mxu0 %v349
  %1298 = vmatmul.mubr.bf16.gmra.mrb[0].mxu0 %v348
  %v1299 = vpop.f32.mrb[0].mxu0
  %v1300 = vadd.f32 %v1259, %v1299
  %v1301 = vpop.f32.mrb[0].mxu0
  %v1302 = vpop.f32.mrb[0].mxu0
  %v1303 = vadd.f32 %v1262, %v1302
  %v1304 = vpop.f32.mrb[0].mxu0
  %1305 = vdwg.mxu0
  %1306 = vmatprep.subr.bf16.mxu0 0
  %1307 = vmatpush1.bf16.msra.mxu0 %v950
  %1308 = vmatprep.subr.bf16.mxu0 0
  %1309 = vmatpush1.bf16.msra.mxu0 %v951
  %1310 = vmatprep.subr.bf16.mxu0 0
  %1311 = vmatpush1.bf16.msra.mxu0 %v952
  %1312 = vmatprep.subr.bf16.mxu0 0
  %1313 = vmatpush1.bf16.msra.mxu0 %v953
  %1314 = vmatprep.subr.bf16.mxu0 0
  %1315 = vmatpush1.bf16.msra.mxu0 %v954
  %1316 = vmatprep.subr.bf16.mxu0 0
  %1317 = vmatpush1.bf16.msra.mxu0 %v955
  %1318 = vmatprep.subr.bf16.mxu0 0
  %1319 = vmatpush1.bf16.msra.mxu0 %v956
  %1320 = vmatprep.subr.bf16.mxu0 0
  %1321 = vmatpush1.bf16.msra.mxu0 %v957
  %1322 = vmatprep.subr.bf16.mxu0 0
  %1323 = vmatpush1.bf16.msra.mxu0 %v958
  %1324 = vmatprep.subr.bf16.mxu0 0
  %1325 = vmatpush1.bf16.msra.mxu0 %v959
  %1326 = vmatprep.subr.bf16.mxu0 0
  %1327 = vmatpush1.bf16.msra.mxu0 %v960
  %1328 = vmatprep.subr.bf16.mxu0 0
  %1329 = vmatpush1.bf16.msra.mxu0 %v961
  %1330 = vmatprep.subr.bf16.mxu0 0
  %1331 = vmatpush1.bf16.msra.mxu0 %v962
  %1332 = vmatprep.subr.bf16.mxu0 0
  %1333 = vmatpush1.bf16.msra.mxu0 %v963
  %1334 = vmatprep.subr.bf16.mxu0 0
  %1335 = vmatpush1.bf16.msra.mxu0 %v964
  %1336 = vmatprep.subr.bf16.mxu0 0
  %1337 = vmatpush1.bf16.msra.mxu0 %v965
  %1338 = vmatprep.mubr.bf16.mxu0 %v351
  %1339 = vmatmul.mubr.bf16.gmra.mrb[0].mxu0 %v350
  %v1340 = vpop.f32.mrb[0].mxu0
  %v1341 = vadd.f32 %v1300, %v1340
  %v1342 = vpop.f32.mrb[0].mxu0
  %v1343 = vpop.f32.mrb[0].mxu0
  %v1344 = vadd.f32 %v1303, %v1343
  %v1345 = vpop.f32.mrb[0].mxu0
  %1346 = vdwg.mxu0
  %1347 = vmatprep.subr.bf16.mxu0 0
  %1348 = vmatpush1.bf16.msra.mxu0 %v966
  %1349 = vmatprep.subr.bf16.mxu0 0
  %1350 = vmatpush1.bf16.msra.mxu0 %v967
  %1351 = vmatprep.subr.bf16.mxu0 0
  %1352 = vmatpush1.bf16.msra.mxu0 %v968
  %1353 = vmatprep.subr.bf16.mxu0 0
  %1354 = vmatpush1.bf16.msra.mxu0 %v969
  %1355 = vmatprep.subr.bf16.mxu0 0
  %1356 = vmatpush1.bf16.msra.mxu0 %v970
  %1357 = vmatprep.subr.bf16.mxu0 0
  %1358 = vmatpush1.bf16.msra.mxu0 %v971
  %1359 = vmatprep.subr.bf16.mxu0 0
  %1360 = vmatpush1.bf16.msra.mxu0 %v972
  %1361 = vmatprep.subr.bf16.mxu0 0
  %1362 = vmatpush1.bf16.msra.mxu0 %v973
  %1363 = vmatprep.subr.bf16.mxu0 0
  %1364 = vmatpush1.bf16.msra.mxu0 %v974
  %1365 = vmatprep.subr.bf16.mxu0 0
  %1366 = vmatpush1.bf16.msra.mxu0 %v975
  %1367 = vmatprep.subr.bf16.mxu0 0
  %1368 = vmatpush1.bf16.msra.mxu0 %v976
  %1369 = vmatprep.subr.bf16.mxu0 0
  %1370 = vmatpush1.bf16.msra.mxu0 %v977
  %1371 = vmatprep.subr.bf16.mxu0 0
  %1372 = vmatpush1.bf16.msra.mxu0 %v978
  %1373 = vmatprep.subr.bf16.mxu0 0
  %1374 = vmatpush1.bf16.msra.mxu0 %v979
  %1375 = vmatprep.subr.bf16.mxu0 0
  %1376 = vmatpush1.bf16.msra.mxu0 %v980
  %1377 = vmatprep.subr.bf16.mxu0 0
  %1378 = vmatpush1.bf16.msra.mxu0 %v981
  %1379 = vmatprep.mubr.bf16.mxu0 %v353
  %1380 = vmatmul.mubr.bf16.gmra.mrb[0].mxu0 %v352
  %v1381 = vpop.f32.mrb[0].mxu0
  %v1382 = vadd.f32 %v1341, %v1381
  %v1383 = vpop.f32.mrb[0].mxu0
  %v1384 = vpop.f32.mrb[0].mxu0
  %v1385 = vadd.f32 %v1344, %v1384
  %v1386 = vpop.f32.mrb[0].mxu0
  %1387 = vdwg.mxu0
  %1388 = vmatprep.subr.bf16.mxu0 0
  %1389 = vmatpush1.bf16.msra.mxu0 %v982
  %1390 = vmatprep.subr.bf16.mxu0 0
  %1391 = vmatpush1.bf16.msra.mxu0 %v983
  %1392 = vmatprep.subr.bf16.mxu0 0
  %1393 = vmatpush1.bf16.msra.mxu0 %v984
  %1394 = vmatprep.subr.bf16.mxu0 0
  %1395 = vmatpush1.bf16.msra.mxu0 %v985
  %1396 = vmatprep.subr.bf16.mxu0 0
  %1397 = vmatpush1.bf16.msra.mxu0 %v986
  %1398 = vmatprep.subr.bf16.mxu0 0
  %1399 = vmatpush1.bf16.msra.mxu0 %v987
  %1400 = vmatprep.subr.bf16.mxu0 0
  %1401 = vmatpush1.bf16.msra.mxu0 %v988
  %1402 = vmatprep.subr.bf16.mxu0 0
  %1403 = vmatpush1.bf16.msra.mxu0 %v989
  %1404 = vmatprep.subr.bf16.mxu0 0
  %1405 = vmatpush1.bf16.msra.mxu0 %v990
  %1406 = vmatprep.subr.bf16.mxu0 0
  %1407 = vmatpush1.bf16.msra.mxu0 %v991
  %1408 = vmatprep.subr.bf16.mxu0 0
  %1409 = vmatpush1.bf16.msra.mxu0 %v992
  %1410 = vmatprep.subr.bf16.mxu0 0
  %1411 = vmatpush1.bf16.msra.mxu0 %v993
  %1412 = vmatprep.subr.bf16.mxu0 0
  %1413 = vmatpush1.bf16.msra.mxu0 %v994
  %1414 = vmatprep.subr.bf16.mxu0 0
  %1415 = vmatpush1.bf16.msra.mxu0 %v995
  %1416 = vmatprep.subr.bf16.mxu0 0
  %1417 = vmatpush1.bf16.msra.mxu0 %v996
  %1418 = vmatprep.subr.bf16.mxu0 0
  %1419 = vmatpush1.bf16.msra.mxu0 %v997
  %1420 = vmatprep.mubr.bf16.mxu0 %v355
  %1421 = vmatmul.mubr.bf16.gmra.mrb[0].mxu0 %v354
  %v1422 = vpop.f32.mrb[0].mxu0
  %v1423 = vadd.f32 %v1382, %v1422
  %v1424 = vpop.f32.mrb[0].mxu0
  %v1425 = vpop.f32.mrb[0].mxu0
  %v1426 = vadd.f32 %v1385, %v1425
  %v1427 = vpop.f32.mrb[0].mxu0
  %1428 = vdwg.mxu0
  %1429 = vmatprep.subr.bf16.mxu0 0
  %1430 = vmatpush1.bf16.msra.mxu0 %v998
  %1431 = vmatprep.subr.bf16.mxu0 0
  %1432 = vmatpush1.bf16.msra.mxu0 %v999
  %1433 = vmatprep.subr.bf16.mxu0 0
  %1434 = vmatpush1.bf16.msra.mxu0 %v1000
  %1435 = vmatprep.subr.bf16.mxu0 0
  %1436 = vmatpush1.bf16.msra.mxu0 %v1001
  %1437 = vmatprep.subr.bf16.mxu0 0
  %1438 = vmatpush1.bf16.msra.mxu0 %v1002
  %1439 = vmatprep.subr.bf16.mxu0 0
  %1440 = vmatpush1.bf16.msra.mxu0 %v1003
  %1441 = vmatprep.subr.bf16.mxu0 0
  %1442 = vmatpush1.bf16.msra.mxu0 %v1004
  %1443 = vmatprep.subr.bf16.mxu0 0
  %1444 = vmatpush1.bf16.msra.mxu0 %v1005
  %1445 = vmatprep.subr.bf16.mxu0 0
  %1446 = vmatpush1.bf16.msra.mxu0 %v1006
  %1447 = vmatprep.subr.bf16.mxu0 0
  %1448 = vmatpush1.bf16.msra.mxu0 %v1007
  %1449 = vmatprep.subr.bf16.mxu0 0
  %1450 = vmatpush1.bf16.msra.mxu0 %v1008
  %1451 = vmatprep.subr.bf16.mxu0 0
  %1452 = vmatpush1.bf16.msra.mxu0 %v1009
  %1453 = vmatprep.subr.bf16.mxu0 0
  %1454 = vmatpush1.bf16.msra.mxu0 %v1010
  %1455 = vmatprep.subr.bf16.mxu0 0
  %1456 = vmatpush1.bf16.msra.mxu0 %v1011
  %1457 = vmatprep.subr.bf16.mxu0 0
  %1458 = vmatpush1.bf16.msra.mxu0 %v1012
  %1459 = vmatprep.subr.bf16.mxu0 0
  %1460 = vmatpush1.bf16.msra.mxu0 %v1013
  %1461 = vmatprep.mubr.bf16.mxu0 %v357
  %1462 = vmatmul.mubr.bf16.gmra.mrb[0].mxu0 %v356
  %v1463 = vpop.f32.mrb[0].mxu0
  %v1464 = vadd.f32 %v1423, %v1463
  %v1465 = vpop.f32.mrb[0].mxu0
  %v1466 = vpop.f32.mrb[0].mxu0
  %v1467 = vadd.f32 %v1426, %v1466
  %v1468 = vpop.f32.mrb[0].mxu0
  %1469 = vdwg.mxu0
  %v1470 = vsub.f32 0.0, %v1464
  %v1471 = vsub.f32 0.0, %v1467
  %v1472 = vmul.f32 %v1470, 1.442695
  %v1473 = vpow.pop %v1472
  %v1474 = vmul.f32 %v1471, 1.442695
  %v1475 = vpow.pop %v1474
  %v1476 = vadd.f32 %v1473, 1.0
  %v1477 = vadd.f32 %v1475, 1.0
  %v1478 = vrcp.pop %v1476
  %v1479 = vrcp.pop %v1477
  %1480 = vst [vmem:[%s3] sm:$0xff] %v1478
  %1481 = vst [vmem:[%s3 + $0x8] sm:$0xff] %v1479
  // Predicated region
  $region14: #{_lambda_.9} parent=0 // pred_check
    _
  $region15: #{_lambda_.9} parent=0 // pred_check_branch
    %1483 = sbr.rel (0) target = $region17
  $region16: #{_lambda_.9} parent=0 // pred_region
    _
  $region17: #{_lambda_.9} parent=0 // pred_fallthru
    _
  // Predicated region
  $region18: #{_lambda_.9} parent=0 // pred_check
    _
  $region19: #{_lambda_.9} parent=0 // pred_check_branch
    %1485 = sbr.rel (0) target = $region21
  $region20: #{_lambda_.9} parent=0 // pred_region
    _
  $region21: #{_lambda_.9} parent=0 // pred_fallthru
    _

// kernel: _lambda_.8
$region0: #{_lambda_.8}
  #allocation0 [shape = 'u32[]', space=smem, size = 0x4, offset = 0x4, fixed_abs, tag = 'smem constant byte address 0x4 - core index']
  #allocation1 [shape = 'u32[144,128]{1,0:T(1,128)}', space=vmem, size = 0x12000, scoped, tag = 'internal scratch']
  %s0 = inlined_call_operand.vmem [shape: bf16[16,2304], index: 0, kind: input, shape index: {}]
  %s1 = inlined_call_operand.vmem [shape: bf16[2304,512], index: 1, kind: input, shape index: {}]
  %s2 = inlined_call_operand.vmem [shape: f32[1,512], index: 2, kind: input, shape index: {}]
  %s3 = inlined_call_operand.vmem [shape: bf16[16,512], index: 3, kind: output, shape index: {}]
  %s4 = sld [smem:[#allocation0]]
  $region22: #{_lambda_.8} parent=0
    _
  %s6 = ssub.s32 1, %s4
  %s7 = scalar_select 0, %s6, %s4
  // Predicated region
  $region2: #{_lambda_.8} parent=0 // pred_check
    _
  $region3: #{_lambda_.8} parent=0 // pred_check_branch
    %9 = sbr.rel (0) target = $region5
  $region4: #{_lambda_.8} parent=0 // pred_region
    _
  $region5: #{_lambda_.8} parent=0 // pred_fallthru
    _
  // Predicated region
  $region6: #{_lambda_.8} parent=0 // pred_check
    _
  $region7: #{_lambda_.8} parent=0 // pred_check_branch
    %11 = sbr.rel (0) target = $region9
  $region8: #{_lambda_.8} parent=0 // pred_region
    _
  $region9: #{_lambda_.8} parent=0 // pred_fallthru
    _
  // Predicated region
  $region10: #{_lambda_.8} parent=0 // pred_check
    _
  $region11: #{_lambda_.8} parent=0 // pred_check_branch
    %13 = sbr.rel (0) target = $region13
  $region12: #{_lambda_.8} parent=0 // pred_region
    _
  $region13: #{_lambda_.8} parent=0 // pred_fallthru
    _
  %v14 = vld [vmem:[%s0] sm:$0xff]
  %v15 = vld [vmem:[%s0 + $0x8] sm:$0xff]
  %v16 = vld [vmem:[%s0 + $0x10] sm:$0xff]
  %v17 = vld [vmem:[%s0 + $0x18] sm:$0xff]
  %v18 = vld [vmem:[%s0 + $0x20] sm:$0xff]
  %v19 = vld [vmem:[%s0 + $0x28] sm:$0xff]
  %v20 = vld [vmem:[%s0 + $0x30] sm:$0xff]
  %v21 = vld [vmem:[%s0 + $0x38] sm:$0xff]
  %v22 = vld [vmem:[%s0 + $0x40] sm:$0xff]
  %v23 = vld [vmem:[%s0 + $0x48] sm:$0xff]
  %v24 = vld [vmem:[%s0 + $0x50] sm:$0xff]
  %v25 = vld [vmem:[%s0 + $0x58] sm:$0xff]
  %v26 = vld [vmem:[%s0 + $0x60] sm:$0xff]
  %v27 = vld [vmem:[%s0 + $0x68] sm:$0xff]
  %v28 = vld [vmem:[%s0 + $0x70] sm:$0xff]
  %v29 = vld [vmem:[%s0 + $0x78] sm:$0xff]
  %v30 = vld [vmem:[%s0 + $0x80] sm:$0xff]
  %v31 = vld [vmem:[%s0 + $0x88] sm:$0xff]
  %v32 = vld [vmem:[%s1] sm:$0xff]
  %v33 = vld [vmem:[%s1 + $0x8] sm:$0xff]
  %v34 = vld [vmem:[%s1 + $0x10] sm:$0xff]
  %v35 = vld [vmem:[%s1 + $0x18] sm:$0xff]
  %v36 = vld [vmem:[%s1 + $0x20] sm:$0xff]
  %v37 = vld [vmem:[%s1 + $0x28] sm:$0xff]
  %v38 = vld [vmem:[%s1 + $0x30] sm:$0xff]
  %v39 = vld [vmem:[%s1 + $0x38] sm:$0xff]
  %v40 = vld [vmem:[%s1 + $0x40] sm:$0xff]
  %v41 = vld [vmem:[%s1 + $0x48] sm:$0xff]
  %v42 = vld [vmem:[%s1 + $0x50] sm:$0xff]
  %v43 = vld [vmem:[%s1 + $0x58] sm:$0xff]
  %v44 = vld [vmem:[%s1 + $0x60] sm:$0xff]
  %v45 = vld [vmem:[%s1 + $0x68] sm:$0xff]
  %v46 = vld [vmem:[%s1 + $0x70] sm:$0xff]
  %v47 = vld [vmem:[%s1 + $0x78] sm:$0xff]
  %v48 = vld [vmem:[%s1 + $0x80] sm:$0xff]
  %v49 = vld [vmem:[%s1 + $0x88] sm:$0xff]
  %v50 = vld [vmem:[%s1 + $0x90] sm:$0xff]
  %v51 = vld [vmem:[%s1 + $0x98] sm:$0xff]
  %v52 = vld [vmem:[%s1 + $0xa0] sm:$0xff]
  %v53 = vld [vmem:[%s1 + $0xa8] sm:$0xff]
  %v54 = vld [vmem:[%s1 + $0xb0] sm:$0xff]
  %v55 = vld [vmem:[%s1 + $0xb8] sm:$0xff]
  %v56 = vld [vmem:[%s1 + $0xc0] sm:$0xff]
  %v57 = vld [vmem:[%s1 + $0xc8] sm:$0xff]
  %v58 = vld [vmem:[%s1 + $0xd0] sm:$0xff]
  %v59 = vld [vmem:[%s1 + $0xd8] sm:$0xff]
  %v60 = vld [vmem:[%s1 + $0xe0] sm:$0xff]
  %v61 = vld [vmem:[%s1 + $0xe8] sm:$0xff]
  %v62 = vld [vmem:[%s1 + $0xf0] sm:$0xff]
  %v63 = vld [vmem:[%s1 + $0xf8] sm:$0xff]
  %v64 = vld [vmem:[%s1 + $0x100] sm:$0xff]
  %v65 = vld [vmem:[%s1 + $0x108] sm:$0xff]
  %v66 = vld [vmem:[%s1 + $0x110] sm:$0xff]
  %v67 = vld [vmem:[%s1 + $0x118] sm:$0xff]
  %v68 = vld [vmem:[%s1 + $0x120] sm:$0xff]
  %v69 = vld [vmem:[%s1 + $0x128] sm:$0xff]
  %v70 = vld [vmem:[%s1 + $0x130] sm:$0xff]
  %v71 = vld [vmem:[%s1 + $0x138] sm:$0xff]
  %v72 = vld [vmem:[%s1 + $0x140] sm:$0xff]
  %v73 = vld [vmem:[%s1 + $0x148] sm:$0xff]
  %v74 = vld [vmem:[%s1 + $0x150] sm:$0xff]
  %v75 = vld [vmem:[%s1 + $0x158] sm:$0xff]
  %v76 = vld [vmem:[%s1 + $0x160] sm:$0xff]
  %v77 = vld [vmem:[%s1 + $0x168] sm:$0xff]
  %v78 = vld [vmem:[%s1 + $0x170] sm:$0xff]
  %v79 = vld [vmem:[%s1 + $0x178] sm:$0xff]
  %v80 = vld [vmem:[%s1 + $0x180] sm:$0xff]
  %v81 = vld [vmem:[%s1 + $0x188] sm:$0xff]
  %v82 = vld [vmem:[%s1 + $0x190] sm:$0xff]
  %v83 = vld [vmem:[%s1 + $0x198] sm:$0xff]
  %v84 = vld [vmem:[%s1 + $0x1a0] sm:$0xff]
  %v85 = vld [vmem:[%s1 + $0x1a8] sm:$0xff]
  %v86 = vld [vmem:[%s1 + $0x1b0] sm:$0xff]
  %v87 = vld [vmem:[%s1 + $0x1b8] sm:$0xff]
  %v88 = vld [vmem:[%s1 + $0x1c0] sm:$0xff]
  %v89 = vld [vmem:[%s1 + $0x1c8] sm:$0xff]
  %v90 = vld [vmem:[%s1 + $0x1d0] sm:$0xff]
  %v91 = vld [vmem:[%s1 + $0x1d8] sm:$0xff]
  %v92 = vld [vmem:[%s1 + $0x1e0] sm:$0xff]
  %v93 = vld [vmem:[%s1 + $0x1e8] sm:$0xff]
  %v94 = vld [vmem:[%s1 + $0x1f0] sm:$0xff]
  %v95 = vld [vmem:[%s1 + $0x1f8] sm:$0xff]
  %v96 = vld [vmem:[%s1 + $0x200] sm:$0xff]
  %v97 = vld [vmem:[%s1 + $0x208] sm:$0xff]
  %v98 = vld [vmem:[%s1 + $0x210] sm:$0xff]
  %v99 = vld [vmem:[%s1 + $0x218] sm:$0xff]
  %v100 = vld [vmem:[%s1 + $0x220] sm:$0xff]
  %v101 = vld [vmem:[%s1 + $0x228] sm:$0xff]
  %v102 = vld [vmem:[%s1 + $0x230] sm:$0xff]
  %v103 = vld [vmem:[%s1 + $0x238] sm:$0xff]
  %v104 = vld [vmem:[%s1 + $0x240] sm:$0xff]
  %v105 = vld [vmem:[%s1 + $0x248] sm:$0xff]
  %v106 = vld [vmem:[%s1 + $0x250] sm:$0xff]
  %v107 = vld [vmem:[%s1 + $0x258] sm:$0xff]
  %v108 = vld [vmem:[%s1 + $0x260] sm:$0xff]
  %v109 = vld [vmem:[%s1 + $0x268] sm:$0xff]
  %v110 = vld [vmem:[%s1 + $0x270] sm:$0xff]
  %v111 = vld [vmem:[%s1 + $0x278] sm:$0xff]
  %v112 = vld [vmem:[%s1 + $0x280] sm:$0xff]
  %v113 = vld [vmem:[%s1 + $0x288] sm:$0xff]
  %v114 = vld [vmem:[%s1 + $0x290] sm:$0xff]
  %v115 = vld [vmem:[%s1 + $0x298] sm:$0xff]
  %v116 = vld [vmem:[%s1 + $0x2a0] sm:$0xff]
  %v117 = vld [vmem:[%s1 + $0x2a8] sm:$0xff]
  %v118 = vld [vmem:[%s1 + $0x2b0] sm:$0xff]
  %v119 = vld [vmem:[%s1 + $0x2b8] sm:$0xff]
  %v120 = vld [vmem:[%s1 + $0x2c0] sm:$0xff]
  %v121 = vld [vmem:[%s1 + $0x2c8] sm:$0xff]
  %v122 = vld [vmem:[%s1 + $0x2d0] sm:$0xff]
  %v123 = vld [vmem:[%s1 + $0x2d8] sm:$0xff]
  %v124 = vld [vmem:[%s1 + $0x2e0] sm:$0xff]
  %v125 = vld [vmem:[%s1 + $0x2e8] sm:$0xff]
  %v126 = vld [vmem:[%s1 + $0x2f0] sm:$0xff]
  %v127 = vld [vmem:[%s1 + $0x2f8] sm:$0xff]
  %v128 = vld [vmem:[%s1 + $0x300] sm:$0xff]
  %v129 = vld [vmem:[%s1 + $0x308] sm:$0xff]
  %v130 = vld [vmem:[%s1 + $0x310] sm:$0xff]
  %v131 = vld [vmem:[%s1 + $0x318] sm:$0xff]
  %v132 = vld [vmem:[%s1 + $0x320] sm:$0xff]
  %v133 = vld [vmem:[%s1 + $0x328] sm:$0xff]
  %v134 = vld [vmem:[%s1 + $0x330] sm:$0xff]
  %v135 = vld [vmem:[%s1 + $0x338] sm:$0xff]
  %v136 = vld [vmem:[%s1 + $0x340] sm:$0xff]
  %v137 = vld [vmem:[%s1 + $0x348] sm:$0xff]
  %v138 = vld [vmem:[%s1 + $0x350] sm:$0xff]
  %v139 = vld [vmem:[%s1 + $0x358] sm:$0xff]
  %v140 = vld [vmem:[%s1 + $0x360] sm:$0xff]
  %v141 = vld [vmem:[%s1 + $0x368] sm:$0xff]
  %v142 = vld [vmem:[%s1 + $0x370] sm:$0xff]
  %v143 = vld [vmem:[%s1 + $0x378] sm:$0xff]
  %v144 = vld [vmem:[%s1 + $0x380] sm:$0xff]
  %v145 = vld [vmem:[%s1 + $0x388] sm:$0xff]
  %v146 = vld [vmem:[%s1 + $0x390] sm:$0xff]
  %v147 = vld [vmem:[%s1 + $0x398] sm:$0xff]
  %v148 = vld [vmem:[%s1 + $0x3a0] sm:$0xff]
  %v149 = vld [vmem:[%s1 + $0x3a8] sm:$0xff]
  %v150 = vld [vmem:[%s1 + $0x3b0] sm:$0xff]
  %v151 = vld [vmem:[%s1 + $0x3b8] sm:$0xff]
  %v152 = vld [vmem:[%s1 + $0x3c0] sm:$0xff]
  %v153 = vld [vmem:[%s1 + $0x3c8] sm:$0xff]
  %v154 = vld [vmem:[%s1 + $0x3d0] sm:$0xff]
  %v155 = vld [vmem:[%s1 + $0x3d8] sm:$0xff]
  %v156 = vld [vmem:[%s1 + $0x3e0] sm:$0xff]
  %v157 = vld [vmem:[%s1 + $0x3e8] sm:$0xff]
  %v158 = vld [vmem:[%s1 + $0x3f0] sm:$0xff]
  %v159 = vld [vmem:[%s1 + $0x3f8] sm:$0xff]
  %v160 = vld [vmem:[%s1 + $0x400] sm:$0xff]
  %v161 = vld [vmem:[%s1 + $0x408] sm:$0xff]
  %v162 = vld [vmem:[%s1 + $0x410] sm:$0xff]
  %v163 = vld [vmem:[%s1 + $0x418] sm:$0xff]
  %v164 = vld [vmem:[%s1 + $0x420] sm:$0xff]
  %v165 = vld [vmem:[%s1 + $0x428] sm:$0xff]
  %v166 = vld [vmem:[%s1 + $0x430] sm:$0xff]
  %v167 = vld [vmem:[%s1 + $0x438] sm:$0xff]
  %v168 = vld [vmem:[%s1 + $0x440] sm:$0xff]
  %v169 = vld [vmem:[%s1 + $0x448] sm:$0xff]
  %v170 = vld [vmem:[%s1 + $0x450] sm:$0xff]
  %v171 = vld [vmem:[%s1 + $0x458] sm:$0xff]
  %v172 = vld [vmem:[%s1 + $0x460] sm:$0xff]
  %v173 = vld [vmem:[%s1 + $0x468] sm:$0xff]
  %v174 = vld [vmem:[%s1 + $0x470] sm:$0xff]
  %v175 = vld [vmem:[%s1 + $0x478] sm:$0xff]
  %v176 = vld [vmem:[%s1 + $0x480] sm:$0xff]
  %v177 = vld [vmem:[%s1 + $0x488] sm:$0xff]
  %v178 = vld [vmem:[%s1 + $0x490] sm:$0xff]
  %v179 = vld [vmem:[%s1 + $0x498] sm:$0xff]
  %v180 = vld [vmem:[%s1 + $0x4a0] sm:$0xff]
  %v181 = vld [vmem:[%s1 + $0x4a8] sm:$0xff]
  %v182 = vld [vmem:[%s1 + $0x4b0] sm:$0xff]
  %v183 = vld [vmem:[%s1 + $0x4b8] sm:$0xff]
  %v184 = vld [vmem:[%s1 + $0x4c0] sm:$0xff]
  %v185 = vld [vmem:[%s1 + $0x4c8] sm:$0xff]
  %v186 = vld [vmem:[%s1 + $0x4d0] sm:$0xff]
  %v187 = vld [vmem:[%s1 + $0x4d8] sm:$0xff]
  %v188 = vld [vmem:[%s1 + $0x4e0] sm:$0xff]
  %v189 = vld [vmem:[%s1 + $0x4e8] sm:$0xff]
  %v190 = vld [vmem:[%s1 + $0x4f0] sm:$0xff]
  %v191 = vld [vmem:[%s1 + $0x4f8] sm:$0xff]
  %v192 = vld [vmem:[%s1 + $0x500] sm:$0xff]
  %v193 = vld [vmem:[%s1 + $0x508] sm:$0xff]
  %v194 = vld [vmem:[%s1 + $0x510] sm:$0xff]
  %v195 = vld [vmem:[%s1 + $0x518] sm:$0xff]
  %v196 = vld [vmem:[%s1 + $0x520] sm:$0xff]
  %v197 = vld [vmem:[%s1 + $0x528] sm:$0xff]
  %v198 = vld [vmem:[%s1 + $0x530] sm:$0xff]
  %v199 = vld [vmem:[%s1 + $0x538] sm:$0xff]
  %v200 = vld [vmem:[%s1 + $0x540] sm:$0xff]
  %v201 = vld [vmem:[%s1 + $0x548] sm:$0xff]
  %v202 = vld [vmem:[%s1 + $0x550] sm:$0xff]
  %v203 = vld [vmem:[%s1 + $0x558] sm:$0xff]
  %v204 = vld [vmem:[%s1 + $0x560] sm:$0xff]
  %v205 = vld [vmem:[%s1 + $0x568] sm:$0xff]
  %v206 = vld [vmem:[%s1 + $0x570] sm:$0xff]
  %v207 = vld [vmem:[%s1 + $0x578] sm:$0xff]
  %v208 = vld [vmem:[%s1 + $0x580] sm:$0xff]
  %v209 = vld [vmem:[%s1 + $0x588] sm:$0xff]
  %v210 = vld [vmem:[%s1 + $0x590] sm:$0xff]
  %v211 = vld [vmem:[%s1 + $0x598] sm:$0xff]
  %v212 = vld [vmem:[%s1 + $0x5a0] sm:$0xff]
  %v213 = vld [vmem:[%s1 + $0x5a8] sm:$0xff]
  %v214 = vld [vmem:[%s1 + $0x5b0] sm:$0xff]
  %v215 = vld [vmem:[%s1 + $0x5b8] sm:$0xff]
  %v216 = vld [vmem:[%s1 + $0x5c0] sm:$0xff]
  %v217 = vld [vmem:[%s1 + $0x5c8] sm:$0xff]
  %v218 = vld [vmem:[%s1 + $0x5d0] sm:$0xff]
  %v219 = vld [vmem:[%s1 + $0x5d8] sm:$0xff]
  %v220 = vld [vmem:[%s1 + $0x5e0] sm:$0xff]
  %v221 = vld [vmem:[%s1 + $0x5e8] sm:$0xff]
  %v222 = vld [vmem:[%s1 + $0x5f0] sm:$0xff]
  %v223 = vld [vmem:[%s1 + $0x5f8] sm:$0xff]
  %v224 = vld [vmem:[%s1 + $0x600] sm:$0xff]
  %v225 = vld [vmem:[%s1 + $0x608] sm:$0xff]
  %v226 = vld [vmem:[%s1 + $0x610] sm:$0xff]
  %v227 = vld [vmem:[%s1 + $0x618] sm:$0xff]
  %v228 = vld [vmem:[%s1 + $0x620] sm:$0xff]
  %v229 = vld [vmem:[%s1 + $0x628] sm:$0xff]
  %v230 = vld [vmem:[%s1 + $0x630] sm:$0xff]
  %v231 = vld [vmem:[%s1 + $0x638] sm:$0xff]
  %v232 = vld [vmem:[%s1 + $0x640] sm:$0xff]
  %v233 = vld [vmem:[%s1 + $0x648] sm:$0xff]
  %v234 = vld [vmem:[%s1 + $0x650] sm:$0xff]
  %v235 = vld [vmem:[%s1 + $0x658] sm:$0xff]
  %v236 = vld [vmem:[%s1 + $0x660] sm:$0xff]
  %v237 = vld [vmem:[%s1 + $0x668] sm:$0xff]
  %v238 = vld [vmem:[%s1 + $0x670] sm:$0xff]
  %v239 = vld [vmem:[%s1 + $0x678] sm:$0xff]
  %v240 = vld [vmem:[%s1 + $0x680] sm:$0xff]
  %v241 = vld [vmem:[%s1 + $0x688] sm:$0xff]
  %v242 = vld [vmem:[%s1 + $0x690] sm:$0xff]
  %v243 = vld [vmem:[%s1 + $0x698] sm:$0xff]
  %v244 = vld [vmem:[%s1 + $0x6a0] sm:$0xff]
  %v245 = vld [vmem:[%s1 + $0x6a8] sm:$0xff]
  %v246 = vld [vmem:[%s1 + $0x6b0] sm:$0xff]
  %v247 = vld [vmem:[%s1 + $0x6b8] sm:$0xff]
  %v248 = vld [vmem:[%s1 + $0x6c0] sm:$0xff]
  %v249 = vld [vmem:[%s1 + $0x6c8] sm:$0xff]
  %v250 = vld [vmem:[%s1 + $0x6d0] sm:$0xff]
  %v251 = vld [vmem:[%s1 + $0x6d8] sm:$0xff]
  %v252 = vld [vmem:[%s1 + $0x6e0] sm:$0xff]
  %v253 = vld [vmem:[%s1 + $0x6e8] sm:$0xff]
  %v254 = vld [vmem:[%s1 + $0x6f0] sm:$0xff]
  %v255 = vld [vmem:[%s1 + $0x6f8] sm:$0xff]
  %v256 = vld [vmem:[%s1 + $0x700] sm:$0xff]
  %v257 = vld [vmem:[%s1 + $0x708] sm:$0xff]
  %v258 = vld [vmem:[%s1 + $0x710] sm:$0xff]
  %v259 = vld [vmem:[%s1 + $0x718] sm:$0xff]
  %v260 = vld [vmem:[%s1 + $0x720] sm:$0xff]
  %v261 = vld [vmem:[%s1 + $0x728] sm:$0xff]
  %v262 = vld [vmem:[%s1 + $0x730] sm:$0xff]
  %v263 = vld [vmem:[%s1 + $0x738] sm:$0xff]
  %v264 = vld [vmem:[%s1 + $0x740] sm:$0xff]
  %v265 = vld [vmem:[%s1 + $0x748] sm:$0xff]
  %v266 = vld [vmem:[%s1 + $0x750] sm:$0xff]
  %v267 = vld [vmem:[%s1 + $0x758] sm:$0xff]
  %v268 = vld [vmem:[%s1 + $0x760] sm:$0xff]
  %v269 = vld [vmem:[%s1 + $0x768] sm:$0xff]
  %v270 = vld [vmem:[%s1 + $0x770] sm:$0xff]
  %v271 = vld [vmem:[%s1 + $0x778] sm:$0xff]
  %v272 = vld [vmem:[%s1 + $0x780] sm:$0xff]
  %v273 = vld [vmem:[%s1 + $0x788] sm:$0xff]
  %v274 = vld [vmem:[%s1 + $0x790] sm:$0xff]
  %v275 = vld [vmem:[%s1 + $0x798] sm:$0xff]
  %v276 = vld [vmem:[%s1 + $0x7a0] sm:$0xff]
  %v277 = vld [vmem:[%s1 + $0x7a8] sm:$0xff]
  %v278 = vld [vmem:[%s1 + $0x7b0] sm:$0xff]
  %v279 = vld [vmem:[%s1 + $0x7b8] sm:$0xff]
  %v280 = vld [vmem:[%s1 + $0x7c0] sm:$0xff]
  %v281 = vld [vmem:[%s1 + $0x7c8] sm:$0xff]
  %v282 = vld [vmem:[%s1 + $0x7d0] sm:$0xff]
  %v283 = vld [vmem:[%s1 + $0x7d8] sm:$0xff]
  %v284 = vld [vmem:[%s1 + $0x7e0] sm:$0xff]
  %v285 = vld [vmem:[%s1 + $0x7e8] sm:$0xff]
  %v286 = vld [vmem:[%s1 + $0x7f0] sm:$0xff]
  %v287 = vld [vmem:[%s1 + $0x7f8] sm:$0xff]
  %v288 = vld [vmem:[%s1 + $0x800] sm:$0xff]
  %v289 = vld [vmem:[%s1 + $0x808] sm:$0xff]
  %v290 = vld [vmem:[%s1 + $0x810] sm:$0xff]
  %v291 = vld [vmem:[%s1 + $0x818] sm:$0xff]
  %v292 = vld [vmem:[%s1 + $0x820] sm:$0xff]
  %v293 = vld [vmem:[%s1 + $0x828] sm:$0xff]
  %v294 = vld [vmem:[%s1 + $0x830] sm:$0xff]
  %v295 = vld [vmem:[%s1 + $0x838] sm:$0xff]
  %v296 = vld [vmem:[%s1 + $0x840] sm:$0xff]
  %v297 = vld [vmem:[%s1 + $0x848] sm:$0xff]
  %v298 = vld [vmem:[%s1 + $0x850] sm:$0xff]
  %v299 = vld [vmem:[%s1 + $0x858] sm:$0xff]
  %v300 = vld [vmem:[%s1 + $0x860] sm:$0xff]
  %v301 = vld [vmem:[%s1 + $0x868] sm:$0xff]
  %v302 = vld [vmem:[%s1 + $0x870] sm:$0xff]
  %v303 = vld [vmem:[%s1 + $0x878] sm:$0xff]
  %v304 = vld [vmem:[%s1 + $0x880] sm:$0xff]
  %v305 = vld [vmem:[%s1 + $0x888] sm:$0xff]
  %v306 = vld [vmem:[%s1 + $0x890] sm:$0xff]
  %v307 = vld [vmem:[%s1 + $0x898] sm:$0xff]
  %v308 = vld [vmem:[%s1 + $0x8a0] sm:$0xff]
  %v309 = vld [vmem:[%s1 + $0x8a8] sm:$0xff]
  %v310 = vld [vmem:[%s1 + $0x8b0] sm:$0xff]
  %v311 = vld [vmem:[%s1 + $0x8b8] sm:$0xff]
  %v312 = vld [vmem:[%s1 + $0x8c0] sm:$0xff]
  %v313 = vld [vmem:[%s1 + $0x8c8] sm:$0xff]
  %v314 = vld [vmem:[%s1 + $0x8d0] sm:$0xff]
  %v315 = vld [vmem:[%s1 + $0x8d8] sm:$0xff]
  %v316 = vld [vmem:[%s1 + $0x8e0] sm:$0xff]
  %v317 = vld [vmem:[%s1 + $0x8e8] sm:$0xff]
  %v318 = vld [vmem:[%s1 + $0x8f0] sm:$0xff]
  %v319 = vld [vmem:[%s1 + $0x8f8] sm:$0xff]
  %v320 = vld [vmem:[%s1 + $0x900] sm:$0xff]
  %v321 = vld [vmem:[%s1 + $0x908] sm:$0xff]
  %v322 = vld [vmem:[%s1 + $0x910] sm:$0xff]
  %v323 = vld [vmem:[%s1 + $0x918] sm:$0xff]
  %v324 = vld [vmem:[%s1 + $0x920] sm:$0xff]
  %v325 = vld [vmem:[%s1 + $0x928] sm:$0xff]
  %v326 = vld [vmem:[%s1 + $0x930] sm:$0xff]
  %v327 = vld [vmem:[%s1 + $0x938] sm:$0xff]
  %v328 = vld [vmem:[%s1 + $0x940] sm:$0xff]
  %v329 = vld [vmem:[%s1 + $0x948] sm:$0xff]
  %v330 = vld [vmem:[%s1 + $0x950] sm:$0xff]
  %v331 = vld [vmem:[%s1 + $0x958] sm:$0xff]
  %v332 = vld [vmem:[%s1 + $0x960] sm:$0xff]
  %v333 = vld [vmem:[%s1 + $0x968] sm:$0xff]
  %v334 = vld [vmem:[%s1 + $0x970] sm:$0xff]
  %v335 = vld [vmem:[%s1 + $0x978] sm:$0xff]
  %v336 = vld [vmem:[%s1 + $0x980] sm:$0xff]
  %v337 = vld [vmem:[%s1 + $0x988] sm:$0xff]
  %v338 = vld [vmem:[%s1 + $0x990] sm:$0xff]
  %v339 = vld [vmem:[%s1 + $0x998] sm:$0xff]
  %v340 = vld [vmem:[%s1 + $0x9a0] sm:$0xff]
  %v341 = vld [vmem:[%s1 + $0x9a8] sm:$0xff]
  %v342 = vld [vmem:[%s1 + $0x9b0] sm:$0xff]
  %v343 = vld [vmem:[%s1 + $0x9b8] sm:$0xff]
  %v344 = vld [vmem:[%s1 + $0x9c0] sm:$0xff]
  %v345 = vld [vmem:[%s1 + $0x9c8] sm:$0xff]
  %v346 = vld [vmem:[%s1 + $0x9d0] sm:$0xff]
  %v347 = vld [vmem:[%s1 + $0x9d8] sm:$0xff]
  %v348 = vld [vmem:[%s1 + $0x9e0] sm:$0xff]
  %v349 = vld [vmem:[%s1 + $0x9e8] sm:$0xff]
  %v350 = vld [vmem:[%s1 + $0x9f0] sm:$0xff]
  %v351 = vld [vmem:[%s1 + $0x9f8] sm:$0xff]
  %v352 = vld [vmem:[%s1 + $0xa00] sm:$0xff]
  %v353 = vld [vmem:[%s1 + $0xa08] sm:$0xff]
  %v354 = vld [vmem:[%s1 + $0xa10] sm:$0xff]
  %v355 = vld [vmem:[%s1 + $0xa18] sm:$0xff]
  %v356 = vld [vmem:[%s1 + $0xa20] sm:$0xff]
  %v357 = vld [vmem:[%s1 + $0xa28] sm:$0xff]
  %v358 = vld [vmem:[%s1 + $0xa30] sm:$0xff]
  %v359 = vld [vmem:[%s1 + $0xa38] sm:$0xff]
  %v360 = vld [vmem:[%s1 + $0xa40] sm:$0xff]
  %v361 = vld [vmem:[%s1 + $0xa48] sm:$0xff]
  %v362 = vld [vmem:[%s1 + $0xa50] sm:$0xff]
  %v363 = vld [vmem:[%s1 + $0xa58] sm:$0xff]
  %v364 = vld [vmem:[%s1 + $0xa60] sm:$0xff]
  %v365 = vld [vmem:[%s1 + $0xa68] sm:$0xff]
  %v366 = vld [vmem:[%s1 + $0xa70] sm:$0xff]
  %v367 = vld [vmem:[%s1 + $0xa78] sm:$0xff]
  %v368 = vld [vmem:[%s1 + $0xa80] sm:$0xff]
  %v369 = vld [vmem:[%s1 + $0xa88] sm:$0xff]
  %v370 = vld [vmem:[%s1 + $0xa90] sm:$0xff]
  %v371 = vld [vmem:[%s1 + $0xa98] sm:$0xff]
  %v372 = vld [vmem:[%s1 + $0xaa0] sm:$0xff]
  %v373 = vld [vmem:[%s1 + $0xaa8] sm:$0xff]
  %v374 = vld [vmem:[%s1 + $0xab0] sm:$0xff]
  %v375 = vld [vmem:[%s1 + $0xab8] sm:$0xff]
  %v376 = vld [vmem:[%s1 + $0xac0] sm:$0xff]
  %v377 = vld [vmem:[%s1 + $0xac8] sm:$0xff]
  %v378 = vld [vmem:[%s1 + $0xad0] sm:$0xff]
  %v379 = vld [vmem:[%s1 + $0xad8] sm:$0xff]
  %v380 = vld [vmem:[%s1 + $0xae0] sm:$0xff]
  %v381 = vld [vmem:[%s1 + $0xae8] sm:$0xff]
  %v382 = vld [vmem:[%s1 + $0xaf0] sm:$0xff]
  %v383 = vld [vmem:[%s1 + $0xaf8] sm:$0xff]
  %v384 = vld [vmem:[%s1 + $0xb00] sm:$0xff]
  %v385 = vld [vmem:[%s1 + $0xb08] sm:$0xff]
  %v386 = vld [vmem:[%s1 + $0xb10] sm:$0xff]
  %v387 = vld [vmem:[%s1 + $0xb18] sm:$0xff]
  %v388 = vld [vmem:[%s1 + $0xb20] sm:$0xff]
  %v389 = vld [vmem:[%s1 + $0xb28] sm:$0xff]
  %v390 = vld [vmem:[%s1 + $0xb30] sm:$0xff]
  %v391 = vld [vmem:[%s1 + $0xb38] sm:$0xff]
  %v392 = vld [vmem:[%s1 + $0xb40] sm:$0xff]
  %v393 = vld [vmem:[%s1 + $0xb48] sm:$0xff]
  %v394 = vld [vmem:[%s1 + $0xb50] sm:$0xff]
  %v395 = vld [vmem:[%s1 + $0xb58] sm:$0xff]
  %v396 = vld [vmem:[%s1 + $0xb60] sm:$0xff]
  %v397 = vld [vmem:[%s1 + $0xb68] sm:$0xff]
  %v398 = vld [vmem:[%s1 + $0xb70] sm:$0xff]
  %v399 = vld [vmem:[%s1 + $0xb78] sm:$0xff]
  %v400 = vld [vmem:[%s1 + $0xb80] sm:$0xff]
  %v401 = vld [vmem:[%s1 + $0xb88] sm:$0xff]
  %v402 = vld [vmem:[%s1 + $0xb90] sm:$0xff]
  %v403 = vld [vmem:[%s1 + $0xb98] sm:$0xff]
  %v404 = vld [vmem:[%s1 + $0xba0] sm:$0xff]
  %v405 = vld [vmem:[%s1 + $0xba8] sm:$0xff]
  %v406 = vld [vmem:[%s1 + $0xbb0] sm:$0xff]
  %v407 = vld [vmem:[%s1 + $0xbb8] sm:$0xff]
  %v408 = vld [vmem:[%s1 + $0xbc0] sm:$0xff]
  %v409 = vld [vmem:[%s1 + $0xbc8] sm:$0xff]
  %v410 = vld [vmem:[%s1 + $0xbd0] sm:$0xff]
  %v411 = vld [vmem:[%s1 + $0xbd8] sm:$0xff]
  %v412 = vld [vmem:[%s1 + $0xbe0] sm:$0xff]
  %v413 = vld [vmem:[%s1 + $0xbe8] sm:$0xff]
  %v414 = vld [vmem:[%s1 + $0xbf0] sm:$0xff]
  %v415 = vld [vmem:[%s1 + $0xbf8] sm:$0xff]
  %v416 = vld [vmem:[%s1 + $0xc00] sm:$0xff]
  %v417 = vld [vmem:[%s1 + $0xc08] sm:$0xff]
  %v418 = vld [vmem:[%s1 + $0xc10] sm:$0xff]
  %v419 = vld [vmem:[%s1 + $0xc18] sm:$0xff]
  %v420 = vld [vmem:[%s1 + $0xc20] sm:$0xff]
  %v421 = vld [vmem:[%s1 + $0xc28] sm:$0xff]
  %v422 = vld [vmem:[%s1 + $0xc30] sm:$0xff]
  %v423 = vld [vmem:[%s1 + $0xc38] sm:$0xff]
  %v424 = vld [vmem:[%s1 + $0xc40] sm:$0xff]
  %v425 = vld [vmem:[%s1 + $0xc48] sm:$0xff]
  %v426 = vld [vmem:[%s1 + $0xc50] sm:$0xff]
  %v427 = vld [vmem:[%s1 + $0xc58] sm:$0xff]
  %v428 = vld [vmem:[%s1 + $0xc60] sm:$0xff]
  %v429 = vld [vmem:[%s1 + $0xc68] sm:$0xff]
  %v430 = vld [vmem:[%s1 + $0xc70] sm:$0xff]
  %v431 = vld [vmem:[%s1 + $0xc78] sm:$0xff]
  %v432 = vld [vmem:[%s1 + $0xc80] sm:$0xff]
  %v433 = vld [vmem:[%s1 + $0xc88] sm:$0xff]
  %v434 = vld [vmem:[%s1 + $0xc90] sm:$0xff]
  %v435 = vld [vmem:[%s1 + $0xc98] sm:$0xff]
  %v436 = vld [vmem:[%s1 + $0xca0] sm:$0xff]
  %v437 = vld [vmem:[%s1 + $0xca8] sm:$0xff]
  %v438 = vld [vmem:[%s1 + $0xcb0] sm:$0xff]
  %v439 = vld [vmem:[%s1 + $0xcb8] sm:$0xff]
  %v440 = vld [vmem:[%s1 + $0xcc0] sm:$0xff]
  %v441 = vld [vmem:[%s1 + $0xcc8] sm:$0xff]
  %v442 = vld [vmem:[%s1 + $0xcd0] sm:$0xff]
  %v443 = vld [vmem:[%s1 + $0xcd8] sm:$0xff]
  %v444 = vld [vmem:[%s1 + $0xce0] sm:$0xff]
  %v445 = vld [vmem:[%s1 + $0xce8] sm:$0xff]
  %v446 = vld [vmem:[%s1 + $0xcf0] sm:$0xff]
  %v447 = vld [vmem:[%s1 + $0xcf8] sm:$0xff]
  %v448 = vld [vmem:[%s1 + $0xd00] sm:$0xff]
  %v449 = vld [vmem:[%s1 + $0xd08] sm:$0xff]
  %v450 = vld [vmem:[%s1 + $0xd10] sm:$0xff]
  %v451 = vld [vmem:[%s1 + $0xd18] sm:$0xff]
  %v452 = vld [vmem:[%s1 + $0xd20] sm:$0xff]
  %v453 = vld [vmem:[%s1 + $0xd28] sm:$0xff]
  %v454 = vld [vmem:[%s1 + $0xd30] sm:$0xff]
  %v455 = vld [vmem:[%s1 + $0xd38] sm:$0xff]
  %v456 = vld [vmem:[%s1 + $0xd40] sm:$0xff]
  %v457 = vld [vmem:[%s1 + $0xd48] sm:$0xff]
  %v458 = vld [vmem:[%s1 + $0xd50] sm:$0xff]
  %v459 = vld [vmem:[%s1 + $0xd58] sm:$0xff]
  %v460 = vld [vmem:[%s1 + $0xd60] sm:$0xff]
  %v461 = vld [vmem:[%s1 + $0xd68] sm:$0xff]
  %v462 = vld [vmem:[%s1 + $0xd70] sm:$0xff]
  %v463 = vld [vmem:[%s1 + $0xd78] sm:$0xff]
  %v464 = vld [vmem:[%s1 + $0xd80] sm:$0xff]
  %v465 = vld [vmem:[%s1 + $0xd88] sm:$0xff]
  %v466 = vld [vmem:[%s1 + $0xd90] sm:$0xff]
  %v467 = vld [vmem:[%s1 + $0xd98] sm:$0xff]
  %v468 = vld [vmem:[%s1 + $0xda0] sm:$0xff]
  %v469 = vld [vmem:[%s1 + $0xda8] sm:$0xff]
  %v470 = vld [vmem:[%s1 + $0xdb0] sm:$0xff]
  %v471 = vld [vmem:[%s1 + $0xdb8] sm:$0xff]
  %v472 = vld [vmem:[%s1 + $0xdc0] sm:$0xff]
  %v473 = vld [vmem:[%s1 + $0xdc8] sm:$0xff]
  %v474 = vld [vmem:[%s1 + $0xdd0] sm:$0xff]
  %v475 = vld [vmem:[%s1 + $0xdd8] sm:$0xff]
  %v476 = vld [vmem:[%s1 + $0xde0] sm:$0xff]
  %v477 = vld [vmem:[%s1 + $0xde8] sm:$0xff]
  %v478 = vld [vmem:[%s1 + $0xdf0] sm:$0xff]
  %v479 = vld [vmem:[%s1 + $0xdf8] sm:$0xff]
  %v480 = vld [vmem:[%s1 + $0xe00] sm:$0xff]
  %v481 = vld [vmem:[%s1 + $0xe08] sm:$0xff]
  %v482 = vld [vmem:[%s1 + $0xe10] sm:$0xff]
  %v483 = vld [vmem:[%s1 + $0xe18] sm:$0xff]
  %v484 = vld [vmem:[%s1 + $0xe20] sm:$0xff]
  %v485 = vld [vmem:[%s1 + $0xe28] sm:$0xff]
  %v486 = vld [vmem:[%s1 + $0xe30] sm:$0xff]
  %v487 = vld [vmem:[%s1 + $0xe38] sm:$0xff]
  %v488 = vld [vmem:[%s1 + $0xe40] sm:$0xff]
  %v489 = vld [vmem:[%s1 + $0xe48] sm:$0xff]
  %v490 = vld [vmem:[%s1 + $0xe50] sm:$0xff]
  %v491 = vld [vmem:[%s1 + $0xe58] sm:$0xff]
  %v492 = vld [vmem:[%s1 + $0xe60] sm:$0xff]
  %v493 = vld [vmem:[%s1 + $0xe68] sm:$0xff]
  %v494 = vld [vmem:[%s1 + $0xe70] sm:$0xff]
  %v495 = vld [vmem:[%s1 + $0xe78] sm:$0xff]
  %v496 = vld [vmem:[%s1 + $0xe80] sm:$0xff]
  %v497 = vld [vmem:[%s1 + $0xe88] sm:$0xff]
  %v498 = vld [vmem:[%s1 + $0xe90] sm:$0xff]
  %v499 = vld [vmem:[%s1 + $0xe98] sm:$0xff]
  %v500 = vld [vmem:[%s1 + $0xea0] sm:$0xff]
  %v501 = vld [vmem:[%s1 + $0xea8] sm:$0xff]
  %v502 = vld [vmem:[%s1 + $0xeb0] sm:$0xff]
  %v503 = vld [vmem:[%s1 + $0xeb8] sm:$0xff]
  %v504 = vld [vmem:[%s1 + $0xec0] sm:$0xff]
  %v505 = vld [vmem:[%s1 + $0xec8] sm:$0xff]
  %v506 = vld [vmem:[%s1 + $0xed0] sm:$0xff]
  %v507 = vld [vmem:[%s1 + $0xed8] sm:$0xff]
  %v508 = vld [vmem:[%s1 + $0xee0] sm:$0xff]
  %v509 = vld [vmem:[%s1 + $0xee8] sm:$0xff]
  %v510 = vld [vmem:[%s1 + $0xef0] sm:$0xff]
  %v511 = vld [vmem:[%s1 + $0xef8] sm:$0xff]
  %v512 = vld [vmem:[%s1 + $0xf00] sm:$0xff]
  %v513 = vld [vmem:[%s1 + $0xf08] sm:$0xff]
  %v514 = vld [vmem:[%s1 + $0xf10] sm:$0xff]
  %v515 = vld [vmem:[%s1 + $0xf18] sm:$0xff]
  %v516 = vld [vmem:[%s1 + $0xf20] sm:$0xff]
  %v517 = vld [vmem:[%s1 + $0xf28] sm:$0xff]
  %v518 = vld [vmem:[%s1 + $0xf30] sm:$0xff]
  %v519 = vld [vmem:[%s1 + $0xf38] sm:$0xff]
  %v520 = vld [vmem:[%s1 + $0xf40] sm:$0xff]
  %v521 = vld [vmem:[%s1 + $0xf48] sm:$0xff]
  %v522 = vld [vmem:[%s1 + $0xf50] sm:$0xff]
  %v523 = vld [vmem:[%s1 + $0xf58] sm:$0xff]
  %v524 = vld [vmem:[%s1 + $0xf60] sm:$0xff]
  %v525 = vld [vmem:[%s1 + $0xf68] sm:$0xff]
  %v526 = vld [vmem:[%s1 + $0xf70] sm:$0xff]
  %v527 = vld [vmem:[%s1 + $0xf78] sm:$0xff]
  %v528 = vld [vmem:[%s1 + $0xf80] sm:$0xff]
  %v529 = vld [vmem:[%s1 + $0xf88] sm:$0xff]
  %v530 = vld [vmem:[%s1 + $0xf90] sm:$0xff]
  %v531 = vld [vmem:[%s1 + $0xf98] sm:$0xff]
  %v532 = vld [vmem:[%s1 + $0xfa0] sm:$0xff]
  %v533 = vld [vmem:[%s1 + $0xfa8] sm:$0xff]
  %v534 = vld [vmem:[%s1 + $0xfb0] sm:$0xff]
  %v535 = vld [vmem:[%s1 + $0xfb8] sm:$0xff]
  %v536 = vld [vmem:[%s1 + $0xfc0] sm:$0xff]
  %v537 = vld [vmem:[%s1 + $0xfc8] sm:$0xff]
  %v538 = vld [vmem:[%s1 + $0xfd0] sm:$0xff]
  %v539 = vld [vmem:[%s1 + $0xfd8] sm:$0xff]
  %v540 = vld [vmem:[%s1 + $0xfe0] sm:$0xff]
  %v541 = vld [vmem:[%s1 + $0xfe8] sm:$0xff]
  %v542 = vld [vmem:[%s1 + $0xff0] sm:$0xff]
  %v543 = vld [vmem:[%s1 + $0xff8] sm:$0xff]
  %v544 = vld [vmem:[%s1 + $0x1000] sm:$0xff]
  %v545 = vld [vmem:[%s1 + $0x1008] sm:$0xff]
  %v546 = vld [vmem:[%s1 + $0x1010] sm:$0xff]
  %v547 = vld [vmem:[%s1 + $0x1018] sm:$0xff]
  %v548 = vld [vmem:[%s1 + $0x1020] sm:$0xff]
  %v549 = vld [vmem:[%s1 + $0x1028] sm:$0xff]
  %v550 = vld [vmem:[%s1 + $0x1030] sm:$0xff]
  %v551 = vld [vmem:[%s1 + $0x1038] sm:$0xff]
  %v552 = vld [vmem:[%s1 + $0x1040] sm:$0xff]
  %v553 = vld [vmem:[%s1 + $0x1048] sm:$0xff]
  %v554 = vld [vmem:[%s1 + $0x1050] sm:$0xff]
  %v555 = vld [vmem:[%s1 + $0x1058] sm:$0xff]
  %v556 = vld [vmem:[%s1 + $0x1060] sm:$0xff]
  %v557 = vld [vmem:[%s1 + $0x1068] sm:$0xff]
  %v558 = vld [vmem:[%s1 + $0x1070] sm:$0xff]
  %v559 = vld [vmem:[%s1 + $0x1078] sm:$0xff]
  %v560 = vld [vmem:[%s1 + $0x1080] sm:$0xff]
  %v561 = vld [vmem:[%s1 + $0x1088] sm:$0xff]
  %v562 = vld [vmem:[%s1 + $0x1090] sm:$0xff]
  %v563 = vld [vmem:[%s1 + $0x1098] sm:$0xff]
  %v564 = vld [vmem:[%s1 + $0x10a0] sm:$0xff]
  %v565 = vld [vmem:[%s1 + $0x10a8] sm:$0xff]
  %v566 = vld [vmem:[%s1 + $0x10b0] sm:$0xff]
  %v567 = vld [vmem:[%s1 + $0x10b8] sm:$0xff]
  %v568 = vld [vmem:[%s1 + $0x10c0] sm:$0xff]
  %v569 = vld [vmem:[%s1 + $0x10c8] sm:$0xff]
  %v570 = vld [vmem:[%s1 + $0x10d0] sm:$0xff]
  %v571 = vld [vmem:[%s1 + $0x10d8] sm:$0xff]
  %v572 = vld [vmem:[%s1 + $0x10e0] sm:$0xff]
  %v573 = vld [vmem:[%s1 + $0x10e8] sm:$0xff]
  %v574 = vld [vmem:[%s1 + $0x10f0] sm:$0xff]
  %v575 = vld [vmem:[%s1 + $0x10f8] sm:$0xff]
  %v576 = vld [vmem:[%s1 + $0x1100] sm:$0xff]
  %v577 = vld [vmem:[%s1 + $0x1108] sm:$0xff]
  %v578 = vld [vmem:[%s1 + $0x1110] sm:$0xff]
  %v579 = vld [vmem:[%s1 + $0x1118] sm:$0xff]
  %v580 = vld [vmem:[%s1 + $0x1120] sm:$0xff]
  %v581 = vld [vmem:[%s1 + $0x1128] sm:$0xff]
  %v582 = vld [vmem:[%s1 + $0x1130] sm:$0xff]
  %v583 = vld [vmem:[%s1 + $0x1138] sm:$0xff]
  %v584 = vld [vmem:[%s1 + $0x1140] sm:$0xff]
  %v585 = vld [vmem:[%s1 + $0x1148] sm:$0xff]
  %v586 = vld [vmem:[%s1 + $0x1150] sm:$0xff]
  %v587 = vld [vmem:[%s1 + $0x1158] sm:$0xff]
  %v588 = vld [vmem:[%s1 + $0x1160] sm:$0xff]
  %v589 = vld [vmem:[%s1 + $0x1168] sm:$0xff]
  %v590 = vld [vmem:[%s1 + $0x1170] sm:$0xff]
  %v591 = vld [vmem:[%s1 + $0x1178] sm:$0xff]
  %v592 = vld [vmem:[%s1 + $0x1180] sm:$0xff]
  %v593 = vld [vmem:[%s1 + $0x1188] sm:$0xff]
  %v594 = vld [vmem:[%s1 + $0x1190] sm:$0xff]
  %v595 = vld [vmem:[%s1 + $0x1198] sm:$0xff]
  %v596 = vld [vmem:[%s1 + $0x11a0] sm:$0xff]
  %v597 = vld [vmem:[%s1 + $0x11a8] sm:$0xff]
  %v598 = vld [vmem:[%s1 + $0x11b0] sm:$0xff]
  %v599 = vld [vmem:[%s1 + $0x11b8] sm:$0xff]
  %v600 = vld [vmem:[%s1 + $0x11c0] sm:$0xff]
  %v601 = vld [vmem:[%s1 + $0x11c8] sm:$0xff]
  %v602 = vld [vmem:[%s1 + $0x11d0] sm:$0xff]
  %v603 = vld [vmem:[%s1 + $0x11d8] sm:$0xff]
  %v604 = vld [vmem:[%s1 + $0x11e0] sm:$0xff]
  %v605 = vld [vmem:[%s1 + $0x11e8] sm:$0xff]
  %v606 = vld [vmem:[%s1 + $0x11f0] sm:$0xff]
  %v607 = vld [vmem:[%s1 + $0x11f8] sm:$0xff]
  %v608 = vld [vmem:[%s2] sm:$0xf]
  %v610 = vlaneseq
  %v611 = vshrl.u32 %v610, 7
  %v612 = vsub.s32 0, %v611
  %v613 = vrot.slane %v608, %v612
  %v614 = vlaneseq
  %v615 = vshrl.u32 %v614, 7
  %v616 = vsub.s32 1, %v615
  %v617 = vrot.slane %v608, %v616
  %v618 = vlaneseq
  %v619 = vshrl.u32 %v618, 7
  %v620 = vsub.s32 2, %v619
  %v621 = vrot.slane %v608, %v620
  %v622 = vlaneseq
  %v623 = vshrl.u32 %v622, 7
  %v624 = vsub.s32 3, %v623
  %v625 = vrot.slane %v608, %v624
  %v648 = vunpack.c.l.b16 %v14
  %v649 = vunpack.c.h.b16 %v14
  %v650 = vunpack.c.l.b16 %v15
  %v651 = vunpack.c.h.b16 %v15
  %v652 = vunpack.c.l.b16 %v16
  %v653 = vunpack.c.h.b16 %v16
  %v654 = vunpack.c.l.b16 %v17
  %v655 = vunpack.c.h.b16 %v17
  %v656 = vunpack.c.l.b16 %v18
  %v657 = vunpack.c.h.b16 %v18
  %v658 = vunpack.c.l.b16 %v19
  %v659 = vunpack.c.h.b16 %v19
  %v660 = vunpack.c.l.b16 %v20
  %v661 = vunpack.c.h.b16 %v20
  %v662 = vunpack.c.l.b16 %v21
  %v663 = vunpack.c.h.b16 %v21
  %v664 = vunpack.c.l.b16 %v22
  %v665 = vunpack.c.h.b16 %v22
  %v666 = vunpack.c.l.b16 %v23
  %v667 = vunpack.c.h.b16 %v23
  %v668 = vunpack.c.l.b16 %v24
  %v669 = vunpack.c.h.b16 %v24
  %v670 = vunpack.c.l.b16 %v25
  %v671 = vunpack.c.h.b16 %v25
  %v672 = vunpack.c.l.b16 %v26
  %v673 = vunpack.c.h.b16 %v26
  %v674 = vunpack.c.l.b16 %v27
  %v675 = vunpack.c.h.b16 %v27
  %v676 = vunpack.c.l.b16 %v28
  %v677 = vunpack.c.h.b16 %v28
  %v678 = vunpack.c.l.b16 %v29
  %v679 = vunpack.c.h.b16 %v29
  %v680 = vunpack.c.l.b16 %v30
  %v681 = vunpack.c.h.b16 %v30
  %v682 = vunpack.c.l.b16 %v31
  %v683 = vunpack.c.h.b16 %v31
  %v684 = vpack.c.b16 %v666, %v648
  %v685 = vpack.c.b16 %v667, %v649
  %v686 = vpack.c.b16 %v668, %v650
  %v687 = vpack.c.b16 %v669, %v651
  %v688 = vpack.c.b16 %v670, %v652
  %v689 = vpack.c.b16 %v671, %v653
  %v690 = vpack.c.b16 %v672, %v654
  %v691 = vpack.c.b16 %v673, %v655
  %v692 = vpack.c.b16 %v674, %v656
  %v693 = vpack.c.b16 %v675, %v657
  %v694 = vpack.c.b16 %v676, %v658
  %v695 = vpack.c.b16 %v677, %v659
  %v696 = vpack.c.b16 %v678, %v660
  %v697 = vpack.c.b16 %v679, %v661
  %v698 = vpack.c.b16 %v680, %v662
  %v699 = vpack.c.b16 %v681, %v663
  %v700 = vpack.c.b16 %v682, %v664
  %v701 = vpack.c.b16 %v683, %v665
  %v1296 = vunpack.c.l.b16 %v32
  %v1297 = vunpack.c.h.b16 %v32
  %v1298 = vunpack.c.l.b16 %v33
  %v1299 = vunpack.c.h.b16 %v33
  %v1300 = vunpack.c.l.b16 %v34
  %v1301 = vunpack.c.h.b16 %v34
  %v1302 = vunpack.c.l.b16 %v35
  %v1303 = vunpack.c.h.b16 %v35
  %v1304 = vunpack.c.l.b16 %v36
  %v1305 = vunpack.c.h.b16 %v36
  %v1306 = vunpack.c.l.b16 %v37
  %v1307 = vunpack.c.h.b16 %v37
  %v1308 = vunpack.c.l.b16 %v38
  %v1309 = vunpack.c.h.b16 %v38
  %v1310 = vunpack.c.l.b16 %v39
  %v1311 = vunpack.c.h.b16 %v39
  %v1312 = vunpack.c.l.b16 %v40
  %v1313 = vunpack.c.h.b16 %v40
  %v1314 = vunpack.c.l.b16 %v41
  %v1315 = vunpack.c.h.b16 %v41
  %v1316 = vunpack.c.l.b16 %v42
  %v1317 = vunpack.c.h.b16 %v42
  %v1318 = vunpack.c.l.b16 %v43
  %v1319 = vunpack.c.h.b16 %v43
  %v1320 = vunpack.c.l.b16 %v44
  %v1321 = vunpack.c.h.b16 %v44
  %v1322 = vunpack.c.l.b16 %v45
  %v1323 = vunpack.c.h.b16 %v45
  %v1324 = vunpack.c.l.b16 %v46
  %v1325 = vunpack.c.h.b16 %v46
  %v1326 = vunpack.c.l.b16 %v47
  %v1327 = vunpack.c.h.b16 %v47
  %v1328 = vunpack.c.l.b16 %v48
  %v1329 = vunpack.c.h.b16 %v48
  %v1330 = vunpack.c.l.b16 %v49
  %v1331 = vunpack.c.h.b16 %v49
  %v1332 = vunpack.c.l.b16 %v50
  %v1333 = vunpack.c.h.b16 %v50
  %v1334 = vunpack.c.l.b16 %v51
  %v1335 = vunpack.c.h.b16 %v51
  %v1336 = vunpack.c.l.b16 %v52
  %v1337 = vunpack.c.h.b16 %v52
  %v1338 = vunpack.c.l.b16 %v53
  %v1339 = vunpack.c.h.b16 %v53
  %v1340 = vunpack.c.l.b16 %v54
  %v1341 = vunpack.c.h.b16 %v54
  %v1342 = vunpack.c.l.b16 %v55
  %v1343 = vunpack.c.h.b16 %v55
  %v1344 = vunpack.c.l.b16 %v56
  %v1345 = vunpack.c.h.b16 %v56
  %v1346 = vunpack.c.l.b16 %v57
  %v1347 = vunpack.c.h.b16 %v57
  %v1348 = vunpack.c.l.b16 %v58
  %v1349 = vunpack.c.h.b16 %v58
  %v1350 = vunpack.c.l.b16 %v59
  %v1351 = vunpack.c.h.b16 %v59
  %v1352 = vunpack.c.l.b16 %v60
  %v1353 = vunpack.c.h.b16 %v60
  %v1354 = vunpack.c.l.b16 %v61
  %v1355 = vunpack.c.h.b16 %v61
  %v1356 = vunpack.c.l.b16 %v62
  %v1357 = vunpack.c.h.b16 %v62
  %v1358 = vunpack.c.l.b16 %v63
  %v1359 = vunpack.c.h.b16 %v63
  %v1360 = vunpack.c.l.b16 %v64
  %v1361 = vunpack.c.h.b16 %v64
  %v1362 = vunpack.c.l.b16 %v65
  %v1363 = vunpack.c.h.b16 %v65
  %v1364 = vunpack.c.l.b16 %v66
  %v1365 = vunpack.c.h.b16 %v66
  %v1366 = vunpack.c.l.b16 %v67
  %v1367 = vunpack.c.h.b16 %v67
  %v1368 = vunpack.c.l.b16 %v68
  %v1369 = vunpack.c.h.b16 %v68
  %v1370 = vunpack.c.l.b16 %v69
  %v1371 = vunpack.c.h.b16 %v69
  %v1372 = vunpack.c.l.b16 %v70
  %v1373 = vunpack.c.h.b16 %v70
  %v1374 = vunpack.c.l.b16 %v71
  %v1375 = vunpack.c.h.b16 %v71
  %v1376 = vunpack.c.l.b16 %v72
  %v1377 = vunpack.c.h.b16 %v72
  %v1378 = vunpack.c.l.b16 %v73
  %v1379 = vunpack.c.h.b16 %v73
  %v1380 = vunpack.c.l.b16 %v74
  %v1381 = vunpack.c.h.b16 %v74
  %v1382 = vunpack.c.l.b16 %v75
  %v1383 = vunpack.c.h.b16 %v75
  %v1384 = vunpack.c.l.b16 %v76
  %v1385 = vunpack.c.h.b16 %v76
  %v1386 = vunpack.c.l.b16 %v77
  %v1387 = vunpack.c.h.b16 %v77
  %v1388 = vunpack.c.l.b16 %v78
  %v1389 = vunpack.c.h.b16 %v78
  %v1390 = vunpack.c.l.b16 %v79
  %v1391 = vunpack.c.h.b16 %v79
  %v1392 = vunpack.c.l.b16 %v80
  %v1393 = vunpack.c.h.b16 %v80
  %v1394 = vunpack.c.l.b16 %v81
  %v1395 = vunpack.c.h.b16 %v81
  %v1396 = vunpack.c.l.b16 %v82
  %v1397 = vunpack.c.h.b16 %v82
  %v1398 = vunpack.c.l.b16 %v83
  %v1399 = vunpack.c.h.b16 %v83
  %v1400 = vunpack.c.l.b16 %v84
  %v1401 = vunpack.c.h.b16 %v84
  %v1402 = vunpack.c.l.b16 %v85
  %v1403 = vunpack.c.h.b16 %v85
  %v1404 = vunpack.c.l.b16 %v86
  %v1405 = vunpack.c.h.b16 %v86
  %v1406 = vunpack.c.l.b16 %v87
  %v1407 = vunpack.c.h.b16 %v87
  %v1408 = vunpack.c.l.b16 %v88
  %v1409 = vunpack.c.h.b16 %v88
  %v1410 = vunpack.c.l.b16 %v89
  %v1411 = vunpack.c.h.b16 %v89
  %v1412 = vunpack.c.l.b16 %v90
  %v1413 = vunpack.c.h.b16 %v90
  %v1414 = vunpack.c.l.b16 %v91
  %v1415 = vunpack.c.h.b16 %v91
  %v1416 = vunpack.c.l.b16 %v92
  %v1417 = vunpack.c.h.b16 %v92
  %v1418 = vunpack.c.l.b16 %v93
  %v1419 = vunpack.c.h.b16 %v93
  %v1420 = vunpack.c.l.b16 %v94
  %v1421 = vunpack.c.h.b16 %v94
  %v1422 = vunpack.c.l.b16 %v95
  %v1423 = vunpack.c.h.b16 %v95
  %v1424 = vunpack.c.l.b16 %v96
  %v1425 = vunpack.c.h.b16 %v96
  %v1426 = vunpack.c.l.b16 %v97
  %v1427 = vunpack.c.h.b16 %v97
  %v1428 = vunpack.c.l.b16 %v98
  %v1429 = vunpack.c.h.b16 %v98
  %v1430 = vunpack.c.l.b16 %v99
  %v1431 = vunpack.c.h.b16 %v99
  %v1432 = vunpack.c.l.b16 %v100
  %v1433 = vunpack.c.h.b16 %v100
  %v1434 = vunpack.c.l.b16 %v101
  %v1435 = vunpack.c.h.b16 %v101
  %v1436 = vunpack.c.l.b16 %v102
  %v1437 = vunpack.c.h.b16 %v102
  %v1438 = vunpack.c.l.b16 %v103
  %v1439 = vunpack.c.h.b16 %v103
  %v1440 = vunpack.c.l.b16 %v104
  %v1441 = vunpack.c.h.b16 %v104
  %v1442 = vunpack.c.l.b16 %v105
  %v1443 = vunpack.c.h.b16 %v105
  %v1444 = vunpack.c.l.b16 %v106
  %v1445 = vunpack.c.h.b16 %v106
  %v1446 = vunpack.c.l.b16 %v107
  %v1447 = vunpack.c.h.b16 %v107
  %v1448 = vunpack.c.l.b16 %v108
  %v1449 = vunpack.c.h.b16 %v108
  %v1450 = vunpack.c.l.b16 %v109
  %v1451 = vunpack.c.h.b16 %v109
  %v1452 = vunpack.c.l.b16 %v110
  %v1453 = vunpack.c.h.b16 %v110
  %v1454 = vunpack.c.l.b16 %v111
  %v1455 = vunpack.c.h.b16 %v111
  %v1456 = vunpack.c.l.b16 %v112
  %v1457 = vunpack.c.h.b16 %v112
  %v1458 = vunpack.c.l.b16 %v113
  %v1459 = vunpack.c.h.b16 %v113
  %v1460 = vunpack.c.l.b16 %v114
  %v1461 = vunpack.c.h.b16 %v114
  %v1462 = vunpack.c.l.b16 %v115
  %v1463 = vunpack.c.h.b16 %v115
  %v1464 = vunpack.c.l.b16 %v116
  %v1465 = vunpack.c.h.b16 %v116
  %v1466 = vunpack.c.l.b16 %v117
  %v1467 = vunpack.c.h.b16 %v117
  %v1468 = vunpack.c.l.b16 %v118
  %v1469 = vunpack.c.h.b16 %v118
  %v1470 = vunpack.c.l.b16 %v119
  %v1471 = vunpack.c.h.b16 %v119
  %v1472 = vunpack.c.l.b16 %v120
  %v1473 = vunpack.c.h.b16 %v120
  %v1474 = vunpack.c.l.b16 %v121
  %v1475 = vunpack.c.h.b16 %v121
  %v1476 = vunpack.c.l.b16 %v122
  %v1477 = vunpack.c.h.b16 %v122
  %v1478 = vunpack.c.l.b16 %v123
  %v1479 = vunpack.c.h.b16 %v123
  %v1480 = vunpack.c.l.b16 %v124
  %v1481 = vunpack.c.h.b16 %v124
  %v1482 = vunpack.c.l.b16 %v125
  %v1483 = vunpack.c.h.b16 %v125
  %v1484 = vunpack.c.l.b16 %v126
  %v1485 = vunpack.c.h.b16 %v126
  %v1486 = vunpack.c.l.b16 %v127
  %v1487 = vunpack.c.h.b16 %v127
  %v1488 = vunpack.c.l.b16 %v128
  %v1489 = vunpack.c.h.b16 %v128
  %v1490 = vunpack.c.l.b16 %v129
  %v1491 = vunpack.c.h.b16 %v129
  %v1492 = vunpack.c.l.b16 %v130
  %v1493 = vunpack.c.h.b16 %v130
  %v1494 = vunpack.c.l.b16 %v131
  %v1495 = vunpack.c.h.b16 %v131
  %v1496 = vunpack.c.l.b16 %v132
  %v1497 = vunpack.c.h.b16 %v132
  %v1498 = vunpack.c.l.b16 %v133
  %v1499 = vunpack.c.h.b16 %v133
  %v1500 = vunpack.c.l.b16 %v134
  %v1501 = vunpack.c.h.b16 %v134
  %v1502 = vunpack.c.l.b16 %v135
  %v1503 = vunpack.c.h.b16 %v135
  %v1504 = vunpack.c.l.b16 %v136
  %v1505 = vunpack.c.h.b16 %v136
  %v1506 = vunpack.c.l.b16 %v137
  %v1507 = vunpack.c.h.b16 %v137
  %v1508 = vunpack.c.l.b16 %v138
  %v1509 = vunpack.c.h.b16 %v138
  %v1510 = vunpack.c.l.b16 %v139
  %v1511 = vunpack.c.h.b16 %v139
  %v1512 = vunpack.c.l.b16 %v140
  %v1513 = vunpack.c.h.b16 %v140
  %v1514 = vunpack.c.l.b16 %v141
  %v1515 = vunpack.c.h.b16 %v141
  %v1516 = vunpack.c.l.b16 %v142
  %v1517 = vunpack.c.h.b16 %v142
  %v1518 = vunpack.c.l.b16 %v143
  %v1519 = vunpack.c.h.b16 %v143
  %v1520 = vunpack.c.l.b16 %v144
  %v1521 = vunpack.c.h.b16 %v144
  %v1522 = vunpack.c.l.b16 %v145
  %v1523 = vunpack.c.h.b16 %v145
  %v1524 = vunpack.c.l.b16 %v146
  %v1525 = vunpack.c.h.b16 %v146
  %v1526 = vunpack.c.l.b16 %v147
  %v1527 = vunpack.c.h.b16 %v147
  %v1528 = vunpack.c.l.b16 %v148
  %v1529 = vunpack.c.h.b16 %v148
  %v1530 = vunpack.c.l.b16 %v149
  %v1531 = vunpack.c.h.b16 %v149
  %v1532 = vunpack.c.l.b16 %v150
  %v1533 = vunpack.c.h.b16 %v150
  %v1534 = vunpack.c.l.b16 %v151
  %v1535 = vunpack.c.h.b16 %v151
  %v1536 = vunpack.c.l.b16 %v152
  %v1537 = vunpack.c.h.b16 %v152
  %v1538 = vunpack.c.l.b16 %v153
  %v1539 = vunpack.c.h.b16 %v153
  %v1540 = vunpack.c.l.b16 %v154
  %v1541 = vunpack.c.h.b16 %v154
  %v1542 = vunpack.c.l.b16 %v155
  %v1543 = vunpack.c.h.b16 %v155
  %v1544 = vunpack.c.l.b16 %v156
  %v1545 = vunpack.c.h.b16 %v156
  %v1546 = vunpack.c.l.b16 %v157
  %v1547 = vunpack.c.h.b16 %v157
  %v1548 = vunpack.c.l.b16 %v158
  %v1549 = vunpack.c.h.b16 %v158
  %v1550 = vunpack.c.l.b16 %v159
  %v1551 = vunpack.c.h.b16 %v159
  %v1552 = vunpack.c.l.b16 %v160
  %v1553 = vunpack.c.h.b16 %v160
  %v1554 = vunpack.c.l.b16 %v161
  %v1555 = vunpack.c.h.b16 %v161
  %v1556 = vunpack.c.l.b16 %v162
  %v1557 = vunpack.c.h.b16 %v162
  %v1558 = vunpack.c.l.b16 %v163
  %v1559 = vunpack.c.h.b16 %v163
  %v1560 = vunpack.c.l.b16 %v164
  %v1561 = vunpack.c.h.b16 %v164
  %v1562 = vunpack.c.l.b16 %v165
  %v1563 = vunpack.c.h.b16 %v165
  %v1564 = vunpack.c.l.b16 %v166
  %v1565 = vunpack.c.h.b16 %v166
  %v1566 = vunpack.c.l.b16 %v167
  %v1567 = vunpack.c.h.b16 %v167
  %v1568 = vunpack.c.l.b16 %v168
  %v1569 = vunpack.c.h.b16 %v168
  %v1570 = vunpack.c.l.b16 %v169
  %v1571 = vunpack.c.h.b16 %v169
  %v1572 = vunpack.c.l.b16 %v170
  %v1573 = vunpack.c.h.b16 %v170
  %v1574 = vunpack.c.l.b16 %v171
  %v1575 = vunpack.c.h.b16 %v171
  %v1576 = vunpack.c.l.b16 %v172
  %v1577 = vunpack.c.h.b16 %v172
  %v1578 = vunpack.c.l.b16 %v173
  %v1579 = vunpack.c.h.b16 %v173
  %v1580 = vunpack.c.l.b16 %v174
  %v1581 = vunpack.c.h.b16 %v174
  %v1582 = vunpack.c.l.b16 %v175
  %v1583 = vunpack.c.h.b16 %v175
  %v1584 = vunpack.c.l.b16 %v176
  %v1585 = vunpack.c.h.b16 %v176
  %v1586 = vunpack.c.l.b16 %v177
  %v1587 = vunpack.c.h.b16 %v177
  %v1588 = vunpack.c.l.b16 %v178
  %v1589 = vunpack.c.h.b16 %v178
  %v1590 = vunpack.c.l.b16 %v179
  %v1591 = vunpack.c.h.b16 %v179
  %v1592 = vunpack.c.l.b16 %v180
  %v1593 = vunpack.c.h.b16 %v180
  %v1594 = vunpack.c.l.b16 %v181
  %v1595 = vunpack.c.h.b16 %v181
  %v1596 = vunpack.c.l.b16 %v182
  %v1597 = vunpack.c.h.b16 %v182
  %v1598 = vunpack.c.l.b16 %v183
  %v1599 = vunpack.c.h.b16 %v183
  %v1600 = vunpack.c.l.b16 %v184
  %v1601 = vunpack.c.h.b16 %v184
  %v1602 = vunpack.c.l.b16 %v185
  %v1603 = vunpack.c.h.b16 %v185
  %v1604 = vunpack.c.l.b16 %v186
  %v1605 = vunpack.c.h.b16 %v186
  %v1606 = vunpack.c.l.b16 %v187
  %v1607 = vunpack.c.h.b16 %v187
  %v1608 = vunpack.c.l.b16 %v188
  %v1609 = vunpack.c.h.b16 %v188
  %v1610 = vunpack.c.l.b16 %v189
  %v1611 = vunpack.c.h.b16 %v189
  %v1612 = vunpack.c.l.b16 %v190
  %v1613 = vunpack.c.h.b16 %v190
  %v1614 = vunpack.c.l.b16 %v191
  %v1615 = vunpack.c.h.b16 %v191
  %v1616 = vunpack.c.l.b16 %v192
  %v1617 = vunpack.c.h.b16 %v192
  %v1618 = vunpack.c.l.b16 %v193
  %v1619 = vunpack.c.h.b16 %v193
  %v1620 = vunpack.c.l.b16 %v194
  %v1621 = vunpack.c.h.b16 %v194
  %v1622 = vunpack.c.l.b16 %v195
  %v1623 = vunpack.c.h.b16 %v195
  %v1624 = vunpack.c.l.b16 %v196
  %v1625 = vunpack.c.h.b16 %v196
  %v1626 = vunpack.c.l.b16 %v197
  %v1627 = vunpack.c.h.b16 %v197
  %v1628 = vunpack.c.l.b16 %v198
  %v1629 = vunpack.c.h.b16 %v198
  %v1630 = vunpack.c.l.b16 %v199
  %v1631 = vunpack.c.h.b16 %v199
  %v1632 = vunpack.c.l.b16 %v200
  %v1633 = vunpack.c.h.b16 %v200
  %v1634 = vunpack.c.l.b16 %v201
  %v1635 = vunpack.c.h.b16 %v201
  %v1636 = vunpack.c.l.b16 %v202
  %v1637 = vunpack.c.h.b16 %v202
  %v1638 = vunpack.c.l.b16 %v203
  %v1639 = vunpack.c.h.b16 %v203
  %v1640 = vunpack.c.l.b16 %v204
  %v1641 = vunpack.c.h.b16 %v204
  %v1642 = vunpack.c.l.b16 %v205
  %v1643 = vunpack.c.h.b16 %v205
  %v1644 = vunpack.c.l.b16 %v206
  %v1645 = vunpack.c.h.b16 %v206
  %v1646 = vunpack.c.l.b16 %v207
  %v1647 = vunpack.c.h.b16 %v207
  %v1648 = vunpack.c.l.b16 %v208
  %v1649 = vunpack.c.h.b16 %v208
  %v1650 = vunpack.c.l.b16 %v209
  %v1651 = vunpack.c.h.b16 %v209
  %v1652 = vunpack.c.l.b16 %v210
  %v1653 = vunpack.c.h.b16 %v210
  %v1654 = vunpack.c.l.b16 %v211
  %v1655 = vunpack.c.h.b16 %v211
  %v1656 = vunpack.c.l.b16 %v212
  %v1657 = vunpack.c.h.b16 %v212
  %v1658 = vunpack.c.l.b16 %v213
  %v1659 = vunpack.c.h.b16 %v213
  %v1660 = vunpack.c.l.b16 %v214
  %v1661 = vunpack.c.h.b16 %v214
  %v1662 = vunpack.c.l.b16 %v215
  %v1663 = vunpack.c.h.b16 %v215
  %v1664 = vunpack.c.l.b16 %v216
  %v1665 = vunpack.c.h.b16 %v216
  %v1666 = vunpack.c.l.b16 %v217
  %v1667 = vunpack.c.h.b16 %v217
  %v1668 = vunpack.c.l.b16 %v218
  %v1669 = vunpack.c.h.b16 %v218
  %v1670 = vunpack.c.l.b16 %v219
  %v1671 = vunpack.c.h.b16 %v219
  %v1672 = vunpack.c.l.b16 %v220
  %v1673 = vunpack.c.h.b16 %v220
  %v1674 = vunpack.c.l.b16 %v221
  %v1675 = vunpack.c.h.b16 %v221
  %v1676 = vunpack.c.l.b16 %v222
  %v1677 = vunpack.c.h.b16 %v222
  %v1678 = vunpack.c.l.b16 %v223
  %v1679 = vunpack.c.h.b16 %v223
  %v1680 = vunpack.c.l.b16 %v224
  %v1681 = vunpack.c.h.b16 %v224
  %v1682 = vunpack.c.l.b16 %v225
  %v1683 = vunpack.c.h.b16 %v225
  %v1684 = vunpack.c.l.b16 %v226
  %v1685 = vunpack.c.h.b16 %v226
  %v1686 = vunpack.c.l.b16 %v227
  %v1687 = vunpack.c.h.b16 %v227
  %v1688 = vunpack.c.l.b16 %v228
  %v1689 = vunpack.c.h.b16 %v228
  %v1690 = vunpack.c.l.b16 %v229
  %v1691 = vunpack.c.h.b16 %v229
  %v1692 = vunpack.c.l.b16 %v230
  %v1693 = vunpack.c.h.b16 %v230
  %v1694 = vunpack.c.l.b16 %v231
  %v1695 = vunpack.c.h.b16 %v231
  %v1696 = vunpack.c.l.b16 %v232
  %v1697 = vunpack.c.h.b16 %v232
  %v1698 = vunpack.c.l.b16 %v233
  %v1699 = vunpack.c.h.b16 %v233
  %v1700 = vunpack.c.l.b16 %v234
  %v1701 = vunpack.c.h.b16 %v234
  %v1702 = vunpack.c.l.b16 %v235
  %v1703 = vunpack.c.h.b16 %v235
  %v1704 = vunpack.c.l.b16 %v236
  %v1705 = vunpack.c.h.b16 %v236
  %v1706 = vunpack.c.l.b16 %v237
  %v1707 = vunpack.c.h.b16 %v237
  %v1708 = vunpack.c.l.b16 %v238
  %v1709 = vunpack.c.h.b16 %v238
  %v1710 = vunpack.c.l.b16 %v239
  %v1711 = vunpack.c.h.b16 %v239
  %v1712 = vunpack.c.l.b16 %v240
  %v1713 = vunpack.c.h.b16 %v240
  %v1714 = vunpack.c.l.b16 %v241
  %v1715 = vunpack.c.h.b16 %v241
  %v1716 = vunpack.c.l.b16 %v242
  %v1717 = vunpack.c.h.b16 %v242
  %v1718 = vunpack.c.l.b16 %v243
  %v1719 = vunpack.c.h.b16 %v243
  %v1720 = vunpack.c.l.b16 %v244
  %v1721 = vunpack.c.h.b16 %v244
  %v1722 = vunpack.c.l.b16 %v245
  %v1723 = vunpack.c.h.b16 %v245
  %v1724 = vunpack.c.l.b16 %v246
  %v1725 = vunpack.c.h.b16 %v246
  %v1726 = vunpack.c.l.b16 %v247
  %v1727 = vunpack.c.h.b16 %v247
  %v1728 = vunpack.c.l.b16 %v248
  %v1729 = vunpack.c.h.b16 %v248
  %v1730 = vunpack.c.l.b16 %v249
  %v1731 = vunpack.c.h.b16 %v249
  %v1732 = vunpack.c.l.b16 %v250
  %v1733 = vunpack.c.h.b16 %v250
  %v1734 = vunpack.c.l.b16 %v251
  %v1735 = vunpack.c.h.b16 %v251
  %v1736 = vunpack.c.l.b16 %v252
  %v1737 = vunpack.c.h.b16 %v252
  %v1738 = vunpack.c.l.b16 %v253
  %v1739 = vunpack.c.h.b16 %v253
  %v1740 = vunpack.c.l.b16 %v254
  %v1741 = vunpack.c.h.b16 %v254
  %v1742 = vunpack.c.l.b16 %v255
  %v1743 = vunpack.c.h.b16 %v255
  %v1744 = vunpack.c.l.b16 %v256
  %v1745 = vunpack.c.h.b16 %v256
  %v1746 = vunpack.c.l.b16 %v257
  %v1747 = vunpack.c.h.b16 %v257
  %v1748 = vunpack.c.l.b16 %v258
  %v1749 = vunpack.c.h.b16 %v258
  %v1750 = vunpack.c.l.b16 %v259
  %v1751 = vunpack.c.h.b16 %v259
  %v1752 = vunpack.c.l.b16 %v260
  %v1753 = vunpack.c.h.b16 %v260
  %v1754 = vunpack.c.l.b16 %v261
  %v1755 = vunpack.c.h.b16 %v261
  %v1756 = vunpack.c.l.b16 %v262
  %v1757 = vunpack.c.h.b16 %v262
  %v1758 = vunpack.c.l.b16 %v263
  %v1759 = vunpack.c.h.b16 %v263
  %v1760 = vunpack.c.l.b16 %v264
  %v1761 = vunpack.c.h.b16 %v264
  %v1762 = vunpack.c.l.b16 %v265
  %v1763 = vunpack.c.h.b16 %v265
  %v1764 = vunpack.c.l.b16 %v266
  %v1765 = vunpack.c.h.b16 %v266
  %v1766 = vunpack.c.l.b16 %v267
  %v1767 = vunpack.c.h.b16 %v267
  %v1768 = vunpack.c.l.b16 %v268
  %v1769 = vunpack.c.h.b16 %v268
  %v1770 = vunpack.c.l.b16 %v269
  %v1771 = vunpack.c.h.b16 %v269
  %v1772 = vunpack.c.l.b16 %v270
  %v1773 = vunpack.c.h.b16 %v270
  %v1774 = vunpack.c.l.b16 %v271
  %v1775 = vunpack.c.h.b16 %v271
  %v1776 = vunpack.c.l.b16 %v272
  %v1777 = vunpack.c.h.b16 %v272
  %v1778 = vunpack.c.l.b16 %v273
  %v1779 = vunpack.c.h.b16 %v273
  %v1780 = vunpack.c.l.b16 %v274
  %v1781 = vunpack.c.h.b16 %v274
  %v1782 = vunpack.c.l.b16 %v275
  %v1783 = vunpack.c.h.b16 %v275
  %v1784 = vunpack.c.l.b16 %v276
  %v1785 = vunpack.c.h.b16 %v276
  %v1786 = vunpack.c.l.b16 %v277
  %v1787 = vunpack.c.h.b16 %v277
  %v1788 = vunpack.c.l.b16 %v278
  %v1789 = vunpack.c.h.b16 %v278
  %v1790 = vunpack.c.l.b16 %v279
  %v1791 = vunpack.c.h.b16 %v279
  %v1792 = vunpack.c.l.b16 %v280
  %v1793 = vunpack.c.h.b16 %v280
  %v1794 = vunpack.c.l.b16 %v281
  %v1795 = vunpack.c.h.b16 %v281
  %v1796 = vunpack.c.l.b16 %v282
  %v1797 = vunpack.c.h.b16 %v282
  %v1798 = vunpack.c.l.b16 %v283
  %v1799 = vunpack.c.h.b16 %v283
  %v1800 = vunpack.c.l.b16 %v284
  %v1801 = vunpack.c.h.b16 %v284
  %v1802 = vunpack.c.l.b16 %v285
  %v1803 = vunpack.c.h.b16 %v285
  %v1804 = vunpack.c.l.b16 %v286
  %v1805 = vunpack.c.h.b16 %v286
  %v1806 = vunpack.c.l.b16 %v287
  %v1807 = vunpack.c.h.b16 %v287
  %v1808 = vunpack.c.l.b16 %v288
  %v1809 = vunpack.c.h.b16 %v288
  %v1810 = vunpack.c.l.b16 %v289
  %v1811 = vunpack.c.h.b16 %v289
  %v1812 = vunpack.c.l.b16 %v290
  %v1813 = vunpack.c.h.b16 %v290
  %v1814 = vunpack.c.l.b16 %v291
  %v1815 = vunpack.c.h.b16 %v291
  %v1816 = vunpack.c.l.b16 %v292
  %v1817 = vunpack.c.h.b16 %v292
  %v1818 = vunpack.c.l.b16 %v293
  %v1819 = vunpack.c.h.b16 %v293
  %v1820 = vunpack.c.l.b16 %v294
  %v1821 = vunpack.c.h.b16 %v294
  %v1822 = vunpack.c.l.b16 %v295
  %v1823 = vunpack.c.h.b16 %v295
  %v1824 = vunpack.c.l.b16 %v296
  %v1825 = vunpack.c.h.b16 %v296
  %v1826 = vunpack.c.l.b16 %v297
  %v1827 = vunpack.c.h.b16 %v297
  %v1828 = vunpack.c.l.b16 %v298
  %v1829 = vunpack.c.h.b16 %v298
  %v1830 = vunpack.c.l.b16 %v299
  %v1831 = vunpack.c.h.b16 %v299
  %v1832 = vunpack.c.l.b16 %v300
  %v1833 = vunpack.c.h.b16 %v300
  %v1834 = vunpack.c.l.b16 %v301
  %v1835 = vunpack.c.h.b16 %v301
  %v1836 = vunpack.c.l.b16 %v302
  %v1837 = vunpack.c.h.b16 %v302
  %v1838 = vunpack.c.l.b16 %v303
  %v1839 = vunpack.c.h.b16 %v303
  %v1840 = vunpack.c.l.b16 %v304
  %v1841 = vunpack.c.h.b16 %v304
  %v1842 = vunpack.c.l.b16 %v305
  %v1843 = vunpack.c.h.b16 %v305
  %v1844 = vunpack.c.l.b16 %v306
  %v1845 = vunpack.c.h.b16 %v306
  %v1846 = vunpack.c.l.b16 %v307
  %v1847 = vunpack.c.h.b16 %v307
  %v1848 = vunpack.c.l.b16 %v308
  %v1849 = vunpack.c.h.b16 %v308
  %v1850 = vunpack.c.l.b16 %v309
  %v1851 = vunpack.c.h.b16 %v309
  %v1852 = vunpack.c.l.b16 %v310
  %v1853 = vunpack.c.h.b16 %v310
  %v1854 = vunpack.c.l.b16 %v311
  %v1855 = vunpack.c.h.b16 %v311
  %v1856 = vunpack.c.l.b16 %v312
  %v1857 = vunpack.c.h.b16 %v312
  %v1858 = vunpack.c.l.b16 %v313
  %v1859 = vunpack.c.h.b16 %v313
  %v1860 = vunpack.c.l.b16 %v314
  %v1861 = vunpack.c.h.b16 %v314
  %v1862 = vunpack.c.l.b16 %v315
  %v1863 = vunpack.c.h.b16 %v315
  %v1864 = vunpack.c.l.b16 %v316
  %v1865 = vunpack.c.h.b16 %v316
  %v1866 = vunpack.c.l.b16 %v317
  %v1867 = vunpack.c.h.b16 %v317
  %v1868 = vunpack.c.l.b16 %v318
  %v1869 = vunpack.c.h.b16 %v318
  %v1870 = vunpack.c.l.b16 %v319
  %v1871 = vunpack.c.h.b16 %v319
  %v1872 = vunpack.c.l.b16 %v320
  %v1873 = vunpack.c.h.b16 %v320
  %v1874 = vunpack.c.l.b16 %v321
  %v1875 = vunpack.c.h.b16 %v321
  %v1876 = vunpack.c.l.b16 %v322
  %v1877 = vunpack.c.h.b16 %v322
  %v1878 = vunpack.c.l.b16 %v323
  %v1879 = vunpack.c.h.b16 %v323
  %v1880 = vunpack.c.l.b16 %v324
  %v1881 = vunpack.c.h.b16 %v324
  %v1882 = vunpack.c.l.b16 %v325
  %v1883 = vunpack.c.h.b16 %v325
  %v1884 = vunpack.c.l.b16 %v326
  %v1885 = vunpack.c.h.b16 %v326
  %v1886 = vunpack.c.l.b16 %v327
  %v1887 = vunpack.c.h.b16 %v327
  %v1888 = vunpack.c.l.b16 %v328
  %v1889 = vunpack.c.h.b16 %v328
  %v1890 = vunpack.c.l.b16 %v329
  %v1891 = vunpack.c.h.b16 %v329
  %v1892 = vunpack.c.l.b16 %v330
  %v1893 = vunpack.c.h.b16 %v330
  %v1894 = vunpack.c.l.b16 %v331
  %v1895 = vunpack.c.h.b16 %v331
  %v1896 = vunpack.c.l.b16 %v332
  %v1897 = vunpack.c.h.b16 %v332
  %v1898 = vunpack.c.l.b16 %v333
  %v1899 = vunpack.c.h.b16 %v333
  %v1900 = vunpack.c.l.b16 %v334
  %v1901 = vunpack.c.h.b16 %v334
  %v1902 = vunpack.c.l.b16 %v335
  %v1903 = vunpack.c.h.b16 %v335
  %v1904 = vunpack.c.l.b16 %v336
  %v1905 = vunpack.c.h.b16 %v336
  %v1906 = vunpack.c.l.b16 %v337
  %v1907 = vunpack.c.h.b16 %v337
  %v1908 = vunpack.c.l.b16 %v338
  %v1909 = vunpack.c.h.b16 %v338
  %v1910 = vunpack.c.l.b16 %v339
  %v1911 = vunpack.c.h.b16 %v339
  %v1912 = vunpack.c.l.b16 %v340
  %v1913 = vunpack.c.h.b16 %v340
  %v1914 = vunpack.c.l.b16 %v341
  %v1915 = vunpack.c.h.b16 %v341
  %v1916 = vunpack.c.l.b16 %v342
  %v1917 = vunpack.c.h.b16 %v342
  %v1918 = vunpack.c.l.b16 %v343
  %v1919 = vunpack.c.h.b16 %v343
  %v1920 = vunpack.c.l.b16 %v344
  %v1921 = vunpack.c.h.b16 %v344
  %v1922 = vunpack.c.l.b16 %v345
  %v1923 = vunpack.c.h.b16 %v345
  %v1924 = vunpack.c.l.b16 %v346
  %v1925 = vunpack.c.h.b16 %v346
  %v1926 = vunpack.c.l.b16 %v347
  %v1927 = vunpack.c.h.b16 %v347
  %v1928 = vunpack.c.l.b16 %v348
  %v1929 = vunpack.c.h.b16 %v348
  %v1930 = vunpack.c.l.b16 %v349
  %v1931 = vunpack.c.h.b16 %v349
  %v1932 = vunpack.c.l.b16 %v350
  %v1933 = vunpack.c.h.b16 %v350
  %v1934 = vunpack.c.l.b16 %v351
  %v1935 = vunpack.c.h.b16 %v351
  %v1936 = vunpack.c.l.b16 %v352
  %v1937 = vunpack.c.h.b16 %v352
  %v1938 = vunpack.c.l.b16 %v353
  %v1939 = vunpack.c.h.b16 %v353
  %v1940 = vunpack.c.l.b16 %v354
  %v1941 = vunpack.c.h.b16 %v354
  %v1942 = vunpack.c.l.b16 %v355
  %v1943 = vunpack.c.h.b16 %v355
  %v1944 = vunpack.c.l.b16 %v356
  %v1945 = vunpack.c.h.b16 %v356
  %v1946 = vunpack.c.l.b16 %v357
  %v1947 = vunpack.c.h.b16 %v357
  %v1948 = vunpack.c.l.b16 %v358
  %v1949 = vunpack.c.h.b16 %v358
  %v1950 = vunpack.c.l.b16 %v359
  %v1951 = vunpack.c.h.b16 %v359
  %v1952 = vunpack.c.l.b16 %v360
  %v1953 = vunpack.c.h.b16 %v360
  %v1954 = vunpack.c.l.b16 %v361
  %v1955 = vunpack.c.h.b16 %v361
  %v1956 = vunpack.c.l.b16 %v362
  %v1957 = vunpack.c.h.b16 %v362
  %v1958 = vunpack.c.l.b16 %v363
  %v1959 = vunpack.c.h.b16 %v363
  %v1960 = vunpack.c.l.b16 %v364
  %v1961 = vunpack.c.h.b16 %v364
  %v1962 = vunpack.c.l.b16 %v365
  %v1963 = vunpack.c.h.b16 %v365
  %v1964 = vunpack.c.l.b16 %v366
  %v1965 = vunpack.c.h.b16 %v366
  %v1966 = vunpack.c.l.b16 %v367
  %v1967 = vunpack.c.h.b16 %v367
  %v1968 = vunpack.c.l.b16 %v368
  %v1969 = vunpack.c.h.b16 %v368
  %v1970 = vunpack.c.l.b16 %v369
  %v1971 = vunpack.c.h.b16 %v369
  %v1972 = vunpack.c.l.b16 %v370
  %v1973 = vunpack.c.h.b16 %v370
  %v1974 = vunpack.c.l.b16 %v371
  %v1975 = vunpack.c.h.b16 %v371
  %v1976 = vunpack.c.l.b16 %v372
  %v1977 = vunpack.c.h.b16 %v372
  %v1978 = vunpack.c.l.b16 %v373
  %v1979 = vunpack.c.h.b16 %v373
  %v1980 = vunpack.c.l.b16 %v374
  %v1981 = vunpack.c.h.b16 %v374
  %v1982 = vunpack.c.l.b16 %v375
  %v1983 = vunpack.c.h.b16 %v375
  %v1984 = vunpack.c.l.b16 %v376
  %v1985 = vunpack.c.h.b16 %v376
  %v1986 = vunpack.c.l.b16 %v377
  %v1987 = vunpack.c.h.b16 %v377
  %v1988 = vunpack.c.l.b16 %v378
  %v1989 = vunpack.c.h.b16 %v378
  %v1990 = vunpack.c.l.b16 %v379
  %v1991 = vunpack.c.h.b16 %v379
  %v1992 = vunpack.c.l.b16 %v380
  %v1993 = vunpack.c.h.b16 %v380
  %v1994 = vunpack.c.l.b16 %v381
  %v1995 = vunpack.c.h.b16 %v381
  %v1996 = vunpack.c.l.b16 %v382
  %v1997 = vunpack.c.h.b16 %v382
  %v1998 = vunpack.c.l.b16 %v383
  %v1999 = vunpack.c.h.b16 %v383
  %v2000 = vunpack.c.l.b16 %v384
  %v2001 = vunpack.c.h.b16 %v384
  %v2002 = vunpack.c.l.b16 %v385
  %v2003 = vunpack.c.h.b16 %v385
  %v2004 = vunpack.c.l.b16 %v386
  %v2005 = vunpack.c.h.b16 %v386
  %v2006 = vunpack.c.l.b16 %v387
  %v2007 = vunpack.c.h.b16 %v387
  %v2008 = vunpack.c.l.b16 %v388
  %v2009 = vunpack.c.h.b16 %v388
  %v2010 = vunpack.c.l.b16 %v389
  %v2011 = vunpack.c.h.b16 %v389
  %v2012 = vunpack.c.l.b16 %v390
  %v2013 = vunpack.c.h.b16 %v390
  %v2014 = vunpack.c.l.b16 %v391
  %v2015 = vunpack.c.h.b16 %v391
  %v2016 = vunpack.c.l.b16 %v392
  %v2017 = vunpack.c.h.b16 %v392
  %v2018 = vunpack.c.l.b16 %v393
  %v2019 = vunpack.c.h.b16 %v393
  %v2020 = vunpack.c.l.b16 %v394
  %v2021 = vunpack.c.h.b16 %v394
  %v2022 = vunpack.c.l.b16 %v395
  %v2023 = vunpack.c.h.b16 %v395
  %v2024 = vunpack.c.l.b16 %v396
  %v2025 = vunpack.c.h.b16 %v396
  %v2026 = vunpack.c.l.b16 %v397
  %v2027 = vunpack.c.h.b16 %v397
  %v2028 = vunpack.c.l.b16 %v398
  %v2029 = vunpack.c.h.b16 %v398
  %v2030 = vunpack.c.l.b16 %v399
  %v2031 = vunpack.c.h.b16 %v399
  %v2032 = vunpack.c.l.b16 %v400
  %v2033 = vunpack.c.h.b16 %v400
  %v2034 = vunpack.c.l.b16 %v401
  %v2035 = vunpack.c.h.b16 %v401
  %v2036 = vunpack.c.l.b16 %v402
  %v2037 = vunpack.c.h.b16 %v402
  %v2038 = vunpack.c.l.b16 %v403
  %v2039 = vunpack.c.h.b16 %v403
  %v2040 = vunpack.c.l.b16 %v404
  %v2041 = vunpack.c.h.b16 %v404
  %v2042 = vunpack.c.l.b16 %v405
  %v2043 = vunpack.c.h.b16 %v405
  %v2044 = vunpack.c.l.b16 %v406
  %v2045 = vunpack.c.h.b16 %v406
  %v2046 = vunpack.c.l.b16 %v407
  %v2047 = vunpack.c.h.b16 %v407
  %v2048 = vunpack.c.l.b16 %v408
  %v2049 = vunpack.c.h.b16 %v408
  %v2050 = vunpack.c.l.b16 %v409
  %v2051 = vunpack.c.h.b16 %v409
  %v2052 = vunpack.c.l.b16 %v410
  %v2053 = vunpack.c.h.b16 %v410
  %v2054 = vunpack.c.l.b16 %v411
  %v2055 = vunpack.c.h.b16 %v411
  %v2056 = vunpack.c.l.b16 %v412
  %v2057 = vunpack.c.h.b16 %v412
  %v2058 = vunpack.c.l.b16 %v413
  %v2059 = vunpack.c.h.b16 %v413
  %v2060 = vunpack.c.l.b16 %v414
  %v2061 = vunpack.c.h.b16 %v414
  %v2062 = vunpack.c.l.b16 %v415
  %v2063 = vunpack.c.h.b16 %v415
  %v2064 = vunpack.c.l.b16 %v416
  %v2065 = vunpack.c.h.b16 %v416
  %v2066 = vunpack.c.l.b16 %v417
  %v2067 = vunpack.c.h.b16 %v417
  %v2068 = vunpack.c.l.b16 %v418
  %v2069 = vunpack.c.h.b16 %v418
  %v2070 = vunpack.c.l.b16 %v419
  %v2071 = vunpack.c.h.b16 %v419
  %v2072 = vunpack.c.l.b16 %v420
  %v2073 = vunpack.c.h.b16 %v420
  %v2074 = vunpack.c.l.b16 %v421
  %v2075 = vunpack.c.h.b16 %v421
  %v2076 = vunpack.c.l.b16 %v422
  %v2077 = vunpack.c.h.b16 %v422
  %v2078 = vunpack.c.l.b16 %v423
  %v2079 = vunpack.c.h.b16 %v423
  %v2080 = vunpack.c.l.b16 %v424
  %v2081 = vunpack.c.h.b16 %v424
  %v2082 = vunpack.c.l.b16 %v425
  %v2083 = vunpack.c.h.b16 %v425
  %v2084 = vunpack.c.l.b16 %v426
  %v2085 = vunpack.c.h.b16 %v426
  %v2086 = vunpack.c.l.b16 %v427
  %v2087 = vunpack.c.h.b16 %v427
  %v2088 = vunpack.c.l.b16 %v428
  %v2089 = vunpack.c.h.b16 %v428
  %v2090 = vunpack.c.l.b16 %v429
  %v2091 = vunpack.c.h.b16 %v429
  %v2092 = vunpack.c.l.b16 %v430
  %v2093 = vunpack.c.h.b16 %v430
  %v2094 = vunpack.c.l.b16 %v431
  %v2095 = vunpack.c.h.b16 %v431
  %v2096 = vunpack.c.l.b16 %v432
  %v2097 = vunpack.c.h.b16 %v432
  %v2098 = vunpack.c.l.b16 %v433
  %v2099 = vunpack.c.h.b16 %v433
  %v2100 = vunpack.c.l.b16 %v434
  %v2101 = vunpack.c.h.b16 %v434
  %v2102 = vunpack.c.l.b16 %v435
  %v2103 = vunpack.c.h.b16 %v435
  %v2104 = vunpack.c.l.b16 %v436
  %v2105 = vunpack.c.h.b16 %v436
  %v2106 = vunpack.c.l.b16 %v437
  %v2107 = vunpack.c.h.b16 %v437
  %v2108 = vunpack.c.l.b16 %v438
  %v2109 = vunpack.c.h.b16 %v438
  %v2110 = vunpack.c.l.b16 %v439
  %v2111 = vunpack.c.h.b16 %v439
  %v2112 = vunpack.c.l.b16 %v440
  %v2113 = vunpack.c.h.b16 %v440
  %v2114 = vunpack.c.l.b16 %v441
  %v2115 = vunpack.c.h.b16 %v441
  %v2116 = vunpack.c.l.b16 %v442
  %v2117 = vunpack.c.h.b16 %v442
  %v2118 = vunpack.c.l.b16 %v443
  %v2119 = vunpack.c.h.b16 %v443
  %v2120 = vunpack.c.l.b16 %v444
  %v2121 = vunpack.c.h.b16 %v444
  %v2122 = vunpack.c.l.b16 %v445
  %v2123 = vunpack.c.h.b16 %v445
  %v2124 = vunpack.c.l.b16 %v446
  %v2125 = vunpack.c.h.b16 %v446
  %v2126 = vunpack.c.l.b16 %v447
  %v2127 = vunpack.c.h.b16 %v447
  %v2128 = vunpack.c.l.b16 %v448
  %v2129 = vunpack.c.h.b16 %v448
  %v2130 = vunpack.c.l.b16 %v449
  %v2131 = vunpack.c.h.b16 %v449
  %v2132 = vunpack.c.l.b16 %v450
  %v2133 = vunpack.c.h.b16 %v450
  %v2134 = vunpack.c.l.b16 %v451
  %v2135 = vunpack.c.h.b16 %v451
  %v2136 = vunpack.c.l.b16 %v452
  %v2137 = vunpack.c.h.b16 %v452
  %v2138 = vunpack.c.l.b16 %v453
  %v2139 = vunpack.c.h.b16 %v453
  %v2140 = vunpack.c.l.b16 %v454
  %v2141 = vunpack.c.h.b16 %v454
  %v2142 = vunpack.c.l.b16 %v455
  %v2143 = vunpack.c.h.b16 %v455
  %v2144 = vunpack.c.l.b16 %v456
  %v2145 = vunpack.c.h.b16 %v456
  %v2146 = vunpack.c.l.b16 %v457
  %v2147 = vunpack.c.h.b16 %v457
  %v2148 = vunpack.c.l.b16 %v458
  %v2149 = vunpack.c.h.b16 %v458
  %v2150 = vunpack.c.l.b16 %v459
  %v2151 = vunpack.c.h.b16 %v459
  %v2152 = vunpack.c.l.b16 %v460
  %v2153 = vunpack.c.h.b16 %v460
  %v2154 = vunpack.c.l.b16 %v461
  %v2155 = vunpack.c.h.b16 %v461
  %v2156 = vunpack.c.l.b16 %v462
  %v2157 = vunpack.c.h.b16 %v462
  %v2158 = vunpack.c.l.b16 %v463
  %v2159 = vunpack.c.h.b16 %v463
  %v2160 = vunpack.c.l.b16 %v464
  %v2161 = vunpack.c.h.b16 %v464
  %v2162 = vunpack.c.l.b16 %v465
  %v2163 = vunpack.c.h.b16 %v465
  %v2164 = vunpack.c.l.b16 %v466
  %v2165 = vunpack.c.h.b16 %v466
  %v2166 = vunpack.c.l.b16 %v467
  %v2167 = vunpack.c.h.b16 %v467
  %v2168 = vunpack.c.l.b16 %v468
  %v2169 = vunpack.c.h.b16 %v468
  %v2170 = vunpack.c.l.b16 %v469
  %v2171 = vunpack.c.h.b16 %v469
  %v2172 = vunpack.c.l.b16 %v470
  %v2173 = vunpack.c.h.b16 %v470
  %v2174 = vunpack.c.l.b16 %v471
  %v2175 = vunpack.c.h.b16 %v471
  %v2176 = vunpack.c.l.b16 %v472
  %v2177 = vunpack.c.h.b16 %v472
  %v2178 = vunpack.c.l.b16 %v473
  %v2179 = vunpack.c.h.b16 %v473
  %v2180 = vunpack.c.l.b16 %v474
  %v2181 = vunpack.c.h.b16 %v474
  %v2182 = vunpack.c.l.b16 %v475
  %v2183 = vunpack.c.h.b16 %v475
  %v2184 = vunpack.c.l.b16 %v476
  %v2185 = vunpack.c.h.b16 %v476
  %v2186 = vunpack.c.l.b16 %v477
  %v2187 = vunpack.c.h.b16 %v477
  %v2188 = vunpack.c.l.b16 %v478
  %v2189 = vunpack.c.h.b16 %v478
  %v2190 = vunpack.c.l.b16 %v479
  %v2191 = vunpack.c.h.b16 %v479
  %v2192 = vunpack.c.l.b16 %v480
  %v2193 = vunpack.c.h.b16 %v480
  %v2194 = vunpack.c.l.b16 %v481
  %v2195 = vunpack.c.h.b16 %v481
  %v2196 = vunpack.c.l.b16 %v482
  %v2197 = vunpack.c.h.b16 %v482
  %v2198 = vunpack.c.l.b16 %v483
  %v2199 = vunpack.c.h.b16 %v483
  %v2200 = vunpack.c.l.b16 %v484
  %v2201 = vunpack.c.h.b16 %v484
  %v2202 = vunpack.c.l.b16 %v485
  %v2203 = vunpack.c.h.b16 %v485
  %v2204 = vunpack.c.l.b16 %v486
  %v2205 = vunpack.c.h.b16 %v486
  %v2206 = vunpack.c.l.b16 %v487
  %v2207 = vunpack.c.h.b16 %v487
  %v2208 = vunpack.c.l.b16 %v488
  %v2209 = vunpack.c.h.b16 %v488
  %v2210 = vunpack.c.l.b16 %v489
  %v2211 = vunpack.c.h.b16 %v489
  %v2212 = vunpack.c.l.b16 %v490
  %v2213 = vunpack.c.h.b16 %v490
  %v2214 = vunpack.c.l.b16 %v491
  %v2215 = vunpack.c.h.b16 %v491
  %v2216 = vunpack.c.l.b16 %v492
  %v2217 = vunpack.c.h.b16 %v492
  %v2218 = vunpack.c.l.b16 %v493
  %v2219 = vunpack.c.h.b16 %v493
  %v2220 = vunpack.c.l.b16 %v494
  %v2221 = vunpack.c.h.b16 %v494
  %v2222 = vunpack.c.l.b16 %v495
  %v2223 = vunpack.c.h.b16 %v495
  %v2224 = vunpack.c.l.b16 %v496
  %v2225 = vunpack.c.h.b16 %v496
  %v2226 = vunpack.c.l.b16 %v497
  %v2227 = vunpack.c.h.b16 %v497
  %v2228 = vunpack.c.l.b16 %v498
  %v2229 = vunpack.c.h.b16 %v498
  %v2230 = vunpack.c.l.b16 %v499
  %v2231 = vunpack.c.h.b16 %v499
  %v2232 = vunpack.c.l.b16 %v500
  %v2233 = vunpack.c.h.b16 %v500
  %v2234 = vunpack.c.l.b16 %v501
  %v2235 = vunpack.c.h.b16 %v501
  %v2236 = vunpack.c.l.b16 %v502
  %v2237 = vunpack.c.h.b16 %v502
  %v2238 = vunpack.c.l.b16 %v503
  %v2239 = vunpack.c.h.b16 %v503
  %v2240 = vunpack.c.l.b16 %v504
  %v2241 = vunpack.c.h.b16 %v504
  %v2242 = vunpack.c.l.b16 %v505
  %v2243 = vunpack.c.h.b16 %v505
  %v2244 = vunpack.c.l.b16 %v506
  %v2245 = vunpack.c.h.b16 %v506
  %v2246 = vunpack.c.l.b16 %v507
  %v2247 = vunpack.c.h.b16 %v507
  %v2248 = vunpack.c.l.b16 %v508
  %v2249 = vunpack.c.h.b16 %v508
  %v2250 = vunpack.c.l.b16 %v509
  %v2251 = vunpack.c.h.b16 %v509
  %v2252 = vunpack.c.l.b16 %v510
  %v2253 = vunpack.c.h.b16 %v510
  %v2254 = vunpack.c.l.b16 %v511
  %v2255 = vunpack.c.h.b16 %v511
  %v2256 = vunpack.c.l.b16 %v512
  %v2257 = vunpack.c.h.b16 %v512
  %v2258 = vunpack.c.l.b16 %v513
  %v2259 = vunpack.c.h.b16 %v513
  %v2260 = vunpack.c.l.b16 %v514
  %v2261 = vunpack.c.h.b16 %v514
  %v2262 = vunpack.c.l.b16 %v515
  %v2263 = vunpack.c.h.b16 %v515
  %v2264 = vunpack.c.l.b16 %v516
  %v2265 = vunpack.c.h.b16 %v516
  %v2266 = vunpack.c.l.b16 %v517
  %v2267 = vunpack.c.h.b16 %v517
  %v2268 = vunpack.c.l.b16 %v518
  %v2269 = vunpack.c.h.b16 %v518
  %v2270 = vunpack.c.l.b16 %v519
  %v2271 = vunpack.c.h.b16 %v519
  %v2272 = vunpack.c.l.b16 %v520
  %v2273 = vunpack.c.h.b16 %v520
  %v2274 = vunpack.c.l.b16 %v521
  %v2275 = vunpack.c.h.b16 %v521
  %v2276 = vunpack.c.l.b16 %v522
  %v2277 = vunpack.c.h.b16 %v522
  %v2278 = vunpack.c.l.b16 %v523
  %v2279 = vunpack.c.h.b16 %v523
  %v2280 = vunpack.c.l.b16 %v524
  %v2281 = vunpack.c.h.b16 %v524
  %v2282 = vunpack.c.l.b16 %v525
  %v2283 = vunpack.c.h.b16 %v525
  %v2284 = vunpack.c.l.b16 %v526
  %v2285 = vunpack.c.h.b16 %v526
  %v2286 = vunpack.c.l.b16 %v527
  %v2287 = vunpack.c.h.b16 %v527
  %v2288 = vunpack.c.l.b16 %v528
  %v2289 = vunpack.c.h.b16 %v528
  %v2290 = vunpack.c.l.b16 %v529
  %v2291 = vunpack.c.h.b16 %v529
  %v2292 = vunpack.c.l.b16 %v530
  %v2293 = vunpack.c.h.b16 %v530
  %v2294 = vunpack.c.l.b16 %v531
  %v2295 = vunpack.c.h.b16 %v531
  %v2296 = vunpack.c.l.b16 %v532
  %v2297 = vunpack.c.h.b16 %v532
  %v2298 = vunpack.c.l.b16 %v533
  %v2299 = vunpack.c.h.b16 %v533
  %v2300 = vunpack.c.l.b16 %v534
  %v2301 = vunpack.c.h.b16 %v534
  %v2302 = vunpack.c.l.b16 %v535
  %v2303 = vunpack.c.h.b16 %v535
  %v2304 = vunpack.c.l.b16 %v536
  %v2305 = vunpack.c.h.b16 %v536
  %v2306 = vunpack.c.l.b16 %v537
  %v2307 = vunpack.c.h.b16 %v537
  %v2308 = vunpack.c.l.b16 %v538
  %v2309 = vunpack.c.h.b16 %v538
  %v2310 = vunpack.c.l.b16 %v539
  %v2311 = vunpack.c.h.b16 %v539
  %v2312 = vunpack.c.l.b16 %v540
  %v2313 = vunpack.c.h.b16 %v540
  %v2314 = vunpack.c.l.b16 %v541
  %v2315 = vunpack.c.h.b16 %v541
  %v2316 = vunpack.c.l.b16 %v542
  %v2317 = vunpack.c.h.b16 %v542
  %v2318 = vunpack.c.l.b16 %v543
  %v2319 = vunpack.c.h.b16 %v543
  %v2320 = vunpack.c.l.b16 %v544
  %v2321 = vunpack.c.h.b16 %v544
  %v2322 = vunpack.c.l.b16 %v545
  %v2323 = vunpack.c.h.b16 %v545
  %v2324 = vunpack.c.l.b16 %v546
  %v2325 = vunpack.c.h.b16 %v546
  %v2326 = vunpack.c.l.b16 %v547
  %v2327 = vunpack.c.h.b16 %v547
  %v2328 = vunpack.c.l.b16 %v548
  %v2329 = vunpack.c.h.b16 %v548
  %v2330 = vunpack.c.l.b16 %v549
  %v2331 = vunpack.c.h.b16 %v549
  %v2332 = vunpack.c.l.b16 %v550
  %v2333 = vunpack.c.h.b16 %v550
  %v2334 = vunpack.c.l.b16 %v551
  %v2335 = vunpack.c.h.b16 %v551
  %v2336 = vunpack.c.l.b16 %v552
  %v2337 = vunpack.c.h.b16 %v552
  %v2338 = vunpack.c.l.b16 %v553
  %v2339 = vunpack.c.h.b16 %v553
  %v2340 = vunpack.c.l.b16 %v554
  %v2341 = vunpack.c.h.b16 %v554
  %v2342 = vunpack.c.l.b16 %v555
  %v2343 = vunpack.c.h.b16 %v555
  %v2344 = vunpack.c.l.b16 %v556
  %v2345 = vunpack.c.h.b16 %v556
  %v2346 = vunpack.c.l.b16 %v557
  %v2347 = vunpack.c.h.b16 %v557
  %v2348 = vunpack.c.l.b16 %v558
  %v2349 = vunpack.c.h.b16 %v558
  %v2350 = vunpack.c.l.b16 %v559
  %v2351 = vunpack.c.h.b16 %v559
  %v2352 = vunpack.c.l.b16 %v560
  %v2353 = vunpack.c.h.b16 %v560
  %v2354 = vunpack.c.l.b16 %v561
  %v2355 = vunpack.c.h.b16 %v561
  %v2356 = vunpack.c.l.b16 %v562
  %v2357 = vunpack.c.h.b16 %v562
  %v2358 = vunpack.c.l.b16 %v563
  %v2359 = vunpack.c.h.b16 %v563
  %v2360 = vunpack.c.l.b16 %v564
  %v2361 = vunpack.c.h.b16 %v564
  %v2362 = vunpack.c.l.b16 %v565
  %v2363 = vunpack.c.h.b16 %v565
  %v2364 = vunpack.c.l.b16 %v566
  %v2365 = vunpack.c.h.b16 %v566
  %v2366 = vunpack.c.l.b16 %v567
  %v2367 = vunpack.c.h.b16 %v567
  %v2368 = vunpack.c.l.b16 %v568
  %v2369 = vunpack.c.h.b16 %v568
  %v2370 = vunpack.c.l.b16 %v569
  %v2371 = vunpack.c.h.b16 %v569
  %v2372 = vunpack.c.l.b16 %v570
  %v2373 = vunpack.c.h.b16 %v570
  %v2374 = vunpack.c.l.b16 %v571
  %v2375 = vunpack.c.h.b16 %v571
  %v2376 = vunpack.c.l.b16 %v572
  %v2377 = vunpack.c.h.b16 %v572
  %v2378 = vunpack.c.l.b16 %v573
  %v2379 = vunpack.c.h.b16 %v573
  %v2380 = vunpack.c.l.b16 %v574
  %v2381 = vunpack.c.h.b16 %v574
  %v2382 = vunpack.c.l.b16 %v575
  %v2383 = vunpack.c.h.b16 %v575
  %v2384 = vunpack.c.l.b16 %v576
  %v2385 = vunpack.c.h.b16 %v576
  %v2386 = vunpack.c.l.b16 %v577
  %v2387 = vunpack.c.h.b16 %v577
  %v2388 = vunpack.c.l.b16 %v578
  %v2389 = vunpack.c.h.b16 %v578
  %v2390 = vunpack.c.l.b16 %v579
  %v2391 = vunpack.c.h.b16 %v579
  %v2392 = vunpack.c.l.b16 %v580
  %v2393 = vunpack.c.h.b16 %v580
  %v2394 = vunpack.c.l.b16 %v581
  %v2395 = vunpack.c.h.b16 %v581
  %v2396 = vunpack.c.l.b16 %v582
  %v2397 = vunpack.c.h.b16 %v582
  %v2398 = vunpack.c.l.b16 %v583
  %v2399 = vunpack.c.h.b16 %v583
  %v2400 = vunpack.c.l.b16 %v584
  %v2401 = vunpack.c.h.b16 %v584
  %v2402 = vunpack.c.l.b16 %v585
  %v2403 = vunpack.c.h.b16 %v585
  %v2404 = vunpack.c.l.b16 %v586
  %v2405 = vunpack.c.h.b16 %v586
  %v2406 = vunpack.c.l.b16 %v587
  %v2407 = vunpack.c.h.b16 %v587
  %v2408 = vunpack.c.l.b16 %v588
  %v2409 = vunpack.c.h.b16 %v588
  %v2410 = vunpack.c.l.b16 %v589
  %v2411 = vunpack.c.h.b16 %v589
  %v2412 = vunpack.c.l.b16 %v590
  %v2413 = vunpack.c.h.b16 %v590
  %v2414 = vunpack.c.l.b16 %v591
  %v2415 = vunpack.c.h.b16 %v591
  %v2416 = vunpack.c.l.b16 %v592
  %v2417 = vunpack.c.h.b16 %v592
  %v2418 = vunpack.c.l.b16 %v593
  %v2419 = vunpack.c.h.b16 %v593
  %v2420 = vunpack.c.l.b16 %v594
  %v2421 = vunpack.c.h.b16 %v594
  %v2422 = vunpack.c.l.b16 %v595
  %v2423 = vunpack.c.h.b16 %v595
  %v2424 = vunpack.c.l.b16 %v596
  %v2425 = vunpack.c.h.b16 %v596
  %v2426 = vunpack.c.l.b16 %v597
  %v2427 = vunpack.c.h.b16 %v597
  %v2428 = vunpack.c.l.b16 %v598
  %v2429 = vunpack.c.h.b16 %v598
  %v2430 = vunpack.c.l.b16 %v599
  %v2431 = vunpack.c.h.b16 %v599
  %v2432 = vunpack.c.l.b16 %v600
  %v2433 = vunpack.c.h.b16 %v600
  %v2434 = vunpack.c.l.b16 %v601
  %v2435 = vunpack.c.h.b16 %v601
  %v2436 = vunpack.c.l.b16 %v602
  %v2437 = vunpack.c.h.b16 %v602
  %v2438 = vunpack.c.l.b16 %v603
  %v2439 = vunpack.c.h.b16 %v603
  %v2440 = vunpack.c.l.b16 %v604
  %v2441 = vunpack.c.h.b16 %v604
  %v2442 = vunpack.c.l.b16 %v605
  %v2443 = vunpack.c.h.b16 %v605
  %v2444 = vunpack.c.l.b16 %v606
  %v2445 = vunpack.c.h.b16 %v606
  %v2446 = vunpack.c.l.b16 %v607
  %v2447 = vunpack.c.h.b16 %v607
  %v2448 = vpack.c.b16 %v1300, %v1296
  %v2449 = vpack.c.b16 %v1301, %v1297
  %v2450 = vpack.c.b16 %v1302, %v1298
  %v2451 = vpack.c.b16 %v1303, %v1299
  %v2452 = vpack.c.b16 %v1308, %v1304
  %v2453 = vpack.c.b16 %v1309, %v1305
  %v2454 = vpack.c.b16 %v1310, %v1306
  %v2455 = vpack.c.b16 %v1311, %v1307
  %v2456 = vpack.c.b16 %v1316, %v1312
  %v2457 = vpack.c.b16 %v1317, %v1313
  %v2458 = vpack.c.b16 %v1318, %v1314
  %v2459 = vpack.c.b16 %v1319, %v1315
  %v2460 = vpack.c.b16 %v1324, %v1320
  %v2461 = vpack.c.b16 %v1325, %v1321
  %v2462 = vpack.c.b16 %v1326, %v1322
  %v2463 = vpack.c.b16 %v1327, %v1323
  %v2464 = vpack.c.b16 %v1332, %v1328
  %v2465 = vpack.c.b16 %v1333, %v1329
  %v2466 = vpack.c.b16 %v1334, %v1330
  %v2467 = vpack.c.b16 %v1335, %v1331
  %v2468 = vpack.c.b16 %v1340, %v1336
  %v2469 = vpack.c.b16 %v1341, %v1337
  %v2470 = vpack.c.b16 %v1342, %v1338
  %v2471 = vpack.c.b16 %v1343, %v1339
  %v2472 = vpack.c.b16 %v1348, %v1344
  %v2473 = vpack.c.b16 %v1349, %v1345
  %v2474 = vpack.c.b16 %v1350, %v1346
  %v2475 = vpack.c.b16 %v1351, %v1347
  %v2476 = vpack.c.b16 %v1356, %v1352
  %v2477 = vpack.c.b16 %v1357, %v1353
  %v2478 = vpack.c.b16 %v1358, %v1354
  %v2479 = vpack.c.b16 %v1359, %v1355
  %v2480 = vpack.c.b16 %v1364, %v1360
  %v2481 = vpack.c.b16 %v1365, %v1361
  %v2482 = vpack.c.b16 %v1366, %v1362
  %v2483 = vpack.c.b16 %v1367, %v1363
  %v2484 = vpack.c.b16 %v1372, %v1368
  %v2485 = vpack.c.b16 %v1373, %v1369
  %v2486 = vpack.c.b16 %v1374, %v1370
  %v2487 = vpack.c.b16 %v1375, %v1371
  %v2488 = vpack.c.b16 %v1380, %v1376
  %v2489 = vpack.c.b16 %v1381, %v1377
  %v2490 = vpack.c.b16 %v1382, %v1378
  %v2491 = vpack.c.b16 %v1383, %v1379
  %v2492 = vpack.c.b16 %v1388, %v1384
  %v2493 = vpack.c.b16 %v1389, %v1385
  %v2494 = vpack.c.b16 %v1390, %v1386
  %v2495 = vpack.c.b16 %v1391, %v1387
  %v2496 = vpack.c.b16 %v1396, %v1392
  %v2497 = vpack.c.b16 %v1397, %v1393
  %v2498 = vpack.c.b16 %v1398, %v1394
  %v2499 = vpack.c.b16 %v1399, %v1395
  %v2500 = vpack.c.b16 %v1404, %v1400
  %v2501 = vpack.c.b16 %v1405, %v1401
  %v2502 = vpack.c.b16 %v1406, %v1402
  %v2503 = vpack.c.b16 %v1407, %v1403
  %v2504 = vpack.c.b16 %v1412, %v1408
  %v2505 = vpack.c.b16 %v1413, %v1409
  %v2506 = vpack.c.b16 %v1414, %v1410
  %v2507 = vpack.c.b16 %v1415, %v1411
  %v2508 = vpack.c.b16 %v1420, %v1416
  %v2509 = vpack.c.b16 %v1421, %v1417
  %v2510 = vpack.c.b16 %v1422, %v1418
  %v2511 = vpack.c.b16 %v1423, %v1419
  %v2512 = vpack.c.b16 %v1428, %v1424
  %v2513 = vpack.c.b16 %v1429, %v1425
  %v2514 = vpack.c.b16 %v1430, %v1426
  %v2515 = vpack.c.b16 %v1431, %v1427
  %v2516 = vpack.c.b16 %v1436, %v1432
  %v2517 = vpack.c.b16 %v1437, %v1433
  %v2518 = vpack.c.b16 %v1438, %v1434
  %v2519 = vpack.c.b16 %v1439, %v1435
  %v2520 = vpack.c.b16 %v1444, %v1440
  %v2521 = vpack.c.b16 %v1445, %v1441
  %v2522 = vpack.c.b16 %v1446, %v1442
  %v2523 = vpack.c.b16 %v1447, %v1443
  %v2524 = vpack.c.b16 %v1452, %v1448
  %v2525 = vpack.c.b16 %v1453, %v1449
  %v2526 = vpack.c.b16 %v1454, %v1450
  %v2527 = vpack.c.b16 %v1455, %v1451
  %v2528 = vpack.c.b16 %v1460, %v1456
  %v2529 = vpack.c.b16 %v1461, %v1457
  %v2530 = vpack.c.b16 %v1462, %v1458
  %v2531 = vpack.c.b16 %v1463, %v1459
  %v2532 = vpack.c.b16 %v1468, %v1464
  %v2533 = vpack.c.b16 %v1469, %v1465
  %v2534 = vpack.c.b16 %v1470, %v1466
  %v2535 = vpack.c.b16 %v1471, %v1467
  %v2536 = vpack.c.b16 %v1476, %v1472
  %v2537 = vpack.c.b16 %v1477, %v1473
  %v2538 = vpack.c.b16 %v1478, %v1474
  %v2539 = vpack.c.b16 %v1479, %v1475
  %v2540 = vpack.c.b16 %v1484, %v1480
  %v2541 = vpack.c.b16 %v1485, %v1481
  %v2542 = vpack.c.b16 %v1486, %v1482
  %v2543 = vpack.c.b16 %v1487, %v1483
  %v2544 = vpack.c.b16 %v1492, %v1488
  %v2545 = vpack.c.b16 %v1493, %v1489
  %v2546 = vpack.c.b16 %v1494, %v1490
  %v2547 = vpack.c.b16 %v1495, %v1491
  %v2548 = vpack.c.b16 %v1500, %v1496
  %v2549 = vpack.c.b16 %v1501, %v1497
  %v2550 = vpack.c.b16 %v1502, %v1498
  %v2551 = vpack.c.b16 %v1503, %v1499
  %v2552 = vpack.c.b16 %v1508, %v1504
  %v2553 = vpack.c.b16 %v1509, %v1505
  %v2554 = vpack.c.b16 %v1510, %v1506
  %v2555 = vpack.c.b16 %v1511, %v1507
  %v2556 = vpack.c.b16 %v1516, %v1512
  %v2557 = vpack.c.b16 %v1517, %v1513
  %v2558 = vpack.c.b16 %v1518, %v1514
  %v2559 = vpack.c.b16 %v1519, %v1515
  %v2560 = vpack.c.b16 %v1524, %v1520
  %v2561 = vpack.c.b16 %v1525, %v1521
  %v2562 = vpack.c.b16 %v1526, %v1522
  %v2563 = vpack.c.b16 %v1527, %v1523
  %v2564 = vpack.c.b16 %v1532, %v1528
  %v2565 = vpack.c.b16 %v1533, %v1529
  %v2566 = vpack.c.b16 %v1534, %v1530
  %v2567 = vpack.c.b16 %v1535, %v1531
  %v2568 = vpack.c.b16 %v1540, %v1536
  %v2569 = vpack.c.b16 %v1541, %v1537
  %v2570 = vpack.c.b16 %v1542, %v1538
  %v2571 = vpack.c.b16 %v1543, %v1539
  %v2572 = vpack.c.b16 %v1548, %v1544
  %v2573 = vpack.c.b16 %v1549, %v1545
  %v2574 = vpack.c.b16 %v1550, %v1546
  %v2575 = vpack.c.b16 %v1551, %v1547
  %v2576 = vpack.c.b16 %v1556, %v1552
  %v2577 = vpack.c.b16 %v1557, %v1553
  %v2578 = vpack.c.b16 %v1558, %v1554
  %v2579 = vpack.c.b16 %v1559, %v1555
  %v2580 = vpack.c.b16 %v1564, %v1560
  %v2581 = vpack.c.b16 %v1565, %v1561
  %v2582 = vpack.c.b16 %v1566, %v1562
  %v2583 = vpack.c.b16 %v1567, %v1563
  %v2584 = vpack.c.b16 %v1572, %v1568
  %v2585 = vpack.c.b16 %v1573, %v1569
  %v2586 = vpack.c.b16 %v1574, %v1570
  %v2587 = vpack.c.b16 %v1575, %v1571
  %v2588 = vpack.c.b16 %v1580, %v1576
  %v2589 = vpack.c.b16 %v1581, %v1577
  %v2590 = vpack.c.b16 %v1582, %v1578
  %v2591 = vpack.c.b16 %v1583, %v1579
  %v2592 = vpack.c.b16 %v1588, %v1584
  %v2593 = vpack.c.b16 %v1589, %v1585
  %v2594 = vpack.c.b16 %v1590, %v1586
  %v2595 = vpack.c.b16 %v1591, %v1587
  %v2596 = vpack.c.b16 %v1596, %v1592
  %v2597 = vpack.c.b16 %v1597, %v1593
  %v2598 = vpack.c.b16 %v1598, %v1594
  %v2599 = vpack.c.b16 %v1599, %v1595
  %v2600 = vpack.c.b16 %v1604, %v1600
  %v2601 = vpack.c.b16 %v1605, %v1601
  %v2602 = vpack.c.b16 %v1606, %v1602
  %v2603 = vpack.c.b16 %v1607, %v1603
  %v2604 = vpack.c.b16 %v1612, %v1608
  %v2605 = vpack.c.b16 %v1613, %v1609
  %v2606 = vpack.c.b16 %v1614, %v1610
  %v2607 = vpack.c.b16 %v1615, %v1611
  %v2608 = vpack.c.b16 %v1620, %v1616
  %v2609 = vpack.c.b16 %v1621, %v1617
  %v2610 = vpack.c.b16 %v1622, %v1618
  %v2611 = vpack.c.b16 %v1623, %v1619
  %v2612 = vpack.c.b16 %v1628, %v1624
  %v2613 = vpack.c.b16 %v1629, %v1625
  %v2614 = vpack.c.b16 %v1630, %v1626
  %v2615 = vpack.c.b16 %v1631, %v1627
  %v2616 = vpack.c.b16 %v1636, %v1632
  %v2617 = vpack.c.b16 %v1637, %v1633
  %v2618 = vpack.c.b16 %v1638, %v1634
  %v2619 = vpack.c.b16 %v1639, %v1635
  %v2620 = vpack.c.b16 %v1644, %v1640
  %v2621 = vpack.c.b16 %v1645, %v1641
  %v2622 = vpack.c.b16 %v1646, %v1642
  %v2623 = vpack.c.b16 %v1647, %v1643
  %v2624 = vpack.c.b16 %v1652, %v1648
  %v2625 = vpack.c.b16 %v1653, %v1649
  %v2626 = vpack.c.b16 %v1654, %v1650
  %v2627 = vpack.c.b16 %v1655, %v1651
  %v2628 = vpack.c.b16 %v1660, %v1656
  %v2629 = vpack.c.b16 %v1661, %v1657
  %v2630 = vpack.c.b16 %v1662, %v1658
  %v2631 = vpack.c.b16 %v1663, %v1659
  %v2632 = vpack.c.b16 %v1668, %v1664
  %v2633 = vpack.c.b16 %v1669, %v1665
  %v2634 = vpack.c.b16 %v1670, %v1666
  %v2635 = vpack.c.b16 %v1671, %v1667
  %v2636 = vpack.c.b16 %v1676, %v1672
  %v2637 = vpack.c.b16 %v1677, %v1673
  %v2638 = vpack.c.b16 %v1678, %v1674
  %v2639 = vpack.c.b16 %v1679, %v1675
  %v2640 = vpack.c.b16 %v1684, %v1680
  %v2641 = vpack.c.b16 %v1685, %v1681
  %v2642 = vpack.c.b16 %v1686, %v1682
  %v2643 = vpack.c.b16 %v1687, %v1683
  %v2644 = vpack.c.b16 %v1692, %v1688
  %v2645 = vpack.c.b16 %v1693, %v1689
  %v2646 = vpack.c.b16 %v1694, %v1690
  %v2647 = vpack.c.b16 %v1695, %v1691
  %v2648 = vpack.c.b16 %v1700, %v1696
  %v2649 = vpack.c.b16 %v1701, %v1697
  %v2650 = vpack.c.b16 %v1702, %v1698
  %v2651 = vpack.c.b16 %v1703, %v1699
  %v2652 = vpack.c.b16 %v1708, %v1704
  %v2653 = vpack.c.b16 %v1709, %v1705
  %v2654 = vpack.c.b16 %v1710, %v1706
  %v2655 = vpack.c.b16 %v1711, %v1707
  %v2656 = vpack.c.b16 %v1716, %v1712
  %v2657 = vpack.c.b16 %v1717, %v1713
  %v2658 = vpack.c.b16 %v1718, %v1714
  %v2659 = vpack.c.b16 %v1719, %v1715
  %v2660 = vpack.c.b16 %v1724, %v1720
  %v2661 = vpack.c.b16 %v1725, %v1721
  %v2662 = vpack.c.b16 %v1726, %v1722
  %v2663 = vpack.c.b16 %v1727, %v1723
  %v2664 = vpack.c.b16 %v1732, %v1728
  %v2665 = vpack.c.b16 %v1733, %v1729
  %v2666 = vpack.c.b16 %v1734, %v1730
  %v2667 = vpack.c.b16 %v1735, %v1731
  %v2668 = vpack.c.b16 %v1740, %v1736
  %v2669 = vpack.c.b16 %v1741, %v1737
  %v2670 = vpack.c.b16 %v1742, %v1738
  %v2671 = vpack.c.b16 %v1743, %v1739
  %v2672 = vpack.c.b16 %v1748, %v1744
  %v2673 = vpack.c.b16 %v1749, %v1745
  %v2674 = vpack.c.b16 %v1750, %v1746
  %v2675 = vpack.c.b16 %v1751, %v1747
  %v2676 = vpack.c.b16 %v1756, %v1752
  %v2677 = vpack.c.b16 %v1757, %v1753
  %v2678 = vpack.c.b16 %v1758, %v1754
  %v2679 = vpack.c.b16 %v1759, %v1755
  %v2680 = vpack.c.b16 %v1764, %v1760
  %v2681 = vpack.c.b16 %v1765, %v1761
  %v2682 = vpack.c.b16 %v1766, %v1762
  %v2683 = vpack.c.b16 %v1767, %v1763
  %v2684 = vpack.c.b16 %v1772, %v1768
  %v2685 = vpack.c.b16 %v1773, %v1769
  %v2686 = vpack.c.b16 %v1774, %v1770
  %v2687 = vpack.c.b16 %v1775, %v1771
  %v2688 = vpack.c.b16 %v1780, %v1776
  %v2689 = vpack.c.b16 %v1781, %v1777
  %v2690 = vpack.c.b16 %v1782, %v1778
  %v2691 = vpack.c.b16 %v1783, %v1779
  %v2692 = vpack.c.b16 %v1788, %v1784
  %v2693 = vpack.c.b16 %v1789, %v1785
  %v2694 = vpack.c.b16 %v1790, %v1786
  %v2695 = vpack.c.b16 %v1791, %v1787
  %v2696 = vpack.c.b16 %v1796, %v1792
  %v2697 = vpack.c.b16 %v1797, %v1793
  %v2698 = vpack.c.b16 %v1798, %v1794
  %v2699 = vpack.c.b16 %v1799, %v1795
  %v2700 = vpack.c.b16 %v1804, %v1800
  %v2701 = vpack.c.b16 %v1805, %v1801
  %v2702 = vpack.c.b16 %v1806, %v1802
  %v2703 = vpack.c.b16 %v1807, %v1803
  %v2704 = vpack.c.b16 %v1812, %v1808
  %v2705 = vpack.c.b16 %v1813, %v1809
  %v2706 = vpack.c.b16 %v1814, %v1810
  %v2707 = vpack.c.b16 %v1815, %v1811
  %v2708 = vpack.c.b16 %v1820, %v1816
  %v2709 = vpack.c.b16 %v1821, %v1817
  %v2710 = vpack.c.b16 %v1822, %v1818
  %v2711 = vpack.c.b16 %v1823, %v1819
  %v2712 = vpack.c.b16 %v1828, %v1824
  %v2713 = vpack.c.b16 %v1829, %v1825
  %v2714 = vpack.c.b16 %v1830, %v1826
  %v2715 = vpack.c.b16 %v1831, %v1827
  %v2716 = vpack.c.b16 %v1836, %v1832
  %v2717 = vpack.c.b16 %v1837, %v1833
  %v2718 = vpack.c.b16 %v1838, %v1834
  %v2719 = vpack.c.b16 %v1839, %v1835
  %v2720 = vpack.c.b16 %v1844, %v1840
  %v2721 = vpack.c.b16 %v1845, %v1841
  %v2722 = vpack.c.b16 %v1846, %v1842
  %v2723 = vpack.c.b16 %v1847, %v1843
  %v2724 = vpack.c.b16 %v1852, %v1848
  %v2725 = vpack.c.b16 %v1853, %v1849
  %v2726 = vpack.c.b16 %v1854, %v1850
  %v2727 = vpack.c.b16 %v1855, %v1851
  %v2728 = vpack.c.b16 %v1860, %v1856
  %v2729 = vpack.c.b16 %v1861, %v1857
  %v2730 = vpack.c.b16 %v1862, %v1858
  %v2731 = vpack.c.b16 %v1863, %v1859
  %v2732 = vpack.c.b16 %v1868, %v1864
  %v2733 = vpack.c.b16 %v1869, %v1865
  %v2734 = vpack.c.b16 %v1870, %v1866
  %v2735 = vpack.c.b16 %v1871, %v1867
  %v2736 = vpack.c.b16 %v1876, %v1872
  %v2737 = vpack.c.b16 %v1877, %v1873
  %v2738 = vpack.c.b16 %v1878, %v1874
  %v2739 = vpack.c.b16 %v1879, %v1875
  %v2740 = vpack.c.b16 %v1884, %v1880
  %v2741 = vpack.c.b16 %v1885, %v1881
  %v2742 = vpack.c.b16 %v1886, %v1882
  %v2743 = vpack.c.b16 %v1887, %v1883
  %v2744 = vpack.c.b16 %v1892, %v1888
  %v2745 = vpack.c.b16 %v1893, %v1889
  %v2746 = vpack.c.b16 %v1894, %v1890
  %v2747 = vpack.c.b16 %v1895, %v1891
  %v2748 = vpack.c.b16 %v1900, %v1896
  %v2749 = vpack.c.b16 %v1901, %v1897
  %v2750 = vpack.c.b16 %v1902, %v1898
  %v2751 = vpack.c.b16 %v1903, %v1899
  %v2752 = vpack.c.b16 %v1908, %v1904
  %v2753 = vpack.c.b16 %v1909, %v1905
  %v2754 = vpack.c.b16 %v1910, %v1906
  %v2755 = vpack.c.b16 %v1911, %v1907
  %v2756 = vpack.c.b16 %v1916, %v1912
  %v2757 = vpack.c.b16 %v1917, %v1913
  %v2758 = vpack.c.b16 %v1918, %v1914
  %v2759 = vpack.c.b16 %v1919, %v1915
  %v2760 = vpack.c.b16 %v1924, %v1920
  %v2761 = vpack.c.b16 %v1925, %v1921
  %v2762 = vpack.c.b16 %v1926, %v1922
  %v2763 = vpack.c.b16 %v1927, %v1923
  %v2764 = vpack.c.b16 %v1932, %v1928
  %v2765 = vpack.c.b16 %v1933, %v1929
  %v2766 = vpack.c.b16 %v1934, %v1930
  %v2767 = vpack.c.b16 %v1935, %v1931
  %v2768 = vpack.c.b16 %v1940, %v1936
  %v2769 = vpack.c.b16 %v1941, %v1937
  %v2770 = vpack.c.b16 %v1942, %v1938
  %v2771 = vpack.c.b16 %v1943, %v1939
  %v2772 = vpack.c.b16 %v1948, %v1944
  %v2773 = vpack.c.b16 %v1949, %v1945
  %v2774 = vpack.c.b16 %v1950, %v1946
  %v2775 = vpack.c.b16 %v1951, %v1947
  %v2776 = vpack.c.b16 %v1956, %v1952
  %v2777 = vpack.c.b16 %v1957, %v1953
  %v2778 = vpack.c.b16 %v1958, %v1954
  %v2779 = vpack.c.b16 %v1959, %v1955
  %v2780 = vpack.c.b16 %v1964, %v1960
  %v2781 = vpack.c.b16 %v1965, %v1961
  %v2782 = vpack.c.b16 %v1966, %v1962
  %v2783 = vpack.c.b16 %v1967, %v1963
  %v2784 = vpack.c.b16 %v1972, %v1968
  %v2785 = vpack.c.b16 %v1973, %v1969
  %v2786 = vpack.c.b16 %v1974, %v1970
  %v2787 = vpack.c.b16 %v1975, %v1971
  %v2788 = vpack.c.b16 %v1980, %v1976
  %v2789 = vpack.c.b16 %v1981, %v1977
  %v2790 = vpack.c.b16 %v1982, %v1978
  %v2791 = vpack.c.b16 %v1983, %v1979
  %v2792 = vpack.c.b16 %v1988, %v1984
  %v2793 = vpack.c.b16 %v1989, %v1985
  %v2794 = vpack.c.b16 %v1990, %v1986
  %v2795 = vpack.c.b16 %v1991, %v1987
  %v2796 = vpack.c.b16 %v1996, %v1992
  %v2797 = vpack.c.b16 %v1997, %v1993
  %v2798 = vpack.c.b16 %v1998, %v1994
  %v2799 = vpack.c.b16 %v1999, %v1995
  %v2800 = vpack.c.b16 %v2004, %v2000
  %v2801 = vpack.c.b16 %v2005, %v2001
  %v2802 = vpack.c.b16 %v2006, %v2002
  %v2803 = vpack.c.b16 %v2007, %v2003
  %v2804 = vpack.c.b16 %v2012, %v2008
  %v2805 = vpack.c.b16 %v2013, %v2009
  %v2806 = vpack.c.b16 %v2014, %v2010
  %v2807 = vpack.c.b16 %v2015, %v2011
  %v2808 = vpack.c.b16 %v2020, %v2016
  %v2809 = vpack.c.b16 %v2021, %v2017
  %v2810 = vpack.c.b16 %v2022, %v2018
  %v2811 = vpack.c.b16 %v2023, %v2019
  %v2812 = vpack.c.b16 %v2028, %v2024
  %v2813 = vpack.c.b16 %v2029, %v2025
  %v2814 = vpack.c.b16 %v2030, %v2026
  %v2815 = vpack.c.b16 %v2031, %v2027
  %v2816 = vpack.c.b16 %v2036, %v2032
  %v2817 = vpack.c.b16 %v2037, %v2033
  %v2818 = vpack.c.b16 %v2038, %v2034
  %v2819 = vpack.c.b16 %v2039, %v2035
  %v2820 = vpack.c.b16 %v2044, %v2040
  %v2821 = vpack.c.b16 %v2045, %v2041
  %v2822 = vpack.c.b16 %v2046, %v2042
  %v2823 = vpack.c.b16 %v2047, %v2043
  %v2824 = vpack.c.b16 %v2052, %v2048
  %v2825 = vpack.c.b16 %v2053, %v2049
  %v2826 = vpack.c.b16 %v2054, %v2050
  %v2827 = vpack.c.b16 %v2055, %v2051
  %v2828 = vpack.c.b16 %v2060, %v2056
  %v2829 = vpack.c.b16 %v2061, %v2057
  %v2830 = vpack.c.b16 %v2062, %v2058
  %v2831 = vpack.c.b16 %v2063, %v2059
  %v2832 = vpack.c.b16 %v2068, %v2064
  %v2833 = vpack.c.b16 %v2069, %v2065
  %v2834 = vpack.c.b16 %v2070, %v2066
  %v2835 = vpack.c.b16 %v2071, %v2067
  %v2836 = vpack.c.b16 %v2076, %v2072
  %v2837 = vpack.c.b16 %v2077, %v2073
  %v2838 = vpack.c.b16 %v2078, %v2074
  %v2839 = vpack.c.b16 %v2079, %v2075
  %v2840 = vpack.c.b16 %v2084, %v2080
  %v2841 = vpack.c.b16 %v2085, %v2081
  %v2842 = vpack.c.b16 %v2086, %v2082
  %v2843 = vpack.c.b16 %v2087, %v2083
  %v2844 = vpack.c.b16 %v2092, %v2088
  %v2845 = vpack.c.b16 %v2093, %v2089
  %v2846 = vpack.c.b16 %v2094, %v2090
  %v2847 = vpack.c.b16 %v2095, %v2091
  %v2848 = vpack.c.b16 %v2100, %v2096
  %v2849 = vpack.c.b16 %v2101, %v2097
  %v2850 = vpack.c.b16 %v2102, %v2098
  %v2851 = vpack.c.b16 %v2103, %v2099
  %v2852 = vpack.c.b16 %v2108, %v2104
  %v2853 = vpack.c.b16 %v2109, %v2105
  %v2854 = vpack.c.b16 %v2110, %v2106
  %v2855 = vpack.c.b16 %v2111, %v2107
  %v2856 = vpack.c.b16 %v2116, %v2112
  %v2857 = vpack.c.b16 %v2117, %v2113
  %v2858 = vpack.c.b16 %v2118, %v2114
  %v2859 = vpack.c.b16 %v2119, %v2115
  %v2860 = vpack.c.b16 %v2124, %v2120
  %v2861 = vpack.c.b16 %v2125, %v2121
  %v2862 = vpack.c.b16 %v2126, %v2122
  %v2863 = vpack.c.b16 %v2127, %v2123
  %v2864 = vpack.c.b16 %v2132, %v2128
  %v2865 = vpack.c.b16 %v2133, %v2129
  %v2866 = vpack.c.b16 %v2134, %v2130
  %v2867 = vpack.c.b16 %v2135, %v2131
  %v2868 = vpack.c.b16 %v2140, %v2136
  %v2869 = vpack.c.b16 %v2141, %v2137
  %v2870 = vpack.c.b16 %v2142, %v2138
  %v2871 = vpack.c.b16 %v2143, %v2139
  %v2872 = vpack.c.b16 %v2148, %v2144
  %v2873 = vpack.c.b16 %v2149, %v2145
  %v2874 = vpack.c.b16 %v2150, %v2146
  %v2875 = vpack.c.b16 %v2151, %v2147
  %v2876 = vpack.c.b16 %v2156, %v2152
  %v2877 = vpack.c.b16 %v2157, %v2153
  %v2878 = vpack.c.b16 %v2158, %v2154
  %v2879 = vpack.c.b16 %v2159, %v2155
  %v2880 = vpack.c.b16 %v2164, %v2160
  %v2881 = vpack.c.b16 %v2165, %v2161
  %v2882 = vpack.c.b16 %v2166, %v2162
  %v2883 = vpack.c.b16 %v2167, %v2163
  %v2884 = vpack.c.b16 %v2172, %v2168
  %v2885 = vpack.c.b16 %v2173, %v2169
  %v2886 = vpack.c.b16 %v2174, %v2170
  %v2887 = vpack.c.b16 %v2175, %v2171
  %v2888 = vpack.c.b16 %v2180, %v2176
  %v2889 = vpack.c.b16 %v2181, %v2177
  %v2890 = vpack.c.b16 %v2182, %v2178
  %v2891 = vpack.c.b16 %v2183, %v2179
  %v2892 = vpack.c.b16 %v2188, %v2184
  %v2893 = vpack.c.b16 %v2189, %v2185
  %v2894 = vpack.c.b16 %v2190, %v2186
  %v2895 = vpack.c.b16 %v2191, %v2187
  %v2896 = vpack.c.b16 %v2196, %v2192
  %v2897 = vpack.c.b16 %v2197, %v2193
  %v2898 = vpack.c.b16 %v2198, %v2194
  %v2899 = vpack.c.b16 %v2199, %v2195
  %v2900 = vpack.c.b16 %v2204, %v2200
  %v2901 = vpack.c.b16 %v2205, %v2201
  %v2902 = vpack.c.b16 %v2206, %v2202
  %v2903 = vpack.c.b16 %v2207, %v2203
  %v2904 = vpack.c.b16 %v2212, %v2208
  %v2905 = vpack.c.b16 %v2213, %v2209
  %v2906 = vpack.c.b16 %v2214, %v2210
  %v2907 = vpack.c.b16 %v2215, %v2211
  %v2908 = vpack.c.b16 %v2220, %v2216
  %v2909 = vpack.c.b16 %v2221, %v2217
  %v2910 = vpack.c.b16 %v2222, %v2218
  %v2911 = vpack.c.b16 %v2223, %v2219
  %v2912 = vpack.c.b16 %v2228, %v2224
  %v2913 = vpack.c.b16 %v2229, %v2225
  %v2914 = vpack.c.b16 %v2230, %v2226
  %v2915 = vpack.c.b16 %v2231, %v2227
  %v2916 = vpack.c.b16 %v2236, %v2232
  %v2917 = vpack.c.b16 %v2237, %v2233
  %v2918 = vpack.c.b16 %v2238, %v2234
  %v2919 = vpack.c.b16 %v2239, %v2235
  %v2920 = vpack.c.b16 %v2244, %v2240
  %v2921 = vpack.c.b16 %v2245, %v2241
  %v2922 = vpack.c.b16 %v2246, %v2242
  %v2923 = vpack.c.b16 %v2247, %v2243
  %v2924 = vpack.c.b16 %v2252, %v2248
  %v2925 = vpack.c.b16 %v2253, %v2249
  %v2926 = vpack.c.b16 %v2254, %v2250
  %v2927 = vpack.c.b16 %v2255, %v2251
  %v2928 = vpack.c.b16 %v2260, %v2256
  %v2929 = vpack.c.b16 %v2261, %v2257
  %v2930 = vpack.c.b16 %v2262, %v2258
  %v2931 = vpack.c.b16 %v2263, %v2259
  %v2932 = vpack.c.b16 %v2268, %v2264
  %v2933 = vpack.c.b16 %v2269, %v2265
  %v2934 = vpack.c.b16 %v2270, %v2266
  %v2935 = vpack.c.b16 %v2271, %v2267
  %v2936 = vpack.c.b16 %v2276, %v2272
  %v2937 = vpack.c.b16 %v2277, %v2273
  %v2938 = vpack.c.b16 %v2278, %v2274
  %v2939 = vpack.c.b16 %v2279, %v2275
  %v2940 = vpack.c.b16 %v2284, %v2280
  %v2941 = vpack.c.b16 %v2285, %v2281
  %v2942 = vpack.c.b16 %v2286, %v2282
  %v2943 = vpack.c.b16 %v2287, %v2283
  %v2944 = vpack.c.b16 %v2292, %v2288
  %v2945 = vpack.c.b16 %v2293, %v2289
  %v2946 = vpack.c.b16 %v2294, %v2290
  %v2947 = vpack.c.b16 %v2295, %v2291
  %v2948 = vpack.c.b16 %v2300, %v2296
  %v2949 = vpack.c.b16 %v2301, %v2297
  %v2950 = vpack.c.b16 %v2302, %v2298
  %v2951 = vpack.c.b16 %v2303, %v2299
  %v2952 = vpack.c.b16 %v2308, %v2304
  %v2953 = vpack.c.b16 %v2309, %v2305
  %v2954 = vpack.c.b16 %v2310, %v2306
  %v2955 = vpack.c.b16 %v2311, %v2307
  %v2956 = vpack.c.b16 %v2316, %v2312
  %v2957 = vpack.c.b16 %v2317, %v2313
  %v2958 = vpack.c.b16 %v2318, %v2314
  %v2959 = vpack.c.b16 %v2319, %v2315
  %v2960 = vpack.c.b16 %v2324, %v2320
  %v2961 = vpack.c.b16 %v2325, %v2321
  %v2962 = vpack.c.b16 %v2326, %v2322
  %v2963 = vpack.c.b16 %v2327, %v2323
  %v2964 = vpack.c.b16 %v2332, %v2328
  %v2965 = vpack.c.b16 %v2333, %v2329
  %v2966 = vpack.c.b16 %v2334, %v2330
  %v2967 = vpack.c.b16 %v2335, %v2331
  %v2968 = vpack.c.b16 %v2340, %v2336
  %v2969 = vpack.c.b16 %v2341, %v2337
  %v2970 = vpack.c.b16 %v2342, %v2338
  %v2971 = vpack.c.b16 %v2343, %v2339
  %v2972 = vpack.c.b16 %v2348, %v2344
  %v2973 = vpack.c.b16 %v2349, %v2345
  %v2974 = vpack.c.b16 %v2350, %v2346
  %v2975 = vpack.c.b16 %v2351, %v2347
  %v2976 = vpack.c.b16 %v2356, %v2352
  %v2977 = vpack.c.b16 %v2357, %v2353
  %v2978 = vpack.c.b16 %v2358, %v2354
  %v2979 = vpack.c.b16 %v2359, %v2355
  %v2980 = vpack.c.b16 %v2364, %v2360
  %v2981 = vpack.c.b16 %v2365, %v2361
  %v2982 = vpack.c.b16 %v2366, %v2362
  %v2983 = vpack.c.b16 %v2367, %v2363
  %v2984 = vpack.c.b16 %v2372, %v2368
  %v2985 = vpack.c.b16 %v2373, %v2369
  %v2986 = vpack.c.b16 %v2374, %v2370
  %v2987 = vpack.c.b16 %v2375, %v2371
  %v2988 = vpack.c.b16 %v2380, %v2376
  %v2989 = vpack.c.b16 %v2381, %v2377
  %v2990 = vpack.c.b16 %v2382, %v2378
  %v2991 = vpack.c.b16 %v2383, %v2379
  %v2992 = vpack.c.b16 %v2388, %v2384
  %v2993 = vpack.c.b16 %v2389, %v2385
  %v2994 = vpack.c.b16 %v2390, %v2386
  %v2995 = vpack.c.b16 %v2391, %v2387
  %v2996 = vpack.c.b16 %v2396, %v2392
  %v2997 = vpack.c.b16 %v2397, %v2393
  %v2998 = vpack.c.b16 %v2398, %v2394
  %v2999 = vpack.c.b16 %v2399, %v2395
  %v3000 = vpack.c.b16 %v2404, %v2400
  %v3001 = vpack.c.b16 %v2405, %v2401
  %v3002 = vpack.c.b16 %v2406, %v2402
  %v3003 = vpack.c.b16 %v2407, %v2403
  %v3004 = vpack.c.b16 %v2412, %v2408
  %v3005 = vpack.c.b16 %v2413, %v2409
  %v3006 = vpack.c.b16 %v2414, %v2410
  %v3007 = vpack.c.b16 %v2415, %v2411
  %v3008 = vpack.c.b16 %v2420, %v2416
  %v3009 = vpack.c.b16 %v2421, %v2417
  %v3010 = vpack.c.b16 %v2422, %v2418
  %v3011 = vpack.c.b16 %v2423, %v2419
  %v3012 = vpack.c.b16 %v2428, %v2424
  %v3013 = vpack.c.b16 %v2429, %v2425
  %v3014 = vpack.c.b16 %v2430, %v2426
  %v3015 = vpack.c.b16 %v2431, %v2427
  %v3016 = vpack.c.b16 %v2436, %v2432
  %v3017 = vpack.c.b16 %v2437, %v2433
  %v3018 = vpack.c.b16 %v2438, %v2434
  %v3019 = vpack.c.b16 %v2439, %v2435
  %v3020 = vpack.c.b16 %v2444, %v2440
  %v3021 = vpack.c.b16 %v2445, %v2441
  %v3022 = vpack.c.b16 %v2446, %v2442
  %v3023 = vpack.c.b16 %v2447, %v2443
  %3600 = vmatprep.subr.bf16.mxu0 %v2449
  %3601 = vmatpush1.bf16.msra.mxu0 %v2448
  %3602 = vmatprep.subr.bf16.mxu0 %v2453
  %3603 = vmatpush1.bf16.msra.mxu0 %v2452
  %3604 = vmatprep.subr.bf16.mxu0 %v2457
  %3605 = vmatpush1.bf16.msra.mxu0 %v2456
  %3606 = vmatprep.subr.bf16.mxu0 %v2461
  %3607 = vmatpush1.bf16.msra.mxu0 %v2460
  %3608 = vmatprep.subr.bf16.mxu0 %v2465
  %3609 = vmatpush1.bf16.msra.mxu0 %v2464
  %3610 = vmatprep.subr.bf16.mxu0 %v2469
  %3611 = vmatpush1.bf16.msra.mxu0 %v2468
  %3612 = vmatprep.subr.bf16.mxu0 %v2473
  %3613 = vmatpush1.bf16.msra.mxu0 %v2472
  %3614 = vmatprep.subr.bf16.mxu0 %v2477
  %3615 = vmatpush1.bf16.msra.mxu0 %v2476
  %3616 = vmatprep.subr.bf16.mxu0 %v2481
  %3617 = vmatpush1.bf16.msra.mxu0 %v2480
  %3618 = vmatprep.subr.bf16.mxu0 %v2485
  %3619 = vmatpush1.bf16.msra.mxu0 %v2484
  %3620 = vmatprep.subr.bf16.mxu0 %v2489
  %3621 = vmatpush1.bf16.msra.mxu0 %v2488
  %3622 = vmatprep.subr.bf16.mxu0 %v2493
  %3623 = vmatpush1.bf16.msra.mxu0 %v2492
  %3624 = vmatprep.subr.bf16.mxu0 %v2497
  %3625 = vmatpush1.bf16.msra.mxu0 %v2496
  %3626 = vmatprep.subr.bf16.mxu0 %v2501
  %3627 = vmatpush1.bf16.msra.mxu0 %v2500
  %3628 = vmatprep.subr.bf16.mxu0 %v2505
  %3629 = vmatpush1.bf16.msra.mxu0 %v2504
  %3630 = vmatprep.subr.bf16.mxu0 %v2509
  %3631 = vmatpush1.bf16.msra.mxu0 %v2508
  %3632 = vmatprep.mubr.bf16.mxu0 %v685
  %3633 = vmatmul.mubr.bf16.gmra.mrb[0].mxu0 %v684
  %v3634 = vpop.f32.mrb[0].mxu0
  %v3635 = vadd.f32 %v613, %v3634
  %v3636 = vpop.f32.mrb[0].mxu0
  %v3637 = vadd.f32 %v617, %v3636
  %v3638 = vpop.f32.mrb[0].mxu0
  %v3639 = vadd.f32 %v613, %v3638
  %v3640 = vpop.f32.mrb[0].mxu0
  %v3641 = vadd.f32 %v617, %v3640
  %3642 = vdwg.mxu0
  %3643 = vmatprep.subr.bf16.mxu0 %v2513
  %3644 = vmatpush1.bf16.msra.mxu0 %v2512
  %3645 = vmatprep.subr.bf16.mxu0 %v2517
  %3646 = vmatpush1.bf16.msra.mxu0 %v2516
  %3647 = vmatprep.subr.bf16.mxu0 %v2521
  %3648 = vmatpush1.bf16.msra.mxu0 %v2520
  %3649 = vmatprep.subr.bf16.mxu0 %v2525
  %3650 = vmatpush1.bf16.msra.mxu0 %v2524
  %3651 = vmatprep.subr.bf16.mxu0 %v2529
  %3652 = vmatpush1.bf16.msra.mxu0 %v2528
  %3653 = vmatprep.subr.bf16.mxu0 %v2533
  %3654 = vmatpush1.bf16.msra.mxu0 %v2532
  %3655 = vmatprep.subr.bf16.mxu0 %v2537
  %3656 = vmatpush1.bf16.msra.mxu0 %v2536
  %3657 = vmatprep.subr.bf16.mxu0 %v2541
  %3658 = vmatpush1.bf16.msra.mxu0 %v2540
  %3659 = vmatprep.subr.bf16.mxu0 %v2545
  %3660 = vmatpush1.bf16.msra.mxu0 %v2544
  %3661 = vmatprep.subr.bf16.mxu0 %v2549
  %3662 = vmatpush1.bf16.msra.mxu0 %v2548
  %3663 = vmatprep.subr.bf16.mxu0 %v2553
  %3664 = vmatpush1.bf16.msra.mxu0 %v2552
  %3665 = vmatprep.subr.bf16.mxu0 %v2557
  %3666 = vmatpush1.bf16.msra.mxu0 %v2556
  %3667 = vmatprep.subr.bf16.mxu0 %v2561
  %3668 = vmatpush1.bf16.msra.mxu0 %v2560
  %3669 = vmatprep.subr.bf16.mxu0 %v2565
  %3670 = vmatpush1.bf16.msra.mxu0 %v2564
  %3671 = vmatprep.subr.bf16.mxu0 %v2569
  %3672 = vmatpush1.bf16.msra.mxu0 %v2568
  %3673 = vmatprep.subr.bf16.mxu0 %v2573
  %3674 = vmatpush1.bf16.msra.mxu0 %v2572
  %3675 = vmatprep.mubr.bf16.mxu0 %v687
  %3676 = vmatmul.mubr.bf16.gmra.mrb[0].mxu0 %v686
  %v3677 = vpop.f32.mrb[0].mxu0
  %v3678 = vadd.f32 %v3635, %v3677
  %v3679 = vpop.f32.mrb[0].mxu0
  %v3680 = vadd.f32 %v3637, %v3679
  %v3681 = vpop.f32.mrb[0].mxu0
  %v3682 = vadd.f32 %v3639, %v3681
  %v3683 = vpop.f32.mrb[0].mxu0
  %v3684 = vadd.f32 %v3641, %v3683
  %3685 = vdwg.mxu0
  %3686 = vmatprep.subr.bf16.mxu0 %v2577
  %3687 = vmatpush1.bf16.msra.mxu0 %v2576
  %3688 = vmatprep.subr.bf16.mxu0 %v2581
  %3689 = vmatpush1.bf16.msra.mxu0 %v2580
  %3690 = vmatprep.subr.bf16.mxu0 %v2585
  %3691 = vmatpush1.bf16.msra.mxu0 %v2584
  %3692 = vmatprep.subr.bf16.mxu0 %v2589
  %3693 = vmatpush1.bf16.msra.mxu0 %v2588
  %3694 = vmatprep.subr.bf16.mxu0 %v2593
  %3695 = vmatpush1.bf16.msra.mxu0 %v2592
  %3696 = vmatprep.subr.bf16.mxu0 %v2597
  %3697 = vmatpush1.bf16.msra.mxu0 %v2596
  %3698 = vmatprep.subr.bf16.mxu0 %v2601
  %3699 = vmatpush1.bf16.msra.mxu0 %v2600
  %3700 = vmatprep.subr.bf16.mxu0 %v2605
  %3701 = vmatpush1.bf16.msra.mxu0 %v2604
  %3702 = vmatprep.subr.bf16.mxu0 %v2609
  %3703 = vmatpush1.bf16.msra.mxu0 %v2608
  %3704 = vmatprep.subr.bf16.mxu0 %v2613
  %3705 = vmatpush1.bf16.msra.mxu0 %v2612
  %3706 = vmatprep.subr.bf16.mxu0 %v2617
  %3707 = vmatpush1.bf16.msra.mxu0 %v2616
  %3708 = vmatprep.subr.bf16.mxu0 %v2621
  %3709 = vmatpush1.bf16.msra.mxu0 %v2620
  %3710 = vmatprep.subr.bf16.mxu0 %v2625
  %3711 = vmatpush1.bf16.msra.mxu0 %v2624
  %3712 = vmatprep.subr.bf16.mxu0 %v2629
  %3713 = vmatpush1.bf16.msra.mxu0 %v2628
  %3714 = vmatprep.subr.bf16.mxu0 %v2633
  %3715 = vmatpush1.bf16.msra.mxu0 %v2632
  %3716 = vmatprep.subr.bf16.mxu0 %v2637
  %3717 = vmatpush1.bf16.msra.mxu0 %v2636
  %3718 = vmatprep.mubr.bf16.mxu0 %v689
  %3719 = vmatmul.mubr.bf16.gmra.mrb[0].mxu0 %v688
  %v3720 = vpop.f32.mrb[0].mxu0
  %v3721 = vadd.f32 %v3678, %v3720
  %v3722 = vpop.f32.mrb[0].mxu0
  %v3723 = vadd.f32 %v3680, %v3722
  %v3724 = vpop.f32.mrb[0].mxu0
  %v3725 = vadd.f32 %v3682, %v3724
  %v3726 = vpop.f32.mrb[0].mxu0
  %v3727 = vadd.f32 %v3684, %v3726
  %3728 = vdwg.mxu0
  %3729 = vmatprep.subr.bf16.mxu0 %v2641
  %3730 = vmatpush1.bf16.msra.mxu0 %v2640
  %3731 = vmatprep.subr.bf16.mxu0 %v2645
  %3732 = vmatpush1.bf16.msra.mxu0 %v2644
  %3733 = vmatprep.subr.bf16.mxu0 %v2649
  %3734 = vmatpush1.bf16.msra.mxu0 %v2648
  %3735 = vmatprep.subr.bf16.mxu0 %v2653
  %3736 = vmatpush1.bf16.msra.mxu0 %v2652
  %3737 = vmatprep.subr.bf16.mxu0 %v2657
  %3738 = vmatpush1.bf16.msra.mxu0 %v2656
  %3739 = vmatprep.subr.bf16.mxu0 %v2661
  %3740 = vmatpush1.bf16.msra.mxu0 %v2660
  %3741 = vmatprep.subr.bf16.mxu0 %v2665
  %3742 = vmatpush1.bf16.msra.mxu0 %v2664
  %3743 = vmatprep.subr.bf16.mxu0 %v2669
  %3744 = vmatpush1.bf16.msra.mxu0 %v2668
  %3745 = vmatprep.subr.bf16.mxu0 %v2673
  %3746 = vmatpush1.bf16.msra.mxu0 %v2672
  %3747 = vmatprep.subr.bf16.mxu0 %v2677
  %3748 = vmatpush1.bf16.msra.mxu0 %v2676
  %3749 = vmatprep.subr.bf16.mxu0 %v2681
  %3750 = vmatpush1.bf16.msra.mxu0 %v2680
  %3751 = vmatprep.subr.bf16.mxu0 %v2685
  %3752 = vmatpush1.bf16.msra.mxu0 %v2684
  %3753 = vmatprep.subr.bf16.mxu0 %v2689
  %3754 = vmatpush1.bf16.msra.mxu0 %v2688
  %3755 = vmatprep.subr.bf16.mxu0 %v2693
  %3756 = vmatpush1.bf16.msra.mxu0 %v2692
  %3757 = vmatprep.subr.bf16.mxu0 %v2697
  %3758 = vmatpush1.bf16.msra.mxu0 %v2696
  %3759 = vmatprep.subr.bf16.mxu0 %v2701
  %3760 = vmatpush1.bf16.msra.mxu0 %v2700
  %3761 = vmatprep.mubr.bf16.mxu0 %v691
  %3762 = vmatmul.mubr.bf16.gmra.mrb[0].mxu0 %v690
  %v3763 = vpop.f32.mrb[0].mxu0
  %v3764 = vadd.f32 %v3721, %v3763
  %v3765 = vpop.f32.mrb[0].mxu0
  %v3766 = vadd.f32 %v3723, %v3765
  %v3767 = vpop.f32.mrb[0].mxu0
  %v3768 = vadd.f32 %v3725, %v3767
  %v3769 = vpop.f32.mrb[0].mxu0
  %v3770 = vadd.f32 %v3727, %v3769
  %3771 = vdwg.mxu0
  %3772 = vmatprep.subr.bf16.mxu0 %v2705
  %3773 = vmatpush1.bf16.msra.mxu0 %v2704
  %3774 = vmatprep.subr.bf16.mxu0 %v2709
  %3775 = vmatpush1.bf16.msra.mxu0 %v2708
  %3776 = vmatprep.subr.bf16.mxu0 %v2713
  %3777 = vmatpush1.bf16.msra.mxu0 %v2712
  %3778 = vmatprep.subr.bf16.mxu0 %v2717
  %3779 = vmatpush1.bf16.msra.mxu0 %v2716
  %3780 = vmatprep.subr.bf16.mxu0 %v2721
  %3781 = vmatpush1.bf16.msra.mxu0 %v2720
  %3782 = vmatprep.subr.bf16.mxu0 %v2725
  %3783 = vmatpush1.bf16.msra.mxu0 %v2724
  %3784 = vmatprep.subr.bf16.mxu0 %v2729
  %3785 = vmatpush1.bf16.msra.mxu0 %v2728
  %3786 = vmatprep.subr.bf16.mxu0 %v2733
  %3787 = vmatpush1.bf16.msra.mxu0 %v2732
  %3788 = vmatprep.subr.bf16.mxu0 %v2737
  %3789 = vmatpush1.bf16.msra.mxu0 %v2736
  %3790 = vmatprep.subr.bf16.mxu0 %v2741
  %3791 = vmatpush1.bf16.msra.mxu0 %v2740
  %3792 = vmatprep.subr.bf16.mxu0 %v2745
  %3793 = vmatpush1.bf16.msra.mxu0 %v2744
  %3794 = vmatprep.subr.bf16.mxu0 %v2749
  %3795 = vmatpush1.bf16.msra.mxu0 %v2748
  %3796 = vmatprep.subr.bf16.mxu0 %v2753
  %3797 = vmatpush1.bf16.msra.mxu0 %v2752
  %3798 = vmatprep.subr.bf16.mxu0 %v2757
  %3799 = vmatpush1.bf16.msra.mxu0 %v2756
  %3800 = vmatprep.subr.bf16.mxu0 %v2761
  %3801 = vmatpush1.bf16.msra.mxu0 %v2760
  %3802 = vmatprep.subr.bf16.mxu0 %v2765
  %3803 = vmatpush1.bf16.msra.mxu0 %v2764
  %3804 = vmatprep.mubr.bf16.mxu0 %v693
  %3805 = vmatmul.mubr.bf16.gmra.mrb[0].mxu0 %v692
  %v3806 = vpop.f32.mrb[0].mxu0
  %v3807 = vadd.f32 %v3764, %v3806
  %v3808 = vpop.f32.mrb[0].mxu0
  %v3809 = vadd.f32 %v3766, %v3808
  %v3810 = vpop.f32.mrb[0].mxu0
  %v3811 = vadd.f32 %v3768, %v3810
  %v3812 = vpop.f32.mrb[0].mxu0
  %v3813 = vadd.f32 %v3770, %v3812
  %3814 = vdwg.mxu0
  %3815 = vmatprep.subr.bf16.mxu0 %v2769
  %3816 = vmatpush1.bf16.msra.mxu0 %v2768
  %3817 = vmatprep.subr.bf16.mxu0 %v2773
  %3818 = vmatpush1.bf16.msra.mxu0 %v2772
  %3819 = vmatprep.subr.bf16.mxu0 %v2777
  %3820 = vmatpush1.bf16.msra.mxu0 %v2776
  %3821 = vmatprep.subr.bf16.mxu0 %v2781
  %3822 = vmatpush1.bf16.msra.mxu0 %v2780
  %3823 = vmatprep.subr.bf16.mxu0 %v2785
  %3824 = vmatpush1.bf16.msra.mxu0 %v2784
  %3825 = vmatprep.subr.bf16.mxu0 %v2789
  %3826 = vmatpush1.bf16.msra.mxu0 %v2788
  %3827 = vmatprep.subr.bf16.mxu0 %v2793
  %3828 = vmatpush1.bf16.msra.mxu0 %v2792
  %3829 = vmatprep.subr.bf16.mxu0 %v2797
  %3830 = vmatpush1.bf16.msra.mxu0 %v2796
  %3831 = vmatprep.subr.bf16.mxu0 %v2801
  %3832 = vmatpush1.bf16.msra.mxu0 %v2800
  %3833 = vmatprep.subr.bf16.mxu0 %v2805
  %3834 = vmatpush1.bf16.msra.mxu0 %v2804
  %3835 = vmatprep.subr.bf16.mxu0 %v2809
  %3836 = vmatpush1.bf16.msra.mxu0 %v2808
  %3837 = vmatprep.subr.bf16.mxu0 %v2813
  %3838 = vmatpush1.bf16.msra.mxu0 %v2812
  %3839 = vmatprep.subr.bf16.mxu0 %v2817
  %3840 = vmatpush1.bf16.msra.mxu0 %v2816
  %3841 = vmatprep.subr.bf16.mxu0 %v2821
  %3842 = vmatpush1.bf16.msra.mxu0 %v2820
  %3843 = vmatprep.subr.bf16.mxu0 %v2825
  %3844 = vmatpush1.bf16.msra.mxu0 %v2824
  %3845 = vmatprep.subr.bf16.mxu0 %v2829
  %3846 = vmatpush1.bf16.msra.mxu0 %v2828
  %3847 = vmatprep.mubr.bf16.mxu0 %v695
  %3848 = vmatmul.mubr.bf16.gmra.mrb[0].mxu0 %v694
  %v3849 = vpop.f32.mrb[0].mxu0
  %v3850 = vadd.f32 %v3807, %v3849
  %v3851 = vpop.f32.mrb[0].mxu0
  %v3852 = vadd.f32 %v3809, %v3851
  %v3853 = vpop.f32.mrb[0].mxu0
  %v3854 = vadd.f32 %v3811, %v3853
  %v3855 = vpop.f32.mrb[0].mxu0
  %v3856 = vadd.f32 %v3813, %v3855
  %3857 = vdwg.mxu0
  %3858 = vmatprep.subr.bf16.mxu0 %v2833
  %3859 = vmatpush1.bf16.msra.mxu0 %v2832
  %3860 = vmatprep.subr.bf16.mxu0 %v2837
  %3861 = vmatpush1.bf16.msra.mxu0 %v2836
  %3862 = vmatprep.subr.bf16.mxu0 %v2841
  %3863 = vmatpush1.bf16.msra.mxu0 %v2840
  %3864 = vmatprep.subr.bf16.mxu0 %v2845
  %3865 = vmatpush1.bf16.msra.mxu0 %v2844
  %3866 = vmatprep.subr.bf16.mxu0 %v2849
  %3867 = vmatpush1.bf16.msra.mxu0 %v2848
  %3868 = vmatprep.subr.bf16.mxu0 %v2853
  %3869 = vmatpush1.bf16.msra.mxu0 %v2852
  %3870 = vmatprep.subr.bf16.mxu0 %v2857
  %3871 = vmatpush1.bf16.msra.mxu0 %v2856
  %3872 = vmatprep.subr.bf16.mxu0 %v2861
  %3873 = vmatpush1.bf16.msra.mxu0 %v2860
  %3874 = vmatprep.subr.bf16.mxu0 %v2865
  %3875 = vmatpush1.bf16.msra.mxu0 %v2864
  %3876 = vmatprep.subr.bf16.mxu0 %v2869
  %3877 = vmatpush1.bf16.msra.mxu0 %v2868
  %3878 = vmatprep.subr.bf16.mxu0 %v2873
  %3879 = vmatpush1.bf16.msra.mxu0 %v2872
  %3880 = vmatprep.subr.bf16.mxu0 %v2877
  %3881 = vmatpush1.bf16.msra.mxu0 %v2876
  %3882 = vmatprep.subr.bf16.mxu0 %v2881
  %3883 = vmatpush1.bf16.msra.mxu0 %v2880
  %3884 = vmatprep.subr.bf16.mxu0 %v2885
  %3885 = vmatpush1.bf16.msra.mxu0 %v2884
  %3886 = vmatprep.subr.bf16.mxu0 %v2889
  %3887 = vmatpush1.bf16.msra.mxu0 %v2888
  %3888 = vmatprep.subr.bf16.mxu0 %v2893
  %3889 = vmatpush1.bf16.msra.mxu0 %v2892
  %3890 = vmatprep.mubr.bf16.mxu0 %v697
  %3891 = vmatmul.mubr.bf16.gmra.mrb[0].mxu0 %v696
  %v3892 = vpop.f32.mrb[0].mxu0
  %v3893 = vadd.f32 %v3850, %v3892
  %v3894 = vpop.f32.mrb[0].mxu0
  %v3895 = vadd.f32 %v3852, %v3894
  %v3896 = vpop.f32.mrb[0].mxu0
  %v3897 = vadd.f32 %v3854, %v3896
  %v3898 = vpop.f32.mrb[0].mxu0
  %v3899 = vadd.f32 %v3856, %v3898
  %3900 = vdwg.mxu0
  %3901 = vmatprep.subr.bf16.mxu0 %v2897
  %3902 = vmatpush1.bf16.msra.mxu0 %v2896
  %3903 = vmatprep.subr.bf16.mxu0 %v2901
  %3904 = vmatpush1.bf16.msra.mxu0 %v2900
  %3905 = vmatprep.subr.bf16.mxu0 %v2905
  %3906 = vmatpush1.bf16.msra.mxu0 %v2904
  %3907 = vmatprep.subr.bf16.mxu0 %v2909
  %3908 = vmatpush1.bf16.msra.mxu0 %v2908
  %3909 = vmatprep.subr.bf16.mxu0 %v2913
  %3910 = vmatpush1.bf16.msra.mxu0 %v2912
  %3911 = vmatprep.subr.bf16.mxu0 %v2917
  %3912 = vmatpush1.bf16.msra.mxu0 %v2916
  %3913 = vmatprep.subr.bf16.mxu0 %v2921
  %3914 = vmatpush1.bf16.msra.mxu0 %v2920
  %3915 = vmatprep.subr.bf16.mxu0 %v2925
  %3916 = vmatpush1.bf16.msra.mxu0 %v2924
  %3917 = vmatprep.subr.bf16.mxu0 %v2929
  %3918 = vmatpush1.bf16.msra.mxu0 %v2928
  %3919 = vmatprep.subr.bf16.mxu0 %v2933
  %3920 = vmatpush1.bf16.msra.mxu0 %v2932
  %3921 = vmatprep.subr.bf16.mxu0 %v2937
  %3922 = vmatpush1.bf16.msra.mxu0 %v2936
  %3923 = vmatprep.subr.bf16.mxu0 %v2941
  %3924 = vmatpush1.bf16.msra.mxu0 %v2940
  %3925 = vmatprep.subr.bf16.mxu0 %v2945
  %3926 = vmatpush1.bf16.msra.mxu0 %v2944
  %3927 = vmatprep.subr.bf16.mxu0 %v2949
  %3928 = vmatpush1.bf16.msra.mxu0 %v2948
  %3929 = vmatprep.subr.bf16.mxu0 %v2953
  %3930 = vmatpush1.bf16.msra.mxu0 %v2952
  %3931 = vmatprep.subr.bf16.mxu0 %v2957
  %3932 = vmatpush1.bf16.msra.mxu0 %v2956
  %3933 = vmatprep.mubr.bf16.mxu0 %v699
  %3934 = vmatmul.mubr.bf16.gmra.mrb[0].mxu0 %v698
  %v3935 = vpop.f32.mrb[0].mxu0
  %v3936 = vadd.f32 %v3893, %v3935
  %v3937 = vpop.f32.mrb[0].mxu0
  %v3938 = vadd.f32 %v3895, %v3937
  %v3939 = vpop.f32.mrb[0].mxu0
  %v3940 = vadd.f32 %v3897, %v3939
  %v3941 = vpop.f32.mrb[0].mxu0
  %v3942 = vadd.f32 %v3899, %v3941
  %3943 = vdwg.mxu0
  %3944 = vmatprep.subr.bf16.mxu0 %v2961
  %3945 = vmatpush1.bf16.msra.mxu0 %v2960
  %3946 = vmatprep.subr.bf16.mxu0 %v2965
  %3947 = vmatpush1.bf16.msra.mxu0 %v2964
  %3948 = vmatprep.subr.bf16.mxu0 %v2969
  %3949 = vmatpush1.bf16.msra.mxu0 %v2968
  %3950 = vmatprep.subr.bf16.mxu0 %v2973
  %3951 = vmatpush1.bf16.msra.mxu0 %v2972
  %3952 = vmatprep.subr.bf16.mxu0 %v2977
  %3953 = vmatpush1.bf16.msra.mxu0 %v2976
  %3954 = vmatprep.subr.bf16.mxu0 %v2981
  %3955 = vmatpush1.bf16.msra.mxu0 %v2980
  %3956 = vmatprep.subr.bf16.mxu0 %v2985
  %3957 = vmatpush1.bf16.msra.mxu0 %v2984
  %3958 = vmatprep.subr.bf16.mxu0 %v2989
  %3959 = vmatpush1.bf16.msra.mxu0 %v2988
  %3960 = vmatprep.subr.bf16.mxu0 %v2993
  %3961 = vmatpush1.bf16.msra.mxu0 %v2992
  %3962 = vmatprep.subr.bf16.mxu0 %v2997
  %3963 = vmatpush1.bf16.msra.mxu0 %v2996
  %3964 = vmatprep.subr.bf16.mxu0 %v3001
  %3965 = vmatpush1.bf16.msra.mxu0 %v3000
  %3966 = vmatprep.subr.bf16.mxu0 %v3005
  %3967 = vmatpush1.bf16.msra.mxu0 %v3004
  %3968 = vmatprep.subr.bf16.mxu0 %v3009
  %3969 = vmatpush1.bf16.msra.mxu0 %v3008
  %3970 = vmatprep.subr.bf16.mxu0 %v3013
  %3971 = vmatpush1.bf16.msra.mxu0 %v3012
  %3972 = vmatprep.subr.bf16.mxu0 %v3017
  %3973 = vmatpush1.bf16.msra.mxu0 %v3016
  %3974 = vmatprep.subr.bf16.mxu0 %v3021
  %3975 = vmatpush1.bf16.msra.mxu0 %v3020
  %3976 = vmatprep.mubr.bf16.mxu0 %v701
  %3977 = vmatmul.mubr.bf16.gmra.mrb[0].mxu0 %v700
  %v3978 = vpop.f32.mrb[0].mxu0
  %v3979 = vadd.f32 %v3936, %v3978
  %v3980 = vpop.f32.mrb[0].mxu0
  %v3981 = vadd.f32 %v3938, %v3980
  %v3982 = vpop.f32.mrb[0].mxu0
  %v3983 = vadd.f32 %v3940, %v3982
  %v3984 = vpop.f32.mrb[0].mxu0
  %v3985 = vadd.f32 %v3942, %v3984
  %3986 = vdwg.mxu0
  %3987 = vmatprep.subr.bf16.mxu0 %v2451
  %3988 = vmatpush1.bf16.msra.mxu0 %v2450
  %3989 = vmatprep.subr.bf16.mxu0 %v2455
  %3990 = vmatpush1.bf16.msra.mxu0 %v2454
  %3991 = vmatprep.subr.bf16.mxu0 %v2459
  %3992 = vmatpush1.bf16.msra.mxu0 %v2458
  %3993 = vmatprep.subr.bf16.mxu0 %v2463
  %3994 = vmatpush1.bf16.msra.mxu0 %v2462
  %3995 = vmatprep.subr.bf16.mxu0 %v2467
  %3996 = vmatpush1.bf16.msra.mxu0 %v2466
  %3997 = vmatprep.subr.bf16.mxu0 %v2471
  %3998 = vmatpush1.bf16.msra.mxu0 %v2470
  %3999 = vmatprep.subr.bf16.mxu0 %v2475
  %4000 = vmatpush1.bf16.msra.mxu0 %v2474
  %4001 = vmatprep.subr.bf16.mxu0 %v2479
  %4002 = vmatpush1.bf16.msra.mxu0 %v2478
  %4003 = vmatprep.subr.bf16.mxu0 %v2483
  %4004 = vmatpush1.bf16.msra.mxu0 %v2482
  %4005 = vmatprep.subr.bf16.mxu0 %v2487
  %4006 = vmatpush1.bf16.msra.mxu0 %v2486
  %4007 = vmatprep.subr.bf16.mxu0 %v2491
  %4008 = vmatpush1.bf16.msra.mxu0 %v2490
  %4009 = vmatprep.subr.bf16.mxu0 %v2495
  %4010 = vmatpush1.bf16.msra.mxu0 %v2494
  %4011 = vmatprep.subr.bf16.mxu0 %v2499
  %4012 = vmatpush1.bf16.msra.mxu0 %v2498
  %4013 = vmatprep.subr.bf16.mxu0 %v2503
  %4014 = vmatpush1.bf16.msra.mxu0 %v2502
  %4015 = vmatprep.subr.bf16.mxu0 %v2507
  %4016 = vmatpush1.bf16.msra.mxu0 %v2506
  %4017 = vmatprep.subr.bf16.mxu0 %v2511
  %4018 = vmatpush1.bf16.msra.mxu0 %v2510
  %4019 = vmatprep.mubr.bf16.mxu0 %v685
  %4020 = vmatmul.mubr.bf16.gmra.mrb[0].mxu0 %v684
  %v4021 = vpop.f32.mrb[0].mxu0
  %v4022 = vadd.f32 %v621, %v4021
  %v4023 = vpop.f32.mrb[0].mxu0
  %v4024 = vadd.f32 %v625, %v4023
  %v4025 = vpop.f32.mrb[0].mxu0
  %v4026 = vadd.f32 %v621, %v4025
  %v4027 = vpop.f32.mrb[0].mxu0
  %v4028 = vadd.f32 %v625, %v4027
  %4029 = vdwg.mxu0
  %4030 = vmatprep.subr.bf16.mxu0 %v2515
  %4031 = vmatpush1.bf16.msra.mxu0 %v2514
  %4032 = vmatprep.subr.bf16.mxu0 %v2519
  %4033 = vmatpush1.bf16.msra.mxu0 %v2518
  %4034 = vmatprep.subr.bf16.mxu0 %v2523
  %4035 = vmatpush1.bf16.msra.mxu0 %v2522
  %4036 = vmatprep.subr.bf16.mxu0 %v2527
  %4037 = vmatpush1.bf16.msra.mxu0 %v2526
  %4038 = vmatprep.subr.bf16.mxu0 %v2531
  %4039 = vmatpush1.bf16.msra.mxu0 %v2530
  %4040 = vmatprep.subr.bf16.mxu0 %v2535
  %4041 = vmatpush1.bf16.msra.mxu0 %v2534
  %4042 = vmatprep.subr.bf16.mxu0 %v2539
  %4043 = vmatpush1.bf16.msra.mxu0 %v2538
  %4044 = vmatprep.subr.bf16.mxu0 %v2543
  %4045 = vmatpush1.bf16.msra.mxu0 %v2542
  %4046 = vmatprep.subr.bf16.mxu0 %v2547
  %4047 = vmatpush1.bf16.msra.mxu0 %v2546
  %4048 = vmatprep.subr.bf16.mxu0 %v2551
  %4049 = vmatpush1.bf16.msra.mxu0 %v2550
  %4050 = vmatprep.subr.bf16.mxu0 %v2555
  %4051 = vmatpush1.bf16.msra.mxu0 %v2554
  %4052 = vmatprep.subr.bf16.mxu0 %v2559
  %4053 = vmatpush1.bf16.msra.mxu0 %v2558
  %4054 = vmatprep.subr.bf16.mxu0 %v2563
  %4055 = vmatpush1.bf16.msra.mxu0 %v2562
  %4056 = vmatprep.subr.bf16.mxu0 %v2567
  %4057 = vmatpush1.bf16.msra.mxu0 %v2566
  %4058 = vmatprep.subr.bf16.mxu0 %v2571
  %4059 = vmatpush1.bf16.msra.mxu0 %v2570
  %4060 = vmatprep.subr.bf16.mxu0 %v2575
  %4061 = vmatpush1.bf16.msra.mxu0 %v2574
  %4062 = vmatprep.mubr.bf16.mxu0 %v687
  %4063 = vmatmul.mubr.bf16.gmra.mrb[0].mxu0 %v686
  %v4064 = vpop.f32.mrb[0].mxu0
  %v4065 = vadd.f32 %v4022, %v4064
  %v4066 = vpop.f32.mrb[0].mxu0
  %v4067 = vadd.f32 %v4024, %v4066
  %v4068 = vpop.f32.mrb[0].mxu0
  %v4069 = vadd.f32 %v4026, %v4068
  %v4070 = vpop.f32.mrb[0].mxu0
  %v4071 = vadd.f32 %v4028, %v4070
  %4072 = vdwg.mxu0
  %4073 = vmatprep.subr.bf16.mxu0 %v2579
  %4074 = vmatpush1.bf16.msra.mxu0 %v2578
  %4075 = vmatprep.subr.bf16.mxu0 %v2583
  %4076 = vmatpush1.bf16.msra.mxu0 %v2582
  %4077 = vmatprep.subr.bf16.mxu0 %v2587
  %4078 = vmatpush1.bf16.msra.mxu0 %v2586
  %4079 = vmatprep.subr.bf16.mxu0 %v2591
  %4080 = vmatpush1.bf16.msra.mxu0 %v2590
  %4081 = vmatprep.subr.bf16.mxu0 %v2595
  %4082 = vmatpush1.bf16.msra.mxu0 %v2594
  %4083 = vmatprep.subr.bf16.mxu0 %v2599
  %4084 = vmatpush1.bf16.msra.mxu0 %v2598
  %4085 = vmatprep.subr.bf16.mxu0 %v2603
  %4086 = vmatpush1.bf16.msra.mxu0 %v2602
  %4087 = vmatprep.subr.bf16.mxu0 %v2607
  %4088 = vmatpush1.bf16.msra.mxu0 %v2606
  %4089 = vmatprep.subr.bf16.mxu0 %v2611
  %4090 = vmatpush1.bf16.msra.mxu0 %v2610
  %4091 = vmatprep.subr.bf16.mxu0 %v2615
  %4092 = vmatpush1.bf16.msra.mxu0 %v2614
  %4093 = vmatprep.subr.bf16.mxu0 %v2619
  %4094 = vmatpush1.bf16.msra.mxu0 %v2618
  %4095 = vmatprep.subr.bf16.mxu0 %v2623
  %4096 = vmatpush1.bf16.msra.mxu0 %v2622
  %4097 = vmatprep.subr.bf16.mxu0 %v2627
  %4098 = vmatpush1.bf16.msra.mxu0 %v2626
  %4099 = vmatprep.subr.bf16.mxu0 %v2631
  %4100 = vmatpush1.bf16.msra.mxu0 %v2630
  %4101 = vmatprep.subr.bf16.mxu0 %v2635
  %4102 = vmatpush1.bf16.msra.mxu0 %v2634
  %4103 = vmatprep.subr.bf16.mxu0 %v2639
  %4104 = vmatpush1.bf16.msra.mxu0 %v2638
  %4105 = vmatprep.mubr.bf16.mxu0 %v689
  %4106 = vmatmul.mubr.bf16.gmra.mrb[0].mxu0 %v688
  %v4107 = vpop.f32.mrb[0].mxu0
  %v4108 = vadd.f32 %v4065, %v4107
  %v4109 = vpop.f32.mrb[0].mxu0
  %v4110 = vadd.f32 %v4067, %v4109
  %v4111 = vpop.f32.mrb[0].mxu0
  %v4112 = vadd.f32 %v4069, %v4111
  %v4113 = vpop.f32.mrb[0].mxu0
  %v4114 = vadd.f32 %v4071, %v4113
  %4115 = vdwg.mxu0
  %4116 = vmatprep.subr.bf16.mxu0 %v2643
  %4117 = vmatpush1.bf16.msra.mxu0 %v2642
  %4118 = vmatprep.subr.bf16.mxu0 %v2647
  %4119 = vmatpush1.bf16.msra.mxu0 %v2646
  %4120 = vmatprep.subr.bf16.mxu0 %v2651
  %4121 = vmatpush1.bf16.msra.mxu0 %v2650
  %4122 = vmatprep.subr.bf16.mxu0 %v2655
  %4123 = vmatpush1.bf16.msra.mxu0 %v2654
  %4124 = vmatprep.subr.bf16.mxu0 %v2659
  %4125 = vmatpush1.bf16.msra.mxu0 %v2658
  %4126 = vmatprep.subr.bf16.mxu0 %v2663
  %4127 = vmatpush1.bf16.msra.mxu0 %v2662
  %4128 = vmatprep.subr.bf16.mxu0 %v2667
  %4129 = vmatpush1.bf16.msra.mxu0 %v2666
  %4130 = vmatprep.subr.bf16.mxu0 %v2671
  %4131 = vmatpush1.bf16.msra.mxu0 %v2670
  %4132 = vmatprep.subr.bf16.mxu0 %v2675
  %4133 = vmatpush1.bf16.msra.mxu0 %v2674
  %4134 = vmatprep.subr.bf16.mxu0 %v2679
  %4135 = vmatpush1.bf16.msra.mxu0 %v2678
  %4136 = vmatprep.subr.bf16.mxu0 %v2683
  %4137 = vmatpush1.bf16.msra.mxu0 %v2682
  %4138 = vmatprep.subr.bf16.mxu0 %v2687
  %4139 = vmatpush1.bf16.msra.mxu0 %v2686
  %4140 = vmatprep.subr.bf16.mxu0 %v2691
  %4141 = vmatpush1.bf16.msra.mxu0 %v2690
  %4142 = vmatprep.subr.bf16.mxu0 %v2695
  %4143 = vmatpush1.bf16.msra.mxu0 %v2694
  %4144 = vmatprep.subr.bf16.mxu0 %v2699
  %4145 = vmatpush1.bf16.msra.mxu0 %v2698
  %4146 = vmatprep.subr.bf16.mxu0 %v2703
  %4147 = vmatpush1.bf16.msra.mxu0 %v2702
  %4148 = vmatprep.mubr.bf16.mxu0 %v691
  %4149 = vmatmul.mubr.bf16.gmra.mrb[0].mxu0 %v690
  %v4150 = vpop.f32.mrb[0].mxu0
  %v4151 = vadd.f32 %v4108, %v4150
  %v4152 = vpop.f32.mrb[0].mxu0
  %v4153 = vadd.f32 %v4110, %v4152
  %v4154 = vpop.f32.mrb[0].mxu0
  %v4155 = vadd.f32 %v4112, %v4154
  %v4156 = vpop.f32.mrb[0].mxu0
  %v4157 = vadd.f32 %v4114, %v4156
  %4158 = vdwg.mxu0
  %4159 = vmatprep.subr.bf16.mxu0 %v2707
  %4160 = vmatpush1.bf16.msra.mxu0 %v2706
  %4161 = vmatprep.subr.bf16.mxu0 %v2711
  %4162 = vmatpush1.bf16.msra.mxu0 %v2710
  %4163 = vmatprep.subr.bf16.mxu0 %v2715
  %4164 = vmatpush1.bf16.msra.mxu0 %v2714
  %4165 = vmatprep.subr.bf16.mxu0 %v2719
  %4166 = vmatpush1.bf16.msra.mxu0 %v2718
  %4167 = vmatprep.subr.bf16.mxu0 %v2723
  %4168 = vmatpush1.bf16.msra.mxu0 %v2722
  %4169 = vmatprep.subr.bf16.mxu0 %v2727
  %4170 = vmatpush1.bf16.msra.mxu0 %v2726
  %4171 = vmatprep.subr.bf16.mxu0 %v2731
  %4172 = vmatpush1.bf16.msra.mxu0 %v2730
  %4173 = vmatprep.subr.bf16.mxu0 %v2735
  %4174 = vmatpush1.bf16.msra.mxu0 %v2734
  %4175 = vmatprep.subr.bf16.mxu0 %v2739
  %4176 = vmatpush1.bf16.msra.mxu0 %v2738
  %4177 = vmatprep.subr.bf16.mxu0 %v2743
  %4178 = vmatpush1.bf16.msra.mxu0 %v2742
  %4179 = vmatprep.subr.bf16.mxu0 %v2747
  %4180 = vmatpush1.bf16.msra.mxu0 %v2746
  %4181 = vmatprep.subr.bf16.mxu0 %v2751
  %4182 = vmatpush1.bf16.msra.mxu0 %v2750
  %4183 = vmatprep.subr.bf16.mxu0 %v2755
  %4184 = vmatpush1.bf16.msra.mxu0 %v2754
  %4185 = vmatprep.subr.bf16.mxu0 %v2759
  %4186 = vmatpush1.bf16.msra.mxu0 %v2758
  %4187 = vmatprep.subr.bf16.mxu0 %v2763
  %4188 = vmatpush1.bf16.msra.mxu0 %v2762
  %4189 = vmatprep.subr.bf16.mxu0 %v2767
  %4190 = vmatpush1.bf16.msra.mxu0 %v2766
  %4191 = vmatprep.mubr.bf16.mxu0 %v693
  %4192 = vmatmul.mubr.bf16.gmra.mrb[0].mxu0 %v692
  %v4193 = vpop.f32.mrb[0].mxu0
  %v4194 = vadd.f32 %v4151, %v4193
  %v4195 = vpop.f32.mrb[0].mxu0
  %v4196 = vadd.f32 %v4153, %v4195
  %v4197 = vpop.f32.mrb[0].mxu0
  %v4198 = vadd.f32 %v4155, %v4197
  %v4199 = vpop.f32.mrb[0].mxu0
  %v4200 = vadd.f32 %v4157, %v4199
  %4201 = vdwg.mxu0
  %4202 = vmatprep.subr.bf16.mxu0 %v2771
  %4203 = vmatpush1.bf16.msra.mxu0 %v2770
  %4204 = vmatprep.subr.bf16.mxu0 %v2775
  %4205 = vmatpush1.bf16.msra.mxu0 %v2774
  %4206 = vmatprep.subr.bf16.mxu0 %v2779
  %4207 = vmatpush1.bf16.msra.mxu0 %v2778
  %4208 = vmatprep.subr.bf16.mxu0 %v2783
  %4209 = vmatpush1.bf16.msra.mxu0 %v2782
  %4210 = vmatprep.subr.bf16.mxu0 %v2787
  %4211 = vmatpush1.bf16.msra.mxu0 %v2786
  %4212 = vmatprep.subr.bf16.mxu0 %v2791
  %4213 = vmatpush1.bf16.msra.mxu0 %v2790
  %4214 = vmatprep.subr.bf16.mxu0 %v2795
  %4215 = vmatpush1.bf16.msra.mxu0 %v2794
  %4216 = vmatprep.subr.bf16.mxu0 %v2799
  %4217 = vmatpush1.bf16.msra.mxu0 %v2798
  %4218 = vmatprep.subr.bf16.mxu0 %v2803
  %4219 = vmatpush1.bf16.msra.mxu0 %v2802
  %4220 = vmatprep.subr.bf16.mxu0 %v2807
  %4221 = vmatpush1.bf16.msra.mxu0 %v2806
  %4222 = vmatprep.subr.bf16.mxu0 %v2811
  %4223 = vmatpush1.bf16.msra.mxu0 %v2810
  %4224 = vmatprep.subr.bf16.mxu0 %v2815
  %4225 = vmatpush1.bf16.msra.mxu0 %v2814
  %4226 = vmatprep.subr.bf16.mxu0 %v2819
  %4227 = vmatpush1.bf16.msra.mxu0 %v2818
  %4228 = vmatprep.subr.bf16.mxu0 %v2823
  %4229 = vmatpush1.bf16.msra.mxu0 %v2822
  %4230 = vmatprep.subr.bf16.mxu0 %v2827
  %4231 = vmatpush1.bf16.msra.mxu0 %v2826
  %4232 = vmatprep.subr.bf16.mxu0 %v2831
  %4233 = vmatpush1.bf16.msra.mxu0 %v2830
  %4234 = vmatprep.mubr.bf16.mxu0 %v695
  %4235 = vmatmul.mubr.bf16.gmra.mrb[0].mxu0 %v694
  %v4236 = vpop.f32.mrb[0].mxu0
  %v4237 = vadd.f32 %v4194, %v4236
  %v4238 = vpop.f32.mrb[0].mxu0
  %v4239 = vadd.f32 %v4196, %v4238
  %v4240 = vpop.f32.mrb[0].mxu0
  %v4241 = vadd.f32 %v4198, %v4240
  %v4242 = vpop.f32.mrb[0].mxu0
  %v4243 = vadd.f32 %v4200, %v4242
  %4244 = vdwg.mxu0
  %4245 = vmatprep.subr.bf16.mxu0 %v2835
  %4246 = vmatpush1.bf16.msra.mxu0 %v2834
  %4247 = vmatprep.subr.bf16.mxu0 %v2839
  %4248 = vmatpush1.bf16.msra.mxu0 %v2838
  %4249 = vmatprep.subr.bf16.mxu0 %v2843
  %4250 = vmatpush1.bf16.msra.mxu0 %v2842
  %4251 = vmatprep.subr.bf16.mxu0 %v2847
  %4252 = vmatpush1.bf16.msra.mxu0 %v2846
  %4253 = vmatprep.subr.bf16.mxu0 %v2851
  %4254 = vmatpush1.bf16.msra.mxu0 %v2850
  %4255 = vmatprep.subr.bf16.mxu0 %v2855
  %4256 = vmatpush1.bf16.msra.mxu0 %v2854
  %4257 = vmatprep.subr.bf16.mxu0 %v2859
  %4258 = vmatpush1.bf16.msra.mxu0 %v2858
  %4259 = vmatprep.subr.bf16.mxu0 %v2863
  %4260 = vmatpush1.bf16.msra.mxu0 %v2862
  %4261 = vmatprep.subr.bf16.mxu0 %v2867
  %4262 = vmatpush1.bf16.msra.mxu0 %v2866
  %4263 = vmatprep.subr.bf16.mxu0 %v2871
  %4264 = vmatpush1.bf16.msra.mxu0 %v2870
  %4265 = vmatprep.subr.bf16.mxu0 %v2875
  %4266 = vmatpush1.bf16.msra.mxu0 %v2874
  %4267 = vmatprep.subr.bf16.mxu0 %v2879
  %4268 = vmatpush1.bf16.msra.mxu0 %v2878
  %4269 = vmatprep.subr.bf16.mxu0 %v2883
  %4270 = vmatpush1.bf16.msra.mxu0 %v2882
  %4271 = vmatprep.subr.bf16.mxu0 %v2887
  %4272 = vmatpush1.bf16.msra.mxu0 %v2886
  %4273 = vmatprep.subr.bf16.mxu0 %v2891
  %4274 = vmatpush1.bf16.msra.mxu0 %v2890
  %4275 = vmatprep.subr.bf16.mxu0 %v2895
  %4276 = vmatpush1.bf16.msra.mxu0 %v2894
  %4277 = vmatprep.mubr.bf16.mxu0 %v697
  %4278 = vmatmul.mubr.bf16.gmra.mrb[0].mxu0 %v696
  %v4279 = vpop.f32.mrb[0].mxu0
  %v4280 = vadd.f32 %v4237, %v4279
  %v4281 = vpop.f32.mrb[0].mxu0
  %v4282 = vadd.f32 %v4239, %v4281
  %v4283 = vpop.f32.mrb[0].mxu0
  %v4284 = vadd.f32 %v4241, %v4283
  %v4285 = vpop.f32.mrb[0].mxu0
  %v4286 = vadd.f32 %v4243, %v4285
  %4287 = vdwg.mxu0
  %4288 = vmatprep.subr.bf16.mxu0 %v2899
  %4289 = vmatpush1.bf16.msra.mxu0 %v2898
  %4290 = vmatprep.subr.bf16.mxu0 %v2903
  %4291 = vmatpush1.bf16.msra.mxu0 %v2902
  %4292 = vmatprep.subr.bf16.mxu0 %v2907
  %4293 = vmatpush1.bf16.msra.mxu0 %v2906
  %4294 = vmatprep.subr.bf16.mxu0 %v2911
  %4295 = vmatpush1.bf16.msra.mxu0 %v2910
  %4296 = vmatprep.subr.bf16.mxu0 %v2915
  %4297 = vmatpush1.bf16.msra.mxu0 %v2914
  %4298 = vmatprep.subr.bf16.mxu0 %v2919
  %4299 = vmatpush1.bf16.msra.mxu0 %v2918
  %4300 = vmatprep.subr.bf16.mxu0 %v2923
  %4301 = vmatpush1.bf16.msra.mxu0 %v2922
  %4302 = vmatprep.subr.bf16.mxu0 %v2927
  %4303 = vmatpush1.bf16.msra.mxu0 %v2926
  %4304 = vmatprep.subr.bf16.mxu0 %v2931
  %4305 = vmatpush1.bf16.msra.mxu0 %v2930
  %4306 = vmatprep.subr.bf16.mxu0 %v2935
  %4307 = vmatpush1.bf16.msra.mxu0 %v2934
  %4308 = vmatprep.subr.bf16.mxu0 %v2939
  %4309 = vmatpush1.bf16.msra.mxu0 %v2938
  %4310 = vmatprep.subr.bf16.mxu0 %v2943
  %4311 = vmatpush1.bf16.msra.mxu0 %v2942
  %4312 = vmatprep.subr.bf16.mxu0 %v2947
  %4313 = vmatpush1.bf16.msra.mxu0 %v2946
  %4314 = vmatprep.subr.bf16.mxu0 %v2951
  %4315 = vmatpush1.bf16.msra.mxu0 %v2950
  %4316 = vmatprep.subr.bf16.mxu0 %v2955
  %4317 = vmatpush1.bf16.msra.mxu0 %v2954
  %4318 = vmatprep.subr.bf16.mxu0 %v2959
  %4319 = vmatpush1.bf16.msra.mxu0 %v2958
  %4320 = vmatprep.mubr.bf16.mxu0 %v699
  %4321 = vmatmul.mubr.bf16.gmra.mrb[0].mxu0 %v698
  %v4322 = vpop.f32.mrb[0].mxu0
  %v4323 = vadd.f32 %v4280, %v4322
  %v4324 = vpop.f32.mrb[0].mxu0
  %v4325 = vadd.f32 %v4282, %v4324
  %v4326 = vpop.f32.mrb[0].mxu0
  %v4327 = vadd.f32 %v4284, %v4326
  %v4328 = vpop.f32.mrb[0].mxu0
  %v4329 = vadd.f32 %v4286, %v4328
  %4330 = vdwg.mxu0
  %4331 = vmatprep.subr.bf16.mxu0 %v2963
  %4332 = vmatpush1.bf16.msra.mxu0 %v2962
  %4333 = vmatprep.subr.bf16.mxu0 %v2967
  %4334 = vmatpush1.bf16.msra.mxu0 %v2966
  %4335 = vmatprep.subr.bf16.mxu0 %v2971
  %4336 = vmatpush1.bf16.msra.mxu0 %v2970
  %4337 = vmatprep.subr.bf16.mxu0 %v2975
  %4338 = vmatpush1.bf16.msra.mxu0 %v2974
  %4339 = vmatprep.subr.bf16.mxu0 %v2979
  %4340 = vmatpush1.bf16.msra.mxu0 %v2978
  %4341 = vmatprep.subr.bf16.mxu0 %v2983
  %4342 = vmatpush1.bf16.msra.mxu0 %v2982
  %4343 = vmatprep.subr.bf16.mxu0 %v2987
  %4344 = vmatpush1.bf16.msra.mxu0 %v2986
  %4345 = vmatprep.subr.bf16.mxu0 %v2991
  %4346 = vmatpush1.bf16.msra.mxu0 %v2990
  %4347 = vmatprep.subr.bf16.mxu0 %v2995
  %4348 = vmatpush1.bf16.msra.mxu0 %v2994
  %4349 = vmatprep.subr.bf16.mxu0 %v2999
  %4350 = vmatpush1.bf16.msra.mxu0 %v2998
  %4351 = vmatprep.subr.bf16.mxu0 %v3003
  %4352 = vmatpush1.bf16.msra.mxu0 %v3002
  %4353 = vmatprep.subr.bf16.mxu0 %v3007
  %4354 = vmatpush1.bf16.msra.mxu0 %v3006
  %4355 = vmatprep.subr.bf16.mxu0 %v3011
  %4356 = vmatpush1.bf16.msra.mxu0 %v3010
  %4357 = vmatprep.subr.bf16.mxu0 %v3015
  %4358 = vmatpush1.bf16.msra.mxu0 %v3014
  %4359 = vmatprep.subr.bf16.mxu0 %v3019
  %4360 = vmatpush1.bf16.msra.mxu0 %v3018
  %4361 = vmatprep.subr.bf16.mxu0 %v3023
  %4362 = vmatpush1.bf16.msra.mxu0 %v3022
  %4363 = vmatprep.mubr.bf16.mxu0 %v701
  %4364 = vmatmul.mubr.bf16.gmra.mrb[0].mxu0 %v700
  %v4365 = vpop.f32.mrb[0].mxu0
  %v4366 = vadd.f32 %v4323, %v4365
  %v4367 = vpop.f32.mrb[0].mxu0
  %v4368 = vadd.f32 %v4325, %v4367
  %v4369 = vpop.f32.mrb[0].mxu0
  %v4370 = vadd.f32 %v4327, %v4369
  %v4371 = vpop.f32.mrb[0].mxu0
  %v4372 = vadd.f32 %v4329, %v4371
  %4373 = vdwg.mxu0
  %v4374 = vmul.f32 %v3979, 0.2
  %v4375 = vmul.f32 %v3981, 0.2
  %v4376 = vmul.f32 %v4366, 0.2
  %v4377 = vmul.f32 %v4368, 0.2
  %v4378 = vmul.f32 %v3983, 0.2
  %v4379 = vmul.f32 %v3985, 0.2
  %v4380 = vmul.f32 %v4370, 0.2
  %v4381 = vmul.f32 %v4372, 0.2
  %v4382 = vmax.f32 %v3979, %v4374
  %v4383 = vmax.f32 %v3981, %v4375
  %v4384 = vmax.f32 %v4366, %v4376
  %v4385 = vmax.f32 %v4368, %v4377
  %v4386 = vmax.f32 %v3983, %v4378
  %v4387 = vmax.f32 %v3985, %v4379
  %v4388 = vmax.f32 %v4370, %v4380
  %v4389 = vmax.f32 %v4372, %v4381
  %v4390 = vpack.c.bf16 %v4386, %v4382
  %v4391 = vpack.c.bf16 %v4387, %v4383
  %v4392 = vpack.c.bf16 %v4388, %v4384
  %v4393 = vpack.c.bf16 %v4389, %v4385
  %v4398 = vunpack.c.l.b16 %v4390
  %v4399 = vunpack.c.l.b16 %v4391
  %v4400 = vunpack.c.l.b16 %v4392
  %v4401 = vunpack.c.l.b16 %v4393
  %v4402 = vunpack.c.h.b16 %v4390
  %v4403 = vunpack.c.h.b16 %v4391
  %v4404 = vunpack.c.h.b16 %v4392
  %v4405 = vunpack.c.h.b16 %v4393
  %v4406 = vpack.c.b16 %v4399, %v4398
  %v4407 = vpack.c.b16 %v4401, %v4400
  %v4408 = vpack.c.b16 %v4403, %v4402
  %v4409 = vpack.c.b16 %v4405, %v4404
  %4414 = vst [vmem:[%s3] sm:$0xff] %v4406
  %4415 = vst [vmem:[%s3 + $0x8] sm:$0xff] %v4407
  %4416 = vst [vmem:[%s3 + $0x10] sm:$0xff] %v4408
  %4417 = vst [vmem:[%s3 + $0x18] sm:$0xff] %v4409
  // Predicated region
  $region14: #{_lambda_.8} parent=0 // pred_check
    _
  $region15: #{_lambda_.8} parent=0 // pred_check_branch
    %4419 = sbr.rel (0) target = $region17
  $region16: #{_lambda_.8} parent=0 // pred_region
    _
  $region17: #{_lambda_.8} parent=0 // pred_fallthru
    _
  // Predicated region
  $region18: #{_lambda_.8} parent=0 // pred_check
    _
  $region19: #{_lambda_.8} parent=0 // pred_check_branch
    %4421 = sbr.rel (0) target = $region21
  $region20: #{_lambda_.8} parent=0 // pred_region
    _
  $region21: #{_lambda_.8} parent=0 // pred_fallthru
    _

</llo_original>
